<compile_context>
chip_gen: v7x
topology: tpu7x:2x2x1
jax: 0.10.0
libtpu: 0.0.40
codegen_flags: <defaults>
</compile_context>

<pallas_src>
import jax
import jax.numpy as jnp
from jax.experimental import pallas as pl
from jax.experimental.pallas import tpu as pltpu

EPS = 1e-5
IN_DIM = 3 * 32 * 32      # 3072
HID_DIM = 1024
NUM_CLASSES = 10
C_PAD = 128               # logits padded to one full 128-lane register


def _round_up(x, m):
    return ((x + m - 1) // m) * m


def mlp_kernel(x_ref, w1_ref, b1_ref, w2_ref, b2_ref, out_ref):
    """Fused fc1 -> (folded eval BN + bias) -> ReLU -> fc2 for one batch tile."""
    # In-kernel bf16 cast of the f32 activations; MXU accumulates in f32.
    xb = x_ref[...].astype(jnp.bfloat16)
    h = jnp.dot(xb, w1_ref[...], preferred_element_type=jnp.float32)
    h = jnp.maximum(h + b1_ref[...], 0.0)          # folded BN/bias + ReLU
    # Dropout is identity in eval mode.
    out_ref[...] = (
        jnp.dot(h.astype(jnp.bfloat16), w2_ref[...],
                preferred_element_type=jnp.float32)
        + b2_ref[...]
    )


def _choose_tm(n, max_tm=256):
    """Batch tile: multiple of 16 (bf16 sublane packing), as large as possible,
    with padding waste minimized for n > max_tm. No forced megacore split at
    small n (would duplicate the resident-weight fetch on both TensorCores)."""
    n16 = _round_up(n, 16)
    if n16 <= max_tm:
        return n16
    n_tiles = pl.cdiv(n16, max_tm)
    return _round_up(pl.cdiv(n16, n_tiles), 16)


def mlp_logits(x, params, *, max_tm=256):
    N, D = x.shape
    H = HID_DIM
    assert D == IN_DIM

    # Fold eval-mode BatchNorm + fc1 bias into fc1 (in f32, before the bf16 cast).
    scale = params["gamma"] * jax.lax.rsqrt(params["running_var"] + EPS)    # (1, H)
    w1f = (params["w1"] * scale).astype(jnp.bfloat16)                       # (D, H) bf16, 6 MiB
    b1f = (params["b1"] - params["running_mean"]) * scale + params["beta"]  # (1, H) f32

    # fc2 padded to 128 output lanes (lane-dense logits store) and cast to bf16.
    w2p = jnp.pad(params["w2"], ((0, 0), (0, C_PAD - NUM_CLASSES))).astype(jnp.bfloat16)
    b2p = jnp.pad(params["b2"], ((0, 0), (0, C_PAD - NUM_CLASSES)))         # (1, 128) f32

    tm = _choose_tm(N, max_tm)
    n_pad = _round_up(N, tm)
    x_in = x if n_pad == N else jnp.pad(x, ((0, n_pad - N), (0, 0)))

    res = lambda i: (0, 0)            # resident (constant-index) operands
    resident = pl.Buffered(1)         # DMA'd once, single-buffered in VMEM

    out = pl.pallas_call(
        mlp_kernel,
        out_shape=jax.ShapeDtypeStruct((n_pad, C_PAD), jnp.float32),
        grid=(n_pad // tm,),
        in_specs=[
            pl.BlockSpec((tm, D), lambda i: (i, 0)),                  # x tile (f32, streamed)
            pl.BlockSpec((D, H), res, pipeline_mode=resident),        # W1 (bf16, resident)
            pl.BlockSpec((1, H), res, pipeline_mode=resident),        # folded b1 (f32)
            pl.BlockSpec((H, C_PAD), res, pipeline_mode=resident),    # W2 (bf16, padded)
            pl.BlockSpec((1, C_PAD), res, pipeline_mode=resident),    # b2 (padded)
        ],
        out_specs=pl.BlockSpec((tm, C_PAD), lambda i: (i, 0)),
        compiler_params=pltpu.CompilerParams(
            dimension_semantics=("parallel",),
            vmem_limit_bytes=24 << 20,   # ~13 MiB working set; fits v5e/v6e/v7x
        ),
    )(x_in, w1f, b1f, w2p, b2p)

    return out[:N, :NUM_CLASSES]


def model_forward(x, params, y=None):
    """Mirrors Model.forward: returns pred if y is None else (loss, acc)."""
    logits = mlp_logits(x, params)
    pred = jnp.argmax(logits, axis=1)
    if y is None:
        return pred
    logp = jax.nn.log_softmax(logits, axis=-1)
    y_i = y.astype(jnp.int32)
    loss = -jnp.mean(jnp.take_along_axis(logp, y_i[:, None], axis=1))
    acc = jnp.mean((pred.astype(jnp.int32) == y_i).astype(jnp.float32))
    return loss, acc


def init_params(key):
    """Deterministic init mimicking PyTorch defaults (uniform(+-1/sqrt(fan_in)))."""
    k1, k2, k3, k4 = jax.random.split(key, 4)
    bound1 = 1.0 / jnp.sqrt(jnp.float32(IN_DIM))
    bound2 = 1.0 / jnp.sqrt(jnp.float32(HID_DIM))
    return {
        "w1": jax.random.uniform(k1, (IN_DIM, HID_DIM), jnp.float32, -bound1, bound1),
        "b1": jax.random.uniform(k2, (1, HID_DIM), jnp.float32, -bound1, bound1),
        "gamma": jnp.ones((1, HID_DIM), jnp.float32),
        "beta": jnp.zeros((1, HID_DIM), jnp.float32),
        "running_mean": jnp.zeros((1, HID_DIM), jnp.float32),
        "running_var": jnp.ones((1, HID_DIM), jnp.float32),
        "w2": jax.random.uniform(k3, (HID_DIM, NUM_CLASSES), jnp.float32, -bound2, bound2),
        "b2": jax.random.uniform(k4, (1, NUM_CLASSES), jnp.float32, -bound2, bound2),
    }


if __name__ == "__main__":
    key = jax.random.PRNGKey(0)
    kx, ky, kp = jax.random.split(key, 3)

    N = 16  # small batch (input dim is fixed at 3*32*32 by the module definition)
    x = jax.random.normal(kx, (N, IN_DIM), jnp.float32)
    y = jax.random.randint(ky, (N,), 0, NUM_CLASSES, dtype=jnp.int32)
    params = init_params(kp)

    # y is None -> predictions
    pred = jax.block_until_ready(model_forward(x, params))
    # y given -> (loss, acc)
    loss, acc = model_forward(x, params, y)
    jax.block_until_ready((loss, acc))

    # sanity: pure-JAX reference for the (bf16 matmuls, folded-BN) logits path
    scale = params["gamma"] * jax.lax.rsqrt(params["running_var"] + EPS)
    w1f = (params["w1"] * scale).astype(jnp.bfloat16)
    b1f = (params["b1"] - params["running_mean"]) * scale + params["beta"]
    x_bf = x.astype(jnp.bfloat16)
    h_ref = jnp.maximum(
        jnp.dot(x_bf, w1f, preferred_element_type=jnp.float32) + b1f, 0.0)
    logits_ref = (
        jnp.dot(h_ref.astype(jnp.bfloat16), params["w2"].astype(jnp.bfloat16),
                preferred_element_type=jnp.float32)
        + params["b2"]
    )

    logits = mlp_logits(x, params)
    assert logits.shape == (N, NUM_CLASSES)
    assert jnp.allclose(logits, logits_ref, atol=1e-2, rtol=1e-2)
    assert pred.shape == (N,)

    print("KERNEL_OK")
</pallas_src>

<mosaic_0001>
module attributes {stable_mosaic.version = 11 : i64} {
  func.func @mlp_kernel(%arg0: i32, %arg1: memref<16x3072xf32, #tpu.memory_space<vmem>>, %arg2: memref<3072x1024xbf16, #tpu.memory_space<vmem>>, %arg3: memref<1x1024xf32, #tpu.memory_space<vmem>>, %arg4: memref<1024x128xbf16, #tpu.memory_space<vmem>>, %arg5: memref<1x128xf32, #tpu.memory_space<vmem>>, %arg6: memref<16x128xf32, #tpu.memory_space<vmem>>) attributes {dimension_semantics = [#tpu.dimension_semantics<parallel>], iteration_bounds = array<i64: 1>, scalar_prefetch = 0 : i64, scratch_operands = 0 : i64, tpu.core_type = #tpu.core_type<tc>, window_params = [{transform_indices = @transform_0, window_bounds = array<i64: 16, 3072>}, {pipeline_mode = #tpu.pipeline_mode<synchronous>, transform_indices = @transform_1, window_bounds = array<i64: 3072, 1024>}, {pipeline_mode = #tpu.pipeline_mode<synchronous>, transform_indices = @transform_2, window_bounds = array<i64: 1, 1024>}, {pipeline_mode = #tpu.pipeline_mode<synchronous>, transform_indices = @transform_3, window_bounds = array<i64: 1024, 128>}, {pipeline_mode = #tpu.pipeline_mode<synchronous>, transform_indices = @transform_4, window_bounds = array<i64: 1, 128>}, {transform_indices = @transform_5, window_bounds = array<i64: 16, 128>}]} {
    %c0 = arith.constant 0 : index
    %c0_0 = arith.constant 0 : index
    %0 = vector.load %arg1[%c0, %c0_0] : memref<16x3072xf32, #tpu.memory_space<vmem>>, vector<16x3072xf32>
    %1 = arith.truncf %0 : vector<16x3072xf32> to vector<16x3072xbf16>
    %c0_1 = arith.constant 0 : index
    %c0_2 = arith.constant 0 : index
    %2 = vector.load %arg2[%c0_1, %c0_2] : memref<3072x1024xbf16, #tpu.memory_space<vmem>>, vector<3072x1024xbf16>
    %cst = arith.constant dense<0.000000e+00> : vector<16x1024xf32>
    %3 = tpu.matmul %1, %2, %cst {dimension_numbers = #tpu.dot_dimension_numbers<[1], [0], [0], [1], [0, 0, 1, 1], [], []>} : vector<16x3072xbf16>, vector<3072x1024xbf16>, vector<16x1024xf32> -> vector<16x1024xf32>
    %c0_3 = arith.constant 0 : index
    %c0_4 = arith.constant 0 : index
    %4 = vector.load %arg3[%c0_3, %c0_4] : memref<1x1024xf32, #tpu.memory_space<vmem>>, vector<1x1024xf32>
    %5 = vector.broadcast %4 : vector<1x1024xf32> to vector<16x1024xf32>
    %6 = arith.addf %3, %5 : vector<16x1024xf32>
    %cst_5 = arith.constant 0.000000e+00 : f32
    %7 = vector.broadcast %cst_5 : f32 to vector<16x1024xf32>
    %8 = arith.maximumf %6, %7 : vector<16x1024xf32>
    %9 = arith.truncf %8 : vector<16x1024xf32> to vector<16x1024xbf16>
    %c0_6 = arith.constant 0 : index
    %c0_7 = arith.constant 0 : index
    %10 = vector.load %arg4[%c0_6, %c0_7] : memref<1024x128xbf16, #tpu.memory_space<vmem>>, vector<1024x128xbf16>
    %cst_8 = arith.constant dense<0.000000e+00> : vector<16x128xf32>
    %11 = tpu.matmul %9, %10, %cst_8 {dimension_numbers = #tpu.dot_dimension_numbers<[1], [0], [0], [1], [0, 0, 1, 1], [], []>} : vector<16x1024xbf16>, vector<1024x128xbf16>, vector<16x128xf32> -> vector<16x128xf32>
    %c0_9 = arith.constant 0 : index
    %c0_10 = arith.constant 0 : index
    %12 = vector.load %arg5[%c0_9, %c0_10] : memref<1x128xf32, #tpu.memory_space<vmem>>, vector<1x128xf32>
    %13 = vector.broadcast %12 : vector<1x128xf32> to vector<16x128xf32>
    %14 = arith.addf %11, %13 : vector<16x128xf32>
    %c0_11 = arith.constant 0 : index
    %c0_12 = arith.constant 0 : index
    %15 = vector.load %arg6[%c0_11, %c0_12] : memref<16x128xf32, #tpu.memory_space<vmem>>, vector<16x128xf32>
    tpu.vector_store %arg6[%c0_11, %c0_12], %14 {strides = array<i32>} : memref<16x128xf32, #tpu.memory_space<vmem>>, vector<16x128xf32>,
    return
  }
  func.func @transform_0(%arg0: i32) -> (i32, i32) {
    %c0_i32 = arith.constant 0 : i32
    %c0_i32_0 = arith.constant 0 : i32
    return %arg0, %c0_i32 : i32, i32
  }
  func.func @transform_1(%arg0: i32) -> (i32, i32) {
    %c0_i32 = arith.constant 0 : i32
    %c0_i32_0 = arith.constant 0 : i32
    %c0_i32_1 = arith.constant 0 : i32
    return %c0_i32, %c0_i32_0 : i32, i32
  }
  func.func @transform_2(%arg0: i32) -> (i32, i32) {
    %c0_i32 = arith.constant 0 : i32
    %c0_i32_0 = arith.constant 0 : i32
    %c0_i32_1 = arith.constant 0 : i32
    return %c0_i32, %c0_i32_0 : i32, i32
  }
  func.func @transform_3(%arg0: i32) -> (i32, i32) {
    %c0_i32 = arith.constant 0 : i32
    %c0_i32_0 = arith.constant 0 : i32
    %c0_i32_1 = arith.constant 0 : i32
    return %c0_i32, %c0_i32_0 : i32, i32
  }
  func.func @transform_4(%arg0: i32) -> (i32, i32) {
    %c0_i32 = arith.constant 0 : i32
    %c0_i32_0 = arith.constant 0 : i32
    %c0_i32_1 = arith.constant 0 : i32
    return %c0_i32, %c0_i32_0 : i32, i32
  }
  func.func @transform_5(%arg0: i32) -> (i32, i32) {
    %c0_i32 = arith.constant 0 : i32
    %c0_i32_0 = arith.constant 0 : i32
    return %arg0, %c0_i32 : i32, i32
  }
}

</mosaic_0001>

<llo_original>
// kernel: tpu_custom_call.1
$region0: #{tpu_custom_call.1}
  #allocation0 [shape = 'u32[]', space=smem, size = 0x4, offset = 0x4, fixed_abs, tag = 'smem constant byte address 0x4 - core index']
  #allocation1 [shape = 'u32[144,128]{1,0:T(1,128)}', space=vmem, size = 0x12000, scoped, tag = 'internal scratch']
  %s0 = inlined_call_operand.hbm [shape: f32[16,3072], index: 0, kind: input, shape index: {}]
  %s1 = inlined_call_operand.hbm [shape: bf16[3072,1024], index: 1, kind: input, shape index: {}]
  %s2 = inlined_call_operand.hbm [shape: f32[1,1024], index: 2, kind: input, shape index: {}]
  %s3 = inlined_call_operand.hbm [shape: bf16[1024,128], index: 3, kind: input, shape index: {}]
  %s4 = inlined_call_operand.hbm [shape: f32[1,128], index: 4, kind: input, shape index: {}]
  %s5 = inlined_call_operand.hbm [shape: f32[16,128], index: 5, kind: output, shape index: {}]
  %s6 = sld [smem:[#allocation0]]
  $region50: #{tpu_custom_call.1} parent=0
    _
  %s8 = ssub.s32 1, %s6
  %s9 = scalar_select 0, %s8, %s6
  $region1: #{tpu_custom_call.1} parent=0
    #allocation2 [shape = 'u8[196608]{0}', space=vmem, size = 0x30000, scoped, tag = 'input window, operand 0, single buffered']
    #allocation3 [shape = 's32[1]{0}', space=sflag, size = 0x4, scoped, tag = 'scoped memory for tpu_custom_call.1']
    #allocation4 [shape = 's32[1]{0}', space=sflag, size = 0x4, scoped, tag = 'scoped memory for tpu_custom_call.1']
    #allocation5 [shape = 'u8[6291456]{0}', space=vmem, size = 0x600000, scoped, tag = 'input window, operand 1, single buffered']
    #allocation6 [shape = 's32[1]{0}', space=sflag, size = 0x4, scoped, tag = 'scoped memory for tpu_custom_call.1']
    #allocation7 [shape = 'u8[4096]{0}', space=vmem, size = 0x1000, scoped, tag = 'input window, operand 2, single buffered']
    #allocation8 [shape = 'u8[262144]{0}', space=vmem, size = 0x40000, scoped, tag = 'input window, operand 3, single buffered']
    #allocation9 [shape = 's32[1]{0}', space=sflag, size = 0x4, scoped, tag = 'scoped memory for tpu_custom_call.1']
    #allocation10 [shape = 'u8[512]{0}', space=vmem, size = 0x400, scoped, tag = 'input window, operand 4, single buffered']
    #allocation11 [shape = 'u8[8192]{0}', space=vmem, size = 0x2000, scoped, tag = 'output window, operand 0, single buffered']
    %10 = vsyncpa [#allocation3], 0
    %11 = vsyncpa [#allocation6], 0
    %12 = vsyncpa [#allocation9], 0
    %13 = vsyncpa [#allocation4], 0
    // Predicated region
    $region2: #{tpu_custom_call.1} parent=1 // pred_check
      _
    $region3: #{tpu_custom_call.1} parent=1 // pred_check_branch
      %15 = sbr.rel (0) target = $region5
    $region4: #{tpu_custom_call.1} parent=1 // pred_region
      %s17 = ssub.s32 6144, 6144
      %18 = vsyncadd [#allocation3], %s17
      %s19 = sshll.u32 [#allocation2], 4
      %s20 = int_to_ptr.vmem [resolvable:$true] %s19
      %25 = dma.hbm_to_vmem [thread:$0]  %s0, 6144, %s20, [#allocation3], 3072, 3072, 192
    $region5: #{tpu_custom_call.1} parent=1 // pred_fallthru
      _
    // Predicated region
    $region6: #{tpu_custom_call.1} parent=1 // pred_check
      _
    $region7: #{tpu_custom_call.1} parent=1 // pred_check_branch
      %27 = sbr.rel (0) target = $region9
    $region8: #{tpu_custom_call.1} parent=1 // pred_region
      %s29 = ssub.s32 196608, 196608
      %30 = vsyncadd [#allocation6], %s29
      %s31 = sshll.u32 [#allocation5], 4
      %s32 = int_to_ptr.vmem [resolvable:$true] %s31
      %37 = dma.hbm_to_vmem [thread:$0]  %s1, 196608, %s32, [#allocation6], 512, 512, 32
    $region9: #{tpu_custom_call.1} parent=1 // pred_fallthru
      _
    // Predicated region
    $region10: #{tpu_custom_call.1} parent=1 // pred_check
      _
    $region11: #{tpu_custom_call.1} parent=1 // pred_check_branch
      %39 = sbr.rel (0) target = $region13
    $region12: #{tpu_custom_call.1} parent=1 // pred_region
      %s41 = ssub.s32 128, 128
      %42 = vsyncadd [#allocation6], %s41
      %s44 = sshll.u32 [#allocation7], 4
      %s45 = int_to_ptr.vmem [resolvable:$true] %s44
      %47 = dma.hbm_to_vmem [thread:$0]  %s2, 128, %s45, [#allocation6]
    $region13: #{tpu_custom_call.1} parent=1 // pred_fallthru
      _
    // Predicated region
    $region14: #{tpu_custom_call.1} parent=1 // pred_check
      _
    $region15: #{tpu_custom_call.1} parent=1 // pred_check_branch
      %49 = sbr.rel (0) target = $region17
    $region16: #{tpu_custom_call.1} parent=1 // pred_region
      %s51 = ssub.s32 8192, 8192
      %52 = vsyncadd [#allocation9], %s51
      %s53 = sshll.u32 [#allocation8], 4
      %s54 = int_to_ptr.vmem [resolvable:$true] %s53
      %59 = dma.hbm_to_vmem [thread:$0]  %s3, 8192, %s54, [#allocation9], 64, 64, 4
    $region17: #{tpu_custom_call.1} parent=1 // pred_fallthru
      _
    // Predicated region
    $region18: #{tpu_custom_call.1} parent=1 // pred_check
      _
    $region19: #{tpu_custom_call.1} parent=1 // pred_check_branch
      %61 = sbr.rel (0) target = $region21
    $region20: #{tpu_custom_call.1} parent=1 // pred_region
      %s63 = ssub.s32 16, 16
      %64 = vsyncadd [#allocation9], %s63
      %s66 = sshll.u32 [#allocation10], 4
      %s67 = int_to_ptr.vmem [resolvable:$true] %s66
      %69 = dma.hbm_to_vmem [thread:$0]  %s4, 16, %s67, [#allocation9]
    $region21: #{tpu_custom_call.1} parent=1 // pred_fallthru
      _
    // Predicated region
    $region22: #{tpu_custom_call.1} parent=1 // pred_check
      _
    $region23: #{tpu_custom_call.1} parent=1 // pred_check_branch
      %71 = sbr.rel (0) target = $region25
    $region24: #{tpu_custom_call.1} parent=1 // pred_region
      %72 = dma.done [#allocation3], 6144
    $region25: #{tpu_custom_call.1} parent=1 // pred_fallthru
      _
    // Predicated region
    $region26: #{tpu_custom_call.1} parent=1 // pred_check
      _
    $region27: #{tpu_custom_call.1} parent=1 // pred_check_branch
      %74 = sbr.rel (0) target = $region29
    $region28: #{tpu_custom_call.1} parent=1 // pred_region
      %75 = dma.done [#allocation6], 196608
    $region29: #{tpu_custom_call.1} parent=1 // pred_fallthru
      _
    // Predicated region
    $region30: #{tpu_custom_call.1} parent=1 // pred_check
      _
    $region31: #{tpu_custom_call.1} parent=1 // pred_check_branch
      %77 = sbr.rel (0) target = $region33
    $region32: #{tpu_custom_call.1} parent=1 // pred_region
      %78 = dma.done [#allocation6], 128
    $region33: #{tpu_custom_call.1} parent=1 // pred_fallthru
      _
    // Predicated region
    $region34: #{tpu_custom_call.1} parent=1 // pred_check
      _
    $region35: #{tpu_custom_call.1} parent=1 // pred_check_branch
      %80 = sbr.rel (0) target = $region37
    $region36: #{tpu_custom_call.1} parent=1 // pred_region
      %81 = dma.done [#allocation9], 8192
    $region37: #{tpu_custom_call.1} parent=1 // pred_fallthru
      _
    // Predicated region
    $region38: #{tpu_custom_call.1} parent=1 // pred_check
      _
    $region39: #{tpu_custom_call.1} parent=1 // pred_check_branch
      %83 = sbr.rel (0) target = $region41
    $region40: #{tpu_custom_call.1} parent=1 // pred_region
      %84 = dma.done [#allocation9], 16
    $region41: #{tpu_custom_call.1} parent=1 // pred_fallthru
      _
    %v86 = vld [vmem:[#allocation2] sm:$0xff]
    %v87 = vld [vmem:[#allocation2 + $0x8] sm:$0xff]
    %v88 = vld [vmem:[#allocation2 + $0x10] sm:$0xff]
    %v89 = vld [vmem:[#allocation2 + $0x18] sm:$0xff]
    %v90 = vld [vmem:[#allocation2 + $0x20] sm:$0xff]
    %v91 = vld [vmem:[#allocation2 + $0x28] sm:$0xff]
    %v92 = vld [vmem:[#allocation2 + $0x30] sm:$0xff]
    %v93 = vld [vmem:[#allocation2 + $0x38] sm:$0xff]
    %v94 = vld [vmem:[#allocation2 + $0x40] sm:$0xff]
    %v95 = vld [vmem:[#allocation2 + $0x48] sm:$0xff]
    %v96 = vld [vmem:[#allocation2 + $0x50] sm:$0xff]
    %v97 = vld [vmem:[#allocation2 + $0x58] sm:$0xff]
    %v98 = vld [vmem:[#allocation2 + $0x60] sm:$0xff]
    %v99 = vld [vmem:[#allocation2 + $0x68] sm:$0xff]
    %v100 = vld [vmem:[#allocation2 + $0x70] sm:$0xff]
    %v101 = vld [vmem:[#allocation2 + $0x78] sm:$0xff]
    %v102 = vld [vmem:[#allocation2 + $0x80] sm:$0xff]
    %v103 = vld [vmem:[#allocation2 + $0x88] sm:$0xff]
    %v104 = vld [vmem:[#allocation2 + $0x90] sm:$0xff]
    %v105 = vld [vmem:[#allocation2 + $0x98] sm:$0xff]
    %v106 = vld [vmem:[#allocation2 + $0xa0] sm:$0xff]
    %v107 = vld [vmem:[#allocation2 + $0xa8] sm:$0xff]
    %v108 = vld [vmem:[#allocation2 + $0xb0] sm:$0xff]
    %v109 = vld [vmem:[#allocation2 + $0xb8] sm:$0xff]
    %v110 = vld [vmem:[#allocation2 + $0xc0] sm:$0xff]
    %v111 = vld [vmem:[#allocation2 + $0xc8] sm:$0xff]
    %v112 = vld [vmem:[#allocation2 + $0xd0] sm:$0xff]
    %v113 = vld [vmem:[#allocation2 + $0xd8] sm:$0xff]
    %v114 = vld [vmem:[#allocation2 + $0xe0] sm:$0xff]
    %v115 = vld [vmem:[#allocation2 + $0xe8] sm:$0xff]
    %v116 = vld [vmem:[#allocation2 + $0xf0] sm:$0xff]
    %v117 = vld [vmem:[#allocation2 + $0xf8] sm:$0xff]
    %v118 = vld [vmem:[#allocation2 + $0x100] sm:$0xff]
    %v119 = vld [vmem:[#allocation2 + $0x108] sm:$0xff]
    %v120 = vld [vmem:[#allocation2 + $0x110] sm:$0xff]
    %v121 = vld [vmem:[#allocation2 + $0x118] sm:$0xff]
    %v122 = vld [vmem:[#allocation2 + $0x120] sm:$0xff]
    %v123 = vld [vmem:[#allocation2 + $0x128] sm:$0xff]
    %v124 = vld [vmem:[#allocation2 + $0x130] sm:$0xff]
    %v125 = vld [vmem:[#allocation2 + $0x138] sm:$0xff]
    %v126 = vld [vmem:[#allocation2 + $0x140] sm:$0xff]
    %v127 = vld [vmem:[#allocation2 + $0x148] sm:$0xff]
    %v128 = vld [vmem:[#allocation2 + $0x150] sm:$0xff]
    %v129 = vld [vmem:[#allocation2 + $0x158] sm:$0xff]
    %v130 = vld [vmem:[#allocation2 + $0x160] sm:$0xff]
    %v131 = vld [vmem:[#allocation2 + $0x168] sm:$0xff]
    %v132 = vld [vmem:[#allocation2 + $0x170] sm:$0xff]
    %v133 = vld [vmem:[#allocation2 + $0x178] sm:$0xff]
    %v134 = vpack.c.bf16 %v110, %v86
    %v135 = vpack.c.bf16 %v111, %v87
    %v136 = vpack.c.bf16 %v112, %v88
    %v137 = vpack.c.bf16 %v113, %v89
    %v138 = vpack.c.bf16 %v114, %v90
    %v139 = vpack.c.bf16 %v115, %v91
    %v140 = vpack.c.bf16 %v116, %v92
    %v141 = vpack.c.bf16 %v117, %v93
    %v142 = vpack.c.bf16 %v118, %v94
    %v143 = vpack.c.bf16 %v119, %v95
    %v144 = vpack.c.bf16 %v120, %v96
    %v145 = vpack.c.bf16 %v121, %v97
    %v146 = vpack.c.bf16 %v122, %v98
    %v147 = vpack.c.bf16 %v123, %v99
    %v148 = vpack.c.bf16 %v124, %v100
    %v149 = vpack.c.bf16 %v125, %v101
    %v150 = vpack.c.bf16 %v126, %v102
    %v151 = vpack.c.bf16 %v127, %v103
    %v152 = vpack.c.bf16 %v128, %v104
    %v153 = vpack.c.bf16 %v129, %v105
    %v154 = vpack.c.bf16 %v130, %v106
    %v155 = vpack.c.bf16 %v131, %v107
    %v156 = vpack.c.bf16 %v132, %v108
    %v157 = vpack.c.bf16 %v133, %v109
    %v158 = vld [vmem:[#allocation5] sm:$0xff]
    %v159 = vld [vmem:[#allocation5 + $0x8] sm:$0xff]
    %v160 = vld [vmem:[#allocation5 + $0x10] sm:$0xff]
    %v161 = vld [vmem:[#allocation5 + $0x18] sm:$0xff]
    %v162 = vld [vmem:[#allocation5 + $0x20] sm:$0xff]
    %v163 = vld [vmem:[#allocation5 + $0x28] sm:$0xff]
    %v164 = vld [vmem:[#allocation5 + $0x30] sm:$0xff]
    %v165 = vld [vmem:[#allocation5 + $0x38] sm:$0xff]
    %v166 = vld [vmem:[#allocation5 + $0x40] sm:$0xff]
    %v167 = vld [vmem:[#allocation5 + $0x48] sm:$0xff]
    %v168 = vld [vmem:[#allocation5 + $0x50] sm:$0xff]
    %v169 = vld [vmem:[#allocation5 + $0x58] sm:$0xff]
    %v170 = vld [vmem:[#allocation5 + $0x60] sm:$0xff]
    %v171 = vld [vmem:[#allocation5 + $0x68] sm:$0xff]
    %v172 = vld [vmem:[#allocation5 + $0x70] sm:$0xff]
    %v173 = vld [vmem:[#allocation5 + $0x78] sm:$0xff]
    %v174 = vld [vmem:[#allocation5 + $0x80] sm:$0xff]
    %v175 = vld [vmem:[#allocation5 + $0x88] sm:$0xff]
    %v176 = vld [vmem:[#allocation5 + $0x90] sm:$0xff]
    %v177 = vld [vmem:[#allocation5 + $0x98] sm:$0xff]
    %v178 = vld [vmem:[#allocation5 + $0xa0] sm:$0xff]
    %v179 = vld [vmem:[#allocation5 + $0xa8] sm:$0xff]
    %v180 = vld [vmem:[#allocation5 + $0xb0] sm:$0xff]
    %v181 = vld [vmem:[#allocation5 + $0xb8] sm:$0xff]
    %v182 = vld [vmem:[#allocation5 + $0xc0] sm:$0xff]
    %v183 = vld [vmem:[#allocation5 + $0xc8] sm:$0xff]
    %v184 = vld [vmem:[#allocation5 + $0xd0] sm:$0xff]
    %v185 = vld [vmem:[#allocation5 + $0xd8] sm:$0xff]
    %v186 = vld [vmem:[#allocation5 + $0xe0] sm:$0xff]
    %v187 = vld [vmem:[#allocation5 + $0xe8] sm:$0xff]
    %v188 = vld [vmem:[#allocation5 + $0xf0] sm:$0xff]
    %v189 = vld [vmem:[#allocation5 + $0xf8] sm:$0xff]
    %v190 = vld [vmem:[#allocation5 + $0x100] sm:$0xff]
    %v191 = vld [vmem:[#allocation5 + $0x108] sm:$0xff]
    %v192 = vld [vmem:[#allocation5 + $0x110] sm:$0xff]
    %v193 = vld [vmem:[#allocation5 + $0x118] sm:$0xff]
    %v194 = vld [vmem:[#allocation5 + $0x120] sm:$0xff]
    %v195 = vld [vmem:[#allocation5 + $0x128] sm:$0xff]
    %v196 = vld [vmem:[#allocation5 + $0x130] sm:$0xff]
    %v197 = vld [vmem:[#allocation5 + $0x138] sm:$0xff]
    %v198 = vld [vmem:[#allocation5 + $0x140] sm:$0xff]
    %v199 = vld [vmem:[#allocation5 + $0x148] sm:$0xff]
    %v200 = vld [vmem:[#allocation5 + $0x150] sm:$0xff]
    %v201 = vld [vmem:[#allocation5 + $0x158] sm:$0xff]
    %v202 = vld [vmem:[#allocation5 + $0x160] sm:$0xff]
    %v203 = vld [vmem:[#allocation5 + $0x168] sm:$0xff]
    %v204 = vld [vmem:[#allocation5 + $0x170] sm:$0xff]
    %v205 = vld [vmem:[#allocation5 + $0x178] sm:$0xff]
    %v206 = vld [vmem:[#allocation5 + $0x180] sm:$0xff]
    %v207 = vld [vmem:[#allocation5 + $0x188] sm:$0xff]
    %v208 = vld [vmem:[#allocation5 + $0x190] sm:$0xff]
    %v209 = vld [vmem:[#allocation5 + $0x198] sm:$0xff]
    %v210 = vld [vmem:[#allocation5 + $0x1a0] sm:$0xff]
    %v211 = vld [vmem:[#allocation5 + $0x1a8] sm:$0xff]
    %v212 = vld [vmem:[#allocation5 + $0x1b0] sm:$0xff]
    %v213 = vld [vmem:[#allocation5 + $0x1b8] sm:$0xff]
    %v214 = vld [vmem:[#allocation5 + $0x1c0] sm:$0xff]
    %v215 = vld [vmem:[#allocation5 + $0x1c8] sm:$0xff]
    %v216 = vld [vmem:[#allocation5 + $0x1d0] sm:$0xff]
    %v217 = vld [vmem:[#allocation5 + $0x1d8] sm:$0xff]
    %v218 = vld [vmem:[#allocation5 + $0x1e0] sm:$0xff]
    %v219 = vld [vmem:[#allocation5 + $0x1e8] sm:$0xff]
    %v220 = vld [vmem:[#allocation5 + $0x1f0] sm:$0xff]
    %v221 = vld [vmem:[#allocation5 + $0x1f8] sm:$0xff]
    %v222 = vld [vmem:[#allocation5 + $0x200] sm:$0xff]
    %v223 = vld [vmem:[#allocation5 + $0x208] sm:$0xff]
    %v224 = vld [vmem:[#allocation5 + $0x210] sm:$0xff]
    %v225 = vld [vmem:[#allocation5 + $0x218] sm:$0xff]
    %v226 = vld [vmem:[#allocation5 + $0x220] sm:$0xff]
    %v227 = vld [vmem:[#allocation5 + $0x228] sm:$0xff]
    %v228 = vld [vmem:[#allocation5 + $0x230] sm:$0xff]
    %v229 = vld [vmem:[#allocation5 + $0x238] sm:$0xff]
    %v230 = vld [vmem:[#allocation5 + $0x240] sm:$0xff]
    %v231 = vld [vmem:[#allocation5 + $0x248] sm:$0xff]
    %v232 = vld [vmem:[#allocation5 + $0x250] sm:$0xff]
    %v233 = vld [vmem:[#allocation5 + $0x258] sm:$0xff]
    %v234 = vld [vmem:[#allocation5 + $0x260] sm:$0xff]
    %v235 = vld [vmem:[#allocation5 + $0x268] sm:$0xff]
    %v236 = vld [vmem:[#allocation5 + $0x270] sm:$0xff]
    %v237 = vld [vmem:[#allocation5 + $0x278] sm:$0xff]
    %v238 = vld [vmem:[#allocation5 + $0x280] sm:$0xff]
    %v239 = vld [vmem:[#allocation5 + $0x288] sm:$0xff]
    %v240 = vld [vmem:[#allocation5 + $0x290] sm:$0xff]
    %v241 = vld [vmem:[#allocation5 + $0x298] sm:$0xff]
    %v242 = vld [vmem:[#allocation5 + $0x2a0] sm:$0xff]
    %v243 = vld [vmem:[#allocation5 + $0x2a8] sm:$0xff]
    %v244 = vld [vmem:[#allocation5 + $0x2b0] sm:$0xff]
    %v245 = vld [vmem:[#allocation5 + $0x2b8] sm:$0xff]
    %v246 = vld [vmem:[#allocation5 + $0x2c0] sm:$0xff]
    %v247 = vld [vmem:[#allocation5 + $0x2c8] sm:$0xff]
    %v248 = vld [vmem:[#allocation5 + $0x2d0] sm:$0xff]
    %v249 = vld [vmem:[#allocation5 + $0x2d8] sm:$0xff]
    %v250 = vld [vmem:[#allocation5 + $0x2e0] sm:$0xff]
    %v251 = vld [vmem:[#allocation5 + $0x2e8] sm:$0xff]
    %v252 = vld [vmem:[#allocation5 + $0x2f0] sm:$0xff]
    %v253 = vld [vmem:[#allocation5 + $0x2f8] sm:$0xff]
    %v254 = vld [vmem:[#allocation5 + $0x300] sm:$0xff]
    %v255 = vld [vmem:[#allocation5 + $0x308] sm:$0xff]
    %v256 = vld [vmem:[#allocation5 + $0x310] sm:$0xff]
    %v257 = vld [vmem:[#allocation5 + $0x318] sm:$0xff]
    %v258 = vld [vmem:[#allocation5 + $0x320] sm:$0xff]
    %v259 = vld [vmem:[#allocation5 + $0x328] sm:$0xff]
    %v260 = vld [vmem:[#allocation5 + $0x330] sm:$0xff]
    %v261 = vld [vmem:[#allocation5 + $0x338] sm:$0xff]
    %v262 = vld [vmem:[#allocation5 + $0x340] sm:$0xff]
    %v263 = vld [vmem:[#allocation5 + $0x348] sm:$0xff]
    %v264 = vld [vmem:[#allocation5 + $0x350] sm:$0xff]
    %v265 = vld [vmem:[#allocation5 + $0x358] sm:$0xff]
    %v266 = vld [vmem:[#allocation5 + $0x360] sm:$0xff]
    %v267 = vld [vmem:[#allocation5 + $0x368] sm:$0xff]
    %v268 = vld [vmem:[#allocation5 + $0x370] sm:$0xff]
    %v269 = vld [vmem:[#allocation5 + $0x378] sm:$0xff]
    %v270 = vld [vmem:[#allocation5 + $0x380] sm:$0xff]
    %v271 = vld [vmem:[#allocation5 + $0x388] sm:$0xff]
    %v272 = vld [vmem:[#allocation5 + $0x390] sm:$0xff]
    %v273 = vld [vmem:[#allocation5 + $0x398] sm:$0xff]
    %v274 = vld [vmem:[#allocation5 + $0x3a0] sm:$0xff]
    %v275 = vld [vmem:[#allocation5 + $0x3a8] sm:$0xff]
    %v276 = vld [vmem:[#allocation5 + $0x3b0] sm:$0xff]
    %v277 = vld [vmem:[#allocation5 + $0x3b8] sm:$0xff]
    %v278 = vld [vmem:[#allocation5 + $0x3c0] sm:$0xff]
    %v279 = vld [vmem:[#allocation5 + $0x3c8] sm:$0xff]
    %v280 = vld [vmem:[#allocation5 + $0x3d0] sm:$0xff]
    %v281 = vld [vmem:[#allocation5 + $0x3d8] sm:$0xff]
    %v282 = vld [vmem:[#allocation5 + $0x3e0] sm:$0xff]
    %v283 = vld [vmem:[#allocation5 + $0x3e8] sm:$0xff]
    %v284 = vld [vmem:[#allocation5 + $0x3f0] sm:$0xff]
    %v285 = vld [vmem:[#allocation5 + $0x3f8] sm:$0xff]
    %v286 = vld [vmem:[#allocation5 + $0x400] sm:$0xff]
    %v287 = vld [vmem:[#allocation5 + $0x408] sm:$0xff]
    %v288 = vld [vmem:[#allocation5 + $0x410] sm:$0xff]
    %v289 = vld [vmem:[#allocation5 + $0x418] sm:$0xff]
    %v290 = vld [vmem:[#allocation5 + $0x420] sm:$0xff]
    %v291 = vld [vmem:[#allocation5 + $0x428] sm:$0xff]
    %v292 = vld [vmem:[#allocation5 + $0x430] sm:$0xff]
    %v293 = vld [vmem:[#allocation5 + $0x438] sm:$0xff]
    %v294 = vld [vmem:[#allocation5 + $0x440] sm:$0xff]
    %v295 = vld [vmem:[#allocation5 + $0x448] sm:$0xff]
    %v296 = vld [vmem:[#allocation5 + $0x450] sm:$0xff]
    %v297 = vld [vmem:[#allocation5 + $0x458] sm:$0xff]
    %v298 = vld [vmem:[#allocation5 + $0x460] sm:$0xff]
    %v299 = vld [vmem:[#allocation5 + $0x468] sm:$0xff]
    %v300 = vld [vmem:[#allocation5 + $0x470] sm:$0xff]
    %v301 = vld [vmem:[#allocation5 + $0x478] sm:$0xff]
    %v302 = vld [vmem:[#allocation5 + $0x480] sm:$0xff]
    %v303 = vld [vmem:[#allocation5 + $0x488] sm:$0xff]
    %v304 = vld [vmem:[#allocation5 + $0x490] sm:$0xff]
    %v305 = vld [vmem:[#allocation5 + $0x498] sm:$0xff]
    %v306 = vld [vmem:[#allocation5 + $0x4a0] sm:$0xff]
    %v307 = vld [vmem:[#allocation5 + $0x4a8] sm:$0xff]
    %v308 = vld [vmem:[#allocation5 + $0x4b0] sm:$0xff]
    %v309 = vld [vmem:[#allocation5 + $0x4b8] sm:$0xff]
    %v310 = vld [vmem:[#allocation5 + $0x4c0] sm:$0xff]
    %v311 = vld [vmem:[#allocation5 + $0x4c8] sm:$0xff]
    %v312 = vld [vmem:[#allocation5 + $0x4d0] sm:$0xff]
    %v313 = vld [vmem:[#allocation5 + $0x4d8] sm:$0xff]
    %v314 = vld [vmem:[#allocation5 + $0x4e0] sm:$0xff]
    %v315 = vld [vmem:[#allocation5 + $0x4e8] sm:$0xff]
    %v316 = vld [vmem:[#allocation5 + $0x4f0] sm:$0xff]
    %v317 = vld [vmem:[#allocation5 + $0x4f8] sm:$0xff]
    %v318 = vld [vmem:[#allocation5 + $0x500] sm:$0xff]
    %v319 = vld [vmem:[#allocation5 + $0x508] sm:$0xff]
    %v320 = vld [vmem:[#allocation5 + $0x510] sm:$0xff]
    %v321 = vld [vmem:[#allocation5 + $0x518] sm:$0xff]
    %v322 = vld [vmem:[#allocation5 + $0x520] sm:$0xff]
    %v323 = vld [vmem:[#allocation5 + $0x528] sm:$0xff]
    %v324 = vld [vmem:[#allocation5 + $0x530] sm:$0xff]
    %v325 = vld [vmem:[#allocation5 + $0x538] sm:$0xff]
    %v326 = vld [vmem:[#allocation5 + $0x540] sm:$0xff]
    %v327 = vld [vmem:[#allocation5 + $0x548] sm:$0xff]
    %v328 = vld [vmem:[#allocation5 + $0x550] sm:$0xff]
    %v329 = vld [vmem:[#allocation5 + $0x558] sm:$0xff]
    %v330 = vld [vmem:[#allocation5 + $0x560] sm:$0xff]
    %v331 = vld [vmem:[#allocation5 + $0x568] sm:$0xff]
    %v332 = vld [vmem:[#allocation5 + $0x570] sm:$0xff]
    %v333 = vld [vmem:[#allocation5 + $0x578] sm:$0xff]
    %v334 = vld [vmem:[#allocation5 + $0x580] sm:$0xff]
    %v335 = vld [vmem:[#allocation5 + $0x588] sm:$0xff]
    %v336 = vld [vmem:[#allocation5 + $0x590] sm:$0xff]
    %v337 = vld [vmem:[#allocation5 + $0x598] sm:$0xff]
    %v338 = vld [vmem:[#allocation5 + $0x5a0] sm:$0xff]
    %v339 = vld [vmem:[#allocation5 + $0x5a8] sm:$0xff]
    %v340 = vld [vmem:[#allocation5 + $0x5b0] sm:$0xff]
    %v341 = vld [vmem:[#allocation5 + $0x5b8] sm:$0xff]
    %v342 = vld [vmem:[#allocation5 + $0x5c0] sm:$0xff]
    %v343 = vld [vmem:[#allocation5 + $0x5c8] sm:$0xff]
    %v344 = vld [vmem:[#allocation5 + $0x5d0] sm:$0xff]
    %v345 = vld [vmem:[#allocation5 + $0x5d8] sm:$0xff]
    %v346 = vld [vmem:[#allocation5 + $0x5e0] sm:$0xff]
    %v347 = vld [vmem:[#allocation5 + $0x5e8] sm:$0xff]
    %v348 = vld [vmem:[#allocation5 + $0x5f0] sm:$0xff]
    %v349 = vld [vmem:[#allocation5 + $0x5f8] sm:$0xff]
    %v350 = vld [vmem:[#allocation5 + $0x600] sm:$0xff]
    %v351 = vld [vmem:[#allocation5 + $0x608] sm:$0xff]
    %v352 = vld [vmem:[#allocation5 + $0x610] sm:$0xff]
    %v353 = vld [vmem:[#allocation5 + $0x618] sm:$0xff]
    %v354 = vld [vmem:[#allocation5 + $0x620] sm:$0xff]
    %v355 = vld [vmem:[#allocation5 + $0x628] sm:$0xff]
    %v356 = vld [vmem:[#allocation5 + $0x630] sm:$0xff]
    %v357 = vld [vmem:[#allocation5 + $0x638] sm:$0xff]
    %v358 = vld [vmem:[#allocation5 + $0x640] sm:$0xff]
    %v359 = vld [vmem:[#allocation5 + $0x648] sm:$0xff]
    %v360 = vld [vmem:[#allocation5 + $0x650] sm:$0xff]
    %v361 = vld [vmem:[#allocation5 + $0x658] sm:$0xff]
    %v362 = vld [vmem:[#allocation5 + $0x660] sm:$0xff]
    %v363 = vld [vmem:[#allocation5 + $0x668] sm:$0xff]
    %v364 = vld [vmem:[#allocation5 + $0x670] sm:$0xff]
    %v365 = vld [vmem:[#allocation5 + $0x678] sm:$0xff]
    %v366 = vld [vmem:[#allocation5 + $0x680] sm:$0xff]
    %v367 = vld [vmem:[#allocation5 + $0x688] sm:$0xff]
    %v368 = vld [vmem:[#allocation5 + $0x690] sm:$0xff]
    %v369 = vld [vmem:[#allocation5 + $0x698] sm:$0xff]
    %v370 = vld [vmem:[#allocation5 + $0x6a0] sm:$0xff]
    %v371 = vld [vmem:[#allocation5 + $0x6a8] sm:$0xff]
    %v372 = vld [vmem:[#allocation5 + $0x6b0] sm:$0xff]
    %v373 = vld [vmem:[#allocation5 + $0x6b8] sm:$0xff]
    %v374 = vld [vmem:[#allocation5 + $0x6c0] sm:$0xff]
    %v375 = vld [vmem:[#allocation5 + $0x6c8] sm:$0xff]
    %v376 = vld [vmem:[#allocation5 + $0x6d0] sm:$0xff]
    %v377 = vld [vmem:[#allocation5 + $0x6d8] sm:$0xff]
    %v378 = vld [vmem:[#allocation5 + $0x6e0] sm:$0xff]
    %v379 = vld [vmem:[#allocation5 + $0x6e8] sm:$0xff]
    %v380 = vld [vmem:[#allocation5 + $0x6f0] sm:$0xff]
    %v381 = vld [vmem:[#allocation5 + $0x6f8] sm:$0xff]
    %v382 = vld [vmem:[#allocation5 + $0x700] sm:$0xff]
    %v383 = vld [vmem:[#allocation5 + $0x708] sm:$0xff]
    %v384 = vld [vmem:[#allocation5 + $0x710] sm:$0xff]
    %v385 = vld [vmem:[#allocation5 + $0x718] sm:$0xff]
    %v386 = vld [vmem:[#allocation5 + $0x720] sm:$0xff]
    %v387 = vld [vmem:[#allocation5 + $0x728] sm:$0xff]
    %v388 = vld [vmem:[#allocation5 + $0x730] sm:$0xff]
    %v389 = vld [vmem:[#allocation5 + $0x738] sm:$0xff]
    %v390 = vld [vmem:[#allocation5 + $0x740] sm:$0xff]
    %v391 = vld [vmem:[#allocation5 + $0x748] sm:$0xff]
    %v392 = vld [vmem:[#allocation5 + $0x750] sm:$0xff]
    %v393 = vld [vmem:[#allocation5 + $0x758] sm:$0xff]
    %v394 = vld [vmem:[#allocation5 + $0x760] sm:$0xff]
    %v395 = vld [vmem:[#allocation5 + $0x768] sm:$0xff]
    %v396 = vld [vmem:[#allocation5 + $0x770] sm:$0xff]
    %v397 = vld [vmem:[#allocation5 + $0x778] sm:$0xff]
    %v398 = vld [vmem:[#allocation5 + $0x780] sm:$0xff]
    %v399 = vld [vmem:[#allocation5 + $0x788] sm:$0xff]
    %v400 = vld [vmem:[#allocation5 + $0x790] sm:$0xff]
    %v401 = vld [vmem:[#allocation5 + $0x798] sm:$0xff]
    %v402 = vld [vmem:[#allocation5 + $0x7a0] sm:$0xff]
    %v403 = vld [vmem:[#allocation5 + $0x7a8] sm:$0xff]
    %v404 = vld [vmem:[#allocation5 + $0x7b0] sm:$0xff]
    %v405 = vld [vmem:[#allocation5 + $0x7b8] sm:$0xff]
    %v406 = vld [vmem:[#allocation5 + $0x7c0] sm:$0xff]
    %v407 = vld [vmem:[#allocation5 + $0x7c8] sm:$0xff]
    %v408 = vld [vmem:[#allocation5 + $0x7d0] sm:$0xff]
    %v409 = vld [vmem:[#allocation5 + $0x7d8] sm:$0xff]
    %v410 = vld [vmem:[#allocation5 + $0x7e0] sm:$0xff]
    %v411 = vld [vmem:[#allocation5 + $0x7e8] sm:$0xff]
    %v412 = vld [vmem:[#allocation5 + $0x7f0] sm:$0xff]
    %v413 = vld [vmem:[#allocation5 + $0x7f8] sm:$0xff]
    %v414 = vld [vmem:[#allocation5 + $0x800] sm:$0xff]
    %v415 = vld [vmem:[#allocation5 + $0x808] sm:$0xff]
    %v416 = vld [vmem:[#allocation5 + $0x810] sm:$0xff]
    %v417 = vld [vmem:[#allocation5 + $0x818] sm:$0xff]
    %v418 = vld [vmem:[#allocation5 + $0x820] sm:$0xff]
    %v419 = vld [vmem:[#allocation5 + $0x828] sm:$0xff]
    %v420 = vld [vmem:[#allocation5 + $0x830] sm:$0xff]
    %v421 = vld [vmem:[#allocation5 + $0x838] sm:$0xff]
    %v422 = vld [vmem:[#allocation5 + $0x840] sm:$0xff]
    %v423 = vld [vmem:[#allocation5 + $0x848] sm:$0xff]
    %v424 = vld [vmem:[#allocation5 + $0x850] sm:$0xff]
    %v425 = vld [vmem:[#allocation5 + $0x858] sm:$0xff]
    %v426 = vld [vmem:[#allocation5 + $0x860] sm:$0xff]
    %v427 = vld [vmem:[#allocation5 + $0x868] sm:$0xff]
    %v428 = vld [vmem:[#allocation5 + $0x870] sm:$0xff]
    %v429 = vld [vmem:[#allocation5 + $0x878] sm:$0xff]
    %v430 = vld [vmem:[#allocation5 + $0x880] sm:$0xff]
    %v431 = vld [vmem:[#allocation5 + $0x888] sm:$0xff]
    %v432 = vld [vmem:[#allocation5 + $0x890] sm:$0xff]
    %v433 = vld [vmem:[#allocation5 + $0x898] sm:$0xff]
    %v434 = vld [vmem:[#allocation5 + $0x8a0] sm:$0xff]
    %v435 = vld [vmem:[#allocation5 + $0x8a8] sm:$0xff]
    %v436 = vld [vmem:[#allocation5 + $0x8b0] sm:$0xff]
    %v437 = vld [vmem:[#allocation5 + $0x8b8] sm:$0xff]
    %v438 = vld [vmem:[#allocation5 + $0x8c0] sm:$0xff]
    %v439 = vld [vmem:[#allocation5 + $0x8c8] sm:$0xff]
    %v440 = vld [vmem:[#allocation5 + $0x8d0] sm:$0xff]
    %v441 = vld [vmem:[#allocation5 + $0x8d8] sm:$0xff]
    %v442 = vld [vmem:[#allocation5 + $0x8e0] sm:$0xff]
    %v443 = vld [vmem:[#allocation5 + $0x8e8] sm:$0xff]
    %v444 = vld [vmem:[#allocation5 + $0x8f0] sm:$0xff]
    %v445 = vld [vmem:[#allocation5 + $0x8f8] sm:$0xff]
    %v446 = vld [vmem:[#allocation5 + $0x900] sm:$0xff]
    %v447 = vld [vmem:[#allocation5 + $0x908] sm:$0xff]
    %v448 = vld [vmem:[#allocation5 + $0x910] sm:$0xff]
    %v449 = vld [vmem:[#allocation5 + $0x918] sm:$0xff]
    %v450 = vld [vmem:[#allocation5 + $0x920] sm:$0xff]
    %v451 = vld [vmem:[#allocation5 + $0x928] sm:$0xff]
    %v452 = vld [vmem:[#allocation5 + $0x930] sm:$0xff]
    %v453 = vld [vmem:[#allocation5 + $0x938] sm:$0xff]
    %v454 = vld [vmem:[#allocation5 + $0x940] sm:$0xff]
    %v455 = vld [vmem:[#allocation5 + $0x948] sm:$0xff]
    %v456 = vld [vmem:[#allocation5 + $0x950] sm:$0xff]
    %v457 = vld [vmem:[#allocation5 + $0x958] sm:$0xff]
    %v458 = vld [vmem:[#allocation5 + $0x960] sm:$0xff]
    %v459 = vld [vmem:[#allocation5 + $0x968] sm:$0xff]
    %v460 = vld [vmem:[#allocation5 + $0x970] sm:$0xff]
    %v461 = vld [vmem:[#allocation5 + $0x978] sm:$0xff]
    %v462 = vld [vmem:[#allocation5 + $0x980] sm:$0xff]
    %v463 = vld [vmem:[#allocation5 + $0x988] sm:$0xff]
    %v464 = vld [vmem:[#allocation5 + $0x990] sm:$0xff]
    %v465 = vld [vmem:[#allocation5 + $0x998] sm:$0xff]
    %v466 = vld [vmem:[#allocation5 + $0x9a0] sm:$0xff]
    %v467 = vld [vmem:[#allocation5 + $0x9a8] sm:$0xff]
    %v468 = vld [vmem:[#allocation5 + $0x9b0] sm:$0xff]
    %v469 = vld [vmem:[#allocation5 + $0x9b8] sm:$0xff]
    %v470 = vld [vmem:[#allocation5 + $0x9c0] sm:$0xff]
    %v471 = vld [vmem:[#allocation5 + $0x9c8] sm:$0xff]
    %v472 = vld [vmem:[#allocation5 + $0x9d0] sm:$0xff]
    %v473 = vld [vmem:[#allocation5 + $0x9d8] sm:$0xff]
    %v474 = vld [vmem:[#allocation5 + $0x9e0] sm:$0xff]
    %v475 = vld [vmem:[#allocation5 + $0x9e8] sm:$0xff]
    %v476 = vld [vmem:[#allocation5 + $0x9f0] sm:$0xff]
    %v477 = vld [vmem:[#allocation5 + $0x9f8] sm:$0xff]
    %v478 = vld [vmem:[#allocation5 + $0xa00] sm:$0xff]
    %v479 = vld [vmem:[#allocation5 + $0xa08] sm:$0xff]
    %v480 = vld [vmem:[#allocation5 + $0xa10] sm:$0xff]
    %v481 = vld [vmem:[#allocation5 + $0xa18] sm:$0xff]
    %v482 = vld [vmem:[#allocation5 + $0xa20] sm:$0xff]
    %v483 = vld [vmem:[#allocation5 + $0xa28] sm:$0xff]
    %v484 = vld [vmem:[#allocation5 + $0xa30] sm:$0xff]
    %v485 = vld [vmem:[#allocation5 + $0xa38] sm:$0xff]
    %v486 = vld [vmem:[#allocation5 + $0xa40] sm:$0xff]
    %v487 = vld [vmem:[#allocation5 + $0xa48] sm:$0xff]
    %v488 = vld [vmem:[#allocation5 + $0xa50] sm:$0xff]
    %v489 = vld [vmem:[#allocation5 + $0xa58] sm:$0xff]
    %v490 = vld [vmem:[#allocation5 + $0xa60] sm:$0xff]
    %v491 = vld [vmem:[#allocation5 + $0xa68] sm:$0xff]
    %v492 = vld [vmem:[#allocation5 + $0xa70] sm:$0xff]
    %v493 = vld [vmem:[#allocation5 + $0xa78] sm:$0xff]
    %v494 = vld [vmem:[#allocation5 + $0xa80] sm:$0xff]
    %v495 = vld [vmem:[#allocation5 + $0xa88] sm:$0xff]
    %v496 = vld [vmem:[#allocation5 + $0xa90] sm:$0xff]
    %v497 = vld [vmem:[#allocation5 + $0xa98] sm:$0xff]
    %v498 = vld [vmem:[#allocation5 + $0xaa0] sm:$0xff]
    %v499 = vld [vmem:[#allocation5 + $0xaa8] sm:$0xff]
    %v500 = vld [vmem:[#allocation5 + $0xab0] sm:$0xff]
    %v501 = vld [vmem:[#allocation5 + $0xab8] sm:$0xff]
    %v502 = vld [vmem:[#allocation5 + $0xac0] sm:$0xff]
    %v503 = vld [vmem:[#allocation5 + $0xac8] sm:$0xff]
    %v504 = vld [vmem:[#allocation5 + $0xad0] sm:$0xff]
    %v505 = vld [vmem:[#allocation5 + $0xad8] sm:$0xff]
    %v506 = vld [vmem:[#allocation5 + $0xae0] sm:$0xff]
    %v507 = vld [vmem:[#allocation5 + $0xae8] sm:$0xff]
    %v508 = vld [vmem:[#allocation5 + $0xaf0] sm:$0xff]
    %v509 = vld [vmem:[#allocation5 + $0xaf8] sm:$0xff]
    %v510 = vld [vmem:[#allocation5 + $0xb00] sm:$0xff]
    %v511 = vld [vmem:[#allocation5 + $0xb08] sm:$0xff]
    %v512 = vld [vmem:[#allocation5 + $0xb10] sm:$0xff]
    %v513 = vld [vmem:[#allocation5 + $0xb18] sm:$0xff]
    %v514 = vld [vmem:[#allocation5 + $0xb20] sm:$0xff]
    %v515 = vld [vmem:[#allocation5 + $0xb28] sm:$0xff]
    %v516 = vld [vmem:[#allocation5 + $0xb30] sm:$0xff]
    %v517 = vld [vmem:[#allocation5 + $0xb38] sm:$0xff]
    %v518 = vld [vmem:[#allocation5 + $0xb40] sm:$0xff]
    %v519 = vld [vmem:[#allocation5 + $0xb48] sm:$0xff]
    %v520 = vld [vmem:[#allocation5 + $0xb50] sm:$0xff]
    %v521 = vld [vmem:[#allocation5 + $0xb58] sm:$0xff]
    %v522 = vld [vmem:[#allocation5 + $0xb60] sm:$0xff]
    %v523 = vld [vmem:[#allocation5 + $0xb68] sm:$0xff]
    %v524 = vld [vmem:[#allocation5 + $0xb70] sm:$0xff]
    %v525 = vld [vmem:[#allocation5 + $0xb78] sm:$0xff]
    %v526 = vld [vmem:[#allocation5 + $0xb80] sm:$0xff]
    %v527 = vld [vmem:[#allocation5 + $0xb88] sm:$0xff]
    %v528 = vld [vmem:[#allocation5 + $0xb90] sm:$0xff]
    %v529 = vld [vmem:[#allocation5 + $0xb98] sm:$0xff]
    %v530 = vld [vmem:[#allocation5 + $0xba0] sm:$0xff]
    %v531 = vld [vmem:[#allocation5 + $0xba8] sm:$0xff]
    %v532 = vld [vmem:[#allocation5 + $0xbb0] sm:$0xff]
    %v533 = vld [vmem:[#allocation5 + $0xbb8] sm:$0xff]
    %v534 = vld [vmem:[#allocation5 + $0xbc0] sm:$0xff]
    %v535 = vld [vmem:[#allocation5 + $0xbc8] sm:$0xff]
    %v536 = vld [vmem:[#allocation5 + $0xbd0] sm:$0xff]
    %v537 = vld [vmem:[#allocation5 + $0xbd8] sm:$0xff]
    %v538 = vld [vmem:[#allocation5 + $0xbe0] sm:$0xff]
    %v539 = vld [vmem:[#allocation5 + $0xbe8] sm:$0xff]
    %v540 = vld [vmem:[#allocation5 + $0xbf0] sm:$0xff]
    %v541 = vld [vmem:[#allocation5 + $0xbf8] sm:$0xff]
    %v542 = vld [vmem:[#allocation5 + $0xc00] sm:$0xff]
    %v543 = vld [vmem:[#allocation5 + $0xc08] sm:$0xff]
    %v544 = vld [vmem:[#allocation5 + $0xc10] sm:$0xff]
    %v545 = vld [vmem:[#allocation5 + $0xc18] sm:$0xff]
    %v546 = vld [vmem:[#allocation5 + $0xc20] sm:$0xff]
    %v547 = vld [vmem:[#allocation5 + $0xc28] sm:$0xff]
    %v548 = vld [vmem:[#allocation5 + $0xc30] sm:$0xff]
    %v549 = vld [vmem:[#allocation5 + $0xc38] sm:$0xff]
    %v550 = vld [vmem:[#allocation5 + $0xc40] sm:$0xff]
    %v551 = vld [vmem:[#allocation5 + $0xc48] sm:$0xff]
    %v552 = vld [vmem:[#allocation5 + $0xc50] sm:$0xff]
    %v553 = vld [vmem:[#allocation5 + $0xc58] sm:$0xff]
    %v554 = vld [vmem:[#allocation5 + $0xc60] sm:$0xff]
    %v555 = vld [vmem:[#allocation5 + $0xc68] sm:$0xff]
    %v556 = vld [vmem:[#allocation5 + $0xc70] sm:$0xff]
    %v557 = vld [vmem:[#allocation5 + $0xc78] sm:$0xff]
    %v558 = vld [vmem:[#allocation5 + $0xc80] sm:$0xff]
    %v559 = vld [vmem:[#allocation5 + $0xc88] sm:$0xff]
    %v560 = vld [vmem:[#allocation5 + $0xc90] sm:$0xff]
    %v561 = vld [vmem:[#allocation5 + $0xc98] sm:$0xff]
    %v562 = vld [vmem:[#allocation5 + $0xca0] sm:$0xff]
    %v563 = vld [vmem:[#allocation5 + $0xca8] sm:$0xff]
    %v564 = vld [vmem:[#allocation5 + $0xcb0] sm:$0xff]
    %v565 = vld [vmem:[#allocation5 + $0xcb8] sm:$0xff]
    %v566 = vld [vmem:[#allocation5 + $0xcc0] sm:$0xff]
    %v567 = vld [vmem:[#allocation5 + $0xcc8] sm:$0xff]
    %v568 = vld [vmem:[#allocation5 + $0xcd0] sm:$0xff]
    %v569 = vld [vmem:[#allocation5 + $0xcd8] sm:$0xff]
    %v570 = vld [vmem:[#allocation5 + $0xce0] sm:$0xff]
    %v571 = vld [vmem:[#allocation5 + $0xce8] sm:$0xff]
    %v572 = vld [vmem:[#allocation5 + $0xcf0] sm:$0xff]
    %v573 = vld [vmem:[#allocation5 + $0xcf8] sm:$0xff]
    %v574 = vld [vmem:[#allocation5 + $0xd00] sm:$0xff]
    %v575 = vld [vmem:[#allocation5 + $0xd08] sm:$0xff]
    %v576 = vld [vmem:[#allocation5 + $0xd10] sm:$0xff]
    %v577 = vld [vmem:[#allocation5 + $0xd18] sm:$0xff]
    %v578 = vld [vmem:[#allocation5 + $0xd20] sm:$0xff]
    %v579 = vld [vmem:[#allocation5 + $0xd28] sm:$0xff]
    %v580 = vld [vmem:[#allocation5 + $0xd30] sm:$0xff]
    %v581 = vld [vmem:[#allocation5 + $0xd38] sm:$0xff]
    %v582 = vld [vmem:[#allocation5 + $0xd40] sm:$0xff]
    %v583 = vld [vmem:[#allocation5 + $0xd48] sm:$0xff]
    %v584 = vld [vmem:[#allocation5 + $0xd50] sm:$0xff]
    %v585 = vld [vmem:[#allocation5 + $0xd58] sm:$0xff]
    %v586 = vld [vmem:[#allocation5 + $0xd60] sm:$0xff]
    %v587 = vld [vmem:[#allocation5 + $0xd68] sm:$0xff]
    %v588 = vld [vmem:[#allocation5 + $0xd70] sm:$0xff]
    %v589 = vld [vmem:[#allocation5 + $0xd78] sm:$0xff]
    %v590 = vld [vmem:[#allocation5 + $0xd80] sm:$0xff]
    %v591 = vld [vmem:[#allocation5 + $0xd88] sm:$0xff]
    %v592 = vld [vmem:[#allocation5 + $0xd90] sm:$0xff]
    %v593 = vld [vmem:[#allocation5 + $0xd98] sm:$0xff]
    %v594 = vld [vmem:[#allocation5 + $0xda0] sm:$0xff]
    %v595 = vld [vmem:[#allocation5 + $0xda8] sm:$0xff]
    %v596 = vld [vmem:[#allocation5 + $0xdb0] sm:$0xff]
    %v597 = vld [vmem:[#allocation5 + $0xdb8] sm:$0xff]
    %v598 = vld [vmem:[#allocation5 + $0xdc0] sm:$0xff]
    %v599 = vld [vmem:[#allocation5 + $0xdc8] sm:$0xff]
    %v600 = vld [vmem:[#allocation5 + $0xdd0] sm:$0xff]
    %v601 = vld [vmem:[#allocation5 + $0xdd8] sm:$0xff]
    %v602 = vld [vmem:[#allocation5 + $0xde0] sm:$0xff]
    %v603 = vld [vmem:[#allocation5 + $0xde8] sm:$0xff]
    %v604 = vld [vmem:[#allocation5 + $0xdf0] sm:$0xff]
    %v605 = vld [vmem:[#allocation5 + $0xdf8] sm:$0xff]
    %v606 = vld [vmem:[#allocation5 + $0xe00] sm:$0xff]
    %v607 = vld [vmem:[#allocation5 + $0xe08] sm:$0xff]
    %v608 = vld [vmem:[#allocation5 + $0xe10] sm:$0xff]
    %v609 = vld [vmem:[#allocation5 + $0xe18] sm:$0xff]
    %v610 = vld [vmem:[#allocation5 + $0xe20] sm:$0xff]
    %v611 = vld [vmem:[#allocation5 + $0xe28] sm:$0xff]
    %v612 = vld [vmem:[#allocation5 + $0xe30] sm:$0xff]
    %v613 = vld [vmem:[#allocation5 + $0xe38] sm:$0xff]
    %v614 = vld [vmem:[#allocation5 + $0xe40] sm:$0xff]
    %v615 = vld [vmem:[#allocation5 + $0xe48] sm:$0xff]
    %v616 = vld [vmem:[#allocation5 + $0xe50] sm:$0xff]
    %v617 = vld [vmem:[#allocation5 + $0xe58] sm:$0xff]
    %v618 = vld [vmem:[#allocation5 + $0xe60] sm:$0xff]
    %v619 = vld [vmem:[#allocation5 + $0xe68] sm:$0xff]
    %v620 = vld [vmem:[#allocation5 + $0xe70] sm:$0xff]
    %v621 = vld [vmem:[#allocation5 + $0xe78] sm:$0xff]
    %v622 = vld [vmem:[#allocation5 + $0xe80] sm:$0xff]
    %v623 = vld [vmem:[#allocation5 + $0xe88] sm:$0xff]
    %v624 = vld [vmem:[#allocation5 + $0xe90] sm:$0xff]
    %v625 = vld [vmem:[#allocation5 + $0xe98] sm:$0xff]
    %v626 = vld [vmem:[#allocation5 + $0xea0] sm:$0xff]
    %v627 = vld [vmem:[#allocation5 + $0xea8] sm:$0xff]
    %v628 = vld [vmem:[#allocation5 + $0xeb0] sm:$0xff]
    %v629 = vld [vmem:[#allocation5 + $0xeb8] sm:$0xff]
    %v630 = vld [vmem:[#allocation5 + $0xec0] sm:$0xff]
    %v631 = vld [vmem:[#allocation5 + $0xec8] sm:$0xff]
    %v632 = vld [vmem:[#allocation5 + $0xed0] sm:$0xff]
    %v633 = vld [vmem:[#allocation5 + $0xed8] sm:$0xff]
    %v634 = vld [vmem:[#allocation5 + $0xee0] sm:$0xff]
    %v635 = vld [vmem:[#allocation5 + $0xee8] sm:$0xff]
    %v636 = vld [vmem:[#allocation5 + $0xef0] sm:$0xff]
    %v637 = vld [vmem:[#allocation5 + $0xef8] sm:$0xff]
    %v638 = vld [vmem:[#allocation5 + $0xf00] sm:$0xff]
    %v639 = vld [vmem:[#allocation5 + $0xf08] sm:$0xff]
    %v640 = vld [vmem:[#allocation5 + $0xf10] sm:$0xff]
    %v641 = vld [vmem:[#allocation5 + $0xf18] sm:$0xff]
    %v642 = vld [vmem:[#allocation5 + $0xf20] sm:$0xff]
    %v643 = vld [vmem:[#allocation5 + $0xf28] sm:$0xff]
    %v644 = vld [vmem:[#allocation5 + $0xf30] sm:$0xff]
    %v645 = vld [vmem:[#allocation5 + $0xf38] sm:$0xff]
    %v646 = vld [vmem:[#allocation5 + $0xf40] sm:$0xff]
    %v647 = vld [vmem:[#allocation5 + $0xf48] sm:$0xff]
    %v648 = vld [vmem:[#allocation5 + $0xf50] sm:$0xff]
    %v649 = vld [vmem:[#allocation5 + $0xf58] sm:$0xff]
    %v650 = vld [vmem:[#allocation5 + $0xf60] sm:$0xff]
    %v651 = vld [vmem:[#allocation5 + $0xf68] sm:$0xff]
    %v652 = vld [vmem:[#allocation5 + $0xf70] sm:$0xff]
    %v653 = vld [vmem:[#allocation5 + $0xf78] sm:$0xff]
    %v654 = vld [vmem:[#allocation5 + $0xf80] sm:$0xff]
    %v655 = vld [vmem:[#allocation5 + $0xf88] sm:$0xff]
    %v656 = vld [vmem:[#allocation5 + $0xf90] sm:$0xff]
    %v657 = vld [vmem:[#allocation5 + $0xf98] sm:$0xff]
    %v658 = vld [vmem:[#allocation5 + $0xfa0] sm:$0xff]
    %v659 = vld [vmem:[#allocation5 + $0xfa8] sm:$0xff]
    %v660 = vld [vmem:[#allocation5 + $0xfb0] sm:$0xff]
    %v661 = vld [vmem:[#allocation5 + $0xfb8] sm:$0xff]
    %v662 = vld [vmem:[#allocation5 + $0xfc0] sm:$0xff]
    %v663 = vld [vmem:[#allocation5 + $0xfc8] sm:$0xff]
    %v664 = vld [vmem:[#allocation5 + $0xfd0] sm:$0xff]
    %v665 = vld [vmem:[#allocation5 + $0xfd8] sm:$0xff]
    %v666 = vld [vmem:[#allocation5 + $0xfe0] sm:$0xff]
    %v667 = vld [vmem:[#allocation5 + $0xfe8] sm:$0xff]
    %v668 = vld [vmem:[#allocation5 + $0xff0] sm:$0xff]
    %v669 = vld [vmem:[#allocation5 + $0xff8] sm:$0xff]
    %v670 = vld [vmem:[#allocation5 + $0x1000] sm:$0xff]
    %v671 = vld [vmem:[#allocation5 + $0x1008] sm:$0xff]
    %v672 = vld [vmem:[#allocation5 + $0x1010] sm:$0xff]
    %v673 = vld [vmem:[#allocation5 + $0x1018] sm:$0xff]
    %v674 = vld [vmem:[#allocation5 + $0x1020] sm:$0xff]
    %v675 = vld [vmem:[#allocation5 + $0x1028] sm:$0xff]
    %v676 = vld [vmem:[#allocation5 + $0x1030] sm:$0xff]
    %v677 = vld [vmem:[#allocation5 + $0x1038] sm:$0xff]
    %v678 = vld [vmem:[#allocation5 + $0x1040] sm:$0xff]
    %v679 = vld [vmem:[#allocation5 + $0x1048] sm:$0xff]
    %v680 = vld [vmem:[#allocation5 + $0x1050] sm:$0xff]
    %v681 = vld [vmem:[#allocation5 + $0x1058] sm:$0xff]
    %v682 = vld [vmem:[#allocation5 + $0x1060] sm:$0xff]
    %v683 = vld [vmem:[#allocation5 + $0x1068] sm:$0xff]
    %v684 = vld [vmem:[#allocation5 + $0x1070] sm:$0xff]
    %v685 = vld [vmem:[#allocation5 + $0x1078] sm:$0xff]
    %v686 = vld [vmem:[#allocation5 + $0x1080] sm:$0xff]
    %v687 = vld [vmem:[#allocation5 + $0x1088] sm:$0xff]
    %v688 = vld [vmem:[#allocation5 + $0x1090] sm:$0xff]
    %v689 = vld [vmem:[#allocation5 + $0x1098] sm:$0xff]
    %v690 = vld [vmem:[#allocation5 + $0x10a0] sm:$0xff]
    %v691 = vld [vmem:[#allocation5 + $0x10a8] sm:$0xff]
    %v692 = vld [vmem:[#allocation5 + $0x10b0] sm:$0xff]
    %v693 = vld [vmem:[#allocation5 + $0x10b8] sm:$0xff]
    %v694 = vld [vmem:[#allocation5 + $0x10c0] sm:$0xff]
    %v695 = vld [vmem:[#allocation5 + $0x10c8] sm:$0xff]
    %v696 = vld [vmem:[#allocation5 + $0x10d0] sm:$0xff]
    %v697 = vld [vmem:[#allocation5 + $0x10d8] sm:$0xff]
    %v698 = vld [vmem:[#allocation5 + $0x10e0] sm:$0xff]
    %v699 = vld [vmem:[#allocation5 + $0x10e8] sm:$0xff]
    %v700 = vld [vmem:[#allocation5 + $0x10f0] sm:$0xff]
    %v701 = vld [vmem:[#allocation5 + $0x10f8] sm:$0xff]
    %v702 = vld [vmem:[#allocation5 + $0x1100] sm:$0xff]
    %v703 = vld [vmem:[#allocation5 + $0x1108] sm:$0xff]
    %v704 = vld [vmem:[#allocation5 + $0x1110] sm:$0xff]
    %v705 = vld [vmem:[#allocation5 + $0x1118] sm:$0xff]
    %v706 = vld [vmem:[#allocation5 + $0x1120] sm:$0xff]
    %v707 = vld [vmem:[#allocation5 + $0x1128] sm:$0xff]
    %v708 = vld [vmem:[#allocation5 + $0x1130] sm:$0xff]
    %v709 = vld [vmem:[#allocation5 + $0x1138] sm:$0xff]
    %v710 = vld [vmem:[#allocation5 + $0x1140] sm:$0xff]
    %v711 = vld [vmem:[#allocation5 + $0x1148] sm:$0xff]
    %v712 = vld [vmem:[#allocation5 + $0x1150] sm:$0xff]
    %v713 = vld [vmem:[#allocation5 + $0x1158] sm:$0xff]
    %v714 = vld [vmem:[#allocation5 + $0x1160] sm:$0xff]
    %v715 = vld [vmem:[#allocation5 + $0x1168] sm:$0xff]
    %v716 = vld [vmem:[#allocation5 + $0x1170] sm:$0xff]
    %v717 = vld [vmem:[#allocation5 + $0x1178] sm:$0xff]
    %v718 = vld [vmem:[#allocation5 + $0x1180] sm:$0xff]
    %v719 = vld [vmem:[#allocation5 + $0x1188] sm:$0xff]
    %v720 = vld [vmem:[#allocation5 + $0x1190] sm:$0xff]
    %v721 = vld [vmem:[#allocation5 + $0x1198] sm:$0xff]
    %v722 = vld [vmem:[#allocation5 + $0x11a0] sm:$0xff]
    %v723 = vld [vmem:[#allocation5 + $0x11a8] sm:$0xff]
    %v724 = vld [vmem:[#allocation5 + $0x11b0] sm:$0xff]
    %v725 = vld [vmem:[#allocation5 + $0x11b8] sm:$0xff]
    %v726 = vld [vmem:[#allocation5 + $0x11c0] sm:$0xff]
    %v727 = vld [vmem:[#allocation5 + $0x11c8] sm:$0xff]
    %v728 = vld [vmem:[#allocation5 + $0x11d0] sm:$0xff]
    %v729 = vld [vmem:[#allocation5 + $0x11d8] sm:$0xff]
    %v730 = vld [vmem:[#allocation5 + $0x11e0] sm:$0xff]
    %v731 = vld [vmem:[#allocation5 + $0x11e8] sm:$0xff]
    %v732 = vld [vmem:[#allocation5 + $0x11f0] sm:$0xff]
    %v733 = vld [vmem:[#allocation5 + $0x11f8] sm:$0xff]
    %v734 = vld [vmem:[#allocation5 + $0x1200] sm:$0xff]
    %v735 = vld [vmem:[#allocation5 + $0x1208] sm:$0xff]
    %v736 = vld [vmem:[#allocation5 + $0x1210] sm:$0xff]
    %v737 = vld [vmem:[#allocation5 + $0x1218] sm:$0xff]
    %v738 = vld [vmem:[#allocation5 + $0x1220] sm:$0xff]
    %v739 = vld [vmem:[#allocation5 + $0x1228] sm:$0xff]
    %v740 = vld [vmem:[#allocation5 + $0x1230] sm:$0xff]
    %v741 = vld [vmem:[#allocation5 + $0x1238] sm:$0xff]
    %v742 = vld [vmem:[#allocation5 + $0x1240] sm:$0xff]
    %v743 = vld [vmem:[#allocation5 + $0x1248] sm:$0xff]
    %v744 = vld [vmem:[#allocation5 + $0x1250] sm:$0xff]
    %v745 = vld [vmem:[#allocation5 + $0x1258] sm:$0xff]
    %v746 = vld [vmem:[#allocation5 + $0x1260] sm:$0xff]
    %v747 = vld [vmem:[#allocation5 + $0x1268] sm:$0xff]
    %v748 = vld [vmem:[#allocation5 + $0x1270] sm:$0xff]
    %v749 = vld [vmem:[#allocation5 + $0x1278] sm:$0xff]
    %v750 = vld [vmem:[#allocation5 + $0x1280] sm:$0xff]
    %v751 = vld [vmem:[#allocation5 + $0x1288] sm:$0xff]
    %v752 = vld [vmem:[#allocation5 + $0x1290] sm:$0xff]
    %v753 = vld [vmem:[#allocation5 + $0x1298] sm:$0xff]
    %v754 = vld [vmem:[#allocation5 + $0x12a0] sm:$0xff]
    %v755 = vld [vmem:[#allocation5 + $0x12a8] sm:$0xff]
    %v756 = vld [vmem:[#allocation5 + $0x12b0] sm:$0xff]
    %v757 = vld [vmem:[#allocation5 + $0x12b8] sm:$0xff]
    %v758 = vld [vmem:[#allocation5 + $0x12c0] sm:$0xff]
    %v759 = vld [vmem:[#allocation5 + $0x12c8] sm:$0xff]
    %v760 = vld [vmem:[#allocation5 + $0x12d0] sm:$0xff]
    %v761 = vld [vmem:[#allocation5 + $0x12d8] sm:$0xff]
    %v762 = vld [vmem:[#allocation5 + $0x12e0] sm:$0xff]
    %v763 = vld [vmem:[#allocation5 + $0x12e8] sm:$0xff]
    %v764 = vld [vmem:[#allocation5 + $0x12f0] sm:$0xff]
    %v765 = vld [vmem:[#allocation5 + $0x12f8] sm:$0xff]
    %v766 = vld [vmem:[#allocation5 + $0x1300] sm:$0xff]
    %v767 = vld [vmem:[#allocation5 + $0x1308] sm:$0xff]
    %v768 = vld [vmem:[#allocation5 + $0x1310] sm:$0xff]
    %v769 = vld [vmem:[#allocation5 + $0x1318] sm:$0xff]
    %v770 = vld [vmem:[#allocation5 + $0x1320] sm:$0xff]
    %v771 = vld [vmem:[#allocation5 + $0x1328] sm:$0xff]
    %v772 = vld [vmem:[#allocation5 + $0x1330] sm:$0xff]
    %v773 = vld [vmem:[#allocation5 + $0x1338] sm:$0xff]
    %v774 = vld [vmem:[#allocation5 + $0x1340] sm:$0xff]
    %v775 = vld [vmem:[#allocation5 + $0x1348] sm:$0xff]
    %v776 = vld [vmem:[#allocation5 + $0x1350] sm:$0xff]
    %v777 = vld [vmem:[#allocation5 + $0x1358] sm:$0xff]
    %v778 = vld [vmem:[#allocation5 + $0x1360] sm:$0xff]
    %v779 = vld [vmem:[#allocation5 + $0x1368] sm:$0xff]
    %v780 = vld [vmem:[#allocation5 + $0x1370] sm:$0xff]
    %v781 = vld [vmem:[#allocation5 + $0x1378] sm:$0xff]
    %v782 = vld [vmem:[#allocation5 + $0x1380] sm:$0xff]
    %v783 = vld [vmem:[#allocation5 + $0x1388] sm:$0xff]
    %v784 = vld [vmem:[#allocation5 + $0x1390] sm:$0xff]
    %v785 = vld [vmem:[#allocation5 + $0x1398] sm:$0xff]
    %v786 = vld [vmem:[#allocation5 + $0x13a0] sm:$0xff]
    %v787 = vld [vmem:[#allocation5 + $0x13a8] sm:$0xff]
    %v788 = vld [vmem:[#allocation5 + $0x13b0] sm:$0xff]
    %v789 = vld [vmem:[#allocation5 + $0x13b8] sm:$0xff]
    %v790 = vld [vmem:[#allocation5 + $0x13c0] sm:$0xff]
    %v791 = vld [vmem:[#allocation5 + $0x13c8] sm:$0xff]
    %v792 = vld [vmem:[#allocation5 + $0x13d0] sm:$0xff]
    %v793 = vld [vmem:[#allocation5 + $0x13d8] sm:$0xff]
    %v794 = vld [vmem:[#allocation5 + $0x13e0] sm:$0xff]
    %v795 = vld [vmem:[#allocation5 + $0x13e8] sm:$0xff]
    %v796 = vld [vmem:[#allocation5 + $0x13f0] sm:$0xff]
    %v797 = vld [vmem:[#allocation5 + $0x13f8] sm:$0xff]
    %v798 = vld [vmem:[#allocation5 + $0x1400] sm:$0xff]
    %v799 = vld [vmem:[#allocation5 + $0x1408] sm:$0xff]
    %v800 = vld [vmem:[#allocation5 + $0x1410] sm:$0xff]
    %v801 = vld [vmem:[#allocation5 + $0x1418] sm:$0xff]
    %v802 = vld [vmem:[#allocation5 + $0x1420] sm:$0xff]
    %v803 = vld [vmem:[#allocation5 + $0x1428] sm:$0xff]
    %v804 = vld [vmem:[#allocation5 + $0x1430] sm:$0xff]
    %v805 = vld [vmem:[#allocation5 + $0x1438] sm:$0xff]
    %v806 = vld [vmem:[#allocation5 + $0x1440] sm:$0xff]
    %v807 = vld [vmem:[#allocation5 + $0x1448] sm:$0xff]
    %v808 = vld [vmem:[#allocation5 + $0x1450] sm:$0xff]
    %v809 = vld [vmem:[#allocation5 + $0x1458] sm:$0xff]
    %v810 = vld [vmem:[#allocation5 + $0x1460] sm:$0xff]
    %v811 = vld [vmem:[#allocation5 + $0x1468] sm:$0xff]
    %v812 = vld [vmem:[#allocation5 + $0x1470] sm:$0xff]
    %v813 = vld [vmem:[#allocation5 + $0x1478] sm:$0xff]
    %v814 = vld [vmem:[#allocation5 + $0x1480] sm:$0xff]
    %v815 = vld [vmem:[#allocation5 + $0x1488] sm:$0xff]
    %v816 = vld [vmem:[#allocation5 + $0x1490] sm:$0xff]
    %v817 = vld [vmem:[#allocation5 + $0x1498] sm:$0xff]
    %v818 = vld [vmem:[#allocation5 + $0x14a0] sm:$0xff]
    %v819 = vld [vmem:[#allocation5 + $0x14a8] sm:$0xff]
    %v820 = vld [vmem:[#allocation5 + $0x14b0] sm:$0xff]
    %v821 = vld [vmem:[#allocation5 + $0x14b8] sm:$0xff]
    %v822 = vld [vmem:[#allocation5 + $0x14c0] sm:$0xff]
    %v823 = vld [vmem:[#allocation5 + $0x14c8] sm:$0xff]
    %v824 = vld [vmem:[#allocation5 + $0x14d0] sm:$0xff]
    %v825 = vld [vmem:[#allocation5 + $0x14d8] sm:$0xff]
    %v826 = vld [vmem:[#allocation5 + $0x14e0] sm:$0xff]
    %v827 = vld [vmem:[#allocation5 + $0x14e8] sm:$0xff]
    %v828 = vld [vmem:[#allocation5 + $0x14f0] sm:$0xff]
    %v829 = vld [vmem:[#allocation5 + $0x14f8] sm:$0xff]
    %v830 = vld [vmem:[#allocation5 + $0x1500] sm:$0xff]
    %v831 = vld [vmem:[#allocation5 + $0x1508] sm:$0xff]
    %v832 = vld [vmem:[#allocation5 + $0x1510] sm:$0xff]
    %v833 = vld [vmem:[#allocation5 + $0x1518] sm:$0xff]
    %v834 = vld [vmem:[#allocation5 + $0x1520] sm:$0xff]
    %v835 = vld [vmem:[#allocation5 + $0x1528] sm:$0xff]
    %v836 = vld [vmem:[#allocation5 + $0x1530] sm:$0xff]
    %v837 = vld [vmem:[#allocation5 + $0x1538] sm:$0xff]
    %v838 = vld [vmem:[#allocation5 + $0x1540] sm:$0xff]
    %v839 = vld [vmem:[#allocation5 + $0x1548] sm:$0xff]
    %v840 = vld [vmem:[#allocation5 + $0x1550] sm:$0xff]
    %v841 = vld [vmem:[#allocation5 + $0x1558] sm:$0xff]
    %v842 = vld [vmem:[#allocation5 + $0x1560] sm:$0xff]
    %v843 = vld [vmem:[#allocation5 + $0x1568] sm:$0xff]
    %v844 = vld [vmem:[#allocation5 + $0x1570] sm:$0xff]
    %v845 = vld [vmem:[#allocation5 + $0x1578] sm:$0xff]
    %v846 = vld [vmem:[#allocation5 + $0x1580] sm:$0xff]
    %v847 = vld [vmem:[#allocation5 + $0x1588] sm:$0xff]
    %v848 = vld [vmem:[#allocation5 + $0x1590] sm:$0xff]
    %v849 = vld [vmem:[#allocation5 + $0x1598] sm:$0xff]
    %v850 = vld [vmem:[#allocation5 + $0x15a0] sm:$0xff]
    %v851 = vld [vmem:[#allocation5 + $0x15a8] sm:$0xff]
    %v852 = vld [vmem:[#allocation5 + $0x15b0] sm:$0xff]
    %v853 = vld [vmem:[#allocation5 + $0x15b8] sm:$0xff]
    %v854 = vld [vmem:[#allocation5 + $0x15c0] sm:$0xff]
    %v855 = vld [vmem:[#allocation5 + $0x15c8] sm:$0xff]
    %v856 = vld [vmem:[#allocation5 + $0x15d0] sm:$0xff]
    %v857 = vld [vmem:[#allocation5 + $0x15d8] sm:$0xff]
    %v858 = vld [vmem:[#allocation5 + $0x15e0] sm:$0xff]
    %v859 = vld [vmem:[#allocation5 + $0x15e8] sm:$0xff]
    %v860 = vld [vmem:[#allocation5 + $0x15f0] sm:$0xff]
    %v861 = vld [vmem:[#allocation5 + $0x15f8] sm:$0xff]
    %v862 = vld [vmem:[#allocation5 + $0x1600] sm:$0xff]
    %v863 = vld [vmem:[#allocation5 + $0x1608] sm:$0xff]
    %v864 = vld [vmem:[#allocation5 + $0x1610] sm:$0xff]
    %v865 = vld [vmem:[#allocation5 + $0x1618] sm:$0xff]
    %v866 = vld [vmem:[#allocation5 + $0x1620] sm:$0xff]
    %v867 = vld [vmem:[#allocation5 + $0x1628] sm:$0xff]
    %v868 = vld [vmem:[#allocation5 + $0x1630] sm:$0xff]
    %v869 = vld [vmem:[#allocation5 + $0x1638] sm:$0xff]
    %v870 = vld [vmem:[#allocation5 + $0x1640] sm:$0xff]
    %v871 = vld [vmem:[#allocation5 + $0x1648] sm:$0xff]
    %v872 = vld [vmem:[#allocation5 + $0x1650] sm:$0xff]
    %v873 = vld [vmem:[#allocation5 + $0x1658] sm:$0xff]
    %v874 = vld [vmem:[#allocation5 + $0x1660] sm:$0xff]
    %v875 = vld [vmem:[#allocation5 + $0x1668] sm:$0xff]
    %v876 = vld [vmem:[#allocation5 + $0x1670] sm:$0xff]
    %v877 = vld [vmem:[#allocation5 + $0x1678] sm:$0xff]
    %v878 = vld [vmem:[#allocation5 + $0x1680] sm:$0xff]
    %v879 = vld [vmem:[#allocation5 + $0x1688] sm:$0xff]
    %v880 = vld [vmem:[#allocation5 + $0x1690] sm:$0xff]
    %v881 = vld [vmem:[#allocation5 + $0x1698] sm:$0xff]
    %v882 = vld [vmem:[#allocation5 + $0x16a0] sm:$0xff]
    %v883 = vld [vmem:[#allocation5 + $0x16a8] sm:$0xff]
    %v884 = vld [vmem:[#allocation5 + $0x16b0] sm:$0xff]
    %v885 = vld [vmem:[#allocation5 + $0x16b8] sm:$0xff]
    %v886 = vld [vmem:[#allocation5 + $0x16c0] sm:$0xff]
    %v887 = vld [vmem:[#allocation5 + $0x16c8] sm:$0xff]
    %v888 = vld [vmem:[#allocation5 + $0x16d0] sm:$0xff]
    %v889 = vld [vmem:[#allocation5 + $0x16d8] sm:$0xff]
    %v890 = vld [vmem:[#allocation5 + $0x16e0] sm:$0xff]
    %v891 = vld [vmem:[#allocation5 + $0x16e8] sm:$0xff]
    %v892 = vld [vmem:[#allocation5 + $0x16f0] sm:$0xff]
    %v893 = vld [vmem:[#allocation5 + $0x16f8] sm:$0xff]
    %v894 = vld [vmem:[#allocation5 + $0x1700] sm:$0xff]
    %v895 = vld [vmem:[#allocation5 + $0x1708] sm:$0xff]
    %v896 = vld [vmem:[#allocation5 + $0x1710] sm:$0xff]
    %v897 = vld [vmem:[#allocation5 + $0x1718] sm:$0xff]
    %v898 = vld [vmem:[#allocation5 + $0x1720] sm:$0xff]
    %v899 = vld [vmem:[#allocation5 + $0x1728] sm:$0xff]
    %v900 = vld [vmem:[#allocation5 + $0x1730] sm:$0xff]
    %v901 = vld [vmem:[#allocation5 + $0x1738] sm:$0xff]
    %v902 = vld [vmem:[#allocation5 + $0x1740] sm:$0xff]
    %v903 = vld [vmem:[#allocation5 + $0x1748] sm:$0xff]
    %v904 = vld [vmem:[#allocation5 + $0x1750] sm:$0xff]
    %v905 = vld [vmem:[#allocation5 + $0x1758] sm:$0xff]
    %v906 = vld [vmem:[#allocation5 + $0x1760] sm:$0xff]
    %v907 = vld [vmem:[#allocation5 + $0x1768] sm:$0xff]
    %v908 = vld [vmem:[#allocation5 + $0x1770] sm:$0xff]
    %v909 = vld [vmem:[#allocation5 + $0x1778] sm:$0xff]
    %v910 = vld [vmem:[#allocation5 + $0x1780] sm:$0xff]
    %v911 = vld [vmem:[#allocation5 + $0x1788] sm:$0xff]
    %v912 = vld [vmem:[#allocation5 + $0x1790] sm:$0xff]
    %v913 = vld [vmem:[#allocation5 + $0x1798] sm:$0xff]
    %v914 = vld [vmem:[#allocation5 + $0x17a0] sm:$0xff]
    %v915 = vld [vmem:[#allocation5 + $0x17a8] sm:$0xff]
    %v916 = vld [vmem:[#allocation5 + $0x17b0] sm:$0xff]
    %v917 = vld [vmem:[#allocation5 + $0x17b8] sm:$0xff]
    %v918 = vld [vmem:[#allocation5 + $0x17c0] sm:$0xff]
    %v919 = vld [vmem:[#allocation5 + $0x17c8] sm:$0xff]
    %v920 = vld [vmem:[#allocation5 + $0x17d0] sm:$0xff]
    %v921 = vld [vmem:[#allocation5 + $0x17d8] sm:$0xff]
    %v922 = vld [vmem:[#allocation5 + $0x17e0] sm:$0xff]
    %v923 = vld [vmem:[#allocation5 + $0x17e8] sm:$0xff]
    %v924 = vld [vmem:[#allocation5 + $0x17f0] sm:$0xff]
    %v925 = vld [vmem:[#allocation5 + $0x17f8] sm:$0xff]
    %v926 = vld [vmem:[#allocation5 + $0x1800] sm:$0xff]
    %v927 = vld [vmem:[#allocation5 + $0x1808] sm:$0xff]
    %v928 = vld [vmem:[#allocation5 + $0x1810] sm:$0xff]
    %v929 = vld [vmem:[#allocation5 + $0x1818] sm:$0xff]
    %v930 = vld [vmem:[#allocation5 + $0x1820] sm:$0xff]
    %v931 = vld [vmem:[#allocation5 + $0x1828] sm:$0xff]
    %v932 = vld [vmem:[#allocation5 + $0x1830] sm:$0xff]
    %v933 = vld [vmem:[#allocation5 + $0x1838] sm:$0xff]
    %v934 = vld [vmem:[#allocation5 + $0x1840] sm:$0xff]
    %v935 = vld [vmem:[#allocation5 + $0x1848] sm:$0xff]
    %v936 = vld [vmem:[#allocation5 + $0x1850] sm:$0xff]
    %v937 = vld [vmem:[#allocation5 + $0x1858] sm:$0xff]
    %v938 = vld [vmem:[#allocation5 + $0x1860] sm:$0xff]
    %v939 = vld [vmem:[#allocation5 + $0x1868] sm:$0xff]
    %v940 = vld [vmem:[#allocation5 + $0x1870] sm:$0xff]
    %v941 = vld [vmem:[#allocation5 + $0x1878] sm:$0xff]
    %v942 = vld [vmem:[#allocation5 + $0x1880] sm:$0xff]
    %v943 = vld [vmem:[#allocation5 + $0x1888] sm:$0xff]
    %v944 = vld [vmem:[#allocation5 + $0x1890] sm:$0xff]
    %v945 = vld [vmem:[#allocation5 + $0x1898] sm:$0xff]
    %v946 = vld [vmem:[#allocation5 + $0x18a0] sm:$0xff]
    %v947 = vld [vmem:[#allocation5 + $0x18a8] sm:$0xff]
    %v948 = vld [vmem:[#allocation5 + $0x18b0] sm:$0xff]
    %v949 = vld [vmem:[#allocation5 + $0x18b8] sm:$0xff]
    %v950 = vld [vmem:[#allocation5 + $0x18c0] sm:$0xff]
    %v951 = vld [vmem:[#allocation5 + $0x18c8] sm:$0xff]
    %v952 = vld [vmem:[#allocation5 + $0x18d0] sm:$0xff]
    %v953 = vld [vmem:[#allocation5 + $0x18d8] sm:$0xff]
    %v954 = vld [vmem:[#allocation5 + $0x18e0] sm:$0xff]
    %v955 = vld [vmem:[#allocation5 + $0x18e8] sm:$0xff]
    %v956 = vld [vmem:[#allocation5 + $0x18f0] sm:$0xff]
    %v957 = vld [vmem:[#allocation5 + $0x18f8] sm:$0xff]
    %v958 = vld [vmem:[#allocation5 + $0x1900] sm:$0xff]
    %v959 = vld [vmem:[#allocation5 + $0x1908] sm:$0xff]
    %v960 = vld [vmem:[#allocation5 + $0x1910] sm:$0xff]
    %v961 = vld [vmem:[#allocation5 + $0x1918] sm:$0xff]
    %v962 = vld [vmem:[#allocation5 + $0x1920] sm:$0xff]
    %v963 = vld [vmem:[#allocation5 + $0x1928] sm:$0xff]
    %v964 = vld [vmem:[#allocation5 + $0x1930] sm:$0xff]
    %v965 = vld [vmem:[#allocation5 + $0x1938] sm:$0xff]
    %v966 = vld [vmem:[#allocation5 + $0x1940] sm:$0xff]
    %v967 = vld [vmem:[#allocation5 + $0x1948] sm:$0xff]
    %v968 = vld [vmem:[#allocation5 + $0x1950] sm:$0xff]
    %v969 = vld [vmem:[#allocation5 + $0x1958] sm:$0xff]
    %v970 = vld [vmem:[#allocation5 + $0x1960] sm:$0xff]
    %v971 = vld [vmem:[#allocation5 + $0x1968] sm:$0xff]
    %v972 = vld [vmem:[#allocation5 + $0x1970] sm:$0xff]
    %v973 = vld [vmem:[#allocation5 + $0x1978] sm:$0xff]
    %v974 = vld [vmem:[#allocation5 + $0x1980] sm:$0xff]
    %v975 = vld [vmem:[#allocation5 + $0x1988] sm:$0xff]
    %v976 = vld [vmem:[#allocation5 + $0x1990] sm:$0xff]
    %v977 = vld [vmem:[#allocation5 + $0x1998] sm:$0xff]
    %v978 = vld [vmem:[#allocation5 + $0x19a0] sm:$0xff]
    %v979 = vld [vmem:[#allocation5 + $0x19a8] sm:$0xff]
    %v980 = vld [vmem:[#allocation5 + $0x19b0] sm:$0xff]
    %v981 = vld [vmem:[#allocation5 + $0x19b8] sm:$0xff]
    %v982 = vld [vmem:[#allocation5 + $0x19c0] sm:$0xff]
    %v983 = vld [vmem:[#allocation5 + $0x19c8] sm:$0xff]
    %v984 = vld [vmem:[#allocation5 + $0x19d0] sm:$0xff]
    %v985 = vld [vmem:[#allocation5 + $0x19d8] sm:$0xff]
    %v986 = vld [vmem:[#allocation5 + $0x19e0] sm:$0xff]
    %v987 = vld [vmem:[#allocation5 + $0x19e8] sm:$0xff]
    %v988 = vld [vmem:[#allocation5 + $0x19f0] sm:$0xff]
    %v989 = vld [vmem:[#allocation5 + $0x19f8] sm:$0xff]
    %v990 = vld [vmem:[#allocation5 + $0x1a00] sm:$0xff]
    %v991 = vld [vmem:[#allocation5 + $0x1a08] sm:$0xff]
    %v992 = vld [vmem:[#allocation5 + $0x1a10] sm:$0xff]
    %v993 = vld [vmem:[#allocation5 + $0x1a18] sm:$0xff]
    %v994 = vld [vmem:[#allocation5 + $0x1a20] sm:$0xff]
    %v995 = vld [vmem:[#allocation5 + $0x1a28] sm:$0xff]
    %v996 = vld [vmem:[#allocation5 + $0x1a30] sm:$0xff]
    %v997 = vld [vmem:[#allocation5 + $0x1a38] sm:$0xff]
    %v998 = vld [vmem:[#allocation5 + $0x1a40] sm:$0xff]
    %v999 = vld [vmem:[#allocation5 + $0x1a48] sm:$0xff]
    %v1000 = vld [vmem:[#allocation5 + $0x1a50] sm:$0xff]
    %v1001 = vld [vmem:[#allocation5 + $0x1a58] sm:$0xff]
    %v1002 = vld [vmem:[#allocation5 + $0x1a60] sm:$0xff]
    %v1003 = vld [vmem:[#allocation5 + $0x1a68] sm:$0xff]
    %v1004 = vld [vmem:[#allocation5 + $0x1a70] sm:$0xff]
    %v1005 = vld [vmem:[#allocation5 + $0x1a78] sm:$0xff]
    %v1006 = vld [vmem:[#allocation5 + $0x1a80] sm:$0xff]
    %v1007 = vld [vmem:[#allocation5 + $0x1a88] sm:$0xff]
    %v1008 = vld [vmem:[#allocation5 + $0x1a90] sm:$0xff]
    %v1009 = vld [vmem:[#allocation5 + $0x1a98] sm:$0xff]
    %v1010 = vld [vmem:[#allocation5 + $0x1aa0] sm:$0xff]
    %v1011 = vld [vmem:[#allocation5 + $0x1aa8] sm:$0xff]
    %v1012 = vld [vmem:[#allocation5 + $0x1ab0] sm:$0xff]
    %v1013 = vld [vmem:[#allocation5 + $0x1ab8] sm:$0xff]
    %v1014 = vld [vmem:[#allocation5 + $0x1ac0] sm:$0xff]
    %v1015 = vld [vmem:[#allocation5 + $0x1ac8] sm:$0xff]
    %v1016 = vld [vmem:[#allocation5 + $0x1ad0] sm:$0xff]
    %v1017 = vld [vmem:[#allocation5 + $0x1ad8] sm:$0xff]
    %v1018 = vld [vmem:[#allocation5 + $0x1ae0] sm:$0xff]
    %v1019 = vld [vmem:[#allocation5 + $0x1ae8] sm:$0xff]
    %v1020 = vld [vmem:[#allocation5 + $0x1af0] sm:$0xff]
    %v1021 = vld [vmem:[#allocation5 + $0x1af8] sm:$0xff]
    %v1022 = vld [vmem:[#allocation5 + $0x1b00] sm:$0xff]
    %v1023 = vld [vmem:[#allocation5 + $0x1b08] sm:$0xff]
    %v1024 = vld [vmem:[#allocation5 + $0x1b10] sm:$0xff]
    %v1025 = vld [vmem:[#allocation5 + $0x1b18] sm:$0xff]
    %v1026 = vld [vmem:[#allocation5 + $0x1b20] sm:$0xff]
    %v1027 = vld [vmem:[#allocation5 + $0x1b28] sm:$0xff]
    %v1028 = vld [vmem:[#allocation5 + $0x1b30] sm:$0xff]
    %v1029 = vld [vmem:[#allocation5 + $0x1b38] sm:$0xff]
    %v1030 = vld [vmem:[#allocation5 + $0x1b40] sm:$0xff]
    %v1031 = vld [vmem:[#allocation5 + $0x1b48] sm:$0xff]
    %v1032 = vld [vmem:[#allocation5 + $0x1b50] sm:$0xff]
    %v1033 = vld [vmem:[#allocation5 + $0x1b58] sm:$0xff]
    %v1034 = vld [vmem:[#allocation5 + $0x1b60] sm:$0xff]
    %v1035 = vld [vmem:[#allocation5 + $0x1b68] sm:$0xff]
    %v1036 = vld [vmem:[#allocation5 + $0x1b70] sm:$0xff]
    %v1037 = vld [vmem:[#allocation5 + $0x1b78] sm:$0xff]
    %v1038 = vld [vmem:[#allocation5 + $0x1b80] sm:$0xff]
    %v1039 = vld [vmem:[#allocation5 + $0x1b88] sm:$0xff]
    %v1040 = vld [vmem:[#allocation5 + $0x1b90] sm:$0xff]
    %v1041 = vld [vmem:[#allocation5 + $0x1b98] sm:$0xff]
    %v1042 = vld [vmem:[#allocation5 + $0x1ba0] sm:$0xff]
    %v1043 = vld [vmem:[#allocation5 + $0x1ba8] sm:$0xff]
    %v1044 = vld [vmem:[#allocation5 + $0x1bb0] sm:$0xff]
    %v1045 = vld [vmem:[#allocation5 + $0x1bb8] sm:$0xff]
    %v1046 = vld [vmem:[#allocation5 + $0x1bc0] sm:$0xff]
    %v1047 = vld [vmem:[#allocation5 + $0x1bc8] sm:$0xff]
    %v1048 = vld [vmem:[#allocation5 + $0x1bd0] sm:$0xff]
    %v1049 = vld [vmem:[#allocation5 + $0x1bd8] sm:$0xff]
    %v1050 = vld [vmem:[#allocation5 + $0x1be0] sm:$0xff]
    %v1051 = vld [vmem:[#allocation5 + $0x1be8] sm:$0xff]
    %v1052 = vld [vmem:[#allocation5 + $0x1bf0] sm:$0xff]
    %v1053 = vld [vmem:[#allocation5 + $0x1bf8] sm:$0xff]
    %v1054 = vld [vmem:[#allocation5 + $0x1c00] sm:$0xff]
    %v1055 = vld [vmem:[#allocation5 + $0x1c08] sm:$0xff]
    %v1056 = vld [vmem:[#allocation5 + $0x1c10] sm:$0xff]
    %v1057 = vld [vmem:[#allocation5 + $0x1c18] sm:$0xff]
    %v1058 = vld [vmem:[#allocation5 + $0x1c20] sm:$0xff]
    %v1059 = vld [vmem:[#allocation5 + $0x1c28] sm:$0xff]
    %v1060 = vld [vmem:[#allocation5 + $0x1c30] sm:$0xff]
    %v1061 = vld [vmem:[#allocation5 + $0x1c38] sm:$0xff]
    %v1062 = vld [vmem:[#allocation5 + $0x1c40] sm:$0xff]
    %v1063 = vld [vmem:[#allocation5 + $0x1c48] sm:$0xff]
    %v1064 = vld [vmem:[#allocation5 + $0x1c50] sm:$0xff]
    %v1065 = vld [vmem:[#allocation5 + $0x1c58] sm:$0xff]
    %v1066 = vld [vmem:[#allocation5 + $0x1c60] sm:$0xff]
    %v1067 = vld [vmem:[#allocation5 + $0x1c68] sm:$0xff]
    %v1068 = vld [vmem:[#allocation5 + $0x1c70] sm:$0xff]
    %v1069 = vld [vmem:[#allocation5 + $0x1c78] sm:$0xff]
    %v1070 = vld [vmem:[#allocation5 + $0x1c80] sm:$0xff]
    %v1071 = vld [vmem:[#allocation5 + $0x1c88] sm:$0xff]
    %v1072 = vld [vmem:[#allocation5 + $0x1c90] sm:$0xff]
    %v1073 = vld [vmem:[#allocation5 + $0x1c98] sm:$0xff]
    %v1074 = vld [vmem:[#allocation5 + $0x1ca0] sm:$0xff]
    %v1075 = vld [vmem:[#allocation5 + $0x1ca8] sm:$0xff]
    %v1076 = vld [vmem:[#allocation5 + $0x1cb0] sm:$0xff]
    %v1077 = vld [vmem:[#allocation5 + $0x1cb8] sm:$0xff]
    %v1078 = vld [vmem:[#allocation5 + $0x1cc0] sm:$0xff]
    %v1079 = vld [vmem:[#allocation5 + $0x1cc8] sm:$0xff]
    %v1080 = vld [vmem:[#allocation5 + $0x1cd0] sm:$0xff]
    %v1081 = vld [vmem:[#allocation5 + $0x1cd8] sm:$0xff]
    %v1082 = vld [vmem:[#allocation5 + $0x1ce0] sm:$0xff]
    %v1083 = vld [vmem:[#allocation5 + $0x1ce8] sm:$0xff]
    %v1084 = vld [vmem:[#allocation5 + $0x1cf0] sm:$0xff]
    %v1085 = vld [vmem:[#allocation5 + $0x1cf8] sm:$0xff]
    %v1086 = vld [vmem:[#allocation5 + $0x1d00] sm:$0xff]
    %v1087 = vld [vmem:[#allocation5 + $0x1d08] sm:$0xff]
    %v1088 = vld [vmem:[#allocation5 + $0x1d10] sm:$0xff]
    %v1089 = vld [vmem:[#allocation5 + $0x1d18] sm:$0xff]
    %v1090 = vld [vmem:[#allocation5 + $0x1d20] sm:$0xff]
    %v1091 = vld [vmem:[#allocation5 + $0x1d28] sm:$0xff]
    %v1092 = vld [vmem:[#allocation5 + $0x1d30] sm:$0xff]
    %v1093 = vld [vmem:[#allocation5 + $0x1d38] sm:$0xff]
    %v1094 = vld [vmem:[#allocation5 + $0x1d40] sm:$0xff]
    %v1095 = vld [vmem:[#allocation5 + $0x1d48] sm:$0xff]
    %v1096 = vld [vmem:[#allocation5 + $0x1d50] sm:$0xff]
    %v1097 = vld [vmem:[#allocation5 + $0x1d58] sm:$0xff]
    %v1098 = vld [vmem:[#allocation5 + $0x1d60] sm:$0xff]
    %v1099 = vld [vmem:[#allocation5 + $0x1d68] sm:$0xff]
    %v1100 = vld [vmem:[#allocation5 + $0x1d70] sm:$0xff]
    %v1101 = vld [vmem:[#allocation5 + $0x1d78] sm:$0xff]
    %v1102 = vld [vmem:[#allocation5 + $0x1d80] sm:$0xff]
    %v1103 = vld [vmem:[#allocation5 + $0x1d88] sm:$0xff]
    %v1104 = vld [vmem:[#allocation5 + $0x1d90] sm:$0xff]
    %v1105 = vld [vmem:[#allocation5 + $0x1d98] sm:$0xff]
    %v1106 = vld [vmem:[#allocation5 + $0x1da0] sm:$0xff]
    %v1107 = vld [vmem:[#allocation5 + $0x1da8] sm:$0xff]
    %v1108 = vld [vmem:[#allocation5 + $0x1db0] sm:$0xff]
    %v1109 = vld [vmem:[#allocation5 + $0x1db8] sm:$0xff]
    %v1110 = vld [vmem:[#allocation5 + $0x1dc0] sm:$0xff]
    %v1111 = vld [vmem:[#allocation5 + $0x1dc8] sm:$0xff]
    %v1112 = vld [vmem:[#allocation5 + $0x1dd0] sm:$0xff]
    %v1113 = vld [vmem:[#allocation5 + $0x1dd8] sm:$0xff]
    %v1114 = vld [vmem:[#allocation5 + $0x1de0] sm:$0xff]
    %v1115 = vld [vmem:[#allocation5 + $0x1de8] sm:$0xff]
    %v1116 = vld [vmem:[#allocation5 + $0x1df0] sm:$0xff]
    %v1117 = vld [vmem:[#allocation5 + $0x1df8] sm:$0xff]
    %v1118 = vld [vmem:[#allocation5 + $0x1e00] sm:$0xff]
    %v1119 = vld [vmem:[#allocation5 + $0x1e08] sm:$0xff]
    %v1120 = vld [vmem:[#allocation5 + $0x1e10] sm:$0xff]
    %v1121 = vld [vmem:[#allocation5 + $0x1e18] sm:$0xff]
    %v1122 = vld [vmem:[#allocation5 + $0x1e20] sm:$0xff]
    %v1123 = vld [vmem:[#allocation5 + $0x1e28] sm:$0xff]
    %v1124 = vld [vmem:[#allocation5 + $0x1e30] sm:$0xff]
    %v1125 = vld [vmem:[#allocation5 + $0x1e38] sm:$0xff]
    %v1126 = vld [vmem:[#allocation5 + $0x1e40] sm:$0xff]
    %v1127 = vld [vmem:[#allocation5 + $0x1e48] sm:$0xff]
    %v1128 = vld [vmem:[#allocation5 + $0x1e50] sm:$0xff]
    %v1129 = vld [vmem:[#allocation5 + $0x1e58] sm:$0xff]
    %v1130 = vld [vmem:[#allocation5 + $0x1e60] sm:$0xff]
    %v1131 = vld [vmem:[#allocation5 + $0x1e68] sm:$0xff]
    %v1132 = vld [vmem:[#allocation5 + $0x1e70] sm:$0xff]
    %v1133 = vld [vmem:[#allocation5 + $0x1e78] sm:$0xff]
    %v1134 = vld [vmem:[#allocation5 + $0x1e80] sm:$0xff]
    %v1135 = vld [vmem:[#allocation5 + $0x1e88] sm:$0xff]
    %v1136 = vld [vmem:[#allocation5 + $0x1e90] sm:$0xff]
    %v1137 = vld [vmem:[#allocation5 + $0x1e98] sm:$0xff]
    %v1138 = vld [vmem:[#allocation5 + $0x1ea0] sm:$0xff]
    %v1139 = vld [vmem:[#allocation5 + $0x1ea8] sm:$0xff]
    %v1140 = vld [vmem:[#allocation5 + $0x1eb0] sm:$0xff]
    %v1141 = vld [vmem:[#allocation5 + $0x1eb8] sm:$0xff]
    %v1142 = vld [vmem:[#allocation5 + $0x1ec0] sm:$0xff]
    %v1143 = vld [vmem:[#allocation5 + $0x1ec8] sm:$0xff]
    %v1144 = vld [vmem:[#allocation5 + $0x1ed0] sm:$0xff]
    %v1145 = vld [vmem:[#allocation5 + $0x1ed8] sm:$0xff]
    %v1146 = vld [vmem:[#allocation5 + $0x1ee0] sm:$0xff]
    %v1147 = vld [vmem:[#allocation5 + $0x1ee8] sm:$0xff]
    %v1148 = vld [vmem:[#allocation5 + $0x1ef0] sm:$0xff]
    %v1149 = vld [vmem:[#allocation5 + $0x1ef8] sm:$0xff]
    %v1150 = vld [vmem:[#allocation5 + $0x1f00] sm:$0xff]
    %v1151 = vld [vmem:[#allocation5 + $0x1f08] sm:$0xff]
    %v1152 = vld [vmem:[#allocation5 + $0x1f10] sm:$0xff]
    %v1153 = vld [vmem:[#allocation5 + $0x1f18] sm:$0xff]
    %v1154 = vld [vmem:[#allocation5 + $0x1f20] sm:$0xff]
    %v1155 = vld [vmem:[#allocation5 + $0x1f28] sm:$0xff]
    %v1156 = vld [vmem:[#allocation5 + $0x1f30] sm:$0xff]
    %v1157 = vld [vmem:[#allocation5 + $0x1f38] sm:$0xff]
    %v1158 = vld [vmem:[#allocation5 + $0x1f40] sm:$0xff]
    %v1159 = vld [vmem:[#allocation5 + $0x1f48] sm:$0xff]
    %v1160 = vld [vmem:[#allocation5 + $0x1f50] sm:$0xff]
    %v1161 = vld [vmem:[#allocation5 + $0x1f58] sm:$0xff]
    %v1162 = vld [vmem:[#allocation5 + $0x1f60] sm:$0xff]
    %v1163 = vld [vmem:[#allocation5 + $0x1f68] sm:$0xff]
    %v1164 = vld [vmem:[#allocation5 + $0x1f70] sm:$0xff]
    %v1165 = vld [vmem:[#allocation5 + $0x1f78] sm:$0xff]
    %v1166 = vld [vmem:[#allocation5 + $0x1f80] sm:$0xff]
    %v1167 = vld [vmem:[#allocation5 + $0x1f88] sm:$0xff]
    %v1168 = vld [vmem:[#allocation5 + $0x1f90] sm:$0xff]
    %v1169 = vld [vmem:[#allocation5 + $0x1f98] sm:$0xff]
    %v1170 = vld [vmem:[#allocation5 + $0x1fa0] sm:$0xff]
    %v1171 = vld [vmem:[#allocation5 + $0x1fa8] sm:$0xff]
    %v1172 = vld [vmem:[#allocation5 + $0x1fb0] sm:$0xff]
    %v1173 = vld [vmem:[#allocation5 + $0x1fb8] sm:$0xff]
    %v1174 = vld [vmem:[#allocation5 + $0x1fc0] sm:$0xff]
    %v1175 = vld [vmem:[#allocation5 + $0x1fc8] sm:$0xff]
    %v1176 = vld [vmem:[#allocation5 + $0x1fd0] sm:$0xff]
    %v1177 = vld [vmem:[#allocation5 + $0x1fd8] sm:$0xff]
    %v1178 = vld [vmem:[#allocation5 + $0x1fe0] sm:$0xff]
    %v1179 = vld [vmem:[#allocation5 + $0x1fe8] sm:$0xff]
    %v1180 = vld [vmem:[#allocation5 + $0x1ff0] sm:$0xff]
    %v1181 = vld [vmem:[#allocation5 + $0x1ff8] sm:$0xff]
    %v1182 = vld [vmem:[#allocation5 + $0x2000] sm:$0xff]
    %v1183 = vld [vmem:[#allocation5 + $0x2008] sm:$0xff]
    %v1184 = vld [vmem:[#allocation5 + $0x2010] sm:$0xff]
    %v1185 = vld [vmem:[#allocation5 + $0x2018] sm:$0xff]
    %v1186 = vld [vmem:[#allocation5 + $0x2020] sm:$0xff]
    %v1187 = vld [vmem:[#allocation5 + $0x2028] sm:$0xff]
    %v1188 = vld [vmem:[#allocation5 + $0x2030] sm:$0xff]
    %v1189 = vld [vmem:[#allocation5 + $0x2038] sm:$0xff]
    %v1190 = vld [vmem:[#allocation5 + $0x2040] sm:$0xff]
    %v1191 = vld [vmem:[#allocation5 + $0x2048] sm:$0xff]
    %v1192 = vld [vmem:[#allocation5 + $0x2050] sm:$0xff]
    %v1193 = vld [vmem:[#allocation5 + $0x2058] sm:$0xff]
    %v1194 = vld [vmem:[#allocation5 + $0x2060] sm:$0xff]
    %v1195 = vld [vmem:[#allocation5 + $0x2068] sm:$0xff]
    %v1196 = vld [vmem:[#allocation5 + $0x2070] sm:$0xff]
    %v1197 = vld [vmem:[#allocation5 + $0x2078] sm:$0xff]
    %v1198 = vld [vmem:[#allocation5 + $0x2080] sm:$0xff]
    %v1199 = vld [vmem:[#allocation5 + $0x2088] sm:$0xff]
    %v1200 = vld [vmem:[#allocation5 + $0x2090] sm:$0xff]
    %v1201 = vld [vmem:[#allocation5 + $0x2098] sm:$0xff]
    %v1202 = vld [vmem:[#allocation5 + $0x20a0] sm:$0xff]
    %v1203 = vld [vmem:[#allocation5 + $0x20a8] sm:$0xff]
    %v1204 = vld [vmem:[#allocation5 + $0x20b0] sm:$0xff]
    %v1205 = vld [vmem:[#allocation5 + $0x20b8] sm:$0xff]
    %v1206 = vld [vmem:[#allocation5 + $0x20c0] sm:$0xff]
    %v1207 = vld [vmem:[#allocation5 + $0x20c8] sm:$0xff]
    %v1208 = vld [vmem:[#allocation5 + $0x20d0] sm:$0xff]
    %v1209 = vld [vmem:[#allocation5 + $0x20d8] sm:$0xff]
    %v1210 = vld [vmem:[#allocation5 + $0x20e0] sm:$0xff]
    %v1211 = vld [vmem:[#allocation5 + $0x20e8] sm:$0xff]
    %v1212 = vld [vmem:[#allocation5 + $0x20f0] sm:$0xff]
    %v1213 = vld [vmem:[#allocation5 + $0x20f8] sm:$0xff]
    %v1214 = vld [vmem:[#allocation5 + $0x2100] sm:$0xff]
    %v1215 = vld [vmem:[#allocation5 + $0x2108] sm:$0xff]
    %v1216 = vld [vmem:[#allocation5 + $0x2110] sm:$0xff]
    %v1217 = vld [vmem:[#allocation5 + $0x2118] sm:$0xff]
    %v1218 = vld [vmem:[#allocation5 + $0x2120] sm:$0xff]
    %v1219 = vld [vmem:[#allocation5 + $0x2128] sm:$0xff]
    %v1220 = vld [vmem:[#allocation5 + $0x2130] sm:$0xff]
    %v1221 = vld [vmem:[#allocation5 + $0x2138] sm:$0xff]
    %v1222 = vld [vmem:[#allocation5 + $0x2140] sm:$0xff]
    %v1223 = vld [vmem:[#allocation5 + $0x2148] sm:$0xff]
    %v1224 = vld [vmem:[#allocation5 + $0x2150] sm:$0xff]
    %v1225 = vld [vmem:[#allocation5 + $0x2158] sm:$0xff]
    %v1226 = vld [vmem:[#allocation5 + $0x2160] sm:$0xff]
    %v1227 = vld [vmem:[#allocation5 + $0x2168] sm:$0xff]
    %v1228 = vld [vmem:[#allocation5 + $0x2170] sm:$0xff]
    %v1229 = vld [vmem:[#allocation5 + $0x2178] sm:$0xff]
    %v1230 = vld [vmem:[#allocation5 + $0x2180] sm:$0xff]
    %v1231 = vld [vmem:[#allocation5 + $0x2188] sm:$0xff]
    %v1232 = vld [vmem:[#allocation5 + $0x2190] sm:$0xff]
    %v1233 = vld [vmem:[#allocation5 + $0x2198] sm:$0xff]
    %v1234 = vld [vmem:[#allocation5 + $0x21a0] sm:$0xff]
    %v1235 = vld [vmem:[#allocation5 + $0x21a8] sm:$0xff]
    %v1236 = vld [vmem:[#allocation5 + $0x21b0] sm:$0xff]
    %v1237 = vld [vmem:[#allocation5 + $0x21b8] sm:$0xff]
    %v1238 = vld [vmem:[#allocation5 + $0x21c0] sm:$0xff]
    %v1239 = vld [vmem:[#allocation5 + $0x21c8] sm:$0xff]
    %v1240 = vld [vmem:[#allocation5 + $0x21d0] sm:$0xff]
    %v1241 = vld [vmem:[#allocation5 + $0x21d8] sm:$0xff]
    %v1242 = vld [vmem:[#allocation5 + $0x21e0] sm:$0xff]
    %v1243 = vld [vmem:[#allocation5 + $0x21e8] sm:$0xff]
    %v1244 = vld [vmem:[#allocation5 + $0x21f0] sm:$0xff]
    %v1245 = vld [vmem:[#allocation5 + $0x21f8] sm:$0xff]
    %v1246 = vld [vmem:[#allocation5 + $0x2200] sm:$0xff]
    %v1247 = vld [vmem:[#allocation5 + $0x2208] sm:$0xff]
    %v1248 = vld [vmem:[#allocation5 + $0x2210] sm:$0xff]
    %v1249 = vld [vmem:[#allocation5 + $0x2218] sm:$0xff]
    %v1250 = vld [vmem:[#allocation5 + $0x2220] sm:$0xff]
    %v1251 = vld [vmem:[#allocation5 + $0x2228] sm:$0xff]
    %v1252 = vld [vmem:[#allocation5 + $0x2230] sm:$0xff]
    %v1253 = vld [vmem:[#allocation5 + $0x2238] sm:$0xff]
    %v1254 = vld [vmem:[#allocation5 + $0x2240] sm:$0xff]
    %v1255 = vld [vmem:[#allocation5 + $0x2248] sm:$0xff]
    %v1256 = vld [vmem:[#allocation5 + $0x2250] sm:$0xff]
    %v1257 = vld [vmem:[#allocation5 + $0x2258] sm:$0xff]
    %v1258 = vld [vmem:[#allocation5 + $0x2260] sm:$0xff]
    %v1259 = vld [vmem:[#allocation5 + $0x2268] sm:$0xff]
    %v1260 = vld [vmem:[#allocation5 + $0x2270] sm:$0xff]
    %v1261 = vld [vmem:[#allocation5 + $0x2278] sm:$0xff]
    %v1262 = vld [vmem:[#allocation5 + $0x2280] sm:$0xff]
    %v1263 = vld [vmem:[#allocation5 + $0x2288] sm:$0xff]
    %v1264 = vld [vmem:[#allocation5 + $0x2290] sm:$0xff]
    %v1265 = vld [vmem:[#allocation5 + $0x2298] sm:$0xff]
    %v1266 = vld [vmem:[#allocation5 + $0x22a0] sm:$0xff]
    %v1267 = vld [vmem:[#allocation5 + $0x22a8] sm:$0xff]
    %v1268 = vld [vmem:[#allocation5 + $0x22b0] sm:$0xff]
    %v1269 = vld [vmem:[#allocation5 + $0x22b8] sm:$0xff]
    %v1270 = vld [vmem:[#allocation5 + $0x22c0] sm:$0xff]
    %v1271 = vld [vmem:[#allocation5 + $0x22c8] sm:$0xff]
    %v1272 = vld [vmem:[#allocation5 + $0x22d0] sm:$0xff]
    %v1273 = vld [vmem:[#allocation5 + $0x22d8] sm:$0xff]
    %v1274 = vld [vmem:[#allocation5 + $0x22e0] sm:$0xff]
    %v1275 = vld [vmem:[#allocation5 + $0x22e8] sm:$0xff]
    %v1276 = vld [vmem:[#allocation5 + $0x22f0] sm:$0xff]
    %v1277 = vld [vmem:[#allocation5 + $0x22f8] sm:$0xff]
    %v1278 = vld [vmem:[#allocation5 + $0x2300] sm:$0xff]
    %v1279 = vld [vmem:[#allocation5 + $0x2308] sm:$0xff]
    %v1280 = vld [vmem:[#allocation5 + $0x2310] sm:$0xff]
    %v1281 = vld [vmem:[#allocation5 + $0x2318] sm:$0xff]
    %v1282 = vld [vmem:[#allocation5 + $0x2320] sm:$0xff]
    %v1283 = vld [vmem:[#allocation5 + $0x2328] sm:$0xff]
    %v1284 = vld [vmem:[#allocation5 + $0x2330] sm:$0xff]
    %v1285 = vld [vmem:[#allocation5 + $0x2338] sm:$0xff]
    %v1286 = vld [vmem:[#allocation5 + $0x2340] sm:$0xff]
    %v1287 = vld [vmem:[#allocation5 + $0x2348] sm:$0xff]
    %v1288 = vld [vmem:[#allocation5 + $0x2350] sm:$0xff]
    %v1289 = vld [vmem:[#allocation5 + $0x2358] sm:$0xff]
    %v1290 = vld [vmem:[#allocation5 + $0x2360] sm:$0xff]
    %v1291 = vld [vmem:[#allocation5 + $0x2368] sm:$0xff]
    %v1292 = vld [vmem:[#allocation5 + $0x2370] sm:$0xff]
    %v1293 = vld [vmem:[#allocation5 + $0x2378] sm:$0xff]
    %v1294 = vld [vmem:[#allocation5 + $0x2380] sm:$0xff]
    %v1295 = vld [vmem:[#allocation5 + $0x2388] sm:$0xff]
    %v1296 = vld [vmem:[#allocation5 + $0x2390] sm:$0xff]
    %v1297 = vld [vmem:[#allocation5 + $0x2398] sm:$0xff]
    %v1298 = vld [vmem:[#allocation5 + $0x23a0] sm:$0xff]
    %v1299 = vld [vmem:[#allocation5 + $0x23a8] sm:$0xff]
    %v1300 = vld [vmem:[#allocation5 + $0x23b0] sm:$0xff]
    %v1301 = vld [vmem:[#allocation5 + $0x23b8] sm:$0xff]
    %v1302 = vld [vmem:[#allocation5 + $0x23c0] sm:$0xff]
    %v1303 = vld [vmem:[#allocation5 + $0x23c8] sm:$0xff]
    %v1304 = vld [vmem:[#allocation5 + $0x23d0] sm:$0xff]
    %v1305 = vld [vmem:[#allocation5 + $0x23d8] sm:$0xff]
    %v1306 = vld [vmem:[#allocation5 + $0x23e0] sm:$0xff]
    %v1307 = vld [vmem:[#allocation5 + $0x23e8] sm:$0xff]
    %v1308 = vld [vmem:[#allocation5 + $0x23f0] sm:$0xff]
    %v1309 = vld [vmem:[#allocation5 + $0x23f8] sm:$0xff]
    %v1310 = vld [vmem:[#allocation5 + $0x2400] sm:$0xff]
    %v1311 = vld [vmem:[#allocation5 + $0x2408] sm:$0xff]
    %v1312 = vld [vmem:[#allocation5 + $0x2410] sm:$0xff]
    %v1313 = vld [vmem:[#allocation5 + $0x2418] sm:$0xff]
    %v1314 = vld [vmem:[#allocation5 + $0x2420] sm:$0xff]
    %v1315 = vld [vmem:[#allocation5 + $0x2428] sm:$0xff]
    %v1316 = vld [vmem:[#allocation5 + $0x2430] sm:$0xff]
    %v1317 = vld [vmem:[#allocation5 + $0x2438] sm:$0xff]
    %v1318 = vld [vmem:[#allocation5 + $0x2440] sm:$0xff]
    %v1319 = vld [vmem:[#allocation5 + $0x2448] sm:$0xff]
    %v1320 = vld [vmem:[#allocation5 + $0x2450] sm:$0xff]
    %v1321 = vld [vmem:[#allocation5 + $0x2458] sm:$0xff]
    %v1322 = vld [vmem:[#allocation5 + $0x2460] sm:$0xff]
    %v1323 = vld [vmem:[#allocation5 + $0x2468] sm:$0xff]
    %v1324 = vld [vmem:[#allocation5 + $0x2470] sm:$0xff]
    %v1325 = vld [vmem:[#allocation5 + $0x2478] sm:$0xff]
    %v1326 = vld [vmem:[#allocation5 + $0x2480] sm:$0xff]
    %v1327 = vld [vmem:[#allocation5 + $0x2488] sm:$0xff]
    %v1328 = vld [vmem:[#allocation5 + $0x2490] sm:$0xff]
    %v1329 = vld [vmem:[#allocation5 + $0x2498] sm:$0xff]
    %v1330 = vld [vmem:[#allocation5 + $0x24a0] sm:$0xff]
    %v1331 = vld [vmem:[#allocation5 + $0x24a8] sm:$0xff]
    %v1332 = vld [vmem:[#allocation5 + $0x24b0] sm:$0xff]
    %v1333 = vld [vmem:[#allocation5 + $0x24b8] sm:$0xff]
    %v1334 = vld [vmem:[#allocation5 + $0x24c0] sm:$0xff]
    %v1335 = vld [vmem:[#allocation5 + $0x24c8] sm:$0xff]
    %v1336 = vld [vmem:[#allocation5 + $0x24d0] sm:$0xff]
    %v1337 = vld [vmem:[#allocation5 + $0x24d8] sm:$0xff]
    %v1338 = vld [vmem:[#allocation5 + $0x24e0] sm:$0xff]
    %v1339 = vld [vmem:[#allocation5 + $0x24e8] sm:$0xff]
    %v1340 = vld [vmem:[#allocation5 + $0x24f0] sm:$0xff]
    %v1341 = vld [vmem:[#allocation5 + $0x24f8] sm:$0xff]
    %v1342 = vld [vmem:[#allocation5 + $0x2500] sm:$0xff]
    %v1343 = vld [vmem:[#allocation5 + $0x2508] sm:$0xff]
    %v1344 = vld [vmem:[#allocation5 + $0x2510] sm:$0xff]
    %v1345 = vld [vmem:[#allocation5 + $0x2518] sm:$0xff]
    %v1346 = vld [vmem:[#allocation5 + $0x2520] sm:$0xff]
    %v1347 = vld [vmem:[#allocation5 + $0x2528] sm:$0xff]
    %v1348 = vld [vmem:[#allocation5 + $0x2530] sm:$0xff]
    %v1349 = vld [vmem:[#allocation5 + $0x2538] sm:$0xff]
    %v1350 = vld [vmem:[#allocation5 + $0x2540] sm:$0xff]
    %v1351 = vld [vmem:[#allocation5 + $0x2548] sm:$0xff]
    %v1352 = vld [vmem:[#allocation5 + $0x2550] sm:$0xff]
    %v1353 = vld [vmem:[#allocation5 + $0x2558] sm:$0xff]
    %v1354 = vld [vmem:[#allocation5 + $0x2560] sm:$0xff]
    %v1355 = vld [vmem:[#allocation5 + $0x2568] sm:$0xff]
    %v1356 = vld [vmem:[#allocation5 + $0x2570] sm:$0xff]
    %v1357 = vld [vmem:[#allocation5 + $0x2578] sm:$0xff]
    %v1358 = vld [vmem:[#allocation5 + $0x2580] sm:$0xff]
    %v1359 = vld [vmem:[#allocation5 + $0x2588] sm:$0xff]
    %v1360 = vld [vmem:[#allocation5 + $0x2590] sm:$0xff]
    %v1361 = vld [vmem:[#allocation5 + $0x2598] sm:$0xff]
    %v1362 = vld [vmem:[#allocation5 + $0x25a0] sm:$0xff]
    %v1363 = vld [vmem:[#allocation5 + $0x25a8] sm:$0xff]
    %v1364 = vld [vmem:[#allocation5 + $0x25b0] sm:$0xff]
    %v1365 = vld [vmem:[#allocation5 + $0x25b8] sm:$0xff]
    %v1366 = vld [vmem:[#allocation5 + $0x25c0] sm:$0xff]
    %v1367 = vld [vmem:[#allocation5 + $0x25c8] sm:$0xff]
    %v1368 = vld [vmem:[#allocation5 + $0x25d0] sm:$0xff]
    %v1369 = vld [vmem:[#allocation5 + $0x25d8] sm:$0xff]
    %v1370 = vld [vmem:[#allocation5 + $0x25e0] sm:$0xff]
    %v1371 = vld [vmem:[#allocation5 + $0x25e8] sm:$0xff]
    %v1372 = vld [vmem:[#allocation5 + $0x25f0] sm:$0xff]
    %v1373 = vld [vmem:[#allocation5 + $0x25f8] sm:$0xff]
    %v1374 = vld [vmem:[#allocation5 + $0x2600] sm:$0xff]
    %v1375 = vld [vmem:[#allocation5 + $0x2608] sm:$0xff]
    %v1376 = vld [vmem:[#allocation5 + $0x2610] sm:$0xff]
    %v1377 = vld [vmem:[#allocation5 + $0x2618] sm:$0xff]
    %v1378 = vld [vmem:[#allocation5 + $0x2620] sm:$0xff]
    %v1379 = vld [vmem:[#allocation5 + $0x2628] sm:$0xff]
    %v1380 = vld [vmem:[#allocation5 + $0x2630] sm:$0xff]
    %v1381 = vld [vmem:[#allocation5 + $0x2638] sm:$0xff]
    %v1382 = vld [vmem:[#allocation5 + $0x2640] sm:$0xff]
    %v1383 = vld [vmem:[#allocation5 + $0x2648] sm:$0xff]
    %v1384 = vld [vmem:[#allocation5 + $0x2650] sm:$0xff]
    %v1385 = vld [vmem:[#allocation5 + $0x2658] sm:$0xff]
    %v1386 = vld [vmem:[#allocation5 + $0x2660] sm:$0xff]
    %v1387 = vld [vmem:[#allocation5 + $0x2668] sm:$0xff]
    %v1388 = vld [vmem:[#allocation5 + $0x2670] sm:$0xff]
    %v1389 = vld [vmem:[#allocation5 + $0x2678] sm:$0xff]
    %v1390 = vld [vmem:[#allocation5 + $0x2680] sm:$0xff]
    %v1391 = vld [vmem:[#allocation5 + $0x2688] sm:$0xff]
    %v1392 = vld [vmem:[#allocation5 + $0x2690] sm:$0xff]
    %v1393 = vld [vmem:[#allocation5 + $0x2698] sm:$0xff]
    %v1394 = vld [vmem:[#allocation5 + $0x26a0] sm:$0xff]
    %v1395 = vld [vmem:[#allocation5 + $0x26a8] sm:$0xff]
    %v1396 = vld [vmem:[#allocation5 + $0x26b0] sm:$0xff]
    %v1397 = vld [vmem:[#allocation5 + $0x26b8] sm:$0xff]
    %v1398 = vld [vmem:[#allocation5 + $0x26c0] sm:$0xff]
    %v1399 = vld [vmem:[#allocation5 + $0x26c8] sm:$0xff]
    %v1400 = vld [vmem:[#allocation5 + $0x26d0] sm:$0xff]
    %v1401 = vld [vmem:[#allocation5 + $0x26d8] sm:$0xff]
    %v1402 = vld [vmem:[#allocation5 + $0x26e0] sm:$0xff]
    %v1403 = vld [vmem:[#allocation5 + $0x26e8] sm:$0xff]
    %v1404 = vld [vmem:[#allocation5 + $0x26f0] sm:$0xff]
    %v1405 = vld [vmem:[#allocation5 + $0x26f8] sm:$0xff]
    %v1406 = vld [vmem:[#allocation5 + $0x2700] sm:$0xff]
    %v1407 = vld [vmem:[#allocation5 + $0x2708] sm:$0xff]
    %v1408 = vld [vmem:[#allocation5 + $0x2710] sm:$0xff]
    %v1409 = vld [vmem:[#allocation5 + $0x2718] sm:$0xff]
    %v1410 = vld [vmem:[#allocation5 + $0x2720] sm:$0xff]
    %v1411 = vld [vmem:[#allocation5 + $0x2728] sm:$0xff]
    %v1412 = vld [vmem:[#allocation5 + $0x2730] sm:$0xff]
    %v1413 = vld [vmem:[#allocation5 + $0x2738] sm:$0xff]
    %v1414 = vld [vmem:[#allocation5 + $0x2740] sm:$0xff]
    %v1415 = vld [vmem:[#allocation5 + $0x2748] sm:$0xff]
    %v1416 = vld [vmem:[#allocation5 + $0x2750] sm:$0xff]
    %v1417 = vld [vmem:[#allocation5 + $0x2758] sm:$0xff]
    %v1418 = vld [vmem:[#allocation5 + $0x2760] sm:$0xff]
    %v1419 = vld [vmem:[#allocation5 + $0x2768] sm:$0xff]
    %v1420 = vld [vmem:[#allocation5 + $0x2770] sm:$0xff]
    %v1421 = vld [vmem:[#allocation5 + $0x2778] sm:$0xff]
    %v1422 = vld [vmem:[#allocation5 + $0x2780] sm:$0xff]
    %v1423 = vld [vmem:[#allocation5 + $0x2788] sm:$0xff]
    %v1424 = vld [vmem:[#allocation5 + $0x2790] sm:$0xff]
    %v1425 = vld [vmem:[#allocation5 + $0x2798] sm:$0xff]
    %v1426 = vld [vmem:[#allocation5 + $0x27a0] sm:$0xff]
    %v1427 = vld [vmem:[#allocation5 + $0x27a8] sm:$0xff]
    %v1428 = vld [vmem:[#allocation5 + $0x27b0] sm:$0xff]
    %v1429 = vld [vmem:[#allocation5 + $0x27b8] sm:$0xff]
    %v1430 = vld [vmem:[#allocation5 + $0x27c0] sm:$0xff]
    %v1431 = vld [vmem:[#allocation5 + $0x27c8] sm:$0xff]
    %v1432 = vld [vmem:[#allocation5 + $0x27d0] sm:$0xff]
    %v1433 = vld [vmem:[#allocation5 + $0x27d8] sm:$0xff]
    %v1434 = vld [vmem:[#allocation5 + $0x27e0] sm:$0xff]
    %v1435 = vld [vmem:[#allocation5 + $0x27e8] sm:$0xff]
    %v1436 = vld [vmem:[#allocation5 + $0x27f0] sm:$0xff]
    %v1437 = vld [vmem:[#allocation5 + $0x27f8] sm:$0xff]
    %v1438 = vld [vmem:[#allocation5 + $0x2800] sm:$0xff]
    %v1439 = vld [vmem:[#allocation5 + $0x2808] sm:$0xff]
    %v1440 = vld [vmem:[#allocation5 + $0x2810] sm:$0xff]
    %v1441 = vld [vmem:[#allocation5 + $0x2818] sm:$0xff]
    %v1442 = vld [vmem:[#allocation5 + $0x2820] sm:$0xff]
    %v1443 = vld [vmem:[#allocation5 + $0x2828] sm:$0xff]
    %v1444 = vld [vmem:[#allocation5 + $0x2830] sm:$0xff]
    %v1445 = vld [vmem:[#allocation5 + $0x2838] sm:$0xff]
    %v1446 = vld [vmem:[#allocation5 + $0x2840] sm:$0xff]
    %v1447 = vld [vmem:[#allocation5 + $0x2848] sm:$0xff]
    %v1448 = vld [vmem:[#allocation5 + $0x2850] sm:$0xff]
    %v1449 = vld [vmem:[#allocation5 + $0x2858] sm:$0xff]
    %v1450 = vld [vmem:[#allocation5 + $0x2860] sm:$0xff]
    %v1451 = vld [vmem:[#allocation5 + $0x2868] sm:$0xff]
    %v1452 = vld [vmem:[#allocation5 + $0x2870] sm:$0xff]
    %v1453 = vld [vmem:[#allocation5 + $0x2878] sm:$0xff]
    %v1454 = vld [vmem:[#allocation5 + $0x2880] sm:$0xff]
    %v1455 = vld [vmem:[#allocation5 + $0x2888] sm:$0xff]
    %v1456 = vld [vmem:[#allocation5 + $0x2890] sm:$0xff]
    %v1457 = vld [vmem:[#allocation5 + $0x2898] sm:$0xff]
    %v1458 = vld [vmem:[#allocation5 + $0x28a0] sm:$0xff]
    %v1459 = vld [vmem:[#allocation5 + $0x28a8] sm:$0xff]
    %v1460 = vld [vmem:[#allocation5 + $0x28b0] sm:$0xff]
    %v1461 = vld [vmem:[#allocation5 + $0x28b8] sm:$0xff]
    %v1462 = vld [vmem:[#allocation5 + $0x28c0] sm:$0xff]
    %v1463 = vld [vmem:[#allocation5 + $0x28c8] sm:$0xff]
    %v1464 = vld [vmem:[#allocation5 + $0x28d0] sm:$0xff]
    %v1465 = vld [vmem:[#allocation5 + $0x28d8] sm:$0xff]
    %v1466 = vld [vmem:[#allocation5 + $0x28e0] sm:$0xff]
    %v1467 = vld [vmem:[#allocation5 + $0x28e8] sm:$0xff]
    %v1468 = vld [vmem:[#allocation5 + $0x28f0] sm:$0xff]
    %v1469 = vld [vmem:[#allocation5 + $0x28f8] sm:$0xff]
    %v1470 = vld [vmem:[#allocation5 + $0x2900] sm:$0xff]
    %v1471 = vld [vmem:[#allocation5 + $0x2908] sm:$0xff]
    %v1472 = vld [vmem:[#allocation5 + $0x2910] sm:$0xff]
    %v1473 = vld [vmem:[#allocation5 + $0x2918] sm:$0xff]
    %v1474 = vld [vmem:[#allocation5 + $0x2920] sm:$0xff]
    %v1475 = vld [vmem:[#allocation5 + $0x2928] sm:$0xff]
    %v1476 = vld [vmem:[#allocation5 + $0x2930] sm:$0xff]
    %v1477 = vld [vmem:[#allocation5 + $0x2938] sm:$0xff]
    %v1478 = vld [vmem:[#allocation5 + $0x2940] sm:$0xff]
    %v1479 = vld [vmem:[#allocation5 + $0x2948] sm:$0xff]
    %v1480 = vld [vmem:[#allocation5 + $0x2950] sm:$0xff]
    %v1481 = vld [vmem:[#allocation5 + $0x2958] sm:$0xff]
    %v1482 = vld [vmem:[#allocation5 + $0x2960] sm:$0xff]
    %v1483 = vld [vmem:[#allocation5 + $0x2968] sm:$0xff]
    %v1484 = vld [vmem:[#allocation5 + $0x2970] sm:$0xff]
    %v1485 = vld [vmem:[#allocation5 + $0x2978] sm:$0xff]
    %v1486 = vld [vmem:[#allocation5 + $0x2980] sm:$0xff]
    %v1487 = vld [vmem:[#allocation5 + $0x2988] sm:$0xff]
    %v1488 = vld [vmem:[#allocation5 + $0x2990] sm:$0xff]
    %v1489 = vld [vmem:[#allocation5 + $0x2998] sm:$0xff]
    %v1490 = vld [vmem:[#allocation5 + $0x29a0] sm:$0xff]
    %v1491 = vld [vmem:[#allocation5 + $0x29a8] sm:$0xff]
    %v1492 = vld [vmem:[#allocation5 + $0x29b0] sm:$0xff]
    %v1493 = vld [vmem:[#allocation5 + $0x29b8] sm:$0xff]
    %v1494 = vld [vmem:[#allocation5 + $0x29c0] sm:$0xff]
    %v1495 = vld [vmem:[#allocation5 + $0x29c8] sm:$0xff]
    %v1496 = vld [vmem:[#allocation5 + $0x29d0] sm:$0xff]
    %v1497 = vld [vmem:[#allocation5 + $0x29d8] sm:$0xff]
    %v1498 = vld [vmem:[#allocation5 + $0x29e0] sm:$0xff]
    %v1499 = vld [vmem:[#allocation5 + $0x29e8] sm:$0xff]
    %v1500 = vld [vmem:[#allocation5 + $0x29f0] sm:$0xff]
    %v1501 = vld [vmem:[#allocation5 + $0x29f8] sm:$0xff]
    %v1502 = vld [vmem:[#allocation5 + $0x2a00] sm:$0xff]
    %v1503 = vld [vmem:[#allocation5 + $0x2a08] sm:$0xff]
    %v1504 = vld [vmem:[#allocation5 + $0x2a10] sm:$0xff]
    %v1505 = vld [vmem:[#allocation5 + $0x2a18] sm:$0xff]
    %v1506 = vld [vmem:[#allocation5 + $0x2a20] sm:$0xff]
    %v1507 = vld [vmem:[#allocation5 + $0x2a28] sm:$0xff]
    %v1508 = vld [vmem:[#allocation5 + $0x2a30] sm:$0xff]
    %v1509 = vld [vmem:[#allocation5 + $0x2a38] sm:$0xff]
    %v1510 = vld [vmem:[#allocation5 + $0x2a40] sm:$0xff]
    %v1511 = vld [vmem:[#allocation5 + $0x2a48] sm:$0xff]
    %v1512 = vld [vmem:[#allocation5 + $0x2a50] sm:$0xff]
    %v1513 = vld [vmem:[#allocation5 + $0x2a58] sm:$0xff]
    %v1514 = vld [vmem:[#allocation5 + $0x2a60] sm:$0xff]
    %v1515 = vld [vmem:[#allocation5 + $0x2a68] sm:$0xff]
    %v1516 = vld [vmem:[#allocation5 + $0x2a70] sm:$0xff]
    %v1517 = vld [vmem:[#allocation5 + $0x2a78] sm:$0xff]
    %v1518 = vld [vmem:[#allocation5 + $0x2a80] sm:$0xff]
    %v1519 = vld [vmem:[#allocation5 + $0x2a88] sm:$0xff]
    %v1520 = vld [vmem:[#allocation5 + $0x2a90] sm:$0xff]
    %v1521 = vld [vmem:[#allocation5 + $0x2a98] sm:$0xff]
    %v1522 = vld [vmem:[#allocation5 + $0x2aa0] sm:$0xff]
    %v1523 = vld [vmem:[#allocation5 + $0x2aa8] sm:$0xff]
    %v1524 = vld [vmem:[#allocation5 + $0x2ab0] sm:$0xff]
    %v1525 = vld [vmem:[#allocation5 + $0x2ab8] sm:$0xff]
    %v1526 = vld [vmem:[#allocation5 + $0x2ac0] sm:$0xff]
    %v1527 = vld [vmem:[#allocation5 + $0x2ac8] sm:$0xff]
    %v1528 = vld [vmem:[#allocation5 + $0x2ad0] sm:$0xff]
    %v1529 = vld [vmem:[#allocation5 + $0x2ad8] sm:$0xff]
    %v1530 = vld [vmem:[#allocation5 + $0x2ae0] sm:$0xff]
    %v1531 = vld [vmem:[#allocation5 + $0x2ae8] sm:$0xff]
    %v1532 = vld [vmem:[#allocation5 + $0x2af0] sm:$0xff]
    %v1533 = vld [vmem:[#allocation5 + $0x2af8] sm:$0xff]
    %v1534 = vld [vmem:[#allocation5 + $0x2b00] sm:$0xff]
    %v1535 = vld [vmem:[#allocation5 + $0x2b08] sm:$0xff]
    %v1536 = vld [vmem:[#allocation5 + $0x2b10] sm:$0xff]
    %v1537 = vld [vmem:[#allocation5 + $0x2b18] sm:$0xff]
    %v1538 = vld [vmem:[#allocation5 + $0x2b20] sm:$0xff]
    %v1539 = vld [vmem:[#allocation5 + $0x2b28] sm:$0xff]
    %v1540 = vld [vmem:[#allocation5 + $0x2b30] sm:$0xff]
    %v1541 = vld [vmem:[#allocation5 + $0x2b38] sm:$0xff]
    %v1542 = vld [vmem:[#allocation5 + $0x2b40] sm:$0xff]
    %v1543 = vld [vmem:[#allocation5 + $0x2b48] sm:$0xff]
    %v1544 = vld [vmem:[#allocation5 + $0x2b50] sm:$0xff]
    %v1545 = vld [vmem:[#allocation5 + $0x2b58] sm:$0xff]
    %v1546 = vld [vmem:[#allocation5 + $0x2b60] sm:$0xff]
    %v1547 = vld [vmem:[#allocation5 + $0x2b68] sm:$0xff]
    %v1548 = vld [vmem:[#allocation5 + $0x2b70] sm:$0xff]
    %v1549 = vld [vmem:[#allocation5 + $0x2b78] sm:$0xff]
    %v1550 = vld [vmem:[#allocation5 + $0x2b80] sm:$0xff]
    %v1551 = vld [vmem:[#allocation5 + $0x2b88] sm:$0xff]
    %v1552 = vld [vmem:[#allocation5 + $0x2b90] sm:$0xff]
    %v1553 = vld [vmem:[#allocation5 + $0x2b98] sm:$0xff]
    %v1554 = vld [vmem:[#allocation5 + $0x2ba0] sm:$0xff]
    %v1555 = vld [vmem:[#allocation5 + $0x2ba8] sm:$0xff]
    %v1556 = vld [vmem:[#allocation5 + $0x2bb0] sm:$0xff]
    %v1557 = vld [vmem:[#allocation5 + $0x2bb8] sm:$0xff]
    %v1558 = vld [vmem:[#allocation5 + $0x2bc0] sm:$0xff]
    %v1559 = vld [vmem:[#allocation5 + $0x2bc8] sm:$0xff]
    %v1560 = vld [vmem:[#allocation5 + $0x2bd0] sm:$0xff]
    %v1561 = vld [vmem:[#allocation5 + $0x2bd8] sm:$0xff]
    %v1562 = vld [vmem:[#allocation5 + $0x2be0] sm:$0xff]
    %v1563 = vld [vmem:[#allocation5 + $0x2be8] sm:$0xff]
    %v1564 = vld [vmem:[#allocation5 + $0x2bf0] sm:$0xff]
    %v1565 = vld [vmem:[#allocation5 + $0x2bf8] sm:$0xff]
    %v1566 = vld [vmem:[#allocation5 + $0x2c00] sm:$0xff]
    %v1567 = vld [vmem:[#allocation5 + $0x2c08] sm:$0xff]
    %v1568 = vld [vmem:[#allocation5 + $0x2c10] sm:$0xff]
    %v1569 = vld [vmem:[#allocation5 + $0x2c18] sm:$0xff]
    %v1570 = vld [vmem:[#allocation5 + $0x2c20] sm:$0xff]
    %v1571 = vld [vmem:[#allocation5 + $0x2c28] sm:$0xff]
    %v1572 = vld [vmem:[#allocation5 + $0x2c30] sm:$0xff]
    %v1573 = vld [vmem:[#allocation5 + $0x2c38] sm:$0xff]
    %v1574 = vld [vmem:[#allocation5 + $0x2c40] sm:$0xff]
    %v1575 = vld [vmem:[#allocation5 + $0x2c48] sm:$0xff]
    %v1576 = vld [vmem:[#allocation5 + $0x2c50] sm:$0xff]
    %v1577 = vld [vmem:[#allocation5 + $0x2c58] sm:$0xff]
    %v1578 = vld [vmem:[#allocation5 + $0x2c60] sm:$0xff]
    %v1579 = vld [vmem:[#allocation5 + $0x2c68] sm:$0xff]
    %v1580 = vld [vmem:[#allocation5 + $0x2c70] sm:$0xff]
    %v1581 = vld [vmem:[#allocation5 + $0x2c78] sm:$0xff]
    %v1582 = vld [vmem:[#allocation5 + $0x2c80] sm:$0xff]
    %v1583 = vld [vmem:[#allocation5 + $0x2c88] sm:$0xff]
    %v1584 = vld [vmem:[#allocation5 + $0x2c90] sm:$0xff]
    %v1585 = vld [vmem:[#allocation5 + $0x2c98] sm:$0xff]
    %v1586 = vld [vmem:[#allocation5 + $0x2ca0] sm:$0xff]
    %v1587 = vld [vmem:[#allocation5 + $0x2ca8] sm:$0xff]
    %v1588 = vld [vmem:[#allocation5 + $0x2cb0] sm:$0xff]
    %v1589 = vld [vmem:[#allocation5 + $0x2cb8] sm:$0xff]
    %v1590 = vld [vmem:[#allocation5 + $0x2cc0] sm:$0xff]
    %v1591 = vld [vmem:[#allocation5 + $0x2cc8] sm:$0xff]
    %v1592 = vld [vmem:[#allocation5 + $0x2cd0] sm:$0xff]
    %v1593 = vld [vmem:[#allocation5 + $0x2cd8] sm:$0xff]
    %v1594 = vld [vmem:[#allocation5 + $0x2ce0] sm:$0xff]
    %v1595 = vld [vmem:[#allocation5 + $0x2ce8] sm:$0xff]
    %v1596 = vld [vmem:[#allocation5 + $0x2cf0] sm:$0xff]
    %v1597 = vld [vmem:[#allocation5 + $0x2cf8] sm:$0xff]
    %v1598 = vld [vmem:[#allocation5 + $0x2d00] sm:$0xff]
    %v1599 = vld [vmem:[#allocation5 + $0x2d08] sm:$0xff]
    %v1600 = vld [vmem:[#allocation5 + $0x2d10] sm:$0xff]
    %v1601 = vld [vmem:[#allocation5 + $0x2d18] sm:$0xff]
    %v1602 = vld [vmem:[#allocation5 + $0x2d20] sm:$0xff]
    %v1603 = vld [vmem:[#allocation5 + $0x2d28] sm:$0xff]
    %v1604 = vld [vmem:[#allocation5 + $0x2d30] sm:$0xff]
    %v1605 = vld [vmem:[#allocation5 + $0x2d38] sm:$0xff]
    %v1606 = vld [vmem:[#allocation5 + $0x2d40] sm:$0xff]
    %v1607 = vld [vmem:[#allocation5 + $0x2d48] sm:$0xff]
    %v1608 = vld [vmem:[#allocation5 + $0x2d50] sm:$0xff]
    %v1609 = vld [vmem:[#allocation5 + $0x2d58] sm:$0xff]
    %v1610 = vld [vmem:[#allocation5 + $0x2d60] sm:$0xff]
    %v1611 = vld [vmem:[#allocation5 + $0x2d68] sm:$0xff]
    %v1612 = vld [vmem:[#allocation5 + $0x2d70] sm:$0xff]
    %v1613 = vld [vmem:[#allocation5 + $0x2d78] sm:$0xff]
    %v1614 = vld [vmem:[#allocation5 + $0x2d80] sm:$0xff]
    %v1615 = vld [vmem:[#allocation5 + $0x2d88] sm:$0xff]
    %v1616 = vld [vmem:[#allocation5 + $0x2d90] sm:$0xff]
    %v1617 = vld [vmem:[#allocation5 + $0x2d98] sm:$0xff]
    %v1618 = vld [vmem:[#allocation5 + $0x2da0] sm:$0xff]
    %v1619 = vld [vmem:[#allocation5 + $0x2da8] sm:$0xff]
    %v1620 = vld [vmem:[#allocation5 + $0x2db0] sm:$0xff]
    %v1621 = vld [vmem:[#allocation5 + $0x2db8] sm:$0xff]
    %v1622 = vld [vmem:[#allocation5 + $0x2dc0] sm:$0xff]
    %v1623 = vld [vmem:[#allocation5 + $0x2dc8] sm:$0xff]
    %v1624 = vld [vmem:[#allocation5 + $0x2dd0] sm:$0xff]
    %v1625 = vld [vmem:[#allocation5 + $0x2dd8] sm:$0xff]
    %v1626 = vld [vmem:[#allocation5 + $0x2de0] sm:$0xff]
    %v1627 = vld [vmem:[#allocation5 + $0x2de8] sm:$0xff]
    %v1628 = vld [vmem:[#allocation5 + $0x2df0] sm:$0xff]
    %v1629 = vld [vmem:[#allocation5 + $0x2df8] sm:$0xff]
    %v1630 = vld [vmem:[#allocation5 + $0x2e00] sm:$0xff]
    %v1631 = vld [vmem:[#allocation5 + $0x2e08] sm:$0xff]
    %v1632 = vld [vmem:[#allocation5 + $0x2e10] sm:$0xff]
    %v1633 = vld [vmem:[#allocation5 + $0x2e18] sm:$0xff]
    %v1634 = vld [vmem:[#allocation5 + $0x2e20] sm:$0xff]
    %v1635 = vld [vmem:[#allocation5 + $0x2e28] sm:$0xff]
    %v1636 = vld [vmem:[#allocation5 + $0x2e30] sm:$0xff]
    %v1637 = vld [vmem:[#allocation5 + $0x2e38] sm:$0xff]
    %v1638 = vld [vmem:[#allocation5 + $0x2e40] sm:$0xff]
    %v1639 = vld [vmem:[#allocation5 + $0x2e48] sm:$0xff]
    %v1640 = vld [vmem:[#allocation5 + $0x2e50] sm:$0xff]
    %v1641 = vld [vmem:[#allocation5 + $0x2e58] sm:$0xff]
    %v1642 = vld [vmem:[#allocation5 + $0x2e60] sm:$0xff]
    %v1643 = vld [vmem:[#allocation5 + $0x2e68] sm:$0xff]
    %v1644 = vld [vmem:[#allocation5 + $0x2e70] sm:$0xff]
    %v1645 = vld [vmem:[#allocation5 + $0x2e78] sm:$0xff]
    %v1646 = vld [vmem:[#allocation5 + $0x2e80] sm:$0xff]
    %v1647 = vld [vmem:[#allocation5 + $0x2e88] sm:$0xff]
    %v1648 = vld [vmem:[#allocation5 + $0x2e90] sm:$0xff]
    %v1649 = vld [vmem:[#allocation5 + $0x2e98] sm:$0xff]
    %v1650 = vld [vmem:[#allocation5 + $0x2ea0] sm:$0xff]
    %v1651 = vld [vmem:[#allocation5 + $0x2ea8] sm:$0xff]
    %v1652 = vld [vmem:[#allocation5 + $0x2eb0] sm:$0xff]
    %v1653 = vld [vmem:[#allocation5 + $0x2eb8] sm:$0xff]
    %v1654 = vld [vmem:[#allocation5 + $0x2ec0] sm:$0xff]
    %v1655 = vld [vmem:[#allocation5 + $0x2ec8] sm:$0xff]
    %v1656 = vld [vmem:[#allocation5 + $0x2ed0] sm:$0xff]
    %v1657 = vld [vmem:[#allocation5 + $0x2ed8] sm:$0xff]
    %v1658 = vld [vmem:[#allocation5 + $0x2ee0] sm:$0xff]
    %v1659 = vld [vmem:[#allocation5 + $0x2ee8] sm:$0xff]
    %v1660 = vld [vmem:[#allocation5 + $0x2ef0] sm:$0xff]
    %v1661 = vld [vmem:[#allocation5 + $0x2ef8] sm:$0xff]
    %v1662 = vld [vmem:[#allocation5 + $0x2f00] sm:$0xff]
    %v1663 = vld [vmem:[#allocation5 + $0x2f08] sm:$0xff]
    %v1664 = vld [vmem:[#allocation5 + $0x2f10] sm:$0xff]
    %v1665 = vld [vmem:[#allocation5 + $0x2f18] sm:$0xff]
    %v1666 = vld [vmem:[#allocation5 + $0x2f20] sm:$0xff]
    %v1667 = vld [vmem:[#allocation5 + $0x2f28] sm:$0xff]
    %v1668 = vld [vmem:[#allocation5 + $0x2f30] sm:$0xff]
    %v1669 = vld [vmem:[#allocation5 + $0x2f38] sm:$0xff]
    %v1670 = vld [vmem:[#allocation5 + $0x2f40] sm:$0xff]
    %v1671 = vld [vmem:[#allocation5 + $0x2f48] sm:$0xff]
    %v1672 = vld [vmem:[#allocation5 + $0x2f50] sm:$0xff]
    %v1673 = vld [vmem:[#allocation5 + $0x2f58] sm:$0xff]
    %v1674 = vld [vmem:[#allocation5 + $0x2f60] sm:$0xff]
    %v1675 = vld [vmem:[#allocation5 + $0x2f68] sm:$0xff]
    %v1676 = vld [vmem:[#allocation5 + $0x2f70] sm:$0xff]
    %v1677 = vld [vmem:[#allocation5 + $0x2f78] sm:$0xff]
    %v1678 = vld [vmem:[#allocation5 + $0x2f80] sm:$0xff]
    %v1679 = vld [vmem:[#allocation5 + $0x2f88] sm:$0xff]
    %v1680 = vld [vmem:[#allocation5 + $0x2f90] sm:$0xff]
    %v1681 = vld [vmem:[#allocation5 + $0x2f98] sm:$0xff]
    %v1682 = vld [vmem:[#allocation5 + $0x2fa0] sm:$0xff]
    %v1683 = vld [vmem:[#allocation5 + $0x2fa8] sm:$0xff]
    %v1684 = vld [vmem:[#allocation5 + $0x2fb0] sm:$0xff]
    %v1685 = vld [vmem:[#allocation5 + $0x2fb8] sm:$0xff]
    %v1686 = vld [vmem:[#allocation5 + $0x2fc0] sm:$0xff]
    %v1687 = vld [vmem:[#allocation5 + $0x2fc8] sm:$0xff]
    %v1688 = vld [vmem:[#allocation5 + $0x2fd0] sm:$0xff]
    %v1689 = vld [vmem:[#allocation5 + $0x2fd8] sm:$0xff]
    %v1690 = vld [vmem:[#allocation5 + $0x2fe0] sm:$0xff]
    %v1691 = vld [vmem:[#allocation5 + $0x2fe8] sm:$0xff]
    %v1692 = vld [vmem:[#allocation5 + $0x2ff0] sm:$0xff]
    %v1693 = vld [vmem:[#allocation5 + $0x2ff8] sm:$0xff]
    %v1694 = vld [vmem:[#allocation7] sm:$0xff]
    %v1696 = vlaneseq
    %v1697 = vshrl.u32 %v1696, 7
    %v1698 = vsub.s32 0, %v1697
    %v1699 = vrot.slane %v1694, %v1698
    %v1700 = vlaneseq
    %v1701 = vshrl.u32 %v1700, 7
    %v1702 = vsub.s32 1, %v1701
    %v1703 = vrot.slane %v1694, %v1702
    %v1704 = vlaneseq
    %v1705 = vshrl.u32 %v1704, 7
    %v1706 = vsub.s32 2, %v1705
    %v1707 = vrot.slane %v1694, %v1706
    %v1708 = vlaneseq
    %v1709 = vshrl.u32 %v1708, 7
    %v1710 = vsub.s32 3, %v1709
    %v1711 = vrot.slane %v1694, %v1710
    %v1712 = vlaneseq
    %v1713 = vshrl.u32 %v1712, 7
    %v1714 = vsub.s32 4, %v1713
    %v1715 = vrot.slane %v1694, %v1714
    %v1716 = vlaneseq
    %v1717 = vshrl.u32 %v1716, 7
    %v1718 = vsub.s32 5, %v1717
    %v1719 = vrot.slane %v1694, %v1718
    %v1720 = vlaneseq
    %v1721 = vshrl.u32 %v1720, 7
    %v1722 = vsub.s32 6, %v1721
    %v1723 = vrot.slane %v1694, %v1722
    %v1724 = vlaneseq
    %v1725 = vshrl.u32 %v1724, 7
    %v1726 = vsub.s32 7, %v1725
    %v1727 = vrot.slane %v1694, %v1726
    %v3272 = vunpack.c.l.b16 %v158
    %v3273 = vunpack.c.h.b16 %v158
    %v3274 = vunpack.c.l.b16 %v159
    %v3275 = vunpack.c.h.b16 %v159
    %v3276 = vunpack.c.l.b16 %v160
    %v3277 = vunpack.c.h.b16 %v160
    %v3278 = vunpack.c.l.b16 %v161
    %v3279 = vunpack.c.h.b16 %v161
    %v3280 = vunpack.c.l.b16 %v162
    %v3281 = vunpack.c.h.b16 %v162
    %v3282 = vunpack.c.l.b16 %v163
    %v3283 = vunpack.c.h.b16 %v163
    %v3284 = vunpack.c.l.b16 %v164
    %v3285 = vunpack.c.h.b16 %v164
    %v3286 = vunpack.c.l.b16 %v165
    %v3287 = vunpack.c.h.b16 %v165
    %v3288 = vunpack.c.l.b16 %v166
    %v3289 = vunpack.c.h.b16 %v166
    %v3290 = vunpack.c.l.b16 %v167
    %v3291 = vunpack.c.h.b16 %v167
    %v3292 = vunpack.c.l.b16 %v168
    %v3293 = vunpack.c.h.b16 %v168
    %v3294 = vunpack.c.l.b16 %v169
    %v3295 = vunpack.c.h.b16 %v169
    %v3296 = vunpack.c.l.b16 %v170
    %v3297 = vunpack.c.h.b16 %v170
    %v3298 = vunpack.c.l.b16 %v171
    %v3299 = vunpack.c.h.b16 %v171
    %v3300 = vunpack.c.l.b16 %v172
    %v3301 = vunpack.c.h.b16 %v172
    %v3302 = vunpack.c.l.b16 %v173
    %v3303 = vunpack.c.h.b16 %v173
    %v3304 = vunpack.c.l.b16 %v174
    %v3305 = vunpack.c.h.b16 %v174
    %v3306 = vunpack.c.l.b16 %v175
    %v3307 = vunpack.c.h.b16 %v175
    %v3308 = vunpack.c.l.b16 %v176
    %v3309 = vunpack.c.h.b16 %v176
    %v3310 = vunpack.c.l.b16 %v177
    %v3311 = vunpack.c.h.b16 %v177
    %v3312 = vunpack.c.l.b16 %v178
    %v3313 = vunpack.c.h.b16 %v178
    %v3314 = vunpack.c.l.b16 %v179
    %v3315 = vunpack.c.h.b16 %v179
    %v3316 = vunpack.c.l.b16 %v180
    %v3317 = vunpack.c.h.b16 %v180
    %v3318 = vunpack.c.l.b16 %v181
    %v3319 = vunpack.c.h.b16 %v181
    %v3320 = vunpack.c.l.b16 %v182
    %v3321 = vunpack.c.h.b16 %v182
    %v3322 = vunpack.c.l.b16 %v183
    %v3323 = vunpack.c.h.b16 %v183
    %v3324 = vunpack.c.l.b16 %v184
    %v3325 = vunpack.c.h.b16 %v184
    %v3326 = vunpack.c.l.b16 %v185
    %v3327 = vunpack.c.h.b16 %v185
    %v3328 = vunpack.c.l.b16 %v186
    %v3329 = vunpack.c.h.b16 %v186
    %v3330 = vunpack.c.l.b16 %v187
    %v3331 = vunpack.c.h.b16 %v187
    %v3332 = vunpack.c.l.b16 %v188
    %v3333 = vunpack.c.h.b16 %v188
    %v3334 = vunpack.c.l.b16 %v189
    %v3335 = vunpack.c.h.b16 %v189
    %v3336 = vunpack.c.l.b16 %v190
    %v3337 = vunpack.c.h.b16 %v190
    %v3338 = vunpack.c.l.b16 %v191
    %v3339 = vunpack.c.h.b16 %v191
    %v3340 = vunpack.c.l.b16 %v192
    %v3341 = vunpack.c.h.b16 %v192
    %v3342 = vunpack.c.l.b16 %v193
    %v3343 = vunpack.c.h.b16 %v193
    %v3344 = vunpack.c.l.b16 %v194
    %v3345 = vunpack.c.h.b16 %v194
    %v3346 = vunpack.c.l.b16 %v195
    %v3347 = vunpack.c.h.b16 %v195
    %v3348 = vunpack.c.l.b16 %v196
    %v3349 = vunpack.c.h.b16 %v196
    %v3350 = vunpack.c.l.b16 %v197
    %v3351 = vunpack.c.h.b16 %v197
    %v3352 = vunpack.c.l.b16 %v198
    %v3353 = vunpack.c.h.b16 %v198
    %v3354 = vunpack.c.l.b16 %v199
    %v3355 = vunpack.c.h.b16 %v199
    %v3356 = vunpack.c.l.b16 %v200
    %v3357 = vunpack.c.h.b16 %v200
    %v3358 = vunpack.c.l.b16 %v201
    %v3359 = vunpack.c.h.b16 %v201
    %v3360 = vunpack.c.l.b16 %v202
    %v3361 = vunpack.c.h.b16 %v202
    %v3362 = vunpack.c.l.b16 %v203
    %v3363 = vunpack.c.h.b16 %v203
    %v3364 = vunpack.c.l.b16 %v204
    %v3365 = vunpack.c.h.b16 %v204
    %v3366 = vunpack.c.l.b16 %v205
    %v3367 = vunpack.c.h.b16 %v205
    %v3368 = vunpack.c.l.b16 %v206
    %v3369 = vunpack.c.h.b16 %v206
    %v3370 = vunpack.c.l.b16 %v207
    %v3371 = vunpack.c.h.b16 %v207
    %v3372 = vunpack.c.l.b16 %v208
    %v3373 = vunpack.c.h.b16 %v208
    %v3374 = vunpack.c.l.b16 %v209
    %v3375 = vunpack.c.h.b16 %v209
    %v3376 = vunpack.c.l.b16 %v210
    %v3377 = vunpack.c.h.b16 %v210
    %v3378 = vunpack.c.l.b16 %v211
    %v3379 = vunpack.c.h.b16 %v211
    %v3380 = vunpack.c.l.b16 %v212
    %v3381 = vunpack.c.h.b16 %v212
    %v3382 = vunpack.c.l.b16 %v213
    %v3383 = vunpack.c.h.b16 %v213
    %v3384 = vunpack.c.l.b16 %v214
    %v3385 = vunpack.c.h.b16 %v214
    %v3386 = vunpack.c.l.b16 %v215
    %v3387 = vunpack.c.h.b16 %v215
    %v3388 = vunpack.c.l.b16 %v216
    %v3389 = vunpack.c.h.b16 %v216
    %v3390 = vunpack.c.l.b16 %v217
    %v3391 = vunpack.c.h.b16 %v217
    %v3392 = vunpack.c.l.b16 %v218
    %v3393 = vunpack.c.h.b16 %v218
    %v3394 = vunpack.c.l.b16 %v219
    %v3395 = vunpack.c.h.b16 %v219
    %v3396 = vunpack.c.l.b16 %v220
    %v3397 = vunpack.c.h.b16 %v220
    %v3398 = vunpack.c.l.b16 %v221
    %v3399 = vunpack.c.h.b16 %v221
    %v3400 = vunpack.c.l.b16 %v222
    %v3401 = vunpack.c.h.b16 %v222
    %v3402 = vunpack.c.l.b16 %v223
    %v3403 = vunpack.c.h.b16 %v223
    %v3404 = vunpack.c.l.b16 %v224
    %v3405 = vunpack.c.h.b16 %v224
    %v3406 = vunpack.c.l.b16 %v225
    %v3407 = vunpack.c.h.b16 %v225
    %v3408 = vunpack.c.l.b16 %v226
    %v3409 = vunpack.c.h.b16 %v226
    %v3410 = vunpack.c.l.b16 %v227
    %v3411 = vunpack.c.h.b16 %v227
    %v3412 = vunpack.c.l.b16 %v228
    %v3413 = vunpack.c.h.b16 %v228
    %v3414 = vunpack.c.l.b16 %v229
    %v3415 = vunpack.c.h.b16 %v229
    %v3416 = vunpack.c.l.b16 %v230
    %v3417 = vunpack.c.h.b16 %v230
    %v3418 = vunpack.c.l.b16 %v231
    %v3419 = vunpack.c.h.b16 %v231
    %v3420 = vunpack.c.l.b16 %v232
    %v3421 = vunpack.c.h.b16 %v232
    %v3422 = vunpack.c.l.b16 %v233
    %v3423 = vunpack.c.h.b16 %v233
    %v3424 = vunpack.c.l.b16 %v234
    %v3425 = vunpack.c.h.b16 %v234
    %v3426 = vunpack.c.l.b16 %v235
    %v3427 = vunpack.c.h.b16 %v235
    %v3428 = vunpack.c.l.b16 %v236
    %v3429 = vunpack.c.h.b16 %v236
    %v3430 = vunpack.c.l.b16 %v237
    %v3431 = vunpack.c.h.b16 %v237
    %v3432 = vunpack.c.l.b16 %v238
    %v3433 = vunpack.c.h.b16 %v238
    %v3434 = vunpack.c.l.b16 %v239
    %v3435 = vunpack.c.h.b16 %v239
    %v3436 = vunpack.c.l.b16 %v240
    %v3437 = vunpack.c.h.b16 %v240
    %v3438 = vunpack.c.l.b16 %v241
    %v3439 = vunpack.c.h.b16 %v241
    %v3440 = vunpack.c.l.b16 %v242
    %v3441 = vunpack.c.h.b16 %v242
    %v3442 = vunpack.c.l.b16 %v243
    %v3443 = vunpack.c.h.b16 %v243
    %v3444 = vunpack.c.l.b16 %v244
    %v3445 = vunpack.c.h.b16 %v244
    %v3446 = vunpack.c.l.b16 %v245
    %v3447 = vunpack.c.h.b16 %v245
    %v3448 = vunpack.c.l.b16 %v246
    %v3449 = vunpack.c.h.b16 %v246
    %v3450 = vunpack.c.l.b16 %v247
    %v3451 = vunpack.c.h.b16 %v247
    %v3452 = vunpack.c.l.b16 %v248
    %v3453 = vunpack.c.h.b16 %v248
    %v3454 = vunpack.c.l.b16 %v249
    %v3455 = vunpack.c.h.b16 %v249
    %v3456 = vunpack.c.l.b16 %v250
    %v3457 = vunpack.c.h.b16 %v250
    %v3458 = vunpack.c.l.b16 %v251
    %v3459 = vunpack.c.h.b16 %v251
    %v3460 = vunpack.c.l.b16 %v252
    %v3461 = vunpack.c.h.b16 %v252
    %v3462 = vunpack.c.l.b16 %v253
    %v3463 = vunpack.c.h.b16 %v253
    %v3464 = vunpack.c.l.b16 %v254
    %v3465 = vunpack.c.h.b16 %v254
    %v3466 = vunpack.c.l.b16 %v255
    %v3467 = vunpack.c.h.b16 %v255
    %v3468 = vunpack.c.l.b16 %v256
    %v3469 = vunpack.c.h.b16 %v256
    %v3470 = vunpack.c.l.b16 %v257
    %v3471 = vunpack.c.h.b16 %v257
    %v3472 = vunpack.c.l.b16 %v258
    %v3473 = vunpack.c.h.b16 %v258
    %v3474 = vunpack.c.l.b16 %v259
    %v3475 = vunpack.c.h.b16 %v259
    %v3476 = vunpack.c.l.b16 %v260
    %v3477 = vunpack.c.h.b16 %v260
    %v3478 = vunpack.c.l.b16 %v261
    %v3479 = vunpack.c.h.b16 %v261
    %v3480 = vunpack.c.l.b16 %v262
    %v3481 = vunpack.c.h.b16 %v262
    %v3482 = vunpack.c.l.b16 %v263
    %v3483 = vunpack.c.h.b16 %v263
    %v3484 = vunpack.c.l.b16 %v264
    %v3485 = vunpack.c.h.b16 %v264
    %v3486 = vunpack.c.l.b16 %v265
    %v3487 = vunpack.c.h.b16 %v265
    %v3488 = vunpack.c.l.b16 %v266
    %v3489 = vunpack.c.h.b16 %v266
    %v3490 = vunpack.c.l.b16 %v267
    %v3491 = vunpack.c.h.b16 %v267
    %v3492 = vunpack.c.l.b16 %v268
    %v3493 = vunpack.c.h.b16 %v268
    %v3494 = vunpack.c.l.b16 %v269
    %v3495 = vunpack.c.h.b16 %v269
    %v3496 = vunpack.c.l.b16 %v270
    %v3497 = vunpack.c.h.b16 %v270
    %v3498 = vunpack.c.l.b16 %v271
    %v3499 = vunpack.c.h.b16 %v271
    %v3500 = vunpack.c.l.b16 %v272
    %v3501 = vunpack.c.h.b16 %v272
    %v3502 = vunpack.c.l.b16 %v273
    %v3503 = vunpack.c.h.b16 %v273
    %v3504 = vunpack.c.l.b16 %v274
    %v3505 = vunpack.c.h.b16 %v274
    %v3506 = vunpack.c.l.b16 %v275
    %v3507 = vunpack.c.h.b16 %v275
    %v3508 = vunpack.c.l.b16 %v276
    %v3509 = vunpack.c.h.b16 %v276
    %v3510 = vunpack.c.l.b16 %v277
    %v3511 = vunpack.c.h.b16 %v277
    %v3512 = vunpack.c.l.b16 %v278
    %v3513 = vunpack.c.h.b16 %v278
    %v3514 = vunpack.c.l.b16 %v279
    %v3515 = vunpack.c.h.b16 %v279
    %v3516 = vunpack.c.l.b16 %v280
    %v3517 = vunpack.c.h.b16 %v280
    %v3518 = vunpack.c.l.b16 %v281
    %v3519 = vunpack.c.h.b16 %v281
    %v3520 = vunpack.c.l.b16 %v282
    %v3521 = vunpack.c.h.b16 %v282
    %v3522 = vunpack.c.l.b16 %v283
    %v3523 = vunpack.c.h.b16 %v283
    %v3524 = vunpack.c.l.b16 %v284
    %v3525 = vunpack.c.h.b16 %v284
    %v3526 = vunpack.c.l.b16 %v285
    %v3527 = vunpack.c.h.b16 %v285
    %v3528 = vunpack.c.l.b16 %v286
    %v3529 = vunpack.c.h.b16 %v286
    %v3530 = vunpack.c.l.b16 %v287
    %v3531 = vunpack.c.h.b16 %v287
    %v3532 = vunpack.c.l.b16 %v288
    %v3533 = vunpack.c.h.b16 %v288
    %v3534 = vunpack.c.l.b16 %v289
    %v3535 = vunpack.c.h.b16 %v289
    %v3536 = vunpack.c.l.b16 %v290
    %v3537 = vunpack.c.h.b16 %v290
    %v3538 = vunpack.c.l.b16 %v291
    %v3539 = vunpack.c.h.b16 %v291
    %v3540 = vunpack.c.l.b16 %v292
    %v3541 = vunpack.c.h.b16 %v292
    %v3542 = vunpack.c.l.b16 %v293
    %v3543 = vunpack.c.h.b16 %v293
    %v3544 = vunpack.c.l.b16 %v294
    %v3545 = vunpack.c.h.b16 %v294
    %v3546 = vunpack.c.l.b16 %v295
    %v3547 = vunpack.c.h.b16 %v295
    %v3548 = vunpack.c.l.b16 %v296
    %v3549 = vunpack.c.h.b16 %v296
    %v3550 = vunpack.c.l.b16 %v297
    %v3551 = vunpack.c.h.b16 %v297
    %v3552 = vunpack.c.l.b16 %v298
    %v3553 = vunpack.c.h.b16 %v298
    %v3554 = vunpack.c.l.b16 %v299
    %v3555 = vunpack.c.h.b16 %v299
    %v3556 = vunpack.c.l.b16 %v300
    %v3557 = vunpack.c.h.b16 %v300
    %v3558 = vunpack.c.l.b16 %v301
    %v3559 = vunpack.c.h.b16 %v301
    %v3560 = vunpack.c.l.b16 %v302
    %v3561 = vunpack.c.h.b16 %v302
    %v3562 = vunpack.c.l.b16 %v303
    %v3563 = vunpack.c.h.b16 %v303
    %v3564 = vunpack.c.l.b16 %v304
    %v3565 = vunpack.c.h.b16 %v304
    %v3566 = vunpack.c.l.b16 %v305
    %v3567 = vunpack.c.h.b16 %v305
    %v3568 = vunpack.c.l.b16 %v306
    %v3569 = vunpack.c.h.b16 %v306
    %v3570 = vunpack.c.l.b16 %v307
    %v3571 = vunpack.c.h.b16 %v307
    %v3572 = vunpack.c.l.b16 %v308
    %v3573 = vunpack.c.h.b16 %v308
    %v3574 = vunpack.c.l.b16 %v309
    %v3575 = vunpack.c.h.b16 %v309
    %v3576 = vunpack.c.l.b16 %v310
    %v3577 = vunpack.c.h.b16 %v310
    %v3578 = vunpack.c.l.b16 %v311
    %v3579 = vunpack.c.h.b16 %v311
    %v3580 = vunpack.c.l.b16 %v312
    %v3581 = vunpack.c.h.b16 %v312
    %v3582 = vunpack.c.l.b16 %v313
    %v3583 = vunpack.c.h.b16 %v313
    %v3584 = vunpack.c.l.b16 %v314
    %v3585 = vunpack.c.h.b16 %v314
    %v3586 = vunpack.c.l.b16 %v315
    %v3587 = vunpack.c.h.b16 %v315
    %v3588 = vunpack.c.l.b16 %v316
    %v3589 = vunpack.c.h.b16 %v316
    %v3590 = vunpack.c.l.b16 %v317
    %v3591 = vunpack.c.h.b16 %v317
    %v3592 = vunpack.c.l.b16 %v318
    %v3593 = vunpack.c.h.b16 %v318
    %v3594 = vunpack.c.l.b16 %v319
    %v3595 = vunpack.c.h.b16 %v319
    %v3596 = vunpack.c.l.b16 %v320
    %v3597 = vunpack.c.h.b16 %v320
    %v3598 = vunpack.c.l.b16 %v321
    %v3599 = vunpack.c.h.b16 %v321
    %v3600 = vunpack.c.l.b16 %v322
    %v3601 = vunpack.c.h.b16 %v322
    %v3602 = vunpack.c.l.b16 %v323
    %v3603 = vunpack.c.h.b16 %v323
    %v3604 = vunpack.c.l.b16 %v324
    %v3605 = vunpack.c.h.b16 %v324
    %v3606 = vunpack.c.l.b16 %v325
    %v3607 = vunpack.c.h.b16 %v325
    %v3608 = vunpack.c.l.b16 %v326
    %v3609 = vunpack.c.h.b16 %v326
    %v3610 = vunpack.c.l.b16 %v327
    %v3611 = vunpack.c.h.b16 %v327
    %v3612 = vunpack.c.l.b16 %v328
    %v3613 = vunpack.c.h.b16 %v328
    %v3614 = vunpack.c.l.b16 %v329
    %v3615 = vunpack.c.h.b16 %v329
    %v3616 = vunpack.c.l.b16 %v330
    %v3617 = vunpack.c.h.b16 %v330
    %v3618 = vunpack.c.l.b16 %v331
    %v3619 = vunpack.c.h.b16 %v331
    %v3620 = vunpack.c.l.b16 %v332
    %v3621 = vunpack.c.h.b16 %v332
    %v3622 = vunpack.c.l.b16 %v333
    %v3623 = vunpack.c.h.b16 %v333
    %v3624 = vunpack.c.l.b16 %v334
    %v3625 = vunpack.c.h.b16 %v334
    %v3626 = vunpack.c.l.b16 %v335
    %v3627 = vunpack.c.h.b16 %v335
    %v3628 = vunpack.c.l.b16 %v336
    %v3629 = vunpack.c.h.b16 %v336
    %v3630 = vunpack.c.l.b16 %v337
    %v3631 = vunpack.c.h.b16 %v337
    %v3632 = vunpack.c.l.b16 %v338
    %v3633 = vunpack.c.h.b16 %v338
    %v3634 = vunpack.c.l.b16 %v339
    %v3635 = vunpack.c.h.b16 %v339
    %v3636 = vunpack.c.l.b16 %v340
    %v3637 = vunpack.c.h.b16 %v340
    %v3638 = vunpack.c.l.b16 %v341
    %v3639 = vunpack.c.h.b16 %v341
    %v3640 = vunpack.c.l.b16 %v342
    %v3641 = vunpack.c.h.b16 %v342
    %v3642 = vunpack.c.l.b16 %v343
    %v3643 = vunpack.c.h.b16 %v343
    %v3644 = vunpack.c.l.b16 %v344
    %v3645 = vunpack.c.h.b16 %v344
    %v3646 = vunpack.c.l.b16 %v345
    %v3647 = vunpack.c.h.b16 %v345
    %v3648 = vunpack.c.l.b16 %v346
    %v3649 = vunpack.c.h.b16 %v346
    %v3650 = vunpack.c.l.b16 %v347
    %v3651 = vunpack.c.h.b16 %v347
    %v3652 = vunpack.c.l.b16 %v348
    %v3653 = vunpack.c.h.b16 %v348
    %v3654 = vunpack.c.l.b16 %v349
    %v3655 = vunpack.c.h.b16 %v349
    %v3656 = vunpack.c.l.b16 %v350
    %v3657 = vunpack.c.h.b16 %v350
    %v3658 = vunpack.c.l.b16 %v351
    %v3659 = vunpack.c.h.b16 %v351
    %v3660 = vunpack.c.l.b16 %v352
    %v3661 = vunpack.c.h.b16 %v352
    %v3662 = vunpack.c.l.b16 %v353
    %v3663 = vunpack.c.h.b16 %v353
    %v3664 = vunpack.c.l.b16 %v354
    %v3665 = vunpack.c.h.b16 %v354
    %v3666 = vunpack.c.l.b16 %v355
    %v3667 = vunpack.c.h.b16 %v355
    %v3668 = vunpack.c.l.b16 %v356
    %v3669 = vunpack.c.h.b16 %v356
    %v3670 = vunpack.c.l.b16 %v357
    %v3671 = vunpack.c.h.b16 %v357
    %v3672 = vunpack.c.l.b16 %v358
    %v3673 = vunpack.c.h.b16 %v358
    %v3674 = vunpack.c.l.b16 %v359
    %v3675 = vunpack.c.h.b16 %v359
    %v3676 = vunpack.c.l.b16 %v360
    %v3677 = vunpack.c.h.b16 %v360
    %v3678 = vunpack.c.l.b16 %v361
    %v3679 = vunpack.c.h.b16 %v361
    %v3680 = vunpack.c.l.b16 %v362
    %v3681 = vunpack.c.h.b16 %v362
    %v3682 = vunpack.c.l.b16 %v363
    %v3683 = vunpack.c.h.b16 %v363
    %v3684 = vunpack.c.l.b16 %v364
    %v3685 = vunpack.c.h.b16 %v364
    %v3686 = vunpack.c.l.b16 %v365
    %v3687 = vunpack.c.h.b16 %v365
    %v3688 = vunpack.c.l.b16 %v366
    %v3689 = vunpack.c.h.b16 %v366
    %v3690 = vunpack.c.l.b16 %v367
    %v3691 = vunpack.c.h.b16 %v367
    %v3692 = vunpack.c.l.b16 %v368
    %v3693 = vunpack.c.h.b16 %v368
    %v3694 = vunpack.c.l.b16 %v369
    %v3695 = vunpack.c.h.b16 %v369
    %v3696 = vunpack.c.l.b16 %v370
    %v3697 = vunpack.c.h.b16 %v370
    %v3698 = vunpack.c.l.b16 %v371
    %v3699 = vunpack.c.h.b16 %v371
    %v3700 = vunpack.c.l.b16 %v372
    %v3701 = vunpack.c.h.b16 %v372
    %v3702 = vunpack.c.l.b16 %v373
    %v3703 = vunpack.c.h.b16 %v373
    %v3704 = vunpack.c.l.b16 %v374
    %v3705 = vunpack.c.h.b16 %v374
    %v3706 = vunpack.c.l.b16 %v375
    %v3707 = vunpack.c.h.b16 %v375
    %v3708 = vunpack.c.l.b16 %v376
    %v3709 = vunpack.c.h.b16 %v376
    %v3710 = vunpack.c.l.b16 %v377
    %v3711 = vunpack.c.h.b16 %v377
    %v3712 = vunpack.c.l.b16 %v378
    %v3713 = vunpack.c.h.b16 %v378
    %v3714 = vunpack.c.l.b16 %v379
    %v3715 = vunpack.c.h.b16 %v379
    %v3716 = vunpack.c.l.b16 %v380
    %v3717 = vunpack.c.h.b16 %v380
    %v3718 = vunpack.c.l.b16 %v381
    %v3719 = vunpack.c.h.b16 %v381
    %v3720 = vunpack.c.l.b16 %v382
    %v3721 = vunpack.c.h.b16 %v382
    %v3722 = vunpack.c.l.b16 %v383
    %v3723 = vunpack.c.h.b16 %v383
    %v3724 = vunpack.c.l.b16 %v384
    %v3725 = vunpack.c.h.b16 %v384
    %v3726 = vunpack.c.l.b16 %v385
    %v3727 = vunpack.c.h.b16 %v385
    %v3728 = vunpack.c.l.b16 %v386
    %v3729 = vunpack.c.h.b16 %v386
    %v3730 = vunpack.c.l.b16 %v387
    %v3731 = vunpack.c.h.b16 %v387
    %v3732 = vunpack.c.l.b16 %v388
    %v3733 = vunpack.c.h.b16 %v388
    %v3734 = vunpack.c.l.b16 %v389
    %v3735 = vunpack.c.h.b16 %v389
    %v3736 = vunpack.c.l.b16 %v390
    %v3737 = vunpack.c.h.b16 %v390
    %v3738 = vunpack.c.l.b16 %v391
    %v3739 = vunpack.c.h.b16 %v391
    %v3740 = vunpack.c.l.b16 %v392
    %v3741 = vunpack.c.h.b16 %v392
    %v3742 = vunpack.c.l.b16 %v393
    %v3743 = vunpack.c.h.b16 %v393
    %v3744 = vunpack.c.l.b16 %v394
    %v3745 = vunpack.c.h.b16 %v394
    %v3746 = vunpack.c.l.b16 %v395
    %v3747 = vunpack.c.h.b16 %v395
    %v3748 = vunpack.c.l.b16 %v396
    %v3749 = vunpack.c.h.b16 %v396
    %v3750 = vunpack.c.l.b16 %v397
    %v3751 = vunpack.c.h.b16 %v397
    %v3752 = vunpack.c.l.b16 %v398
    %v3753 = vunpack.c.h.b16 %v398
    %v3754 = vunpack.c.l.b16 %v399
    %v3755 = vunpack.c.h.b16 %v399
    %v3756 = vunpack.c.l.b16 %v400
    %v3757 = vunpack.c.h.b16 %v400
    %v3758 = vunpack.c.l.b16 %v401
    %v3759 = vunpack.c.h.b16 %v401
    %v3760 = vunpack.c.l.b16 %v402
    %v3761 = vunpack.c.h.b16 %v402
    %v3762 = vunpack.c.l.b16 %v403
    %v3763 = vunpack.c.h.b16 %v403
    %v3764 = vunpack.c.l.b16 %v404
    %v3765 = vunpack.c.h.b16 %v404
    %v3766 = vunpack.c.l.b16 %v405
    %v3767 = vunpack.c.h.b16 %v405
    %v3768 = vunpack.c.l.b16 %v406
    %v3769 = vunpack.c.h.b16 %v406
    %v3770 = vunpack.c.l.b16 %v407
    %v3771 = vunpack.c.h.b16 %v407
    %v3772 = vunpack.c.l.b16 %v408
    %v3773 = vunpack.c.h.b16 %v408
    %v3774 = vunpack.c.l.b16 %v409
    %v3775 = vunpack.c.h.b16 %v409
    %v3776 = vunpack.c.l.b16 %v410
    %v3777 = vunpack.c.h.b16 %v410
    %v3778 = vunpack.c.l.b16 %v411
    %v3779 = vunpack.c.h.b16 %v411
    %v3780 = vunpack.c.l.b16 %v412
    %v3781 = vunpack.c.h.b16 %v412
    %v3782 = vunpack.c.l.b16 %v413
    %v3783 = vunpack.c.h.b16 %v413
    %v3784 = vunpack.c.l.b16 %v414
    %v3785 = vunpack.c.h.b16 %v414
    %v3786 = vunpack.c.l.b16 %v415
    %v3787 = vunpack.c.h.b16 %v415
    %v3788 = vunpack.c.l.b16 %v416
    %v3789 = vunpack.c.h.b16 %v416
    %v3790 = vunpack.c.l.b16 %v417
    %v3791 = vunpack.c.h.b16 %v417
    %v3792 = vunpack.c.l.b16 %v418
    %v3793 = vunpack.c.h.b16 %v418
    %v3794 = vunpack.c.l.b16 %v419
    %v3795 = vunpack.c.h.b16 %v419
    %v3796 = vunpack.c.l.b16 %v420
    %v3797 = vunpack.c.h.b16 %v420
    %v3798 = vunpack.c.l.b16 %v421
    %v3799 = vunpack.c.h.b16 %v421
    %v3800 = vunpack.c.l.b16 %v422
    %v3801 = vunpack.c.h.b16 %v422
    %v3802 = vunpack.c.l.b16 %v423
    %v3803 = vunpack.c.h.b16 %v423
    %v3804 = vunpack.c.l.b16 %v424
    %v3805 = vunpack.c.h.b16 %v424
    %v3806 = vunpack.c.l.b16 %v425
    %v3807 = vunpack.c.h.b16 %v425
    %v3808 = vunpack.c.l.b16 %v426
    %v3809 = vunpack.c.h.b16 %v426
    %v3810 = vunpack.c.l.b16 %v427
    %v3811 = vunpack.c.h.b16 %v427
    %v3812 = vunpack.c.l.b16 %v428
    %v3813 = vunpack.c.h.b16 %v428
    %v3814 = vunpack.c.l.b16 %v429
    %v3815 = vunpack.c.h.b16 %v429
    %v3816 = vunpack.c.l.b16 %v430
    %v3817 = vunpack.c.h.b16 %v430
    %v3818 = vunpack.c.l.b16 %v431
    %v3819 = vunpack.c.h.b16 %v431
    %v3820 = vunpack.c.l.b16 %v432
    %v3821 = vunpack.c.h.b16 %v432
    %v3822 = vunpack.c.l.b16 %v433
    %v3823 = vunpack.c.h.b16 %v433
    %v3824 = vunpack.c.l.b16 %v434
    %v3825 = vunpack.c.h.b16 %v434
    %v3826 = vunpack.c.l.b16 %v435
    %v3827 = vunpack.c.h.b16 %v435
    %v3828 = vunpack.c.l.b16 %v436
    %v3829 = vunpack.c.h.b16 %v436
    %v3830 = vunpack.c.l.b16 %v437
    %v3831 = vunpack.c.h.b16 %v437
    %v3832 = vunpack.c.l.b16 %v438
    %v3833 = vunpack.c.h.b16 %v438
    %v3834 = vunpack.c.l.b16 %v439
    %v3835 = vunpack.c.h.b16 %v439
    %v3836 = vunpack.c.l.b16 %v440
    %v3837 = vunpack.c.h.b16 %v440
    %v3838 = vunpack.c.l.b16 %v441
    %v3839 = vunpack.c.h.b16 %v441
    %v3840 = vunpack.c.l.b16 %v442
    %v3841 = vunpack.c.h.b16 %v442
    %v3842 = vunpack.c.l.b16 %v443
    %v3843 = vunpack.c.h.b16 %v443
    %v3844 = vunpack.c.l.b16 %v444
    %v3845 = vunpack.c.h.b16 %v444
    %v3846 = vunpack.c.l.b16 %v445
    %v3847 = vunpack.c.h.b16 %v445
    %v3848 = vunpack.c.l.b16 %v446
    %v3849 = vunpack.c.h.b16 %v446
    %v3850 = vunpack.c.l.b16 %v447
    %v3851 = vunpack.c.h.b16 %v447
    %v3852 = vunpack.c.l.b16 %v448
    %v3853 = vunpack.c.h.b16 %v448
    %v3854 = vunpack.c.l.b16 %v449
    %v3855 = vunpack.c.h.b16 %v449
    %v3856 = vunpack.c.l.b16 %v450
    %v3857 = vunpack.c.h.b16 %v450
    %v3858 = vunpack.c.l.b16 %v451
    %v3859 = vunpack.c.h.b16 %v451
    %v3860 = vunpack.c.l.b16 %v452
    %v3861 = vunpack.c.h.b16 %v452
    %v3862 = vunpack.c.l.b16 %v453
    %v3863 = vunpack.c.h.b16 %v453
    %v3864 = vunpack.c.l.b16 %v454
    %v3865 = vunpack.c.h.b16 %v454
    %v3866 = vunpack.c.l.b16 %v455
    %v3867 = vunpack.c.h.b16 %v455
    %v3868 = vunpack.c.l.b16 %v456
    %v3869 = vunpack.c.h.b16 %v456
    %v3870 = vunpack.c.l.b16 %v457
    %v3871 = vunpack.c.h.b16 %v457
    %v3872 = vunpack.c.l.b16 %v458
    %v3873 = vunpack.c.h.b16 %v458
    %v3874 = vunpack.c.l.b16 %v459
    %v3875 = vunpack.c.h.b16 %v459
    %v3876 = vunpack.c.l.b16 %v460
    %v3877 = vunpack.c.h.b16 %v460
    %v3878 = vunpack.c.l.b16 %v461
    %v3879 = vunpack.c.h.b16 %v461
    %v3880 = vunpack.c.l.b16 %v462
    %v3881 = vunpack.c.h.b16 %v462
    %v3882 = vunpack.c.l.b16 %v463
    %v3883 = vunpack.c.h.b16 %v463
    %v3884 = vunpack.c.l.b16 %v464
    %v3885 = vunpack.c.h.b16 %v464
    %v3886 = vunpack.c.l.b16 %v465
    %v3887 = vunpack.c.h.b16 %v465
    %v3888 = vunpack.c.l.b16 %v466
    %v3889 = vunpack.c.h.b16 %v466
    %v3890 = vunpack.c.l.b16 %v467
    %v3891 = vunpack.c.h.b16 %v467
    %v3892 = vunpack.c.l.b16 %v468
    %v3893 = vunpack.c.h.b16 %v468
    %v3894 = vunpack.c.l.b16 %v469
    %v3895 = vunpack.c.h.b16 %v469
    %v3896 = vunpack.c.l.b16 %v470
    %v3897 = vunpack.c.h.b16 %v470
    %v3898 = vunpack.c.l.b16 %v471
    %v3899 = vunpack.c.h.b16 %v471
    %v3900 = vunpack.c.l.b16 %v472
    %v3901 = vunpack.c.h.b16 %v472
    %v3902 = vunpack.c.l.b16 %v473
    %v3903 = vunpack.c.h.b16 %v473
    %v3904 = vunpack.c.l.b16 %v474
    %v3905 = vunpack.c.h.b16 %v474
    %v3906 = vunpack.c.l.b16 %v475
    %v3907 = vunpack.c.h.b16 %v475
    %v3908 = vunpack.c.l.b16 %v476
    %v3909 = vunpack.c.h.b16 %v476
    %v3910 = vunpack.c.l.b16 %v477
    %v3911 = vunpack.c.h.b16 %v477
    %v3912 = vunpack.c.l.b16 %v478
    %v3913 = vunpack.c.h.b16 %v478
    %v3914 = vunpack.c.l.b16 %v479
    %v3915 = vunpack.c.h.b16 %v479
    %v3916 = vunpack.c.l.b16 %v480
    %v3917 = vunpack.c.h.b16 %v480
    %v3918 = vunpack.c.l.b16 %v481
    %v3919 = vunpack.c.h.b16 %v481
    %v3920 = vunpack.c.l.b16 %v482
    %v3921 = vunpack.c.h.b16 %v482
    %v3922 = vunpack.c.l.b16 %v483
    %v3923 = vunpack.c.h.b16 %v483
    %v3924 = vunpack.c.l.b16 %v484
    %v3925 = vunpack.c.h.b16 %v484
    %v3926 = vunpack.c.l.b16 %v485
    %v3927 = vunpack.c.h.b16 %v485
    %v3928 = vunpack.c.l.b16 %v486
    %v3929 = vunpack.c.h.b16 %v486
    %v3930 = vunpack.c.l.b16 %v487
    %v3931 = vunpack.c.h.b16 %v487
    %v3932 = vunpack.c.l.b16 %v488
    %v3933 = vunpack.c.h.b16 %v488
    %v3934 = vunpack.c.l.b16 %v489
    %v3935 = vunpack.c.h.b16 %v489
    %v3936 = vunpack.c.l.b16 %v490
    %v3937 = vunpack.c.h.b16 %v490
    %v3938 = vunpack.c.l.b16 %v491
    %v3939 = vunpack.c.h.b16 %v491
    %v3940 = vunpack.c.l.b16 %v492
    %v3941 = vunpack.c.h.b16 %v492
    %v3942 = vunpack.c.l.b16 %v493
    %v3943 = vunpack.c.h.b16 %v493
    %v3944 = vunpack.c.l.b16 %v494
    %v3945 = vunpack.c.h.b16 %v494
    %v3946 = vunpack.c.l.b16 %v495
    %v3947 = vunpack.c.h.b16 %v495
    %v3948 = vunpack.c.l.b16 %v496
    %v3949 = vunpack.c.h.b16 %v496
    %v3950 = vunpack.c.l.b16 %v497
    %v3951 = vunpack.c.h.b16 %v497
    %v3952 = vunpack.c.l.b16 %v498
    %v3953 = vunpack.c.h.b16 %v498
    %v3954 = vunpack.c.l.b16 %v499
    %v3955 = vunpack.c.h.b16 %v499
    %v3956 = vunpack.c.l.b16 %v500
    %v3957 = vunpack.c.h.b16 %v500
    %v3958 = vunpack.c.l.b16 %v501
    %v3959 = vunpack.c.h.b16 %v501
    %v3960 = vunpack.c.l.b16 %v502
    %v3961 = vunpack.c.h.b16 %v502
    %v3962 = vunpack.c.l.b16 %v503
    %v3963 = vunpack.c.h.b16 %v503
    %v3964 = vunpack.c.l.b16 %v504
    %v3965 = vunpack.c.h.b16 %v504
    %v3966 = vunpack.c.l.b16 %v505
    %v3967 = vunpack.c.h.b16 %v505
    %v3968 = vunpack.c.l.b16 %v506
    %v3969 = vunpack.c.h.b16 %v506
    %v3970 = vunpack.c.l.b16 %v507
    %v3971 = vunpack.c.h.b16 %v507
    %v3972 = vunpack.c.l.b16 %v508
    %v3973 = vunpack.c.h.b16 %v508
    %v3974 = vunpack.c.l.b16 %v509
    %v3975 = vunpack.c.h.b16 %v509
    %v3976 = vunpack.c.l.b16 %v510
    %v3977 = vunpack.c.h.b16 %v510
    %v3978 = vunpack.c.l.b16 %v511
    %v3979 = vunpack.c.h.b16 %v511
    %v3980 = vunpack.c.l.b16 %v512
    %v3981 = vunpack.c.h.b16 %v512
    %v3982 = vunpack.c.l.b16 %v513
    %v3983 = vunpack.c.h.b16 %v513
    %v3984 = vunpack.c.l.b16 %v514
    %v3985 = vunpack.c.h.b16 %v514
    %v3986 = vunpack.c.l.b16 %v515
    %v3987 = vunpack.c.h.b16 %v515
    %v3988 = vunpack.c.l.b16 %v516
    %v3989 = vunpack.c.h.b16 %v516
    %v3990 = vunpack.c.l.b16 %v517
    %v3991 = vunpack.c.h.b16 %v517
    %v3992 = vunpack.c.l.b16 %v518
    %v3993 = vunpack.c.h.b16 %v518
    %v3994 = vunpack.c.l.b16 %v519
    %v3995 = vunpack.c.h.b16 %v519
    %v3996 = vunpack.c.l.b16 %v520
    %v3997 = vunpack.c.h.b16 %v520
    %v3998 = vunpack.c.l.b16 %v521
    %v3999 = vunpack.c.h.b16 %v521
    %v4000 = vunpack.c.l.b16 %v522
    %v4001 = vunpack.c.h.b16 %v522
    %v4002 = vunpack.c.l.b16 %v523
    %v4003 = vunpack.c.h.b16 %v523
    %v4004 = vunpack.c.l.b16 %v524
    %v4005 = vunpack.c.h.b16 %v524
    %v4006 = vunpack.c.l.b16 %v525
    %v4007 = vunpack.c.h.b16 %v525
    %v4008 = vunpack.c.l.b16 %v526
    %v4009 = vunpack.c.h.b16 %v526
    %v4010 = vunpack.c.l.b16 %v527
    %v4011 = vunpack.c.h.b16 %v527
    %v4012 = vunpack.c.l.b16 %v528
    %v4013 = vunpack.c.h.b16 %v528
    %v4014 = vunpack.c.l.b16 %v529
    %v4015 = vunpack.c.h.b16 %v529
    %v4016 = vunpack.c.l.b16 %v530
    %v4017 = vunpack.c.h.b16 %v530
    %v4018 = vunpack.c.l.b16 %v531
    %v4019 = vunpack.c.h.b16 %v531
    %v4020 = vunpack.c.l.b16 %v532
    %v4021 = vunpack.c.h.b16 %v532
    %v4022 = vunpack.c.l.b16 %v533
    %v4023 = vunpack.c.h.b16 %v533
    %v4024 = vunpack.c.l.b16 %v534
    %v4025 = vunpack.c.h.b16 %v534
    %v4026 = vunpack.c.l.b16 %v535
    %v4027 = vunpack.c.h.b16 %v535
    %v4028 = vunpack.c.l.b16 %v536
    %v4029 = vunpack.c.h.b16 %v536
    %v4030 = vunpack.c.l.b16 %v537
    %v4031 = vunpack.c.h.b16 %v537
    %v4032 = vunpack.c.l.b16 %v538
    %v4033 = vunpack.c.h.b16 %v538
    %v4034 = vunpack.c.l.b16 %v539
    %v4035 = vunpack.c.h.b16 %v539
    %v4036 = vunpack.c.l.b16 %v540
    %v4037 = vunpack.c.h.b16 %v540
    %v4038 = vunpack.c.l.b16 %v541
    %v4039 = vunpack.c.h.b16 %v541
    %v4040 = vunpack.c.l.b16 %v542
    %v4041 = vunpack.c.h.b16 %v542
    %v4042 = vunpack.c.l.b16 %v543
    %v4043 = vunpack.c.h.b16 %v543
    %v4044 = vunpack.c.l.b16 %v544
    %v4045 = vunpack.c.h.b16 %v544
    %v4046 = vunpack.c.l.b16 %v545
    %v4047 = vunpack.c.h.b16 %v545
    %v4048 = vunpack.c.l.b16 %v546
    %v4049 = vunpack.c.h.b16 %v546
    %v4050 = vunpack.c.l.b16 %v547
    %v4051 = vunpack.c.h.b16 %v547
    %v4052 = vunpack.c.l.b16 %v548
    %v4053 = vunpack.c.h.b16 %v548
    %v4054 = vunpack.c.l.b16 %v549
    %v4055 = vunpack.c.h.b16 %v549
    %v4056 = vunpack.c.l.b16 %v550
    %v4057 = vunpack.c.h.b16 %v550
    %v4058 = vunpack.c.l.b16 %v551
    %v4059 = vunpack.c.h.b16 %v551
    %v4060 = vunpack.c.l.b16 %v552
    %v4061 = vunpack.c.h.b16 %v552
    %v4062 = vunpack.c.l.b16 %v553
    %v4063 = vunpack.c.h.b16 %v553
    %v4064 = vunpack.c.l.b16 %v554
    %v4065 = vunpack.c.h.b16 %v554
    %v4066 = vunpack.c.l.b16 %v555
    %v4067 = vunpack.c.h.b16 %v555
    %v4068 = vunpack.c.l.b16 %v556
    %v4069 = vunpack.c.h.b16 %v556
    %v4070 = vunpack.c.l.b16 %v557
    %v4071 = vunpack.c.h.b16 %v557
    %v4072 = vunpack.c.l.b16 %v558
    %v4073 = vunpack.c.h.b16 %v558
    %v4074 = vunpack.c.l.b16 %v559
    %v4075 = vunpack.c.h.b16 %v559
    %v4076 = vunpack.c.l.b16 %v560
    %v4077 = vunpack.c.h.b16 %v560
    %v4078 = vunpack.c.l.b16 %v561
    %v4079 = vunpack.c.h.b16 %v561
    %v4080 = vunpack.c.l.b16 %v562
    %v4081 = vunpack.c.h.b16 %v562
    %v4082 = vunpack.c.l.b16 %v563
    %v4083 = vunpack.c.h.b16 %v563
    %v4084 = vunpack.c.l.b16 %v564
    %v4085 = vunpack.c.h.b16 %v564
    %v4086 = vunpack.c.l.b16 %v565
    %v4087 = vunpack.c.h.b16 %v565
    %v4088 = vunpack.c.l.b16 %v566
    %v4089 = vunpack.c.h.b16 %v566
    %v4090 = vunpack.c.l.b16 %v567
    %v4091 = vunpack.c.h.b16 %v567
    %v4092 = vunpack.c.l.b16 %v568
    %v4093 = vunpack.c.h.b16 %v568
    %v4094 = vunpack.c.l.b16 %v569
    %v4095 = vunpack.c.h.b16 %v569
    %v4096 = vunpack.c.l.b16 %v570
    %v4097 = vunpack.c.h.b16 %v570
    %v4098 = vunpack.c.l.b16 %v571
    %v4099 = vunpack.c.h.b16 %v571
    %v4100 = vunpack.c.l.b16 %v572
    %v4101 = vunpack.c.h.b16 %v572
    %v4102 = vunpack.c.l.b16 %v573
    %v4103 = vunpack.c.h.b16 %v573
    %v4104 = vunpack.c.l.b16 %v574
    %v4105 = vunpack.c.h.b16 %v574
    %v4106 = vunpack.c.l.b16 %v575
    %v4107 = vunpack.c.h.b16 %v575
    %v4108 = vunpack.c.l.b16 %v576
    %v4109 = vunpack.c.h.b16 %v576
    %v4110 = vunpack.c.l.b16 %v577
    %v4111 = vunpack.c.h.b16 %v577
    %v4112 = vunpack.c.l.b16 %v578
    %v4113 = vunpack.c.h.b16 %v578
    %v4114 = vunpack.c.l.b16 %v579
    %v4115 = vunpack.c.h.b16 %v579
    %v4116 = vunpack.c.l.b16 %v580
    %v4117 = vunpack.c.h.b16 %v580
    %v4118 = vunpack.c.l.b16 %v581
    %v4119 = vunpack.c.h.b16 %v581
    %v4120 = vunpack.c.l.b16 %v582
    %v4121 = vunpack.c.h.b16 %v582
    %v4122 = vunpack.c.l.b16 %v583
    %v4123 = vunpack.c.h.b16 %v583
    %v4124 = vunpack.c.l.b16 %v584
    %v4125 = vunpack.c.h.b16 %v584
    %v4126 = vunpack.c.l.b16 %v585
    %v4127 = vunpack.c.h.b16 %v585
    %v4128 = vunpack.c.l.b16 %v586
    %v4129 = vunpack.c.h.b16 %v586
    %v4130 = vunpack.c.l.b16 %v587
    %v4131 = vunpack.c.h.b16 %v587
    %v4132 = vunpack.c.l.b16 %v588
    %v4133 = vunpack.c.h.b16 %v588
    %v4134 = vunpack.c.l.b16 %v589
    %v4135 = vunpack.c.h.b16 %v589
    %v4136 = vunpack.c.l.b16 %v590
    %v4137 = vunpack.c.h.b16 %v590
    %v4138 = vunpack.c.l.b16 %v591
    %v4139 = vunpack.c.h.b16 %v591
    %v4140 = vunpack.c.l.b16 %v592
    %v4141 = vunpack.c.h.b16 %v592
    %v4142 = vunpack.c.l.b16 %v593
    %v4143 = vunpack.c.h.b16 %v593
    %v4144 = vunpack.c.l.b16 %v594
    %v4145 = vunpack.c.h.b16 %v594
    %v4146 = vunpack.c.l.b16 %v595
    %v4147 = vunpack.c.h.b16 %v595
    %v4148 = vunpack.c.l.b16 %v596
    %v4149 = vunpack.c.h.b16 %v596
    %v4150 = vunpack.c.l.b16 %v597
    %v4151 = vunpack.c.h.b16 %v597
    %v4152 = vunpack.c.l.b16 %v598
    %v4153 = vunpack.c.h.b16 %v598
    %v4154 = vunpack.c.l.b16 %v599
    %v4155 = vunpack.c.h.b16 %v599
    %v4156 = vunpack.c.l.b16 %v600
    %v4157 = vunpack.c.h.b16 %v600
    %v4158 = vunpack.c.l.b16 %v601
    %v4159 = vunpack.c.h.b16 %v601
    %v4160 = vunpack.c.l.b16 %v602
    %v4161 = vunpack.c.h.b16 %v602
    %v4162 = vunpack.c.l.b16 %v603
    %v4163 = vunpack.c.h.b16 %v603
    %v4164 = vunpack.c.l.b16 %v604
    %v4165 = vunpack.c.h.b16 %v604
    %v4166 = vunpack.c.l.b16 %v605
    %v4167 = vunpack.c.h.b16 %v605
    %v4168 = vunpack.c.l.b16 %v606
    %v4169 = vunpack.c.h.b16 %v606
    %v4170 = vunpack.c.l.b16 %v607
    %v4171 = vunpack.c.h.b16 %v607
    %v4172 = vunpack.c.l.b16 %v608
    %v4173 = vunpack.c.h.b16 %v608
    %v4174 = vunpack.c.l.b16 %v609
    %v4175 = vunpack.c.h.b16 %v609
    %v4176 = vunpack.c.l.b16 %v610
    %v4177 = vunpack.c.h.b16 %v610
    %v4178 = vunpack.c.l.b16 %v611
    %v4179 = vunpack.c.h.b16 %v611
    %v4180 = vunpack.c.l.b16 %v612
    %v4181 = vunpack.c.h.b16 %v612
    %v4182 = vunpack.c.l.b16 %v613
    %v4183 = vunpack.c.h.b16 %v613
    %v4184 = vunpack.c.l.b16 %v614
    %v4185 = vunpack.c.h.b16 %v614
    %v4186 = vunpack.c.l.b16 %v615
    %v4187 = vunpack.c.h.b16 %v615
    %v4188 = vunpack.c.l.b16 %v616
    %v4189 = vunpack.c.h.b16 %v616
    %v4190 = vunpack.c.l.b16 %v617
    %v4191 = vunpack.c.h.b16 %v617
    %v4192 = vunpack.c.l.b16 %v618
    %v4193 = vunpack.c.h.b16 %v618
    %v4194 = vunpack.c.l.b16 %v619
    %v4195 = vunpack.c.h.b16 %v619
    %v4196 = vunpack.c.l.b16 %v620
    %v4197 = vunpack.c.h.b16 %v620
    %v4198 = vunpack.c.l.b16 %v621
    %v4199 = vunpack.c.h.b16 %v621
    %v4200 = vunpack.c.l.b16 %v622
    %v4201 = vunpack.c.h.b16 %v622
    %v4202 = vunpack.c.l.b16 %v623
    %v4203 = vunpack.c.h.b16 %v623
    %v4204 = vunpack.c.l.b16 %v624
    %v4205 = vunpack.c.h.b16 %v624
    %v4206 = vunpack.c.l.b16 %v625
    %v4207 = vunpack.c.h.b16 %v625
    %v4208 = vunpack.c.l.b16 %v626
    %v4209 = vunpack.c.h.b16 %v626
    %v4210 = vunpack.c.l.b16 %v627
    %v4211 = vunpack.c.h.b16 %v627
    %v4212 = vunpack.c.l.b16 %v628
    %v4213 = vunpack.c.h.b16 %v628
    %v4214 = vunpack.c.l.b16 %v629
    %v4215 = vunpack.c.h.b16 %v629
    %v4216 = vunpack.c.l.b16 %v630
    %v4217 = vunpack.c.h.b16 %v630
    %v4218 = vunpack.c.l.b16 %v631
    %v4219 = vunpack.c.h.b16 %v631
    %v4220 = vunpack.c.l.b16 %v632
    %v4221 = vunpack.c.h.b16 %v632
    %v4222 = vunpack.c.l.b16 %v633
    %v4223 = vunpack.c.h.b16 %v633
    %v4224 = vunpack.c.l.b16 %v634
    %v4225 = vunpack.c.h.b16 %v634
    %v4226 = vunpack.c.l.b16 %v635
    %v4227 = vunpack.c.h.b16 %v635
    %v4228 = vunpack.c.l.b16 %v636
    %v4229 = vunpack.c.h.b16 %v636
    %v4230 = vunpack.c.l.b16 %v637
    %v4231 = vunpack.c.h.b16 %v637
    %v4232 = vunpack.c.l.b16 %v638
    %v4233 = vunpack.c.h.b16 %v638
    %v4234 = vunpack.c.l.b16 %v639
    %v4235 = vunpack.c.h.b16 %v639
    %v4236 = vunpack.c.l.b16 %v640
    %v4237 = vunpack.c.h.b16 %v640
    %v4238 = vunpack.c.l.b16 %v641
    %v4239 = vunpack.c.h.b16 %v641
    %v4240 = vunpack.c.l.b16 %v642
    %v4241 = vunpack.c.h.b16 %v642
    %v4242 = vunpack.c.l.b16 %v643
    %v4243 = vunpack.c.h.b16 %v643
    %v4244 = vunpack.c.l.b16 %v644
    %v4245 = vunpack.c.h.b16 %v644
    %v4246 = vunpack.c.l.b16 %v645
    %v4247 = vunpack.c.h.b16 %v645
    %v4248 = vunpack.c.l.b16 %v646
    %v4249 = vunpack.c.h.b16 %v646
    %v4250 = vunpack.c.l.b16 %v647
    %v4251 = vunpack.c.h.b16 %v647
    %v4252 = vunpack.c.l.b16 %v648
    %v4253 = vunpack.c.h.b16 %v648
    %v4254 = vunpack.c.l.b16 %v649
    %v4255 = vunpack.c.h.b16 %v649
    %v4256 = vunpack.c.l.b16 %v650
    %v4257 = vunpack.c.h.b16 %v650
    %v4258 = vunpack.c.l.b16 %v651
    %v4259 = vunpack.c.h.b16 %v651
    %v4260 = vunpack.c.l.b16 %v652
    %v4261 = vunpack.c.h.b16 %v652
    %v4262 = vunpack.c.l.b16 %v653
    %v4263 = vunpack.c.h.b16 %v653
    %v4264 = vunpack.c.l.b16 %v654
    %v4265 = vunpack.c.h.b16 %v654
    %v4266 = vunpack.c.l.b16 %v655
    %v4267 = vunpack.c.h.b16 %v655
    %v4268 = vunpack.c.l.b16 %v656
    %v4269 = vunpack.c.h.b16 %v656
    %v4270 = vunpack.c.l.b16 %v657
    %v4271 = vunpack.c.h.b16 %v657
    %v4272 = vunpack.c.l.b16 %v658
    %v4273 = vunpack.c.h.b16 %v658
    %v4274 = vunpack.c.l.b16 %v659
    %v4275 = vunpack.c.h.b16 %v659
    %v4276 = vunpack.c.l.b16 %v660
    %v4277 = vunpack.c.h.b16 %v660
    %v4278 = vunpack.c.l.b16 %v661
    %v4279 = vunpack.c.h.b16 %v661
    %v4280 = vunpack.c.l.b16 %v662
    %v4281 = vunpack.c.h.b16 %v662
    %v4282 = vunpack.c.l.b16 %v663
    %v4283 = vunpack.c.h.b16 %v663
    %v4284 = vunpack.c.l.b16 %v664
    %v4285 = vunpack.c.h.b16 %v664
    %v4286 = vunpack.c.l.b16 %v665
    %v4287 = vunpack.c.h.b16 %v665
    %v4288 = vunpack.c.l.b16 %v666
    %v4289 = vunpack.c.h.b16 %v666
    %v4290 = vunpack.c.l.b16 %v667
    %v4291 = vunpack.c.h.b16 %v667
    %v4292 = vunpack.c.l.b16 %v668
    %v4293 = vunpack.c.h.b16 %v668
    %v4294 = vunpack.c.l.b16 %v669
    %v4295 = vunpack.c.h.b16 %v669
    %v4296 = vunpack.c.l.b16 %v670
    %v4297 = vunpack.c.h.b16 %v670
    %v4298 = vunpack.c.l.b16 %v671
    %v4299 = vunpack.c.h.b16 %v671
    %v4300 = vunpack.c.l.b16 %v672
    %v4301 = vunpack.c.h.b16 %v672
    %v4302 = vunpack.c.l.b16 %v673
    %v4303 = vunpack.c.h.b16 %v673
    %v4304 = vunpack.c.l.b16 %v674
    %v4305 = vunpack.c.h.b16 %v674
    %v4306 = vunpack.c.l.b16 %v675
    %v4307 = vunpack.c.h.b16 %v675
    %v4308 = vunpack.c.l.b16 %v676
    %v4309 = vunpack.c.h.b16 %v676
    %v4310 = vunpack.c.l.b16 %v677
    %v4311 = vunpack.c.h.b16 %v677
    %v4312 = vunpack.c.l.b16 %v678
    %v4313 = vunpack.c.h.b16 %v678
    %v4314 = vunpack.c.l.b16 %v679
    %v4315 = vunpack.c.h.b16 %v679
    %v4316 = vunpack.c.l.b16 %v680
    %v4317 = vunpack.c.h.b16 %v680
    %v4318 = vunpack.c.l.b16 %v681
    %v4319 = vunpack.c.h.b16 %v681
    %v4320 = vunpack.c.l.b16 %v682
    %v4321 = vunpack.c.h.b16 %v682
    %v4322 = vunpack.c.l.b16 %v683
    %v4323 = vunpack.c.h.b16 %v683
    %v4324 = vunpack.c.l.b16 %v684
    %v4325 = vunpack.c.h.b16 %v684
    %v4326 = vunpack.c.l.b16 %v685
    %v4327 = vunpack.c.h.b16 %v685
    %v4328 = vunpack.c.l.b16 %v686
    %v4329 = vunpack.c.h.b16 %v686
    %v4330 = vunpack.c.l.b16 %v687
    %v4331 = vunpack.c.h.b16 %v687
    %v4332 = vunpack.c.l.b16 %v688
    %v4333 = vunpack.c.h.b16 %v688
    %v4334 = vunpack.c.l.b16 %v689
    %v4335 = vunpack.c.h.b16 %v689
    %v4336 = vunpack.c.l.b16 %v690
    %v4337 = vunpack.c.h.b16 %v690
    %v4338 = vunpack.c.l.b16 %v691
    %v4339 = vunpack.c.h.b16 %v691
    %v4340 = vunpack.c.l.b16 %v692
    %v4341 = vunpack.c.h.b16 %v692
    %v4342 = vunpack.c.l.b16 %v693
    %v4343 = vunpack.c.h.b16 %v693
    %v4344 = vunpack.c.l.b16 %v694
    %v4345 = vunpack.c.h.b16 %v694
    %v4346 = vunpack.c.l.b16 %v695
    %v4347 = vunpack.c.h.b16 %v695
    %v4348 = vunpack.c.l.b16 %v696
    %v4349 = vunpack.c.h.b16 %v696
    %v4350 = vunpack.c.l.b16 %v697
    %v4351 = vunpack.c.h.b16 %v697
    %v4352 = vunpack.c.l.b16 %v698
    %v4353 = vunpack.c.h.b16 %v698
    %v4354 = vunpack.c.l.b16 %v699
    %v4355 = vunpack.c.h.b16 %v699
    %v4356 = vunpack.c.l.b16 %v700
    %v4357 = vunpack.c.h.b16 %v700
    %v4358 = vunpack.c.l.b16 %v701
    %v4359 = vunpack.c.h.b16 %v701
    %v4360 = vunpack.c.l.b16 %v702
    %v4361 = vunpack.c.h.b16 %v702
    %v4362 = vunpack.c.l.b16 %v703
    %v4363 = vunpack.c.h.b16 %v703
    %v4364 = vunpack.c.l.b16 %v704
    %v4365 = vunpack.c.h.b16 %v704
    %v4366 = vunpack.c.l.b16 %v705
    %v4367 = vunpack.c.h.b16 %v705
    %v4368 = vunpack.c.l.b16 %v706
    %v4369 = vunpack.c.h.b16 %v706
    %v4370 = vunpack.c.l.b16 %v707
    %v4371 = vunpack.c.h.b16 %v707
    %v4372 = vunpack.c.l.b16 %v708
    %v4373 = vunpack.c.h.b16 %v708
    %v4374 = vunpack.c.l.b16 %v709
    %v4375 = vunpack.c.h.b16 %v709
    %v4376 = vunpack.c.l.b16 %v710
    %v4377 = vunpack.c.h.b16 %v710
    %v4378 = vunpack.c.l.b16 %v711
    %v4379 = vunpack.c.h.b16 %v711
    %v4380 = vunpack.c.l.b16 %v712
    %v4381 = vunpack.c.h.b16 %v712
    %v4382 = vunpack.c.l.b16 %v713
    %v4383 = vunpack.c.h.b16 %v713
    %v4384 = vunpack.c.l.b16 %v714
    %v4385 = vunpack.c.h.b16 %v714
    %v4386 = vunpack.c.l.b16 %v715
    %v4387 = vunpack.c.h.b16 %v715
    %v4388 = vunpack.c.l.b16 %v716
    %v4389 = vunpack.c.h.b16 %v716
    %v4390 = vunpack.c.l.b16 %v717
    %v4391 = vunpack.c.h.b16 %v717
    %v4392 = vunpack.c.l.b16 %v718
    %v4393 = vunpack.c.h.b16 %v718
    %v4394 = vunpack.c.l.b16 %v719
    %v4395 = vunpack.c.h.b16 %v719
    %v4396 = vunpack.c.l.b16 %v720
    %v4397 = vunpack.c.h.b16 %v720
    %v4398 = vunpack.c.l.b16 %v721
    %v4399 = vunpack.c.h.b16 %v721
    %v4400 = vunpack.c.l.b16 %v722
    %v4401 = vunpack.c.h.b16 %v722
    %v4402 = vunpack.c.l.b16 %v723
    %v4403 = vunpack.c.h.b16 %v723
    %v4404 = vunpack.c.l.b16 %v724
    %v4405 = vunpack.c.h.b16 %v724
    %v4406 = vunpack.c.l.b16 %v725
    %v4407 = vunpack.c.h.b16 %v725
    %v4408 = vunpack.c.l.b16 %v726
    %v4409 = vunpack.c.h.b16 %v726
    %v4410 = vunpack.c.l.b16 %v727
    %v4411 = vunpack.c.h.b16 %v727
    %v4412 = vunpack.c.l.b16 %v728
    %v4413 = vunpack.c.h.b16 %v728
    %v4414 = vunpack.c.l.b16 %v729
    %v4415 = vunpack.c.h.b16 %v729
    %v4416 = vunpack.c.l.b16 %v730
    %v4417 = vunpack.c.h.b16 %v730
    %v4418 = vunpack.c.l.b16 %v731
    %v4419 = vunpack.c.h.b16 %v731
    %v4420 = vunpack.c.l.b16 %v732
    %v4421 = vunpack.c.h.b16 %v732
    %v4422 = vunpack.c.l.b16 %v733
    %v4423 = vunpack.c.h.b16 %v733
    %v4424 = vunpack.c.l.b16 %v734
    %v4425 = vunpack.c.h.b16 %v734
    %v4426 = vunpack.c.l.b16 %v735
    %v4427 = vunpack.c.h.b16 %v735
    %v4428 = vunpack.c.l.b16 %v736
    %v4429 = vunpack.c.h.b16 %v736
    %v4430 = vunpack.c.l.b16 %v737
    %v4431 = vunpack.c.h.b16 %v737
    %v4432 = vunpack.c.l.b16 %v738
    %v4433 = vunpack.c.h.b16 %v738
    %v4434 = vunpack.c.l.b16 %v739
    %v4435 = vunpack.c.h.b16 %v739
    %v4436 = vunpack.c.l.b16 %v740
    %v4437 = vunpack.c.h.b16 %v740
    %v4438 = vunpack.c.l.b16 %v741
    %v4439 = vunpack.c.h.b16 %v741
    %v4440 = vunpack.c.l.b16 %v742
    %v4441 = vunpack.c.h.b16 %v742
    %v4442 = vunpack.c.l.b16 %v743
    %v4443 = vunpack.c.h.b16 %v743
    %v4444 = vunpack.c.l.b16 %v744
    %v4445 = vunpack.c.h.b16 %v744
    %v4446 = vunpack.c.l.b16 %v745
    %v4447 = vunpack.c.h.b16 %v745
    %v4448 = vunpack.c.l.b16 %v746
    %v4449 = vunpack.c.h.b16 %v746
    %v4450 = vunpack.c.l.b16 %v747
    %v4451 = vunpack.c.h.b16 %v747
    %v4452 = vunpack.c.l.b16 %v748
    %v4453 = vunpack.c.h.b16 %v748
    %v4454 = vunpack.c.l.b16 %v749
    %v4455 = vunpack.c.h.b16 %v749
    %v4456 = vunpack.c.l.b16 %v750
    %v4457 = vunpack.c.h.b16 %v750
    %v4458 = vunpack.c.l.b16 %v751
    %v4459 = vunpack.c.h.b16 %v751
    %v4460 = vunpack.c.l.b16 %v752
    %v4461 = vunpack.c.h.b16 %v752
    %v4462 = vunpack.c.l.b16 %v753
    %v4463 = vunpack.c.h.b16 %v753
    %v4464 = vunpack.c.l.b16 %v754
    %v4465 = vunpack.c.h.b16 %v754
    %v4466 = vunpack.c.l.b16 %v755
    %v4467 = vunpack.c.h.b16 %v755
    %v4468 = vunpack.c.l.b16 %v756
    %v4469 = vunpack.c.h.b16 %v756
    %v4470 = vunpack.c.l.b16 %v757
    %v4471 = vunpack.c.h.b16 %v757
    %v4472 = vunpack.c.l.b16 %v758
    %v4473 = vunpack.c.h.b16 %v758
    %v4474 = vunpack.c.l.b16 %v759
    %v4475 = vunpack.c.h.b16 %v759
    %v4476 = vunpack.c.l.b16 %v760
    %v4477 = vunpack.c.h.b16 %v760
    %v4478 = vunpack.c.l.b16 %v761
    %v4479 = vunpack.c.h.b16 %v761
    %v4480 = vunpack.c.l.b16 %v762
    %v4481 = vunpack.c.h.b16 %v762
    %v4482 = vunpack.c.l.b16 %v763
    %v4483 = vunpack.c.h.b16 %v763
    %v4484 = vunpack.c.l.b16 %v764
    %v4485 = vunpack.c.h.b16 %v764
    %v4486 = vunpack.c.l.b16 %v765
    %v4487 = vunpack.c.h.b16 %v765
    %v4488 = vunpack.c.l.b16 %v766
    %v4489 = vunpack.c.h.b16 %v766
    %v4490 = vunpack.c.l.b16 %v767
    %v4491 = vunpack.c.h.b16 %v767
    %v4492 = vunpack.c.l.b16 %v768
    %v4493 = vunpack.c.h.b16 %v768
    %v4494 = vunpack.c.l.b16 %v769
    %v4495 = vunpack.c.h.b16 %v769
    %v4496 = vunpack.c.l.b16 %v770
    %v4497 = vunpack.c.h.b16 %v770
    %v4498 = vunpack.c.l.b16 %v771
    %v4499 = vunpack.c.h.b16 %v771
    %v4500 = vunpack.c.l.b16 %v772
    %v4501 = vunpack.c.h.b16 %v772
    %v4502 = vunpack.c.l.b16 %v773
    %v4503 = vunpack.c.h.b16 %v773
    %v4504 = vunpack.c.l.b16 %v774
    %v4505 = vunpack.c.h.b16 %v774
    %v4506 = vunpack.c.l.b16 %v775
    %v4507 = vunpack.c.h.b16 %v775
    %v4508 = vunpack.c.l.b16 %v776
    %v4509 = vunpack.c.h.b16 %v776
    %v4510 = vunpack.c.l.b16 %v777
    %v4511 = vunpack.c.h.b16 %v777
    %v4512 = vunpack.c.l.b16 %v778
    %v4513 = vunpack.c.h.b16 %v778
    %v4514 = vunpack.c.l.b16 %v779
    %v4515 = vunpack.c.h.b16 %v779
    %v4516 = vunpack.c.l.b16 %v780
    %v4517 = vunpack.c.h.b16 %v780
    %v4518 = vunpack.c.l.b16 %v781
    %v4519 = vunpack.c.h.b16 %v781
    %v4520 = vunpack.c.l.b16 %v782
    %v4521 = vunpack.c.h.b16 %v782
    %v4522 = vunpack.c.l.b16 %v783
    %v4523 = vunpack.c.h.b16 %v783
    %v4524 = vunpack.c.l.b16 %v784
    %v4525 = vunpack.c.h.b16 %v784
    %v4526 = vunpack.c.l.b16 %v785
    %v4527 = vunpack.c.h.b16 %v785
    %v4528 = vunpack.c.l.b16 %v786
    %v4529 = vunpack.c.h.b16 %v786
    %v4530 = vunpack.c.l.b16 %v787
    %v4531 = vunpack.c.h.b16 %v787
    %v4532 = vunpack.c.l.b16 %v788
    %v4533 = vunpack.c.h.b16 %v788
    %v4534 = vunpack.c.l.b16 %v789
    %v4535 = vunpack.c.h.b16 %v789
    %v4536 = vunpack.c.l.b16 %v790
    %v4537 = vunpack.c.h.b16 %v790
    %v4538 = vunpack.c.l.b16 %v791
    %v4539 = vunpack.c.h.b16 %v791
    %v4540 = vunpack.c.l.b16 %v792
    %v4541 = vunpack.c.h.b16 %v792
    %v4542 = vunpack.c.l.b16 %v793
    %v4543 = vunpack.c.h.b16 %v793
    %v4544 = vunpack.c.l.b16 %v794
    %v4545 = vunpack.c.h.b16 %v794
    %v4546 = vunpack.c.l.b16 %v795
    %v4547 = vunpack.c.h.b16 %v795
    %v4548 = vunpack.c.l.b16 %v796
    %v4549 = vunpack.c.h.b16 %v796
    %v4550 = vunpack.c.l.b16 %v797
    %v4551 = vunpack.c.h.b16 %v797
    %v4552 = vunpack.c.l.b16 %v798
    %v4553 = vunpack.c.h.b16 %v798
    %v4554 = vunpack.c.l.b16 %v799
    %v4555 = vunpack.c.h.b16 %v799
    %v4556 = vunpack.c.l.b16 %v800
    %v4557 = vunpack.c.h.b16 %v800
    %v4558 = vunpack.c.l.b16 %v801
    %v4559 = vunpack.c.h.b16 %v801
    %v4560 = vunpack.c.l.b16 %v802
    %v4561 = vunpack.c.h.b16 %v802
    %v4562 = vunpack.c.l.b16 %v803
    %v4563 = vunpack.c.h.b16 %v803
    %v4564 = vunpack.c.l.b16 %v804
    %v4565 = vunpack.c.h.b16 %v804
    %v4566 = vunpack.c.l.b16 %v805
    %v4567 = vunpack.c.h.b16 %v805
    %v4568 = vunpack.c.l.b16 %v806
    %v4569 = vunpack.c.h.b16 %v806
    %v4570 = vunpack.c.l.b16 %v807
    %v4571 = vunpack.c.h.b16 %v807
    %v4572 = vunpack.c.l.b16 %v808
    %v4573 = vunpack.c.h.b16 %v808
    %v4574 = vunpack.c.l.b16 %v809
    %v4575 = vunpack.c.h.b16 %v809
    %v4576 = vunpack.c.l.b16 %v810
    %v4577 = vunpack.c.h.b16 %v810
    %v4578 = vunpack.c.l.b16 %v811
    %v4579 = vunpack.c.h.b16 %v811
    %v4580 = vunpack.c.l.b16 %v812
    %v4581 = vunpack.c.h.b16 %v812
    %v4582 = vunpack.c.l.b16 %v813
    %v4583 = vunpack.c.h.b16 %v813
    %v4584 = vunpack.c.l.b16 %v814
    %v4585 = vunpack.c.h.b16 %v814
    %v4586 = vunpack.c.l.b16 %v815
    %v4587 = vunpack.c.h.b16 %v815
    %v4588 = vunpack.c.l.b16 %v816
    %v4589 = vunpack.c.h.b16 %v816
    %v4590 = vunpack.c.l.b16 %v817
    %v4591 = vunpack.c.h.b16 %v817
    %v4592 = vunpack.c.l.b16 %v818
    %v4593 = vunpack.c.h.b16 %v818
    %v4594 = vunpack.c.l.b16 %v819
    %v4595 = vunpack.c.h.b16 %v819
    %v4596 = vunpack.c.l.b16 %v820
    %v4597 = vunpack.c.h.b16 %v820
    %v4598 = vunpack.c.l.b16 %v821
    %v4599 = vunpack.c.h.b16 %v821
    %v4600 = vunpack.c.l.b16 %v822
    %v4601 = vunpack.c.h.b16 %v822
    %v4602 = vunpack.c.l.b16 %v823
    %v4603 = vunpack.c.h.b16 %v823
    %v4604 = vunpack.c.l.b16 %v824
    %v4605 = vunpack.c.h.b16 %v824
    %v4606 = vunpack.c.l.b16 %v825
    %v4607 = vunpack.c.h.b16 %v825
    %v4608 = vunpack.c.l.b16 %v826
    %v4609 = vunpack.c.h.b16 %v826
    %v4610 = vunpack.c.l.b16 %v827
    %v4611 = vunpack.c.h.b16 %v827
    %v4612 = vunpack.c.l.b16 %v828
    %v4613 = vunpack.c.h.b16 %v828
    %v4614 = vunpack.c.l.b16 %v829
    %v4615 = vunpack.c.h.b16 %v829
    %v4616 = vunpack.c.l.b16 %v830
    %v4617 = vunpack.c.h.b16 %v830
    %v4618 = vunpack.c.l.b16 %v831
    %v4619 = vunpack.c.h.b16 %v831
    %v4620 = vunpack.c.l.b16 %v832
    %v4621 = vunpack.c.h.b16 %v832
    %v4622 = vunpack.c.l.b16 %v833
    %v4623 = vunpack.c.h.b16 %v833
    %v4624 = vunpack.c.l.b16 %v834
    %v4625 = vunpack.c.h.b16 %v834
    %v4626 = vunpack.c.l.b16 %v835
    %v4627 = vunpack.c.h.b16 %v835
    %v4628 = vunpack.c.l.b16 %v836
    %v4629 = vunpack.c.h.b16 %v836
    %v4630 = vunpack.c.l.b16 %v837
    %v4631 = vunpack.c.h.b16 %v837
    %v4632 = vunpack.c.l.b16 %v838
    %v4633 = vunpack.c.h.b16 %v838
    %v4634 = vunpack.c.l.b16 %v839
    %v4635 = vunpack.c.h.b16 %v839
    %v4636 = vunpack.c.l.b16 %v840
    %v4637 = vunpack.c.h.b16 %v840
    %v4638 = vunpack.c.l.b16 %v841
    %v4639 = vunpack.c.h.b16 %v841
    %v4640 = vunpack.c.l.b16 %v842
    %v4641 = vunpack.c.h.b16 %v842
    %v4642 = vunpack.c.l.b16 %v843
    %v4643 = vunpack.c.h.b16 %v843
    %v4644 = vunpack.c.l.b16 %v844
    %v4645 = vunpack.c.h.b16 %v844
    %v4646 = vunpack.c.l.b16 %v845
    %v4647 = vunpack.c.h.b16 %v845
    %v4648 = vunpack.c.l.b16 %v846
    %v4649 = vunpack.c.h.b16 %v846
    %v4650 = vunpack.c.l.b16 %v847
    %v4651 = vunpack.c.h.b16 %v847
    %v4652 = vunpack.c.l.b16 %v848
    %v4653 = vunpack.c.h.b16 %v848
    %v4654 = vunpack.c.l.b16 %v849
    %v4655 = vunpack.c.h.b16 %v849
    %v4656 = vunpack.c.l.b16 %v850
    %v4657 = vunpack.c.h.b16 %v850
    %v4658 = vunpack.c.l.b16 %v851
    %v4659 = vunpack.c.h.b16 %v851
    %v4660 = vunpack.c.l.b16 %v852
    %v4661 = vunpack.c.h.b16 %v852
    %v4662 = vunpack.c.l.b16 %v853
    %v4663 = vunpack.c.h.b16 %v853
    %v4664 = vunpack.c.l.b16 %v854
    %v4665 = vunpack.c.h.b16 %v854
    %v4666 = vunpack.c.l.b16 %v855
    %v4667 = vunpack.c.h.b16 %v855
    %v4668 = vunpack.c.l.b16 %v856
    %v4669 = vunpack.c.h.b16 %v856
    %v4670 = vunpack.c.l.b16 %v857
    %v4671 = vunpack.c.h.b16 %v857
    %v4672 = vunpack.c.l.b16 %v858
    %v4673 = vunpack.c.h.b16 %v858
    %v4674 = vunpack.c.l.b16 %v859
    %v4675 = vunpack.c.h.b16 %v859
    %v4676 = vunpack.c.l.b16 %v860
    %v4677 = vunpack.c.h.b16 %v860
    %v4678 = vunpack.c.l.b16 %v861
    %v4679 = vunpack.c.h.b16 %v861
    %v4680 = vunpack.c.l.b16 %v862
    %v4681 = vunpack.c.h.b16 %v862
    %v4682 = vunpack.c.l.b16 %v863
    %v4683 = vunpack.c.h.b16 %v863
    %v4684 = vunpack.c.l.b16 %v864
    %v4685 = vunpack.c.h.b16 %v864
    %v4686 = vunpack.c.l.b16 %v865
    %v4687 = vunpack.c.h.b16 %v865
    %v4688 = vunpack.c.l.b16 %v866
    %v4689 = vunpack.c.h.b16 %v866
    %v4690 = vunpack.c.l.b16 %v867
    %v4691 = vunpack.c.h.b16 %v867
    %v4692 = vunpack.c.l.b16 %v868
    %v4693 = vunpack.c.h.b16 %v868
    %v4694 = vunpack.c.l.b16 %v869
    %v4695 = vunpack.c.h.b16 %v869
    %v4696 = vunpack.c.l.b16 %v870
    %v4697 = vunpack.c.h.b16 %v870
    %v4698 = vunpack.c.l.b16 %v871
    %v4699 = vunpack.c.h.b16 %v871
    %v4700 = vunpack.c.l.b16 %v872
    %v4701 = vunpack.c.h.b16 %v872
    %v4702 = vunpack.c.l.b16 %v873
    %v4703 = vunpack.c.h.b16 %v873
    %v4704 = vunpack.c.l.b16 %v874
    %v4705 = vunpack.c.h.b16 %v874
    %v4706 = vunpack.c.l.b16 %v875
    %v4707 = vunpack.c.h.b16 %v875
    %v4708 = vunpack.c.l.b16 %v876
    %v4709 = vunpack.c.h.b16 %v876
    %v4710 = vunpack.c.l.b16 %v877
    %v4711 = vunpack.c.h.b16 %v877
    %v4712 = vunpack.c.l.b16 %v878
    %v4713 = vunpack.c.h.b16 %v878
    %v4714 = vunpack.c.l.b16 %v879
    %v4715 = vunpack.c.h.b16 %v879
    %v4716 = vunpack.c.l.b16 %v880
    %v4717 = vunpack.c.h.b16 %v880
    %v4718 = vunpack.c.l.b16 %v881
    %v4719 = vunpack.c.h.b16 %v881
    %v4720 = vunpack.c.l.b16 %v882
    %v4721 = vunpack.c.h.b16 %v882
    %v4722 = vunpack.c.l.b16 %v883
    %v4723 = vunpack.c.h.b16 %v883
    %v4724 = vunpack.c.l.b16 %v884
    %v4725 = vunpack.c.h.b16 %v884
    %v4726 = vunpack.c.l.b16 %v885
    %v4727 = vunpack.c.h.b16 %v885
    %v4728 = vunpack.c.l.b16 %v886
    %v4729 = vunpack.c.h.b16 %v886
    %v4730 = vunpack.c.l.b16 %v887
    %v4731 = vunpack.c.h.b16 %v887
    %v4732 = vunpack.c.l.b16 %v888
    %v4733 = vunpack.c.h.b16 %v888
    %v4734 = vunpack.c.l.b16 %v889
    %v4735 = vunpack.c.h.b16 %v889
    %v4736 = vunpack.c.l.b16 %v890
    %v4737 = vunpack.c.h.b16 %v890
    %v4738 = vunpack.c.l.b16 %v891
    %v4739 = vunpack.c.h.b16 %v891
    %v4740 = vunpack.c.l.b16 %v892
    %v4741 = vunpack.c.h.b16 %v892
    %v4742 = vunpack.c.l.b16 %v893
    %v4743 = vunpack.c.h.b16 %v893
    %v4744 = vunpack.c.l.b16 %v894
    %v4745 = vunpack.c.h.b16 %v894
    %v4746 = vunpack.c.l.b16 %v895
    %v4747 = vunpack.c.h.b16 %v895
    %v4748 = vunpack.c.l.b16 %v896
    %v4749 = vunpack.c.h.b16 %v896
    %v4750 = vunpack.c.l.b16 %v897
    %v4751 = vunpack.c.h.b16 %v897
    %v4752 = vunpack.c.l.b16 %v898
    %v4753 = vunpack.c.h.b16 %v898
    %v4754 = vunpack.c.l.b16 %v899
    %v4755 = vunpack.c.h.b16 %v899
    %v4756 = vunpack.c.l.b16 %v900
    %v4757 = vunpack.c.h.b16 %v900
    %v4758 = vunpack.c.l.b16 %v901
    %v4759 = vunpack.c.h.b16 %v901
    %v4760 = vunpack.c.l.b16 %v902
    %v4761 = vunpack.c.h.b16 %v902
    %v4762 = vunpack.c.l.b16 %v903
    %v4763 = vunpack.c.h.b16 %v903
    %v4764 = vunpack.c.l.b16 %v904
    %v4765 = vunpack.c.h.b16 %v904
    %v4766 = vunpack.c.l.b16 %v905
    %v4767 = vunpack.c.h.b16 %v905
    %v4768 = vunpack.c.l.b16 %v906
    %v4769 = vunpack.c.h.b16 %v906
    %v4770 = vunpack.c.l.b16 %v907
    %v4771 = vunpack.c.h.b16 %v907
    %v4772 = vunpack.c.l.b16 %v908
    %v4773 = vunpack.c.h.b16 %v908
    %v4774 = vunpack.c.l.b16 %v909
    %v4775 = vunpack.c.h.b16 %v909
    %v4776 = vunpack.c.l.b16 %v910
    %v4777 = vunpack.c.h.b16 %v910
    %v4778 = vunpack.c.l.b16 %v911
    %v4779 = vunpack.c.h.b16 %v911
    %v4780 = vunpack.c.l.b16 %v912
    %v4781 = vunpack.c.h.b16 %v912
    %v4782 = vunpack.c.l.b16 %v913
    %v4783 = vunpack.c.h.b16 %v913
    %v4784 = vunpack.c.l.b16 %v914
    %v4785 = vunpack.c.h.b16 %v914
    %v4786 = vunpack.c.l.b16 %v915
    %v4787 = vunpack.c.h.b16 %v915
    %v4788 = vunpack.c.l.b16 %v916
    %v4789 = vunpack.c.h.b16 %v916
    %v4790 = vunpack.c.l.b16 %v917
    %v4791 = vunpack.c.h.b16 %v917
    %v4792 = vunpack.c.l.b16 %v918
    %v4793 = vunpack.c.h.b16 %v918
    %v4794 = vunpack.c.l.b16 %v919
    %v4795 = vunpack.c.h.b16 %v919
    %v4796 = vunpack.c.l.b16 %v920
    %v4797 = vunpack.c.h.b16 %v920
    %v4798 = vunpack.c.l.b16 %v921
    %v4799 = vunpack.c.h.b16 %v921
    %v4800 = vunpack.c.l.b16 %v922
    %v4801 = vunpack.c.h.b16 %v922
    %v4802 = vunpack.c.l.b16 %v923
    %v4803 = vunpack.c.h.b16 %v923
    %v4804 = vunpack.c.l.b16 %v924
    %v4805 = vunpack.c.h.b16 %v924
    %v4806 = vunpack.c.l.b16 %v925
    %v4807 = vunpack.c.h.b16 %v925
    %v4808 = vunpack.c.l.b16 %v926
    %v4809 = vunpack.c.h.b16 %v926
    %v4810 = vunpack.c.l.b16 %v927
    %v4811 = vunpack.c.h.b16 %v927
    %v4812 = vunpack.c.l.b16 %v928
    %v4813 = vunpack.c.h.b16 %v928
    %v4814 = vunpack.c.l.b16 %v929
    %v4815 = vunpack.c.h.b16 %v929
    %v4816 = vunpack.c.l.b16 %v930
    %v4817 = vunpack.c.h.b16 %v930
    %v4818 = vunpack.c.l.b16 %v931
    %v4819 = vunpack.c.h.b16 %v931
    %v4820 = vunpack.c.l.b16 %v932
    %v4821 = vunpack.c.h.b16 %v932
    %v4822 = vunpack.c.l.b16 %v933
    %v4823 = vunpack.c.h.b16 %v933
    %v4824 = vunpack.c.l.b16 %v934
    %v4825 = vunpack.c.h.b16 %v934
    %v4826 = vunpack.c.l.b16 %v935
    %v4827 = vunpack.c.h.b16 %v935
    %v4828 = vunpack.c.l.b16 %v936
    %v4829 = vunpack.c.h.b16 %v936
    %v4830 = vunpack.c.l.b16 %v937
    %v4831 = vunpack.c.h.b16 %v937
    %v4832 = vunpack.c.l.b16 %v938
    %v4833 = vunpack.c.h.b16 %v938
    %v4834 = vunpack.c.l.b16 %v939
    %v4835 = vunpack.c.h.b16 %v939
    %v4836 = vunpack.c.l.b16 %v940
    %v4837 = vunpack.c.h.b16 %v940
    %v4838 = vunpack.c.l.b16 %v941
    %v4839 = vunpack.c.h.b16 %v941
    %v4840 = vunpack.c.l.b16 %v942
    %v4841 = vunpack.c.h.b16 %v942
    %v4842 = vunpack.c.l.b16 %v943
    %v4843 = vunpack.c.h.b16 %v943
    %v4844 = vunpack.c.l.b16 %v944
    %v4845 = vunpack.c.h.b16 %v944
    %v4846 = vunpack.c.l.b16 %v945
    %v4847 = vunpack.c.h.b16 %v945
    %v4848 = vunpack.c.l.b16 %v946
    %v4849 = vunpack.c.h.b16 %v946
    %v4850 = vunpack.c.l.b16 %v947
    %v4851 = vunpack.c.h.b16 %v947
    %v4852 = vunpack.c.l.b16 %v948
    %v4853 = vunpack.c.h.b16 %v948
    %v4854 = vunpack.c.l.b16 %v949
    %v4855 = vunpack.c.h.b16 %v949
    %v4856 = vunpack.c.l.b16 %v950
    %v4857 = vunpack.c.h.b16 %v950
    %v4858 = vunpack.c.l.b16 %v951
    %v4859 = vunpack.c.h.b16 %v951
    %v4860 = vunpack.c.l.b16 %v952
    %v4861 = vunpack.c.h.b16 %v952
    %v4862 = vunpack.c.l.b16 %v953
    %v4863 = vunpack.c.h.b16 %v953
    %v4864 = vunpack.c.l.b16 %v954
    %v4865 = vunpack.c.h.b16 %v954
    %v4866 = vunpack.c.l.b16 %v955
    %v4867 = vunpack.c.h.b16 %v955
    %v4868 = vunpack.c.l.b16 %v956
    %v4869 = vunpack.c.h.b16 %v956
    %v4870 = vunpack.c.l.b16 %v957
    %v4871 = vunpack.c.h.b16 %v957
    %v4872 = vunpack.c.l.b16 %v958
    %v4873 = vunpack.c.h.b16 %v958
    %v4874 = vunpack.c.l.b16 %v959
    %v4875 = vunpack.c.h.b16 %v959
    %v4876 = vunpack.c.l.b16 %v960
    %v4877 = vunpack.c.h.b16 %v960
    %v4878 = vunpack.c.l.b16 %v961
    %v4879 = vunpack.c.h.b16 %v961
    %v4880 = vunpack.c.l.b16 %v962
    %v4881 = vunpack.c.h.b16 %v962
    %v4882 = vunpack.c.l.b16 %v963
    %v4883 = vunpack.c.h.b16 %v963
    %v4884 = vunpack.c.l.b16 %v964
    %v4885 = vunpack.c.h.b16 %v964
    %v4886 = vunpack.c.l.b16 %v965
    %v4887 = vunpack.c.h.b16 %v965
    %v4888 = vunpack.c.l.b16 %v966
    %v4889 = vunpack.c.h.b16 %v966
    %v4890 = vunpack.c.l.b16 %v967
    %v4891 = vunpack.c.h.b16 %v967
    %v4892 = vunpack.c.l.b16 %v968
    %v4893 = vunpack.c.h.b16 %v968
    %v4894 = vunpack.c.l.b16 %v969
    %v4895 = vunpack.c.h.b16 %v969
    %v4896 = vunpack.c.l.b16 %v970
    %v4897 = vunpack.c.h.b16 %v970
    %v4898 = vunpack.c.l.b16 %v971
    %v4899 = vunpack.c.h.b16 %v971
    %v4900 = vunpack.c.l.b16 %v972
    %v4901 = vunpack.c.h.b16 %v972
    %v4902 = vunpack.c.l.b16 %v973
    %v4903 = vunpack.c.h.b16 %v973
    %v4904 = vunpack.c.l.b16 %v974
    %v4905 = vunpack.c.h.b16 %v974
    %v4906 = vunpack.c.l.b16 %v975
    %v4907 = vunpack.c.h.b16 %v975
    %v4908 = vunpack.c.l.b16 %v976
    %v4909 = vunpack.c.h.b16 %v976
    %v4910 = vunpack.c.l.b16 %v977
    %v4911 = vunpack.c.h.b16 %v977
    %v4912 = vunpack.c.l.b16 %v978
    %v4913 = vunpack.c.h.b16 %v978
    %v4914 = vunpack.c.l.b16 %v979
    %v4915 = vunpack.c.h.b16 %v979
    %v4916 = vunpack.c.l.b16 %v980
    %v4917 = vunpack.c.h.b16 %v980
    %v4918 = vunpack.c.l.b16 %v981
    %v4919 = vunpack.c.h.b16 %v981
    %v4920 = vunpack.c.l.b16 %v982
    %v4921 = vunpack.c.h.b16 %v982
    %v4922 = vunpack.c.l.b16 %v983
    %v4923 = vunpack.c.h.b16 %v983
    %v4924 = vunpack.c.l.b16 %v984
    %v4925 = vunpack.c.h.b16 %v984
    %v4926 = vunpack.c.l.b16 %v985
    %v4927 = vunpack.c.h.b16 %v985
    %v4928 = vunpack.c.l.b16 %v986
    %v4929 = vunpack.c.h.b16 %v986
    %v4930 = vunpack.c.l.b16 %v987
    %v4931 = vunpack.c.h.b16 %v987
    %v4932 = vunpack.c.l.b16 %v988
    %v4933 = vunpack.c.h.b16 %v988
    %v4934 = vunpack.c.l.b16 %v989
    %v4935 = vunpack.c.h.b16 %v989
    %v4936 = vunpack.c.l.b16 %v990
    %v4937 = vunpack.c.h.b16 %v990
    %v4938 = vunpack.c.l.b16 %v991
    %v4939 = vunpack.c.h.b16 %v991
    %v4940 = vunpack.c.l.b16 %v992
    %v4941 = vunpack.c.h.b16 %v992
    %v4942 = vunpack.c.l.b16 %v993
    %v4943 = vunpack.c.h.b16 %v993
    %v4944 = vunpack.c.l.b16 %v994
    %v4945 = vunpack.c.h.b16 %v994
    %v4946 = vunpack.c.l.b16 %v995
    %v4947 = vunpack.c.h.b16 %v995
    %v4948 = vunpack.c.l.b16 %v996
    %v4949 = vunpack.c.h.b16 %v996
    %v4950 = vunpack.c.l.b16 %v997
    %v4951 = vunpack.c.h.b16 %v997
    %v4952 = vunpack.c.l.b16 %v998
    %v4953 = vunpack.c.h.b16 %v998
    %v4954 = vunpack.c.l.b16 %v999
    %v4955 = vunpack.c.h.b16 %v999
    %v4956 = vunpack.c.l.b16 %v1000
    %v4957 = vunpack.c.h.b16 %v1000
    %v4958 = vunpack.c.l.b16 %v1001
    %v4959 = vunpack.c.h.b16 %v1001
    %v4960 = vunpack.c.l.b16 %v1002
    %v4961 = vunpack.c.h.b16 %v1002
    %v4962 = vunpack.c.l.b16 %v1003
    %v4963 = vunpack.c.h.b16 %v1003
    %v4964 = vunpack.c.l.b16 %v1004
    %v4965 = vunpack.c.h.b16 %v1004
    %v4966 = vunpack.c.l.b16 %v1005
    %v4967 = vunpack.c.h.b16 %v1005
    %v4968 = vunpack.c.l.b16 %v1006
    %v4969 = vunpack.c.h.b16 %v1006
    %v4970 = vunpack.c.l.b16 %v1007
    %v4971 = vunpack.c.h.b16 %v1007
    %v4972 = vunpack.c.l.b16 %v1008
    %v4973 = vunpack.c.h.b16 %v1008
    %v4974 = vunpack.c.l.b16 %v1009
    %v4975 = vunpack.c.h.b16 %v1009
    %v4976 = vunpack.c.l.b16 %v1010
    %v4977 = vunpack.c.h.b16 %v1010
    %v4978 = vunpack.c.l.b16 %v1011
    %v4979 = vunpack.c.h.b16 %v1011
    %v4980 = vunpack.c.l.b16 %v1012
    %v4981 = vunpack.c.h.b16 %v1012
    %v4982 = vunpack.c.l.b16 %v1013
    %v4983 = vunpack.c.h.b16 %v1013
    %v4984 = vunpack.c.l.b16 %v1014
    %v4985 = vunpack.c.h.b16 %v1014
    %v4986 = vunpack.c.l.b16 %v1015
    %v4987 = vunpack.c.h.b16 %v1015
    %v4988 = vunpack.c.l.b16 %v1016
    %v4989 = vunpack.c.h.b16 %v1016
    %v4990 = vunpack.c.l.b16 %v1017
    %v4991 = vunpack.c.h.b16 %v1017
    %v4992 = vunpack.c.l.b16 %v1018
    %v4993 = vunpack.c.h.b16 %v1018
    %v4994 = vunpack.c.l.b16 %v1019
    %v4995 = vunpack.c.h.b16 %v1019
    %v4996 = vunpack.c.l.b16 %v1020
    %v4997 = vunpack.c.h.b16 %v1020
    %v4998 = vunpack.c.l.b16 %v1021
    %v4999 = vunpack.c.h.b16 %v1021
    %v5000 = vunpack.c.l.b16 %v1022
    %v5001 = vunpack.c.h.b16 %v1022
    %v5002 = vunpack.c.l.b16 %v1023
    %v5003 = vunpack.c.h.b16 %v1023
    %v5004 = vunpack.c.l.b16 %v1024
    %v5005 = vunpack.c.h.b16 %v1024
    %v5006 = vunpack.c.l.b16 %v1025
    %v5007 = vunpack.c.h.b16 %v1025
    %v5008 = vunpack.c.l.b16 %v1026
    %v5009 = vunpack.c.h.b16 %v1026
    %v5010 = vunpack.c.l.b16 %v1027
    %v5011 = vunpack.c.h.b16 %v1027
    %v5012 = vunpack.c.l.b16 %v1028
    %v5013 = vunpack.c.h.b16 %v1028
    %v5014 = vunpack.c.l.b16 %v1029
    %v5015 = vunpack.c.h.b16 %v1029
    %v5016 = vunpack.c.l.b16 %v1030
    %v5017 = vunpack.c.h.b16 %v1030
    %v5018 = vunpack.c.l.b16 %v1031
    %v5019 = vunpack.c.h.b16 %v1031
    %v5020 = vunpack.c.l.b16 %v1032
    %v5021 = vunpack.c.h.b16 %v1032
    %v5022 = vunpack.c.l.b16 %v1033
    %v5023 = vunpack.c.h.b16 %v1033
    %v5024 = vunpack.c.l.b16 %v1034
    %v5025 = vunpack.c.h.b16 %v1034
    %v5026 = vunpack.c.l.b16 %v1035
    %v5027 = vunpack.c.h.b16 %v1035
    %v5028 = vunpack.c.l.b16 %v1036
    %v5029 = vunpack.c.h.b16 %v1036
    %v5030 = vunpack.c.l.b16 %v1037
    %v5031 = vunpack.c.h.b16 %v1037
    %v5032 = vunpack.c.l.b16 %v1038
    %v5033 = vunpack.c.h.b16 %v1038
    %v5034 = vunpack.c.l.b16 %v1039
    %v5035 = vunpack.c.h.b16 %v1039
    %v5036 = vunpack.c.l.b16 %v1040
    %v5037 = vunpack.c.h.b16 %v1040
    %v5038 = vunpack.c.l.b16 %v1041
    %v5039 = vunpack.c.h.b16 %v1041
    %v5040 = vunpack.c.l.b16 %v1042
    %v5041 = vunpack.c.h.b16 %v1042
    %v5042 = vunpack.c.l.b16 %v1043
    %v5043 = vunpack.c.h.b16 %v1043
    %v5044 = vunpack.c.l.b16 %v1044
    %v5045 = vunpack.c.h.b16 %v1044
    %v5046 = vunpack.c.l.b16 %v1045
    %v5047 = vunpack.c.h.b16 %v1045
    %v5048 = vunpack.c.l.b16 %v1046
    %v5049 = vunpack.c.h.b16 %v1046
    %v5050 = vunpack.c.l.b16 %v1047
    %v5051 = vunpack.c.h.b16 %v1047
    %v5052 = vunpack.c.l.b16 %v1048
    %v5053 = vunpack.c.h.b16 %v1048
    %v5054 = vunpack.c.l.b16 %v1049
    %v5055 = vunpack.c.h.b16 %v1049
    %v5056 = vunpack.c.l.b16 %v1050
    %v5057 = vunpack.c.h.b16 %v1050
    %v5058 = vunpack.c.l.b16 %v1051
    %v5059 = vunpack.c.h.b16 %v1051
    %v5060 = vunpack.c.l.b16 %v1052
    %v5061 = vunpack.c.h.b16 %v1052
    %v5062 = vunpack.c.l.b16 %v1053
    %v5063 = vunpack.c.h.b16 %v1053
    %v5064 = vunpack.c.l.b16 %v1054
    %v5065 = vunpack.c.h.b16 %v1054
    %v5066 = vunpack.c.l.b16 %v1055
    %v5067 = vunpack.c.h.b16 %v1055
    %v5068 = vunpack.c.l.b16 %v1056
    %v5069 = vunpack.c.h.b16 %v1056
    %v5070 = vunpack.c.l.b16 %v1057
    %v5071 = vunpack.c.h.b16 %v1057
    %v5072 = vunpack.c.l.b16 %v1058
    %v5073 = vunpack.c.h.b16 %v1058
    %v5074 = vunpack.c.l.b16 %v1059
    %v5075 = vunpack.c.h.b16 %v1059
    %v5076 = vunpack.c.l.b16 %v1060
    %v5077 = vunpack.c.h.b16 %v1060
    %v5078 = vunpack.c.l.b16 %v1061
    %v5079 = vunpack.c.h.b16 %v1061
    %v5080 = vunpack.c.l.b16 %v1062
    %v5081 = vunpack.c.h.b16 %v1062
    %v5082 = vunpack.c.l.b16 %v1063
    %v5083 = vunpack.c.h.b16 %v1063
    %v5084 = vunpack.c.l.b16 %v1064
    %v5085 = vunpack.c.h.b16 %v1064
    %v5086 = vunpack.c.l.b16 %v1065
    %v5087 = vunpack.c.h.b16 %v1065
    %v5088 = vunpack.c.l.b16 %v1066
    %v5089 = vunpack.c.h.b16 %v1066
    %v5090 = vunpack.c.l.b16 %v1067
    %v5091 = vunpack.c.h.b16 %v1067
    %v5092 = vunpack.c.l.b16 %v1068
    %v5093 = vunpack.c.h.b16 %v1068
    %v5094 = vunpack.c.l.b16 %v1069
    %v5095 = vunpack.c.h.b16 %v1069
    %v5096 = vunpack.c.l.b16 %v1070
    %v5097 = vunpack.c.h.b16 %v1070
    %v5098 = vunpack.c.l.b16 %v1071
    %v5099 = vunpack.c.h.b16 %v1071
    %v5100 = vunpack.c.l.b16 %v1072
    %v5101 = vunpack.c.h.b16 %v1072
    %v5102 = vunpack.c.l.b16 %v1073
    %v5103 = vunpack.c.h.b16 %v1073
    %v5104 = vunpack.c.l.b16 %v1074
    %v5105 = vunpack.c.h.b16 %v1074
    %v5106 = vunpack.c.l.b16 %v1075
    %v5107 = vunpack.c.h.b16 %v1075
    %v5108 = vunpack.c.l.b16 %v1076
    %v5109 = vunpack.c.h.b16 %v1076
    %v5110 = vunpack.c.l.b16 %v1077
    %v5111 = vunpack.c.h.b16 %v1077
    %v5112 = vunpack.c.l.b16 %v1078
    %v5113 = vunpack.c.h.b16 %v1078
    %v5114 = vunpack.c.l.b16 %v1079
    %v5115 = vunpack.c.h.b16 %v1079
    %v5116 = vunpack.c.l.b16 %v1080
    %v5117 = vunpack.c.h.b16 %v1080
    %v5118 = vunpack.c.l.b16 %v1081
    %v5119 = vunpack.c.h.b16 %v1081
    %v5120 = vunpack.c.l.b16 %v1082
    %v5121 = vunpack.c.h.b16 %v1082
    %v5122 = vunpack.c.l.b16 %v1083
    %v5123 = vunpack.c.h.b16 %v1083
    %v5124 = vunpack.c.l.b16 %v1084
    %v5125 = vunpack.c.h.b16 %v1084
    %v5126 = vunpack.c.l.b16 %v1085
    %v5127 = vunpack.c.h.b16 %v1085
    %v5128 = vunpack.c.l.b16 %v1086
    %v5129 = vunpack.c.h.b16 %v1086
    %v5130 = vunpack.c.l.b16 %v1087
    %v5131 = vunpack.c.h.b16 %v1087
    %v5132 = vunpack.c.l.b16 %v1088
    %v5133 = vunpack.c.h.b16 %v1088
    %v5134 = vunpack.c.l.b16 %v1089
    %v5135 = vunpack.c.h.b16 %v1089
    %v5136 = vunpack.c.l.b16 %v1090
    %v5137 = vunpack.c.h.b16 %v1090
    %v5138 = vunpack.c.l.b16 %v1091
    %v5139 = vunpack.c.h.b16 %v1091
    %v5140 = vunpack.c.l.b16 %v1092
    %v5141 = vunpack.c.h.b16 %v1092
    %v5142 = vunpack.c.l.b16 %v1093
    %v5143 = vunpack.c.h.b16 %v1093
    %v5144 = vunpack.c.l.b16 %v1094
    %v5145 = vunpack.c.h.b16 %v1094
    %v5146 = vunpack.c.l.b16 %v1095
    %v5147 = vunpack.c.h.b16 %v1095
    %v5148 = vunpack.c.l.b16 %v1096
    %v5149 = vunpack.c.h.b16 %v1096
    %v5150 = vunpack.c.l.b16 %v1097
    %v5151 = vunpack.c.h.b16 %v1097
    %v5152 = vunpack.c.l.b16 %v1098
    %v5153 = vunpack.c.h.b16 %v1098
    %v5154 = vunpack.c.l.b16 %v1099
    %v5155 = vunpack.c.h.b16 %v1099
    %v5156 = vunpack.c.l.b16 %v1100
    %v5157 = vunpack.c.h.b16 %v1100
    %v5158 = vunpack.c.l.b16 %v1101
    %v5159 = vunpack.c.h.b16 %v1101
    %v5160 = vunpack.c.l.b16 %v1102
    %v5161 = vunpack.c.h.b16 %v1102
    %v5162 = vunpack.c.l.b16 %v1103
    %v5163 = vunpack.c.h.b16 %v1103
    %v5164 = vunpack.c.l.b16 %v1104
    %v5165 = vunpack.c.h.b16 %v1104
    %v5166 = vunpack.c.l.b16 %v1105
    %v5167 = vunpack.c.h.b16 %v1105
    %v5168 = vunpack.c.l.b16 %v1106
    %v5169 = vunpack.c.h.b16 %v1106
    %v5170 = vunpack.c.l.b16 %v1107
    %v5171 = vunpack.c.h.b16 %v1107
    %v5172 = vunpack.c.l.b16 %v1108
    %v5173 = vunpack.c.h.b16 %v1108
    %v5174 = vunpack.c.l.b16 %v1109
    %v5175 = vunpack.c.h.b16 %v1109
    %v5176 = vunpack.c.l.b16 %v1110
    %v5177 = vunpack.c.h.b16 %v1110
    %v5178 = vunpack.c.l.b16 %v1111
    %v5179 = vunpack.c.h.b16 %v1111
    %v5180 = vunpack.c.l.b16 %v1112
    %v5181 = vunpack.c.h.b16 %v1112
    %v5182 = vunpack.c.l.b16 %v1113
    %v5183 = vunpack.c.h.b16 %v1113
    %v5184 = vunpack.c.l.b16 %v1114
    %v5185 = vunpack.c.h.b16 %v1114
    %v5186 = vunpack.c.l.b16 %v1115
    %v5187 = vunpack.c.h.b16 %v1115
    %v5188 = vunpack.c.l.b16 %v1116
    %v5189 = vunpack.c.h.b16 %v1116
    %v5190 = vunpack.c.l.b16 %v1117
    %v5191 = vunpack.c.h.b16 %v1117
    %v5192 = vunpack.c.l.b16 %v1118
    %v5193 = vunpack.c.h.b16 %v1118
    %v5194 = vunpack.c.l.b16 %v1119
    %v5195 = vunpack.c.h.b16 %v1119
    %v5196 = vunpack.c.l.b16 %v1120
    %v5197 = vunpack.c.h.b16 %v1120
    %v5198 = vunpack.c.l.b16 %v1121
    %v5199 = vunpack.c.h.b16 %v1121
    %v5200 = vunpack.c.l.b16 %v1122
    %v5201 = vunpack.c.h.b16 %v1122
    %v5202 = vunpack.c.l.b16 %v1123
    %v5203 = vunpack.c.h.b16 %v1123
    %v5204 = vunpack.c.l.b16 %v1124
    %v5205 = vunpack.c.h.b16 %v1124
    %v5206 = vunpack.c.l.b16 %v1125
    %v5207 = vunpack.c.h.b16 %v1125
    %v5208 = vunpack.c.l.b16 %v1126
    %v5209 = vunpack.c.h.b16 %v1126
    %v5210 = vunpack.c.l.b16 %v1127
    %v5211 = vunpack.c.h.b16 %v1127
    %v5212 = vunpack.c.l.b16 %v1128
    %v5213 = vunpack.c.h.b16 %v1128
    %v5214 = vunpack.c.l.b16 %v1129
    %v5215 = vunpack.c.h.b16 %v1129
    %v5216 = vunpack.c.l.b16 %v1130
    %v5217 = vunpack.c.h.b16 %v1130
    %v5218 = vunpack.c.l.b16 %v1131
    %v5219 = vunpack.c.h.b16 %v1131
    %v5220 = vunpack.c.l.b16 %v1132
    %v5221 = vunpack.c.h.b16 %v1132
    %v5222 = vunpack.c.l.b16 %v1133
    %v5223 = vunpack.c.h.b16 %v1133
    %v5224 = vunpack.c.l.b16 %v1134
    %v5225 = vunpack.c.h.b16 %v1134
    %v5226 = vunpack.c.l.b16 %v1135
    %v5227 = vunpack.c.h.b16 %v1135
    %v5228 = vunpack.c.l.b16 %v1136
    %v5229 = vunpack.c.h.b16 %v1136
    %v5230 = vunpack.c.l.b16 %v1137
    %v5231 = vunpack.c.h.b16 %v1137
    %v5232 = vunpack.c.l.b16 %v1138
    %v5233 = vunpack.c.h.b16 %v1138
    %v5234 = vunpack.c.l.b16 %v1139
    %v5235 = vunpack.c.h.b16 %v1139
    %v5236 = vunpack.c.l.b16 %v1140
    %v5237 = vunpack.c.h.b16 %v1140
    %v5238 = vunpack.c.l.b16 %v1141
    %v5239 = vunpack.c.h.b16 %v1141
    %v5240 = vunpack.c.l.b16 %v1142
    %v5241 = vunpack.c.h.b16 %v1142
    %v5242 = vunpack.c.l.b16 %v1143
    %v5243 = vunpack.c.h.b16 %v1143
    %v5244 = vunpack.c.l.b16 %v1144
    %v5245 = vunpack.c.h.b16 %v1144
    %v5246 = vunpack.c.l.b16 %v1145
    %v5247 = vunpack.c.h.b16 %v1145
    %v5248 = vunpack.c.l.b16 %v1146
    %v5249 = vunpack.c.h.b16 %v1146
    %v5250 = vunpack.c.l.b16 %v1147
    %v5251 = vunpack.c.h.b16 %v1147
    %v5252 = vunpack.c.l.b16 %v1148
    %v5253 = vunpack.c.h.b16 %v1148
    %v5254 = vunpack.c.l.b16 %v1149
    %v5255 = vunpack.c.h.b16 %v1149
    %v5256 = vunpack.c.l.b16 %v1150
    %v5257 = vunpack.c.h.b16 %v1150
    %v5258 = vunpack.c.l.b16 %v1151
    %v5259 = vunpack.c.h.b16 %v1151
    %v5260 = vunpack.c.l.b16 %v1152
    %v5261 = vunpack.c.h.b16 %v1152
    %v5262 = vunpack.c.l.b16 %v1153
    %v5263 = vunpack.c.h.b16 %v1153
    %v5264 = vunpack.c.l.b16 %v1154
    %v5265 = vunpack.c.h.b16 %v1154
    %v5266 = vunpack.c.l.b16 %v1155
    %v5267 = vunpack.c.h.b16 %v1155
    %v5268 = vunpack.c.l.b16 %v1156
    %v5269 = vunpack.c.h.b16 %v1156
    %v5270 = vunpack.c.l.b16 %v1157
    %v5271 = vunpack.c.h.b16 %v1157
    %v5272 = vunpack.c.l.b16 %v1158
    %v5273 = vunpack.c.h.b16 %v1158
    %v5274 = vunpack.c.l.b16 %v1159
    %v5275 = vunpack.c.h.b16 %v1159
    %v5276 = vunpack.c.l.b16 %v1160
    %v5277 = vunpack.c.h.b16 %v1160
    %v5278 = vunpack.c.l.b16 %v1161
    %v5279 = vunpack.c.h.b16 %v1161
    %v5280 = vunpack.c.l.b16 %v1162
    %v5281 = vunpack.c.h.b16 %v1162
    %v5282 = vunpack.c.l.b16 %v1163
    %v5283 = vunpack.c.h.b16 %v1163
    %v5284 = vunpack.c.l.b16 %v1164
    %v5285 = vunpack.c.h.b16 %v1164
    %v5286 = vunpack.c.l.b16 %v1165
    %v5287 = vunpack.c.h.b16 %v1165
    %v5288 = vunpack.c.l.b16 %v1166
    %v5289 = vunpack.c.h.b16 %v1166
    %v5290 = vunpack.c.l.b16 %v1167
    %v5291 = vunpack.c.h.b16 %v1167
    %v5292 = vunpack.c.l.b16 %v1168
    %v5293 = vunpack.c.h.b16 %v1168
    %v5294 = vunpack.c.l.b16 %v1169
    %v5295 = vunpack.c.h.b16 %v1169
    %v5296 = vunpack.c.l.b16 %v1170
    %v5297 = vunpack.c.h.b16 %v1170
    %v5298 = vunpack.c.l.b16 %v1171
    %v5299 = vunpack.c.h.b16 %v1171
    %v5300 = vunpack.c.l.b16 %v1172
    %v5301 = vunpack.c.h.b16 %v1172
    %v5302 = vunpack.c.l.b16 %v1173
    %v5303 = vunpack.c.h.b16 %v1173
    %v5304 = vunpack.c.l.b16 %v1174
    %v5305 = vunpack.c.h.b16 %v1174
    %v5306 = vunpack.c.l.b16 %v1175
    %v5307 = vunpack.c.h.b16 %v1175
    %v5308 = vunpack.c.l.b16 %v1176
    %v5309 = vunpack.c.h.b16 %v1176
    %v5310 = vunpack.c.l.b16 %v1177
    %v5311 = vunpack.c.h.b16 %v1177
    %v5312 = vunpack.c.l.b16 %v1178
    %v5313 = vunpack.c.h.b16 %v1178
    %v5314 = vunpack.c.l.b16 %v1179
    %v5315 = vunpack.c.h.b16 %v1179
    %v5316 = vunpack.c.l.b16 %v1180
    %v5317 = vunpack.c.h.b16 %v1180
    %v5318 = vunpack.c.l.b16 %v1181
    %v5319 = vunpack.c.h.b16 %v1181
    %v5320 = vunpack.c.l.b16 %v1182
    %v5321 = vunpack.c.h.b16 %v1182
    %v5322 = vunpack.c.l.b16 %v1183
    %v5323 = vunpack.c.h.b16 %v1183
    %v5324 = vunpack.c.l.b16 %v1184
    %v5325 = vunpack.c.h.b16 %v1184
    %v5326 = vunpack.c.l.b16 %v1185
    %v5327 = vunpack.c.h.b16 %v1185
    %v5328 = vunpack.c.l.b16 %v1186
    %v5329 = vunpack.c.h.b16 %v1186
    %v5330 = vunpack.c.l.b16 %v1187
    %v5331 = vunpack.c.h.b16 %v1187
    %v5332 = vunpack.c.l.b16 %v1188
    %v5333 = vunpack.c.h.b16 %v1188
    %v5334 = vunpack.c.l.b16 %v1189
    %v5335 = vunpack.c.h.b16 %v1189
    %v5336 = vunpack.c.l.b16 %v1190
    %v5337 = vunpack.c.h.b16 %v1190
    %v5338 = vunpack.c.l.b16 %v1191
    %v5339 = vunpack.c.h.b16 %v1191
    %v5340 = vunpack.c.l.b16 %v1192
    %v5341 = vunpack.c.h.b16 %v1192
    %v5342 = vunpack.c.l.b16 %v1193
    %v5343 = vunpack.c.h.b16 %v1193
    %v5344 = vunpack.c.l.b16 %v1194
    %v5345 = vunpack.c.h.b16 %v1194
    %v5346 = vunpack.c.l.b16 %v1195
    %v5347 = vunpack.c.h.b16 %v1195
    %v5348 = vunpack.c.l.b16 %v1196
    %v5349 = vunpack.c.h.b16 %v1196
    %v5350 = vunpack.c.l.b16 %v1197
    %v5351 = vunpack.c.h.b16 %v1197
    %v5352 = vunpack.c.l.b16 %v1198
    %v5353 = vunpack.c.h.b16 %v1198
    %v5354 = vunpack.c.l.b16 %v1199
    %v5355 = vunpack.c.h.b16 %v1199
    %v5356 = vunpack.c.l.b16 %v1200
    %v5357 = vunpack.c.h.b16 %v1200
    %v5358 = vunpack.c.l.b16 %v1201
    %v5359 = vunpack.c.h.b16 %v1201
    %v5360 = vunpack.c.l.b16 %v1202
    %v5361 = vunpack.c.h.b16 %v1202
    %v5362 = vunpack.c.l.b16 %v1203
    %v5363 = vunpack.c.h.b16 %v1203
    %v5364 = vunpack.c.l.b16 %v1204
    %v5365 = vunpack.c.h.b16 %v1204
    %v5366 = vunpack.c.l.b16 %v1205
    %v5367 = vunpack.c.h.b16 %v1205
    %v5368 = vunpack.c.l.b16 %v1206
    %v5369 = vunpack.c.h.b16 %v1206
    %v5370 = vunpack.c.l.b16 %v1207
    %v5371 = vunpack.c.h.b16 %v1207
    %v5372 = vunpack.c.l.b16 %v1208
    %v5373 = vunpack.c.h.b16 %v1208
    %v5374 = vunpack.c.l.b16 %v1209
    %v5375 = vunpack.c.h.b16 %v1209
    %v5376 = vunpack.c.l.b16 %v1210
    %v5377 = vunpack.c.h.b16 %v1210
    %v5378 = vunpack.c.l.b16 %v1211
    %v5379 = vunpack.c.h.b16 %v1211
    %v5380 = vunpack.c.l.b16 %v1212
    %v5381 = vunpack.c.h.b16 %v1212
    %v5382 = vunpack.c.l.b16 %v1213
    %v5383 = vunpack.c.h.b16 %v1213
    %v5384 = vunpack.c.l.b16 %v1214
    %v5385 = vunpack.c.h.b16 %v1214
    %v5386 = vunpack.c.l.b16 %v1215
    %v5387 = vunpack.c.h.b16 %v1215
    %v5388 = vunpack.c.l.b16 %v1216
    %v5389 = vunpack.c.h.b16 %v1216
    %v5390 = vunpack.c.l.b16 %v1217
    %v5391 = vunpack.c.h.b16 %v1217
    %v5392 = vunpack.c.l.b16 %v1218
    %v5393 = vunpack.c.h.b16 %v1218
    %v5394 = vunpack.c.l.b16 %v1219
    %v5395 = vunpack.c.h.b16 %v1219
    %v5396 = vunpack.c.l.b16 %v1220
    %v5397 = vunpack.c.h.b16 %v1220
    %v5398 = vunpack.c.l.b16 %v1221
    %v5399 = vunpack.c.h.b16 %v1221
    %v5400 = vunpack.c.l.b16 %v1222
    %v5401 = vunpack.c.h.b16 %v1222
    %v5402 = vunpack.c.l.b16 %v1223
    %v5403 = vunpack.c.h.b16 %v1223
    %v5404 = vunpack.c.l.b16 %v1224
    %v5405 = vunpack.c.h.b16 %v1224
    %v5406 = vunpack.c.l.b16 %v1225
    %v5407 = vunpack.c.h.b16 %v1225
    %v5408 = vunpack.c.l.b16 %v1226
    %v5409 = vunpack.c.h.b16 %v1226
    %v5410 = vunpack.c.l.b16 %v1227
    %v5411 = vunpack.c.h.b16 %v1227
    %v5412 = vunpack.c.l.b16 %v1228
    %v5413 = vunpack.c.h.b16 %v1228
    %v5414 = vunpack.c.l.b16 %v1229
    %v5415 = vunpack.c.h.b16 %v1229
    %v5416 = vunpack.c.l.b16 %v1230
    %v5417 = vunpack.c.h.b16 %v1230
    %v5418 = vunpack.c.l.b16 %v1231
    %v5419 = vunpack.c.h.b16 %v1231
    %v5420 = vunpack.c.l.b16 %v1232
    %v5421 = vunpack.c.h.b16 %v1232
    %v5422 = vunpack.c.l.b16 %v1233
    %v5423 = vunpack.c.h.b16 %v1233
    %v5424 = vunpack.c.l.b16 %v1234
    %v5425 = vunpack.c.h.b16 %v1234
    %v5426 = vunpack.c.l.b16 %v1235
    %v5427 = vunpack.c.h.b16 %v1235
    %v5428 = vunpack.c.l.b16 %v1236
    %v5429 = vunpack.c.h.b16 %v1236
    %v5430 = vunpack.c.l.b16 %v1237
    %v5431 = vunpack.c.h.b16 %v1237
    %v5432 = vunpack.c.l.b16 %v1238
    %v5433 = vunpack.c.h.b16 %v1238
    %v5434 = vunpack.c.l.b16 %v1239
    %v5435 = vunpack.c.h.b16 %v1239
    %v5436 = vunpack.c.l.b16 %v1240
    %v5437 = vunpack.c.h.b16 %v1240
    %v5438 = vunpack.c.l.b16 %v1241
    %v5439 = vunpack.c.h.b16 %v1241
    %v5440 = vunpack.c.l.b16 %v1242
    %v5441 = vunpack.c.h.b16 %v1242
    %v5442 = vunpack.c.l.b16 %v1243
    %v5443 = vunpack.c.h.b16 %v1243
    %v5444 = vunpack.c.l.b16 %v1244
    %v5445 = vunpack.c.h.b16 %v1244
    %v5446 = vunpack.c.l.b16 %v1245
    %v5447 = vunpack.c.h.b16 %v1245
    %v5448 = vunpack.c.l.b16 %v1246
    %v5449 = vunpack.c.h.b16 %v1246
    %v5450 = vunpack.c.l.b16 %v1247
    %v5451 = vunpack.c.h.b16 %v1247
    %v5452 = vunpack.c.l.b16 %v1248
    %v5453 = vunpack.c.h.b16 %v1248
    %v5454 = vunpack.c.l.b16 %v1249
    %v5455 = vunpack.c.h.b16 %v1249
    %v5456 = vunpack.c.l.b16 %v1250
    %v5457 = vunpack.c.h.b16 %v1250
    %v5458 = vunpack.c.l.b16 %v1251
    %v5459 = vunpack.c.h.b16 %v1251
    %v5460 = vunpack.c.l.b16 %v1252
    %v5461 = vunpack.c.h.b16 %v1252
    %v5462 = vunpack.c.l.b16 %v1253
    %v5463 = vunpack.c.h.b16 %v1253
    %v5464 = vunpack.c.l.b16 %v1254
    %v5465 = vunpack.c.h.b16 %v1254
    %v5466 = vunpack.c.l.b16 %v1255
    %v5467 = vunpack.c.h.b16 %v1255
    %v5468 = vunpack.c.l.b16 %v1256
    %v5469 = vunpack.c.h.b16 %v1256
    %v5470 = vunpack.c.l.b16 %v1257
    %v5471 = vunpack.c.h.b16 %v1257
    %v5472 = vunpack.c.l.b16 %v1258
    %v5473 = vunpack.c.h.b16 %v1258
    %v5474 = vunpack.c.l.b16 %v1259
    %v5475 = vunpack.c.h.b16 %v1259
    %v5476 = vunpack.c.l.b16 %v1260
    %v5477 = vunpack.c.h.b16 %v1260
    %v5478 = vunpack.c.l.b16 %v1261
    %v5479 = vunpack.c.h.b16 %v1261
    %v5480 = vunpack.c.l.b16 %v1262
    %v5481 = vunpack.c.h.b16 %v1262
    %v5482 = vunpack.c.l.b16 %v1263
    %v5483 = vunpack.c.h.b16 %v1263
    %v5484 = vunpack.c.l.b16 %v1264
    %v5485 = vunpack.c.h.b16 %v1264
    %v5486 = vunpack.c.l.b16 %v1265
    %v5487 = vunpack.c.h.b16 %v1265
    %v5488 = vunpack.c.l.b16 %v1266
    %v5489 = vunpack.c.h.b16 %v1266
    %v5490 = vunpack.c.l.b16 %v1267
    %v5491 = vunpack.c.h.b16 %v1267
    %v5492 = vunpack.c.l.b16 %v1268
    %v5493 = vunpack.c.h.b16 %v1268
    %v5494 = vunpack.c.l.b16 %v1269
    %v5495 = vunpack.c.h.b16 %v1269
    %v5496 = vunpack.c.l.b16 %v1270
    %v5497 = vunpack.c.h.b16 %v1270
    %v5498 = vunpack.c.l.b16 %v1271
    %v5499 = vunpack.c.h.b16 %v1271
    %v5500 = vunpack.c.l.b16 %v1272
    %v5501 = vunpack.c.h.b16 %v1272
    %v5502 = vunpack.c.l.b16 %v1273
    %v5503 = vunpack.c.h.b16 %v1273
    %v5504 = vunpack.c.l.b16 %v1274
    %v5505 = vunpack.c.h.b16 %v1274
    %v5506 = vunpack.c.l.b16 %v1275
    %v5507 = vunpack.c.h.b16 %v1275
    %v5508 = vunpack.c.l.b16 %v1276
    %v5509 = vunpack.c.h.b16 %v1276
    %v5510 = vunpack.c.l.b16 %v1277
    %v5511 = vunpack.c.h.b16 %v1277
    %v5512 = vunpack.c.l.b16 %v1278
    %v5513 = vunpack.c.h.b16 %v1278
    %v5514 = vunpack.c.l.b16 %v1279
    %v5515 = vunpack.c.h.b16 %v1279
    %v5516 = vunpack.c.l.b16 %v1280
    %v5517 = vunpack.c.h.b16 %v1280
    %v5518 = vunpack.c.l.b16 %v1281
    %v5519 = vunpack.c.h.b16 %v1281
    %v5520 = vunpack.c.l.b16 %v1282
    %v5521 = vunpack.c.h.b16 %v1282
    %v5522 = vunpack.c.l.b16 %v1283
    %v5523 = vunpack.c.h.b16 %v1283
    %v5524 = vunpack.c.l.b16 %v1284
    %v5525 = vunpack.c.h.b16 %v1284
    %v5526 = vunpack.c.l.b16 %v1285
    %v5527 = vunpack.c.h.b16 %v1285
    %v5528 = vunpack.c.l.b16 %v1286
    %v5529 = vunpack.c.h.b16 %v1286
    %v5530 = vunpack.c.l.b16 %v1287
    %v5531 = vunpack.c.h.b16 %v1287
    %v5532 = vunpack.c.l.b16 %v1288
    %v5533 = vunpack.c.h.b16 %v1288
    %v5534 = vunpack.c.l.b16 %v1289
    %v5535 = vunpack.c.h.b16 %v1289
    %v5536 = vunpack.c.l.b16 %v1290
    %v5537 = vunpack.c.h.b16 %v1290
    %v5538 = vunpack.c.l.b16 %v1291
    %v5539 = vunpack.c.h.b16 %v1291
    %v5540 = vunpack.c.l.b16 %v1292
    %v5541 = vunpack.c.h.b16 %v1292
    %v5542 = vunpack.c.l.b16 %v1293
    %v5543 = vunpack.c.h.b16 %v1293
    %v5544 = vunpack.c.l.b16 %v1294
    %v5545 = vunpack.c.h.b16 %v1294
    %v5546 = vunpack.c.l.b16 %v1295
    %v5547 = vunpack.c.h.b16 %v1295
    %v5548 = vunpack.c.l.b16 %v1296
    %v5549 = vunpack.c.h.b16 %v1296
    %v5550 = vunpack.c.l.b16 %v1297
    %v5551 = vunpack.c.h.b16 %v1297
    %v5552 = vunpack.c.l.b16 %v1298
    %v5553 = vunpack.c.h.b16 %v1298
    %v5554 = vunpack.c.l.b16 %v1299
    %v5555 = vunpack.c.h.b16 %v1299
    %v5556 = vunpack.c.l.b16 %v1300
    %v5557 = vunpack.c.h.b16 %v1300
    %v5558 = vunpack.c.l.b16 %v1301
    %v5559 = vunpack.c.h.b16 %v1301
    %v5560 = vunpack.c.l.b16 %v1302
    %v5561 = vunpack.c.h.b16 %v1302
    %v5562 = vunpack.c.l.b16 %v1303
    %v5563 = vunpack.c.h.b16 %v1303
    %v5564 = vunpack.c.l.b16 %v1304
    %v5565 = vunpack.c.h.b16 %v1304
    %v5566 = vunpack.c.l.b16 %v1305
    %v5567 = vunpack.c.h.b16 %v1305
    %v5568 = vunpack.c.l.b16 %v1306
    %v5569 = vunpack.c.h.b16 %v1306
    %v5570 = vunpack.c.l.b16 %v1307
    %v5571 = vunpack.c.h.b16 %v1307
    %v5572 = vunpack.c.l.b16 %v1308
    %v5573 = vunpack.c.h.b16 %v1308
    %v5574 = vunpack.c.l.b16 %v1309
    %v5575 = vunpack.c.h.b16 %v1309
    %v5576 = vunpack.c.l.b16 %v1310
    %v5577 = vunpack.c.h.b16 %v1310
    %v5578 = vunpack.c.l.b16 %v1311
    %v5579 = vunpack.c.h.b16 %v1311
    %v5580 = vunpack.c.l.b16 %v1312
    %v5581 = vunpack.c.h.b16 %v1312
    %v5582 = vunpack.c.l.b16 %v1313
    %v5583 = vunpack.c.h.b16 %v1313
    %v5584 = vunpack.c.l.b16 %v1314
    %v5585 = vunpack.c.h.b16 %v1314
    %v5586 = vunpack.c.l.b16 %v1315
    %v5587 = vunpack.c.h.b16 %v1315
    %v5588 = vunpack.c.l.b16 %v1316
    %v5589 = vunpack.c.h.b16 %v1316
    %v5590 = vunpack.c.l.b16 %v1317
    %v5591 = vunpack.c.h.b16 %v1317
    %v5592 = vunpack.c.l.b16 %v1318
    %v5593 = vunpack.c.h.b16 %v1318
    %v5594 = vunpack.c.l.b16 %v1319
    %v5595 = vunpack.c.h.b16 %v1319
    %v5596 = vunpack.c.l.b16 %v1320
    %v5597 = vunpack.c.h.b16 %v1320
    %v5598 = vunpack.c.l.b16 %v1321
    %v5599 = vunpack.c.h.b16 %v1321
    %v5600 = vunpack.c.l.b16 %v1322
    %v5601 = vunpack.c.h.b16 %v1322
    %v5602 = vunpack.c.l.b16 %v1323
    %v5603 = vunpack.c.h.b16 %v1323
    %v5604 = vunpack.c.l.b16 %v1324
    %v5605 = vunpack.c.h.b16 %v1324
    %v5606 = vunpack.c.l.b16 %v1325
    %v5607 = vunpack.c.h.b16 %v1325
    %v5608 = vunpack.c.l.b16 %v1326
    %v5609 = vunpack.c.h.b16 %v1326
    %v5610 = vunpack.c.l.b16 %v1327
    %v5611 = vunpack.c.h.b16 %v1327
    %v5612 = vunpack.c.l.b16 %v1328
    %v5613 = vunpack.c.h.b16 %v1328
    %v5614 = vunpack.c.l.b16 %v1329
    %v5615 = vunpack.c.h.b16 %v1329
    %v5616 = vunpack.c.l.b16 %v1330
    %v5617 = vunpack.c.h.b16 %v1330
    %v5618 = vunpack.c.l.b16 %v1331
    %v5619 = vunpack.c.h.b16 %v1331
    %v5620 = vunpack.c.l.b16 %v1332
    %v5621 = vunpack.c.h.b16 %v1332
    %v5622 = vunpack.c.l.b16 %v1333
    %v5623 = vunpack.c.h.b16 %v1333
    %v5624 = vunpack.c.l.b16 %v1334
    %v5625 = vunpack.c.h.b16 %v1334
    %v5626 = vunpack.c.l.b16 %v1335
    %v5627 = vunpack.c.h.b16 %v1335
    %v5628 = vunpack.c.l.b16 %v1336
    %v5629 = vunpack.c.h.b16 %v1336
    %v5630 = vunpack.c.l.b16 %v1337
    %v5631 = vunpack.c.h.b16 %v1337
    %v5632 = vunpack.c.l.b16 %v1338
    %v5633 = vunpack.c.h.b16 %v1338
    %v5634 = vunpack.c.l.b16 %v1339
    %v5635 = vunpack.c.h.b16 %v1339
    %v5636 = vunpack.c.l.b16 %v1340
    %v5637 = vunpack.c.h.b16 %v1340
    %v5638 = vunpack.c.l.b16 %v1341
    %v5639 = vunpack.c.h.b16 %v1341
    %v5640 = vunpack.c.l.b16 %v1342
    %v5641 = vunpack.c.h.b16 %v1342
    %v5642 = vunpack.c.l.b16 %v1343
    %v5643 = vunpack.c.h.b16 %v1343
    %v5644 = vunpack.c.l.b16 %v1344
    %v5645 = vunpack.c.h.b16 %v1344
    %v5646 = vunpack.c.l.b16 %v1345
    %v5647 = vunpack.c.h.b16 %v1345
    %v5648 = vunpack.c.l.b16 %v1346
    %v5649 = vunpack.c.h.b16 %v1346
    %v5650 = vunpack.c.l.b16 %v1347
    %v5651 = vunpack.c.h.b16 %v1347
    %v5652 = vunpack.c.l.b16 %v1348
    %v5653 = vunpack.c.h.b16 %v1348
    %v5654 = vunpack.c.l.b16 %v1349
    %v5655 = vunpack.c.h.b16 %v1349
    %v5656 = vunpack.c.l.b16 %v1350
    %v5657 = vunpack.c.h.b16 %v1350
    %v5658 = vunpack.c.l.b16 %v1351
    %v5659 = vunpack.c.h.b16 %v1351
    %v5660 = vunpack.c.l.b16 %v1352
    %v5661 = vunpack.c.h.b16 %v1352
    %v5662 = vunpack.c.l.b16 %v1353
    %v5663 = vunpack.c.h.b16 %v1353
    %v5664 = vunpack.c.l.b16 %v1354
    %v5665 = vunpack.c.h.b16 %v1354
    %v5666 = vunpack.c.l.b16 %v1355
    %v5667 = vunpack.c.h.b16 %v1355
    %v5668 = vunpack.c.l.b16 %v1356
    %v5669 = vunpack.c.h.b16 %v1356
    %v5670 = vunpack.c.l.b16 %v1357
    %v5671 = vunpack.c.h.b16 %v1357
    %v5672 = vunpack.c.l.b16 %v1358
    %v5673 = vunpack.c.h.b16 %v1358
    %v5674 = vunpack.c.l.b16 %v1359
    %v5675 = vunpack.c.h.b16 %v1359
    %v5676 = vunpack.c.l.b16 %v1360
    %v5677 = vunpack.c.h.b16 %v1360
    %v5678 = vunpack.c.l.b16 %v1361
    %v5679 = vunpack.c.h.b16 %v1361
    %v5680 = vunpack.c.l.b16 %v1362
    %v5681 = vunpack.c.h.b16 %v1362
    %v5682 = vunpack.c.l.b16 %v1363
    %v5683 = vunpack.c.h.b16 %v1363
    %v5684 = vunpack.c.l.b16 %v1364
    %v5685 = vunpack.c.h.b16 %v1364
    %v5686 = vunpack.c.l.b16 %v1365
    %v5687 = vunpack.c.h.b16 %v1365
    %v5688 = vunpack.c.l.b16 %v1366
    %v5689 = vunpack.c.h.b16 %v1366
    %v5690 = vunpack.c.l.b16 %v1367
    %v5691 = vunpack.c.h.b16 %v1367
    %v5692 = vunpack.c.l.b16 %v1368
    %v5693 = vunpack.c.h.b16 %v1368
    %v5694 = vunpack.c.l.b16 %v1369
    %v5695 = vunpack.c.h.b16 %v1369
    %v5696 = vunpack.c.l.b16 %v1370
    %v5697 = vunpack.c.h.b16 %v1370
    %v5698 = vunpack.c.l.b16 %v1371
    %v5699 = vunpack.c.h.b16 %v1371
    %v5700 = vunpack.c.l.b16 %v1372
    %v5701 = vunpack.c.h.b16 %v1372
    %v5702 = vunpack.c.l.b16 %v1373
    %v5703 = vunpack.c.h.b16 %v1373
    %v5704 = vunpack.c.l.b16 %v1374
    %v5705 = vunpack.c.h.b16 %v1374
    %v5706 = vunpack.c.l.b16 %v1375
    %v5707 = vunpack.c.h.b16 %v1375
    %v5708 = vunpack.c.l.b16 %v1376
    %v5709 = vunpack.c.h.b16 %v1376
    %v5710 = vunpack.c.l.b16 %v1377
    %v5711 = vunpack.c.h.b16 %v1377
    %v5712 = vunpack.c.l.b16 %v1378
    %v5713 = vunpack.c.h.b16 %v1378
    %v5714 = vunpack.c.l.b16 %v1379
    %v5715 = vunpack.c.h.b16 %v1379
    %v5716 = vunpack.c.l.b16 %v1380
    %v5717 = vunpack.c.h.b16 %v1380
    %v5718 = vunpack.c.l.b16 %v1381
    %v5719 = vunpack.c.h.b16 %v1381
    %v5720 = vunpack.c.l.b16 %v1382
    %v5721 = vunpack.c.h.b16 %v1382
    %v5722 = vunpack.c.l.b16 %v1383
    %v5723 = vunpack.c.h.b16 %v1383
    %v5724 = vunpack.c.l.b16 %v1384
    %v5725 = vunpack.c.h.b16 %v1384
    %v5726 = vunpack.c.l.b16 %v1385
    %v5727 = vunpack.c.h.b16 %v1385
    %v5728 = vunpack.c.l.b16 %v1386
    %v5729 = vunpack.c.h.b16 %v1386
    %v5730 = vunpack.c.l.b16 %v1387
    %v5731 = vunpack.c.h.b16 %v1387
    %v5732 = vunpack.c.l.b16 %v1388
    %v5733 = vunpack.c.h.b16 %v1388
    %v5734 = vunpack.c.l.b16 %v1389
    %v5735 = vunpack.c.h.b16 %v1389
    %v5736 = vunpack.c.l.b16 %v1390
    %v5737 = vunpack.c.h.b16 %v1390
    %v5738 = vunpack.c.l.b16 %v1391
    %v5739 = vunpack.c.h.b16 %v1391
    %v5740 = vunpack.c.l.b16 %v1392
    %v5741 = vunpack.c.h.b16 %v1392
    %v5742 = vunpack.c.l.b16 %v1393
    %v5743 = vunpack.c.h.b16 %v1393
    %v5744 = vunpack.c.l.b16 %v1394
    %v5745 = vunpack.c.h.b16 %v1394
    %v5746 = vunpack.c.l.b16 %v1395
    %v5747 = vunpack.c.h.b16 %v1395
    %v5748 = vunpack.c.l.b16 %v1396
    %v5749 = vunpack.c.h.b16 %v1396
    %v5750 = vunpack.c.l.b16 %v1397
    %v5751 = vunpack.c.h.b16 %v1397
    %v5752 = vunpack.c.l.b16 %v1398
    %v5753 = vunpack.c.h.b16 %v1398
    %v5754 = vunpack.c.l.b16 %v1399
    %v5755 = vunpack.c.h.b16 %v1399
    %v5756 = vunpack.c.l.b16 %v1400
    %v5757 = vunpack.c.h.b16 %v1400
    %v5758 = vunpack.c.l.b16 %v1401
    %v5759 = vunpack.c.h.b16 %v1401
    %v5760 = vunpack.c.l.b16 %v1402
    %v5761 = vunpack.c.h.b16 %v1402
    %v5762 = vunpack.c.l.b16 %v1403
    %v5763 = vunpack.c.h.b16 %v1403
    %v5764 = vunpack.c.l.b16 %v1404
    %v5765 = vunpack.c.h.b16 %v1404
    %v5766 = vunpack.c.l.b16 %v1405
    %v5767 = vunpack.c.h.b16 %v1405
    %v5768 = vunpack.c.l.b16 %v1406
    %v5769 = vunpack.c.h.b16 %v1406
    %v5770 = vunpack.c.l.b16 %v1407
    %v5771 = vunpack.c.h.b16 %v1407
    %v5772 = vunpack.c.l.b16 %v1408
    %v5773 = vunpack.c.h.b16 %v1408
    %v5774 = vunpack.c.l.b16 %v1409
    %v5775 = vunpack.c.h.b16 %v1409
    %v5776 = vunpack.c.l.b16 %v1410
    %v5777 = vunpack.c.h.b16 %v1410
    %v5778 = vunpack.c.l.b16 %v1411
    %v5779 = vunpack.c.h.b16 %v1411
    %v5780 = vunpack.c.l.b16 %v1412
    %v5781 = vunpack.c.h.b16 %v1412
    %v5782 = vunpack.c.l.b16 %v1413
    %v5783 = vunpack.c.h.b16 %v1413
    %v5784 = vunpack.c.l.b16 %v1414
    %v5785 = vunpack.c.h.b16 %v1414
    %v5786 = vunpack.c.l.b16 %v1415
    %v5787 = vunpack.c.h.b16 %v1415
    %v5788 = vunpack.c.l.b16 %v1416
    %v5789 = vunpack.c.h.b16 %v1416
    %v5790 = vunpack.c.l.b16 %v1417
    %v5791 = vunpack.c.h.b16 %v1417
    %v5792 = vunpack.c.l.b16 %v1418
    %v5793 = vunpack.c.h.b16 %v1418
    %v5794 = vunpack.c.l.b16 %v1419
    %v5795 = vunpack.c.h.b16 %v1419
    %v5796 = vunpack.c.l.b16 %v1420
    %v5797 = vunpack.c.h.b16 %v1420
    %v5798 = vunpack.c.l.b16 %v1421
    %v5799 = vunpack.c.h.b16 %v1421
    %v5800 = vunpack.c.l.b16 %v1422
    %v5801 = vunpack.c.h.b16 %v1422
    %v5802 = vunpack.c.l.b16 %v1423
    %v5803 = vunpack.c.h.b16 %v1423
    %v5804 = vunpack.c.l.b16 %v1424
    %v5805 = vunpack.c.h.b16 %v1424
    %v5806 = vunpack.c.l.b16 %v1425
    %v5807 = vunpack.c.h.b16 %v1425
    %v5808 = vunpack.c.l.b16 %v1426
    %v5809 = vunpack.c.h.b16 %v1426
    %v5810 = vunpack.c.l.b16 %v1427
    %v5811 = vunpack.c.h.b16 %v1427
    %v5812 = vunpack.c.l.b16 %v1428
    %v5813 = vunpack.c.h.b16 %v1428
    %v5814 = vunpack.c.l.b16 %v1429
    %v5815 = vunpack.c.h.b16 %v1429
    %v5816 = vunpack.c.l.b16 %v1430
    %v5817 = vunpack.c.h.b16 %v1430
    %v5818 = vunpack.c.l.b16 %v1431
    %v5819 = vunpack.c.h.b16 %v1431
    %v5820 = vunpack.c.l.b16 %v1432
    %v5821 = vunpack.c.h.b16 %v1432
    %v5822 = vunpack.c.l.b16 %v1433
    %v5823 = vunpack.c.h.b16 %v1433
    %v5824 = vunpack.c.l.b16 %v1434
    %v5825 = vunpack.c.h.b16 %v1434
    %v5826 = vunpack.c.l.b16 %v1435
    %v5827 = vunpack.c.h.b16 %v1435
    %v5828 = vunpack.c.l.b16 %v1436
    %v5829 = vunpack.c.h.b16 %v1436
    %v5830 = vunpack.c.l.b16 %v1437
    %v5831 = vunpack.c.h.b16 %v1437
    %v5832 = vunpack.c.l.b16 %v1438
    %v5833 = vunpack.c.h.b16 %v1438
    %v5834 = vunpack.c.l.b16 %v1439
    %v5835 = vunpack.c.h.b16 %v1439
    %v5836 = vunpack.c.l.b16 %v1440
    %v5837 = vunpack.c.h.b16 %v1440
    %v5838 = vunpack.c.l.b16 %v1441
    %v5839 = vunpack.c.h.b16 %v1441
    %v5840 = vunpack.c.l.b16 %v1442
    %v5841 = vunpack.c.h.b16 %v1442
    %v5842 = vunpack.c.l.b16 %v1443
    %v5843 = vunpack.c.h.b16 %v1443
    %v5844 = vunpack.c.l.b16 %v1444
    %v5845 = vunpack.c.h.b16 %v1444
    %v5846 = vunpack.c.l.b16 %v1445
    %v5847 = vunpack.c.h.b16 %v1445
    %v5848 = vunpack.c.l.b16 %v1446
    %v5849 = vunpack.c.h.b16 %v1446
    %v5850 = vunpack.c.l.b16 %v1447
    %v5851 = vunpack.c.h.b16 %v1447
    %v5852 = vunpack.c.l.b16 %v1448
    %v5853 = vunpack.c.h.b16 %v1448
    %v5854 = vunpack.c.l.b16 %v1449
    %v5855 = vunpack.c.h.b16 %v1449
    %v5856 = vunpack.c.l.b16 %v1450
    %v5857 = vunpack.c.h.b16 %v1450
    %v5858 = vunpack.c.l.b16 %v1451
    %v5859 = vunpack.c.h.b16 %v1451
    %v5860 = vunpack.c.l.b16 %v1452
    %v5861 = vunpack.c.h.b16 %v1452
    %v5862 = vunpack.c.l.b16 %v1453
    %v5863 = vunpack.c.h.b16 %v1453
    %v5864 = vunpack.c.l.b16 %v1454
    %v5865 = vunpack.c.h.b16 %v1454
    %v5866 = vunpack.c.l.b16 %v1455
    %v5867 = vunpack.c.h.b16 %v1455
    %v5868 = vunpack.c.l.b16 %v1456
    %v5869 = vunpack.c.h.b16 %v1456
    %v5870 = vunpack.c.l.b16 %v1457
    %v5871 = vunpack.c.h.b16 %v1457
    %v5872 = vunpack.c.l.b16 %v1458
    %v5873 = vunpack.c.h.b16 %v1458
    %v5874 = vunpack.c.l.b16 %v1459
    %v5875 = vunpack.c.h.b16 %v1459
    %v5876 = vunpack.c.l.b16 %v1460
    %v5877 = vunpack.c.h.b16 %v1460
    %v5878 = vunpack.c.l.b16 %v1461
    %v5879 = vunpack.c.h.b16 %v1461
    %v5880 = vunpack.c.l.b16 %v1462
    %v5881 = vunpack.c.h.b16 %v1462
    %v5882 = vunpack.c.l.b16 %v1463
    %v5883 = vunpack.c.h.b16 %v1463
    %v5884 = vunpack.c.l.b16 %v1464
    %v5885 = vunpack.c.h.b16 %v1464
    %v5886 = vunpack.c.l.b16 %v1465
    %v5887 = vunpack.c.h.b16 %v1465
    %v5888 = vunpack.c.l.b16 %v1466
    %v5889 = vunpack.c.h.b16 %v1466
    %v5890 = vunpack.c.l.b16 %v1467
    %v5891 = vunpack.c.h.b16 %v1467
    %v5892 = vunpack.c.l.b16 %v1468
    %v5893 = vunpack.c.h.b16 %v1468
    %v5894 = vunpack.c.l.b16 %v1469
    %v5895 = vunpack.c.h.b16 %v1469
    %v5896 = vunpack.c.l.b16 %v1470
    %v5897 = vunpack.c.h.b16 %v1470
    %v5898 = vunpack.c.l.b16 %v1471
    %v5899 = vunpack.c.h.b16 %v1471
    %v5900 = vunpack.c.l.b16 %v1472
    %v5901 = vunpack.c.h.b16 %v1472
    %v5902 = vunpack.c.l.b16 %v1473
    %v5903 = vunpack.c.h.b16 %v1473
    %v5904 = vunpack.c.l.b16 %v1474
    %v5905 = vunpack.c.h.b16 %v1474
    %v5906 = vunpack.c.l.b16 %v1475
    %v5907 = vunpack.c.h.b16 %v1475
    %v5908 = vunpack.c.l.b16 %v1476
    %v5909 = vunpack.c.h.b16 %v1476
    %v5910 = vunpack.c.l.b16 %v1477
    %v5911 = vunpack.c.h.b16 %v1477
    %v5912 = vunpack.c.l.b16 %v1478
    %v5913 = vunpack.c.h.b16 %v1478
    %v5914 = vunpack.c.l.b16 %v1479
    %v5915 = vunpack.c.h.b16 %v1479
    %v5916 = vunpack.c.l.b16 %v1480
    %v5917 = vunpack.c.h.b16 %v1480
    %v5918 = vunpack.c.l.b16 %v1481
    %v5919 = vunpack.c.h.b16 %v1481
    %v5920 = vunpack.c.l.b16 %v1482
    %v5921 = vunpack.c.h.b16 %v1482
    %v5922 = vunpack.c.l.b16 %v1483
    %v5923 = vunpack.c.h.b16 %v1483
    %v5924 = vunpack.c.l.b16 %v1484
    %v5925 = vunpack.c.h.b16 %v1484
    %v5926 = vunpack.c.l.b16 %v1485
    %v5927 = vunpack.c.h.b16 %v1485
    %v5928 = vunpack.c.l.b16 %v1486
    %v5929 = vunpack.c.h.b16 %v1486
    %v5930 = vunpack.c.l.b16 %v1487
    %v5931 = vunpack.c.h.b16 %v1487
    %v5932 = vunpack.c.l.b16 %v1488
    %v5933 = vunpack.c.h.b16 %v1488
    %v5934 = vunpack.c.l.b16 %v1489
    %v5935 = vunpack.c.h.b16 %v1489
    %v5936 = vunpack.c.l.b16 %v1490
    %v5937 = vunpack.c.h.b16 %v1490
    %v5938 = vunpack.c.l.b16 %v1491
    %v5939 = vunpack.c.h.b16 %v1491
    %v5940 = vunpack.c.l.b16 %v1492
    %v5941 = vunpack.c.h.b16 %v1492
    %v5942 = vunpack.c.l.b16 %v1493
    %v5943 = vunpack.c.h.b16 %v1493
    %v5944 = vunpack.c.l.b16 %v1494
    %v5945 = vunpack.c.h.b16 %v1494
    %v5946 = vunpack.c.l.b16 %v1495
    %v5947 = vunpack.c.h.b16 %v1495
    %v5948 = vunpack.c.l.b16 %v1496
    %v5949 = vunpack.c.h.b16 %v1496
    %v5950 = vunpack.c.l.b16 %v1497
    %v5951 = vunpack.c.h.b16 %v1497
    %v5952 = vunpack.c.l.b16 %v1498
    %v5953 = vunpack.c.h.b16 %v1498
    %v5954 = vunpack.c.l.b16 %v1499
    %v5955 = vunpack.c.h.b16 %v1499
    %v5956 = vunpack.c.l.b16 %v1500
    %v5957 = vunpack.c.h.b16 %v1500
    %v5958 = vunpack.c.l.b16 %v1501
    %v5959 = vunpack.c.h.b16 %v1501
    %v5960 = vunpack.c.l.b16 %v1502
    %v5961 = vunpack.c.h.b16 %v1502
    %v5962 = vunpack.c.l.b16 %v1503
    %v5963 = vunpack.c.h.b16 %v1503
    %v5964 = vunpack.c.l.b16 %v1504
    %v5965 = vunpack.c.h.b16 %v1504
    %v5966 = vunpack.c.l.b16 %v1505
    %v5967 = vunpack.c.h.b16 %v1505
    %v5968 = vunpack.c.l.b16 %v1506
    %v5969 = vunpack.c.h.b16 %v1506
    %v5970 = vunpack.c.l.b16 %v1507
    %v5971 = vunpack.c.h.b16 %v1507
    %v5972 = vunpack.c.l.b16 %v1508
    %v5973 = vunpack.c.h.b16 %v1508
    %v5974 = vunpack.c.l.b16 %v1509
    %v5975 = vunpack.c.h.b16 %v1509
    %v5976 = vunpack.c.l.b16 %v1510
    %v5977 = vunpack.c.h.b16 %v1510
    %v5978 = vunpack.c.l.b16 %v1511
    %v5979 = vunpack.c.h.b16 %v1511
    %v5980 = vunpack.c.l.b16 %v1512
    %v5981 = vunpack.c.h.b16 %v1512
    %v5982 = vunpack.c.l.b16 %v1513
    %v5983 = vunpack.c.h.b16 %v1513
    %v5984 = vunpack.c.l.b16 %v1514
    %v5985 = vunpack.c.h.b16 %v1514
    %v5986 = vunpack.c.l.b16 %v1515
    %v5987 = vunpack.c.h.b16 %v1515
    %v5988 = vunpack.c.l.b16 %v1516
    %v5989 = vunpack.c.h.b16 %v1516
    %v5990 = vunpack.c.l.b16 %v1517
    %v5991 = vunpack.c.h.b16 %v1517
    %v5992 = vunpack.c.l.b16 %v1518
    %v5993 = vunpack.c.h.b16 %v1518
    %v5994 = vunpack.c.l.b16 %v1519
    %v5995 = vunpack.c.h.b16 %v1519
    %v5996 = vunpack.c.l.b16 %v1520
    %v5997 = vunpack.c.h.b16 %v1520
    %v5998 = vunpack.c.l.b16 %v1521
    %v5999 = vunpack.c.h.b16 %v1521
    %v6000 = vunpack.c.l.b16 %v1522
    %v6001 = vunpack.c.h.b16 %v1522
    %v6002 = vunpack.c.l.b16 %v1523
    %v6003 = vunpack.c.h.b16 %v1523
    %v6004 = vunpack.c.l.b16 %v1524
    %v6005 = vunpack.c.h.b16 %v1524
    %v6006 = vunpack.c.l.b16 %v1525
    %v6007 = vunpack.c.h.b16 %v1525
    %v6008 = vunpack.c.l.b16 %v1526
    %v6009 = vunpack.c.h.b16 %v1526
    %v6010 = vunpack.c.l.b16 %v1527
    %v6011 = vunpack.c.h.b16 %v1527
    %v6012 = vunpack.c.l.b16 %v1528
    %v6013 = vunpack.c.h.b16 %v1528
    %v6014 = vunpack.c.l.b16 %v1529
    %v6015 = vunpack.c.h.b16 %v1529
    %v6016 = vunpack.c.l.b16 %v1530
    %v6017 = vunpack.c.h.b16 %v1530
    %v6018 = vunpack.c.l.b16 %v1531
    %v6019 = vunpack.c.h.b16 %v1531
    %v6020 = vunpack.c.l.b16 %v1532
    %v6021 = vunpack.c.h.b16 %v1532
    %v6022 = vunpack.c.l.b16 %v1533
    %v6023 = vunpack.c.h.b16 %v1533
    %v6024 = vunpack.c.l.b16 %v1534
    %v6025 = vunpack.c.h.b16 %v1534
    %v6026 = vunpack.c.l.b16 %v1535
    %v6027 = vunpack.c.h.b16 %v1535
    %v6028 = vunpack.c.l.b16 %v1536
    %v6029 = vunpack.c.h.b16 %v1536
    %v6030 = vunpack.c.l.b16 %v1537
    %v6031 = vunpack.c.h.b16 %v1537
    %v6032 = vunpack.c.l.b16 %v1538
    %v6033 = vunpack.c.h.b16 %v1538
    %v6034 = vunpack.c.l.b16 %v1539
    %v6035 = vunpack.c.h.b16 %v1539
    %v6036 = vunpack.c.l.b16 %v1540
    %v6037 = vunpack.c.h.b16 %v1540
    %v6038 = vunpack.c.l.b16 %v1541
    %v6039 = vunpack.c.h.b16 %v1541
    %v6040 = vunpack.c.l.b16 %v1542
    %v6041 = vunpack.c.h.b16 %v1542
    %v6042 = vunpack.c.l.b16 %v1543
    %v6043 = vunpack.c.h.b16 %v1543
    %v6044 = vunpack.c.l.b16 %v1544
    %v6045 = vunpack.c.h.b16 %v1544
    %v6046 = vunpack.c.l.b16 %v1545
    %v6047 = vunpack.c.h.b16 %v1545
    %v6048 = vunpack.c.l.b16 %v1546
    %v6049 = vunpack.c.h.b16 %v1546
    %v6050 = vunpack.c.l.b16 %v1547
    %v6051 = vunpack.c.h.b16 %v1547
    %v6052 = vunpack.c.l.b16 %v1548
    %v6053 = vunpack.c.h.b16 %v1548
    %v6054 = vunpack.c.l.b16 %v1549
    %v6055 = vunpack.c.h.b16 %v1549
    %v6056 = vunpack.c.l.b16 %v1550
    %v6057 = vunpack.c.h.b16 %v1550
    %v6058 = vunpack.c.l.b16 %v1551
    %v6059 = vunpack.c.h.b16 %v1551
    %v6060 = vunpack.c.l.b16 %v1552
    %v6061 = vunpack.c.h.b16 %v1552
    %v6062 = vunpack.c.l.b16 %v1553
    %v6063 = vunpack.c.h.b16 %v1553
    %v6064 = vunpack.c.l.b16 %v1554
    %v6065 = vunpack.c.h.b16 %v1554
    %v6066 = vunpack.c.l.b16 %v1555
    %v6067 = vunpack.c.h.b16 %v1555
    %v6068 = vunpack.c.l.b16 %v1556
    %v6069 = vunpack.c.h.b16 %v1556
    %v6070 = vunpack.c.l.b16 %v1557
    %v6071 = vunpack.c.h.b16 %v1557
    %v6072 = vunpack.c.l.b16 %v1558
    %v6073 = vunpack.c.h.b16 %v1558
    %v6074 = vunpack.c.l.b16 %v1559
    %v6075 = vunpack.c.h.b16 %v1559
    %v6076 = vunpack.c.l.b16 %v1560
    %v6077 = vunpack.c.h.b16 %v1560
    %v6078 = vunpack.c.l.b16 %v1561
    %v6079 = vunpack.c.h.b16 %v1561
    %v6080 = vunpack.c.l.b16 %v1562
    %v6081 = vunpack.c.h.b16 %v1562
    %v6082 = vunpack.c.l.b16 %v1563
    %v6083 = vunpack.c.h.b16 %v1563
    %v6084 = vunpack.c.l.b16 %v1564
    %v6085 = vunpack.c.h.b16 %v1564
    %v6086 = vunpack.c.l.b16 %v1565
    %v6087 = vunpack.c.h.b16 %v1565
    %v6088 = vunpack.c.l.b16 %v1566
    %v6089 = vunpack.c.h.b16 %v1566
    %v6090 = vunpack.c.l.b16 %v1567
    %v6091 = vunpack.c.h.b16 %v1567
    %v6092 = vunpack.c.l.b16 %v1568
    %v6093 = vunpack.c.h.b16 %v1568
    %v6094 = vunpack.c.l.b16 %v1569
    %v6095 = vunpack.c.h.b16 %v1569
    %v6096 = vunpack.c.l.b16 %v1570
    %v6097 = vunpack.c.h.b16 %v1570
    %v6098 = vunpack.c.l.b16 %v1571
    %v6099 = vunpack.c.h.b16 %v1571
    %v6100 = vunpack.c.l.b16 %v1572
    %v6101 = vunpack.c.h.b16 %v1572
    %v6102 = vunpack.c.l.b16 %v1573
    %v6103 = vunpack.c.h.b16 %v1573
    %v6104 = vunpack.c.l.b16 %v1574
    %v6105 = vunpack.c.h.b16 %v1574
    %v6106 = vunpack.c.l.b16 %v1575
    %v6107 = vunpack.c.h.b16 %v1575
    %v6108 = vunpack.c.l.b16 %v1576
    %v6109 = vunpack.c.h.b16 %v1576
    %v6110 = vunpack.c.l.b16 %v1577
    %v6111 = vunpack.c.h.b16 %v1577
    %v6112 = vunpack.c.l.b16 %v1578
    %v6113 = vunpack.c.h.b16 %v1578
    %v6114 = vunpack.c.l.b16 %v1579
    %v6115 = vunpack.c.h.b16 %v1579
    %v6116 = vunpack.c.l.b16 %v1580
    %v6117 = vunpack.c.h.b16 %v1580
    %v6118 = vunpack.c.l.b16 %v1581
    %v6119 = vunpack.c.h.b16 %v1581
    %v6120 = vunpack.c.l.b16 %v1582
    %v6121 = vunpack.c.h.b16 %v1582
    %v6122 = vunpack.c.l.b16 %v1583
    %v6123 = vunpack.c.h.b16 %v1583
    %v6124 = vunpack.c.l.b16 %v1584
    %v6125 = vunpack.c.h.b16 %v1584
    %v6126 = vunpack.c.l.b16 %v1585
    %v6127 = vunpack.c.h.b16 %v1585
    %v6128 = vunpack.c.l.b16 %v1586
    %v6129 = vunpack.c.h.b16 %v1586
    %v6130 = vunpack.c.l.b16 %v1587
    %v6131 = vunpack.c.h.b16 %v1587
    %v6132 = vunpack.c.l.b16 %v1588
    %v6133 = vunpack.c.h.b16 %v1588
    %v6134 = vunpack.c.l.b16 %v1589
    %v6135 = vunpack.c.h.b16 %v1589
    %v6136 = vunpack.c.l.b16 %v1590
    %v6137 = vunpack.c.h.b16 %v1590
    %v6138 = vunpack.c.l.b16 %v1591
    %v6139 = vunpack.c.h.b16 %v1591
    %v6140 = vunpack.c.l.b16 %v1592
    %v6141 = vunpack.c.h.b16 %v1592
    %v6142 = vunpack.c.l.b16 %v1593
    %v6143 = vunpack.c.h.b16 %v1593
    %v6144 = vunpack.c.l.b16 %v1594
    %v6145 = vunpack.c.h.b16 %v1594
    %v6146 = vunpack.c.l.b16 %v1595
    %v6147 = vunpack.c.h.b16 %v1595
    %v6148 = vunpack.c.l.b16 %v1596
    %v6149 = vunpack.c.h.b16 %v1596
    %v6150 = vunpack.c.l.b16 %v1597
    %v6151 = vunpack.c.h.b16 %v1597
    %v6152 = vunpack.c.l.b16 %v1598
    %v6153 = vunpack.c.h.b16 %v1598
    %v6154 = vunpack.c.l.b16 %v1599
    %v6155 = vunpack.c.h.b16 %v1599
    %v6156 = vunpack.c.l.b16 %v1600
    %v6157 = vunpack.c.h.b16 %v1600
    %v6158 = vunpack.c.l.b16 %v1601
    %v6159 = vunpack.c.h.b16 %v1601
    %v6160 = vunpack.c.l.b16 %v1602
    %v6161 = vunpack.c.h.b16 %v1602
    %v6162 = vunpack.c.l.b16 %v1603
    %v6163 = vunpack.c.h.b16 %v1603
    %v6164 = vunpack.c.l.b16 %v1604
    %v6165 = vunpack.c.h.b16 %v1604
    %v6166 = vunpack.c.l.b16 %v1605
    %v6167 = vunpack.c.h.b16 %v1605
    %v6168 = vunpack.c.l.b16 %v1606
    %v6169 = vunpack.c.h.b16 %v1606
    %v6170 = vunpack.c.l.b16 %v1607
    %v6171 = vunpack.c.h.b16 %v1607
    %v6172 = vunpack.c.l.b16 %v1608
    %v6173 = vunpack.c.h.b16 %v1608
    %v6174 = vunpack.c.l.b16 %v1609
    %v6175 = vunpack.c.h.b16 %v1609
    %v6176 = vunpack.c.l.b16 %v1610
    %v6177 = vunpack.c.h.b16 %v1610
    %v6178 = vunpack.c.l.b16 %v1611
    %v6179 = vunpack.c.h.b16 %v1611
    %v6180 = vunpack.c.l.b16 %v1612
    %v6181 = vunpack.c.h.b16 %v1612
    %v6182 = vunpack.c.l.b16 %v1613
    %v6183 = vunpack.c.h.b16 %v1613
    %v6184 = vunpack.c.l.b16 %v1614
    %v6185 = vunpack.c.h.b16 %v1614
    %v6186 = vunpack.c.l.b16 %v1615
    %v6187 = vunpack.c.h.b16 %v1615
    %v6188 = vunpack.c.l.b16 %v1616
    %v6189 = vunpack.c.h.b16 %v1616
    %v6190 = vunpack.c.l.b16 %v1617
    %v6191 = vunpack.c.h.b16 %v1617
    %v6192 = vunpack.c.l.b16 %v1618
    %v6193 = vunpack.c.h.b16 %v1618
    %v6194 = vunpack.c.l.b16 %v1619
    %v6195 = vunpack.c.h.b16 %v1619
    %v6196 = vunpack.c.l.b16 %v1620
    %v6197 = vunpack.c.h.b16 %v1620
    %v6198 = vunpack.c.l.b16 %v1621
    %v6199 = vunpack.c.h.b16 %v1621
    %v6200 = vunpack.c.l.b16 %v1622
    %v6201 = vunpack.c.h.b16 %v1622
    %v6202 = vunpack.c.l.b16 %v1623
    %v6203 = vunpack.c.h.b16 %v1623
    %v6204 = vunpack.c.l.b16 %v1624
    %v6205 = vunpack.c.h.b16 %v1624
    %v6206 = vunpack.c.l.b16 %v1625
    %v6207 = vunpack.c.h.b16 %v1625
    %v6208 = vunpack.c.l.b16 %v1626
    %v6209 = vunpack.c.h.b16 %v1626
    %v6210 = vunpack.c.l.b16 %v1627
    %v6211 = vunpack.c.h.b16 %v1627
    %v6212 = vunpack.c.l.b16 %v1628
    %v6213 = vunpack.c.h.b16 %v1628
    %v6214 = vunpack.c.l.b16 %v1629
    %v6215 = vunpack.c.h.b16 %v1629
    %v6216 = vunpack.c.l.b16 %v1630
    %v6217 = vunpack.c.h.b16 %v1630
    %v6218 = vunpack.c.l.b16 %v1631
    %v6219 = vunpack.c.h.b16 %v1631
    %v6220 = vunpack.c.l.b16 %v1632
    %v6221 = vunpack.c.h.b16 %v1632
    %v6222 = vunpack.c.l.b16 %v1633
    %v6223 = vunpack.c.h.b16 %v1633
    %v6224 = vunpack.c.l.b16 %v1634
    %v6225 = vunpack.c.h.b16 %v1634
    %v6226 = vunpack.c.l.b16 %v1635
    %v6227 = vunpack.c.h.b16 %v1635
    %v6228 = vunpack.c.l.b16 %v1636
    %v6229 = vunpack.c.h.b16 %v1636
    %v6230 = vunpack.c.l.b16 %v1637
    %v6231 = vunpack.c.h.b16 %v1637
    %v6232 = vunpack.c.l.b16 %v1638
    %v6233 = vunpack.c.h.b16 %v1638
    %v6234 = vunpack.c.l.b16 %v1639
    %v6235 = vunpack.c.h.b16 %v1639
    %v6236 = vunpack.c.l.b16 %v1640
    %v6237 = vunpack.c.h.b16 %v1640
    %v6238 = vunpack.c.l.b16 %v1641
    %v6239 = vunpack.c.h.b16 %v1641
    %v6240 = vunpack.c.l.b16 %v1642
    %v6241 = vunpack.c.h.b16 %v1642
    %v6242 = vunpack.c.l.b16 %v1643
    %v6243 = vunpack.c.h.b16 %v1643
    %v6244 = vunpack.c.l.b16 %v1644
    %v6245 = vunpack.c.h.b16 %v1644
    %v6246 = vunpack.c.l.b16 %v1645
    %v6247 = vunpack.c.h.b16 %v1645
    %v6248 = vunpack.c.l.b16 %v1646
    %v6249 = vunpack.c.h.b16 %v1646
    %v6250 = vunpack.c.l.b16 %v1647
    %v6251 = vunpack.c.h.b16 %v1647
    %v6252 = vunpack.c.l.b16 %v1648
    %v6253 = vunpack.c.h.b16 %v1648
    %v6254 = vunpack.c.l.b16 %v1649
    %v6255 = vunpack.c.h.b16 %v1649
    %v6256 = vunpack.c.l.b16 %v1650
    %v6257 = vunpack.c.h.b16 %v1650
    %v6258 = vunpack.c.l.b16 %v1651
    %v6259 = vunpack.c.h.b16 %v1651
    %v6260 = vunpack.c.l.b16 %v1652
    %v6261 = vunpack.c.h.b16 %v1652
    %v6262 = vunpack.c.l.b16 %v1653
    %v6263 = vunpack.c.h.b16 %v1653
    %v6264 = vunpack.c.l.b16 %v1654
    %v6265 = vunpack.c.h.b16 %v1654
    %v6266 = vunpack.c.l.b16 %v1655
    %v6267 = vunpack.c.h.b16 %v1655
    %v6268 = vunpack.c.l.b16 %v1656
    %v6269 = vunpack.c.h.b16 %v1656
    %v6270 = vunpack.c.l.b16 %v1657
    %v6271 = vunpack.c.h.b16 %v1657
    %v6272 = vunpack.c.l.b16 %v1658
    %v6273 = vunpack.c.h.b16 %v1658
    %v6274 = vunpack.c.l.b16 %v1659
    %v6275 = vunpack.c.h.b16 %v1659
    %v6276 = vunpack.c.l.b16 %v1660
    %v6277 = vunpack.c.h.b16 %v1660
    %v6278 = vunpack.c.l.b16 %v1661
    %v6279 = vunpack.c.h.b16 %v1661
    %v6280 = vunpack.c.l.b16 %v1662
    %v6281 = vunpack.c.h.b16 %v1662
    %v6282 = vunpack.c.l.b16 %v1663
    %v6283 = vunpack.c.h.b16 %v1663
    %v6284 = vunpack.c.l.b16 %v1664
    %v6285 = vunpack.c.h.b16 %v1664
    %v6286 = vunpack.c.l.b16 %v1665
    %v6287 = vunpack.c.h.b16 %v1665
    %v6288 = vunpack.c.l.b16 %v1666
    %v6289 = vunpack.c.h.b16 %v1666
    %v6290 = vunpack.c.l.b16 %v1667
    %v6291 = vunpack.c.h.b16 %v1667
    %v6292 = vunpack.c.l.b16 %v1668
    %v6293 = vunpack.c.h.b16 %v1668
    %v6294 = vunpack.c.l.b16 %v1669
    %v6295 = vunpack.c.h.b16 %v1669
    %v6296 = vunpack.c.l.b16 %v1670
    %v6297 = vunpack.c.h.b16 %v1670
    %v6298 = vunpack.c.l.b16 %v1671
    %v6299 = vunpack.c.h.b16 %v1671
    %v6300 = vunpack.c.l.b16 %v1672
    %v6301 = vunpack.c.h.b16 %v1672
    %v6302 = vunpack.c.l.b16 %v1673
    %v6303 = vunpack.c.h.b16 %v1673
    %v6304 = vunpack.c.l.b16 %v1674
    %v6305 = vunpack.c.h.b16 %v1674
    %v6306 = vunpack.c.l.b16 %v1675
    %v6307 = vunpack.c.h.b16 %v1675
    %v6308 = vunpack.c.l.b16 %v1676
    %v6309 = vunpack.c.h.b16 %v1676
    %v6310 = vunpack.c.l.b16 %v1677
    %v6311 = vunpack.c.h.b16 %v1677
    %v6312 = vunpack.c.l.b16 %v1678
    %v6313 = vunpack.c.h.b16 %v1678
    %v6314 = vunpack.c.l.b16 %v1679
    %v6315 = vunpack.c.h.b16 %v1679
    %v6316 = vunpack.c.l.b16 %v1680
    %v6317 = vunpack.c.h.b16 %v1680
    %v6318 = vunpack.c.l.b16 %v1681
    %v6319 = vunpack.c.h.b16 %v1681
    %v6320 = vunpack.c.l.b16 %v1682
    %v6321 = vunpack.c.h.b16 %v1682
    %v6322 = vunpack.c.l.b16 %v1683
    %v6323 = vunpack.c.h.b16 %v1683
    %v6324 = vunpack.c.l.b16 %v1684
    %v6325 = vunpack.c.h.b16 %v1684
    %v6326 = vunpack.c.l.b16 %v1685
    %v6327 = vunpack.c.h.b16 %v1685
    %v6328 = vunpack.c.l.b16 %v1686
    %v6329 = vunpack.c.h.b16 %v1686
    %v6330 = vunpack.c.l.b16 %v1687
    %v6331 = vunpack.c.h.b16 %v1687
    %v6332 = vunpack.c.l.b16 %v1688
    %v6333 = vunpack.c.h.b16 %v1688
    %v6334 = vunpack.c.l.b16 %v1689
    %v6335 = vunpack.c.h.b16 %v1689
    %v6336 = vunpack.c.l.b16 %v1690
    %v6337 = vunpack.c.h.b16 %v1690
    %v6338 = vunpack.c.l.b16 %v1691
    %v6339 = vunpack.c.h.b16 %v1691
    %v6340 = vunpack.c.l.b16 %v1692
    %v6341 = vunpack.c.h.b16 %v1692
    %v6342 = vunpack.c.l.b16 %v1693
    %v6343 = vunpack.c.h.b16 %v1693
    %v6344 = vpack.c.b16 %v3280, %v3272
    %v6345 = vpack.c.b16 %v3281, %v3273
    %v6346 = vpack.c.b16 %v3282, %v3274
    %v6347 = vpack.c.b16 %v3283, %v3275
    %v6348 = vpack.c.b16 %v3284, %v3276
    %v6349 = vpack.c.b16 %v3285, %v3277
    %v6350 = vpack.c.b16 %v3286, %v3278
    %v6351 = vpack.c.b16 %v3287, %v3279
    %v6352 = vpack.c.b16 %v3296, %v3288
    %v6353 = vpack.c.b16 %v3297, %v3289
    %v6354 = vpack.c.b16 %v3298, %v3290
    %v6355 = vpack.c.b16 %v3299, %v3291
    %v6356 = vpack.c.b16 %v3300, %v3292
    %v6357 = vpack.c.b16 %v3301, %v3293
    %v6358 = vpack.c.b16 %v3302, %v3294
    %v6359 = vpack.c.b16 %v3303, %v3295
    %v6360 = vpack.c.b16 %v3312, %v3304
    %v6361 = vpack.c.b16 %v3313, %v3305
    %v6362 = vpack.c.b16 %v3314, %v3306
    %v6363 = vpack.c.b16 %v3315, %v3307
    %v6364 = vpack.c.b16 %v3316, %v3308
    %v6365 = vpack.c.b16 %v3317, %v3309
    %v6366 = vpack.c.b16 %v3318, %v3310
    %v6367 = vpack.c.b16 %v3319, %v3311
    %v6368 = vpack.c.b16 %v3328, %v3320
    %v6369 = vpack.c.b16 %v3329, %v3321
    %v6370 = vpack.c.b16 %v3330, %v3322
    %v6371 = vpack.c.b16 %v3331, %v3323
    %v6372 = vpack.c.b16 %v3332, %v3324
    %v6373 = vpack.c.b16 %v3333, %v3325
    %v6374 = vpack.c.b16 %v3334, %v3326
    %v6375 = vpack.c.b16 %v3335, %v3327
    %v6376 = vpack.c.b16 %v3344, %v3336
    %v6377 = vpack.c.b16 %v3345, %v3337
    %v6378 = vpack.c.b16 %v3346, %v3338
    %v6379 = vpack.c.b16 %v3347, %v3339
    %v6380 = vpack.c.b16 %v3348, %v3340
    %v6381 = vpack.c.b16 %v3349, %v3341
    %v6382 = vpack.c.b16 %v3350, %v3342
    %v6383 = vpack.c.b16 %v3351, %v3343
    %v6384 = vpack.c.b16 %v3360, %v3352
    %v6385 = vpack.c.b16 %v3361, %v3353
    %v6386 = vpack.c.b16 %v3362, %v3354
    %v6387 = vpack.c.b16 %v3363, %v3355
    %v6388 = vpack.c.b16 %v3364, %v3356
    %v6389 = vpack.c.b16 %v3365, %v3357
    %v6390 = vpack.c.b16 %v3366, %v3358
    %v6391 = vpack.c.b16 %v3367, %v3359
    %v6392 = vpack.c.b16 %v3376, %v3368
    %v6393 = vpack.c.b16 %v3377, %v3369
    %v6394 = vpack.c.b16 %v3378, %v3370
    %v6395 = vpack.c.b16 %v3379, %v3371
    %v6396 = vpack.c.b16 %v3380, %v3372
    %v6397 = vpack.c.b16 %v3381, %v3373
    %v6398 = vpack.c.b16 %v3382, %v3374
    %v6399 = vpack.c.b16 %v3383, %v3375
    %v6400 = vpack.c.b16 %v3392, %v3384
    %v6401 = vpack.c.b16 %v3393, %v3385
    %v6402 = vpack.c.b16 %v3394, %v3386
    %v6403 = vpack.c.b16 %v3395, %v3387
    %v6404 = vpack.c.b16 %v3396, %v3388
    %v6405 = vpack.c.b16 %v3397, %v3389
    %v6406 = vpack.c.b16 %v3398, %v3390
    %v6407 = vpack.c.b16 %v3399, %v3391
    %v6408 = vpack.c.b16 %v3408, %v3400
    %v6409 = vpack.c.b16 %v3409, %v3401
    %v6410 = vpack.c.b16 %v3410, %v3402
    %v6411 = vpack.c.b16 %v3411, %v3403
    %v6412 = vpack.c.b16 %v3412, %v3404
    %v6413 = vpack.c.b16 %v3413, %v3405
    %v6414 = vpack.c.b16 %v3414, %v3406
    %v6415 = vpack.c.b16 %v3415, %v3407
    %v6416 = vpack.c.b16 %v3424, %v3416
    %v6417 = vpack.c.b16 %v3425, %v3417
    %v6418 = vpack.c.b16 %v3426, %v3418
    %v6419 = vpack.c.b16 %v3427, %v3419
    %v6420 = vpack.c.b16 %v3428, %v3420
    %v6421 = vpack.c.b16 %v3429, %v3421
    %v6422 = vpack.c.b16 %v3430, %v3422
    %v6423 = vpack.c.b16 %v3431, %v3423
    %v6424 = vpack.c.b16 %v3440, %v3432
    %v6425 = vpack.c.b16 %v3441, %v3433
    %v6426 = vpack.c.b16 %v3442, %v3434
    %v6427 = vpack.c.b16 %v3443, %v3435
    %v6428 = vpack.c.b16 %v3444, %v3436
    %v6429 = vpack.c.b16 %v3445, %v3437
    %v6430 = vpack.c.b16 %v3446, %v3438
    %v6431 = vpack.c.b16 %v3447, %v3439
    %v6432 = vpack.c.b16 %v3456, %v3448
    %v6433 = vpack.c.b16 %v3457, %v3449
    %v6434 = vpack.c.b16 %v3458, %v3450
    %v6435 = vpack.c.b16 %v3459, %v3451
    %v6436 = vpack.c.b16 %v3460, %v3452
    %v6437 = vpack.c.b16 %v3461, %v3453
    %v6438 = vpack.c.b16 %v3462, %v3454
    %v6439 = vpack.c.b16 %v3463, %v3455
    %v6440 = vpack.c.b16 %v3472, %v3464
    %v6441 = vpack.c.b16 %v3473, %v3465
    %v6442 = vpack.c.b16 %v3474, %v3466
    %v6443 = vpack.c.b16 %v3475, %v3467
    %v6444 = vpack.c.b16 %v3476, %v3468
    %v6445 = vpack.c.b16 %v3477, %v3469
    %v6446 = vpack.c.b16 %v3478, %v3470
    %v6447 = vpack.c.b16 %v3479, %v3471
    %v6448 = vpack.c.b16 %v3488, %v3480
    %v6449 = vpack.c.b16 %v3489, %v3481
    %v6450 = vpack.c.b16 %v3490, %v3482
    %v6451 = vpack.c.b16 %v3491, %v3483
    %v6452 = vpack.c.b16 %v3492, %v3484
    %v6453 = vpack.c.b16 %v3493, %v3485
    %v6454 = vpack.c.b16 %v3494, %v3486
    %v6455 = vpack.c.b16 %v3495, %v3487
    %v6456 = vpack.c.b16 %v3504, %v3496
    %v6457 = vpack.c.b16 %v3505, %v3497
    %v6458 = vpack.c.b16 %v3506, %v3498
    %v6459 = vpack.c.b16 %v3507, %v3499
    %v6460 = vpack.c.b16 %v3508, %v3500
    %v6461 = vpack.c.b16 %v3509, %v3501
    %v6462 = vpack.c.b16 %v3510, %v3502
    %v6463 = vpack.c.b16 %v3511, %v3503
    %v6464 = vpack.c.b16 %v3520, %v3512
    %v6465 = vpack.c.b16 %v3521, %v3513
    %v6466 = vpack.c.b16 %v3522, %v3514
    %v6467 = vpack.c.b16 %v3523, %v3515
    %v6468 = vpack.c.b16 %v3524, %v3516
    %v6469 = vpack.c.b16 %v3525, %v3517
    %v6470 = vpack.c.b16 %v3526, %v3518
    %v6471 = vpack.c.b16 %v3527, %v3519
    %v6472 = vpack.c.b16 %v3536, %v3528
    %v6473 = vpack.c.b16 %v3537, %v3529
    %v6474 = vpack.c.b16 %v3538, %v3530
    %v6475 = vpack.c.b16 %v3539, %v3531
    %v6476 = vpack.c.b16 %v3540, %v3532
    %v6477 = vpack.c.b16 %v3541, %v3533
    %v6478 = vpack.c.b16 %v3542, %v3534
    %v6479 = vpack.c.b16 %v3543, %v3535
    %v6480 = vpack.c.b16 %v3552, %v3544
    %v6481 = vpack.c.b16 %v3553, %v3545
    %v6482 = vpack.c.b16 %v3554, %v3546
    %v6483 = vpack.c.b16 %v3555, %v3547
    %v6484 = vpack.c.b16 %v3556, %v3548
    %v6485 = vpack.c.b16 %v3557, %v3549
    %v6486 = vpack.c.b16 %v3558, %v3550
    %v6487 = vpack.c.b16 %v3559, %v3551
    %v6488 = vpack.c.b16 %v3568, %v3560
    %v6489 = vpack.c.b16 %v3569, %v3561
    %v6490 = vpack.c.b16 %v3570, %v3562
    %v6491 = vpack.c.b16 %v3571, %v3563
    %v6492 = vpack.c.b16 %v3572, %v3564
    %v6493 = vpack.c.b16 %v3573, %v3565
    %v6494 = vpack.c.b16 %v3574, %v3566
    %v6495 = vpack.c.b16 %v3575, %v3567
    %v6496 = vpack.c.b16 %v3584, %v3576
    %v6497 = vpack.c.b16 %v3585, %v3577
    %v6498 = vpack.c.b16 %v3586, %v3578
    %v6499 = vpack.c.b16 %v3587, %v3579
    %v6500 = vpack.c.b16 %v3588, %v3580
    %v6501 = vpack.c.b16 %v3589, %v3581
    %v6502 = vpack.c.b16 %v3590, %v3582
    %v6503 = vpack.c.b16 %v3591, %v3583
    %v6504 = vpack.c.b16 %v3600, %v3592
    %v6505 = vpack.c.b16 %v3601, %v3593
    %v6506 = vpack.c.b16 %v3602, %v3594
    %v6507 = vpack.c.b16 %v3603, %v3595
    %v6508 = vpack.c.b16 %v3604, %v3596
    %v6509 = vpack.c.b16 %v3605, %v3597
    %v6510 = vpack.c.b16 %v3606, %v3598
    %v6511 = vpack.c.b16 %v3607, %v3599
    %v6512 = vpack.c.b16 %v3616, %v3608
    %v6513 = vpack.c.b16 %v3617, %v3609
    %v6514 = vpack.c.b16 %v3618, %v3610
    %v6515 = vpack.c.b16 %v3619, %v3611
    %v6516 = vpack.c.b16 %v3620, %v3612
    %v6517 = vpack.c.b16 %v3621, %v3613
    %v6518 = vpack.c.b16 %v3622, %v3614
    %v6519 = vpack.c.b16 %v3623, %v3615
    %v6520 = vpack.c.b16 %v3632, %v3624
    %v6521 = vpack.c.b16 %v3633, %v3625
    %v6522 = vpack.c.b16 %v3634, %v3626
    %v6523 = vpack.c.b16 %v3635, %v3627
    %v6524 = vpack.c.b16 %v3636, %v3628
    %v6525 = vpack.c.b16 %v3637, %v3629
    %v6526 = vpack.c.b16 %v3638, %v3630
    %v6527 = vpack.c.b16 %v3639, %v3631
    %v6528 = vpack.c.b16 %v3648, %v3640
    %v6529 = vpack.c.b16 %v3649, %v3641
    %v6530 = vpack.c.b16 %v3650, %v3642
    %v6531 = vpack.c.b16 %v3651, %v3643
    %v6532 = vpack.c.b16 %v3652, %v3644
    %v6533 = vpack.c.b16 %v3653, %v3645
    %v6534 = vpack.c.b16 %v3654, %v3646
    %v6535 = vpack.c.b16 %v3655, %v3647
    %v6536 = vpack.c.b16 %v3664, %v3656
    %v6537 = vpack.c.b16 %v3665, %v3657
    %v6538 = vpack.c.b16 %v3666, %v3658
    %v6539 = vpack.c.b16 %v3667, %v3659
    %v6540 = vpack.c.b16 %v3668, %v3660
    %v6541 = vpack.c.b16 %v3669, %v3661
    %v6542 = vpack.c.b16 %v3670, %v3662
    %v6543 = vpack.c.b16 %v3671, %v3663
    %v6544 = vpack.c.b16 %v3680, %v3672
    %v6545 = vpack.c.b16 %v3681, %v3673
    %v6546 = vpack.c.b16 %v3682, %v3674
    %v6547 = vpack.c.b16 %v3683, %v3675
    %v6548 = vpack.c.b16 %v3684, %v3676
    %v6549 = vpack.c.b16 %v3685, %v3677
    %v6550 = vpack.c.b16 %v3686, %v3678
    %v6551 = vpack.c.b16 %v3687, %v3679
    %v6552 = vpack.c.b16 %v3696, %v3688
    %v6553 = vpack.c.b16 %v3697, %v3689
    %v6554 = vpack.c.b16 %v3698, %v3690
    %v6555 = vpack.c.b16 %v3699, %v3691
    %v6556 = vpack.c.b16 %v3700, %v3692
    %v6557 = vpack.c.b16 %v3701, %v3693
    %v6558 = vpack.c.b16 %v3702, %v3694
    %v6559 = vpack.c.b16 %v3703, %v3695
    %v6560 = vpack.c.b16 %v3712, %v3704
    %v6561 = vpack.c.b16 %v3713, %v3705
    %v6562 = vpack.c.b16 %v3714, %v3706
    %v6563 = vpack.c.b16 %v3715, %v3707
    %v6564 = vpack.c.b16 %v3716, %v3708
    %v6565 = vpack.c.b16 %v3717, %v3709
    %v6566 = vpack.c.b16 %v3718, %v3710
    %v6567 = vpack.c.b16 %v3719, %v3711
    %v6568 = vpack.c.b16 %v3728, %v3720
    %v6569 = vpack.c.b16 %v3729, %v3721
    %v6570 = vpack.c.b16 %v3730, %v3722
    %v6571 = vpack.c.b16 %v3731, %v3723
    %v6572 = vpack.c.b16 %v3732, %v3724
    %v6573 = vpack.c.b16 %v3733, %v3725
    %v6574 = vpack.c.b16 %v3734, %v3726
    %v6575 = vpack.c.b16 %v3735, %v3727
    %v6576 = vpack.c.b16 %v3744, %v3736
    %v6577 = vpack.c.b16 %v3745, %v3737
    %v6578 = vpack.c.b16 %v3746, %v3738
    %v6579 = vpack.c.b16 %v3747, %v3739
    %v6580 = vpack.c.b16 %v3748, %v3740
    %v6581 = vpack.c.b16 %v3749, %v3741
    %v6582 = vpack.c.b16 %v3750, %v3742
    %v6583 = vpack.c.b16 %v3751, %v3743
    %v6584 = vpack.c.b16 %v3760, %v3752
    %v6585 = vpack.c.b16 %v3761, %v3753
    %v6586 = vpack.c.b16 %v3762, %v3754
    %v6587 = vpack.c.b16 %v3763, %v3755
    %v6588 = vpack.c.b16 %v3764, %v3756
    %v6589 = vpack.c.b16 %v3765, %v3757
    %v6590 = vpack.c.b16 %v3766, %v3758
    %v6591 = vpack.c.b16 %v3767, %v3759
    %v6592 = vpack.c.b16 %v3776, %v3768
    %v6593 = vpack.c.b16 %v3777, %v3769
    %v6594 = vpack.c.b16 %v3778, %v3770
    %v6595 = vpack.c.b16 %v3779, %v3771
    %v6596 = vpack.c.b16 %v3780, %v3772
    %v6597 = vpack.c.b16 %v3781, %v3773
    %v6598 = vpack.c.b16 %v3782, %v3774
    %v6599 = vpack.c.b16 %v3783, %v3775
    %v6600 = vpack.c.b16 %v3792, %v3784
    %v6601 = vpack.c.b16 %v3793, %v3785
    %v6602 = vpack.c.b16 %v3794, %v3786
    %v6603 = vpack.c.b16 %v3795, %v3787
    %v6604 = vpack.c.b16 %v3796, %v3788
    %v6605 = vpack.c.b16 %v3797, %v3789
    %v6606 = vpack.c.b16 %v3798, %v3790
    %v6607 = vpack.c.b16 %v3799, %v3791
    %v6608 = vpack.c.b16 %v3808, %v3800
    %v6609 = vpack.c.b16 %v3809, %v3801
    %v6610 = vpack.c.b16 %v3810, %v3802
    %v6611 = vpack.c.b16 %v3811, %v3803
    %v6612 = vpack.c.b16 %v3812, %v3804
    %v6613 = vpack.c.b16 %v3813, %v3805
    %v6614 = vpack.c.b16 %v3814, %v3806
    %v6615 = vpack.c.b16 %v3815, %v3807
    %v6616 = vpack.c.b16 %v3824, %v3816
    %v6617 = vpack.c.b16 %v3825, %v3817
    %v6618 = vpack.c.b16 %v3826, %v3818
    %v6619 = vpack.c.b16 %v3827, %v3819
    %v6620 = vpack.c.b16 %v3828, %v3820
    %v6621 = vpack.c.b16 %v3829, %v3821
    %v6622 = vpack.c.b16 %v3830, %v3822
    %v6623 = vpack.c.b16 %v3831, %v3823
    %v6624 = vpack.c.b16 %v3840, %v3832
    %v6625 = vpack.c.b16 %v3841, %v3833
    %v6626 = vpack.c.b16 %v3842, %v3834
    %v6627 = vpack.c.b16 %v3843, %v3835
    %v6628 = vpack.c.b16 %v3844, %v3836
    %v6629 = vpack.c.b16 %v3845, %v3837
    %v6630 = vpack.c.b16 %v3846, %v3838
    %v6631 = vpack.c.b16 %v3847, %v3839
    %v6632 = vpack.c.b16 %v3856, %v3848
    %v6633 = vpack.c.b16 %v3857, %v3849
    %v6634 = vpack.c.b16 %v3858, %v3850
    %v6635 = vpack.c.b16 %v3859, %v3851
    %v6636 = vpack.c.b16 %v3860, %v3852
    %v6637 = vpack.c.b16 %v3861, %v3853
    %v6638 = vpack.c.b16 %v3862, %v3854
    %v6639 = vpack.c.b16 %v3863, %v3855
    %v6640 = vpack.c.b16 %v3872, %v3864
    %v6641 = vpack.c.b16 %v3873, %v3865
    %v6642 = vpack.c.b16 %v3874, %v3866
    %v6643 = vpack.c.b16 %v3875, %v3867
    %v6644 = vpack.c.b16 %v3876, %v3868
    %v6645 = vpack.c.b16 %v3877, %v3869
    %v6646 = vpack.c.b16 %v3878, %v3870
    %v6647 = vpack.c.b16 %v3879, %v3871
    %v6648 = vpack.c.b16 %v3888, %v3880
    %v6649 = vpack.c.b16 %v3889, %v3881
    %v6650 = vpack.c.b16 %v3890, %v3882
    %v6651 = vpack.c.b16 %v3891, %v3883
    %v6652 = vpack.c.b16 %v3892, %v3884
    %v6653 = vpack.c.b16 %v3893, %v3885
    %v6654 = vpack.c.b16 %v3894, %v3886
    %v6655 = vpack.c.b16 %v3895, %v3887
    %v6656 = vpack.c.b16 %v3904, %v3896
    %v6657 = vpack.c.b16 %v3905, %v3897
    %v6658 = vpack.c.b16 %v3906, %v3898
    %v6659 = vpack.c.b16 %v3907, %v3899
    %v6660 = vpack.c.b16 %v3908, %v3900
    %v6661 = vpack.c.b16 %v3909, %v3901
    %v6662 = vpack.c.b16 %v3910, %v3902
    %v6663 = vpack.c.b16 %v3911, %v3903
    %v6664 = vpack.c.b16 %v3920, %v3912
    %v6665 = vpack.c.b16 %v3921, %v3913
    %v6666 = vpack.c.b16 %v3922, %v3914
    %v6667 = vpack.c.b16 %v3923, %v3915
    %v6668 = vpack.c.b16 %v3924, %v3916
    %v6669 = vpack.c.b16 %v3925, %v3917
    %v6670 = vpack.c.b16 %v3926, %v3918
    %v6671 = vpack.c.b16 %v3927, %v3919
    %v6672 = vpack.c.b16 %v3936, %v3928
    %v6673 = vpack.c.b16 %v3937, %v3929
    %v6674 = vpack.c.b16 %v3938, %v3930
    %v6675 = vpack.c.b16 %v3939, %v3931
    %v6676 = vpack.c.b16 %v3940, %v3932
    %v6677 = vpack.c.b16 %v3941, %v3933
    %v6678 = vpack.c.b16 %v3942, %v3934
    %v6679 = vpack.c.b16 %v3943, %v3935
    %v6680 = vpack.c.b16 %v3952, %v3944
    %v6681 = vpack.c.b16 %v3953, %v3945
    %v6682 = vpack.c.b16 %v3954, %v3946
    %v6683 = vpack.c.b16 %v3955, %v3947
    %v6684 = vpack.c.b16 %v3956, %v3948
    %v6685 = vpack.c.b16 %v3957, %v3949
    %v6686 = vpack.c.b16 %v3958, %v3950
    %v6687 = vpack.c.b16 %v3959, %v3951
    %v6688 = vpack.c.b16 %v3968, %v3960
    %v6689 = vpack.c.b16 %v3969, %v3961
    %v6690 = vpack.c.b16 %v3970, %v3962
    %v6691 = vpack.c.b16 %v3971, %v3963
    %v6692 = vpack.c.b16 %v3972, %v3964
    %v6693 = vpack.c.b16 %v3973, %v3965
    %v6694 = vpack.c.b16 %v3974, %v3966
    %v6695 = vpack.c.b16 %v3975, %v3967
    %v6696 = vpack.c.b16 %v3984, %v3976
    %v6697 = vpack.c.b16 %v3985, %v3977
    %v6698 = vpack.c.b16 %v3986, %v3978
    %v6699 = vpack.c.b16 %v3987, %v3979
    %v6700 = vpack.c.b16 %v3988, %v3980
    %v6701 = vpack.c.b16 %v3989, %v3981
    %v6702 = vpack.c.b16 %v3990, %v3982
    %v6703 = vpack.c.b16 %v3991, %v3983
    %v6704 = vpack.c.b16 %v4000, %v3992
    %v6705 = vpack.c.b16 %v4001, %v3993
    %v6706 = vpack.c.b16 %v4002, %v3994
    %v6707 = vpack.c.b16 %v4003, %v3995
    %v6708 = vpack.c.b16 %v4004, %v3996
    %v6709 = vpack.c.b16 %v4005, %v3997
    %v6710 = vpack.c.b16 %v4006, %v3998
    %v6711 = vpack.c.b16 %v4007, %v3999
    %v6712 = vpack.c.b16 %v4016, %v4008
    %v6713 = vpack.c.b16 %v4017, %v4009
    %v6714 = vpack.c.b16 %v4018, %v4010
    %v6715 = vpack.c.b16 %v4019, %v4011
    %v6716 = vpack.c.b16 %v4020, %v4012
    %v6717 = vpack.c.b16 %v4021, %v4013
    %v6718 = vpack.c.b16 %v4022, %v4014
    %v6719 = vpack.c.b16 %v4023, %v4015
    %v6720 = vpack.c.b16 %v4032, %v4024
    %v6721 = vpack.c.b16 %v4033, %v4025
    %v6722 = vpack.c.b16 %v4034, %v4026
    %v6723 = vpack.c.b16 %v4035, %v4027
    %v6724 = vpack.c.b16 %v4036, %v4028
    %v6725 = vpack.c.b16 %v4037, %v4029
    %v6726 = vpack.c.b16 %v4038, %v4030
    %v6727 = vpack.c.b16 %v4039, %v4031
    %v6728 = vpack.c.b16 %v4048, %v4040
    %v6729 = vpack.c.b16 %v4049, %v4041
    %v6730 = vpack.c.b16 %v4050, %v4042
    %v6731 = vpack.c.b16 %v4051, %v4043
    %v6732 = vpack.c.b16 %v4052, %v4044
    %v6733 = vpack.c.b16 %v4053, %v4045
    %v6734 = vpack.c.b16 %v4054, %v4046
    %v6735 = vpack.c.b16 %v4055, %v4047
    %v6736 = vpack.c.b16 %v4064, %v4056
    %v6737 = vpack.c.b16 %v4065, %v4057
    %v6738 = vpack.c.b16 %v4066, %v4058
    %v6739 = vpack.c.b16 %v4067, %v4059
    %v6740 = vpack.c.b16 %v4068, %v4060
    %v6741 = vpack.c.b16 %v4069, %v4061
    %v6742 = vpack.c.b16 %v4070, %v4062
    %v6743 = vpack.c.b16 %v4071, %v4063
    %v6744 = vpack.c.b16 %v4080, %v4072
    %v6745 = vpack.c.b16 %v4081, %v4073
    %v6746 = vpack.c.b16 %v4082, %v4074
    %v6747 = vpack.c.b16 %v4083, %v4075
    %v6748 = vpack.c.b16 %v4084, %v4076
    %v6749 = vpack.c.b16 %v4085, %v4077
    %v6750 = vpack.c.b16 %v4086, %v4078
    %v6751 = vpack.c.b16 %v4087, %v4079
    %v6752 = vpack.c.b16 %v4096, %v4088
    %v6753 = vpack.c.b16 %v4097, %v4089
    %v6754 = vpack.c.b16 %v4098, %v4090
    %v6755 = vpack.c.b16 %v4099, %v4091
    %v6756 = vpack.c.b16 %v4100, %v4092
    %v6757 = vpack.c.b16 %v4101, %v4093
    %v6758 = vpack.c.b16 %v4102, %v4094
    %v6759 = vpack.c.b16 %v4103, %v4095
    %v6760 = vpack.c.b16 %v4112, %v4104
    %v6761 = vpack.c.b16 %v4113, %v4105
    %v6762 = vpack.c.b16 %v4114, %v4106
    %v6763 = vpack.c.b16 %v4115, %v4107
    %v6764 = vpack.c.b16 %v4116, %v4108
    %v6765 = vpack.c.b16 %v4117, %v4109
    %v6766 = vpack.c.b16 %v4118, %v4110
    %v6767 = vpack.c.b16 %v4119, %v4111
    %v6768 = vpack.c.b16 %v4128, %v4120
    %v6769 = vpack.c.b16 %v4129, %v4121
    %v6770 = vpack.c.b16 %v4130, %v4122
    %v6771 = vpack.c.b16 %v4131, %v4123
    %v6772 = vpack.c.b16 %v4132, %v4124
    %v6773 = vpack.c.b16 %v4133, %v4125
    %v6774 = vpack.c.b16 %v4134, %v4126
    %v6775 = vpack.c.b16 %v4135, %v4127
    %v6776 = vpack.c.b16 %v4144, %v4136
    %v6777 = vpack.c.b16 %v4145, %v4137
    %v6778 = vpack.c.b16 %v4146, %v4138
    %v6779 = vpack.c.b16 %v4147, %v4139
    %v6780 = vpack.c.b16 %v4148, %v4140
    %v6781 = vpack.c.b16 %v4149, %v4141
    %v6782 = vpack.c.b16 %v4150, %v4142
    %v6783 = vpack.c.b16 %v4151, %v4143
    %v6784 = vpack.c.b16 %v4160, %v4152
    %v6785 = vpack.c.b16 %v4161, %v4153
    %v6786 = vpack.c.b16 %v4162, %v4154
    %v6787 = vpack.c.b16 %v4163, %v4155
    %v6788 = vpack.c.b16 %v4164, %v4156
    %v6789 = vpack.c.b16 %v4165, %v4157
    %v6790 = vpack.c.b16 %v4166, %v4158
    %v6791 = vpack.c.b16 %v4167, %v4159
    %v6792 = vpack.c.b16 %v4176, %v4168
    %v6793 = vpack.c.b16 %v4177, %v4169
    %v6794 = vpack.c.b16 %v4178, %v4170
    %v6795 = vpack.c.b16 %v4179, %v4171
    %v6796 = vpack.c.b16 %v4180, %v4172
    %v6797 = vpack.c.b16 %v4181, %v4173
    %v6798 = vpack.c.b16 %v4182, %v4174
    %v6799 = vpack.c.b16 %v4183, %v4175
    %v6800 = vpack.c.b16 %v4192, %v4184
    %v6801 = vpack.c.b16 %v4193, %v4185
    %v6802 = vpack.c.b16 %v4194, %v4186
    %v6803 = vpack.c.b16 %v4195, %v4187
    %v6804 = vpack.c.b16 %v4196, %v4188
    %v6805 = vpack.c.b16 %v4197, %v4189
    %v6806 = vpack.c.b16 %v4198, %v4190
    %v6807 = vpack.c.b16 %v4199, %v4191
    %v6808 = vpack.c.b16 %v4208, %v4200
    %v6809 = vpack.c.b16 %v4209, %v4201
    %v6810 = vpack.c.b16 %v4210, %v4202
    %v6811 = vpack.c.b16 %v4211, %v4203
    %v6812 = vpack.c.b16 %v4212, %v4204
    %v6813 = vpack.c.b16 %v4213, %v4205
    %v6814 = vpack.c.b16 %v4214, %v4206
    %v6815 = vpack.c.b16 %v4215, %v4207
    %v6816 = vpack.c.b16 %v4224, %v4216
    %v6817 = vpack.c.b16 %v4225, %v4217
    %v6818 = vpack.c.b16 %v4226, %v4218
    %v6819 = vpack.c.b16 %v4227, %v4219
    %v6820 = vpack.c.b16 %v4228, %v4220
    %v6821 = vpack.c.b16 %v4229, %v4221
    %v6822 = vpack.c.b16 %v4230, %v4222
    %v6823 = vpack.c.b16 %v4231, %v4223
    %v6824 = vpack.c.b16 %v4240, %v4232
    %v6825 = vpack.c.b16 %v4241, %v4233
    %v6826 = vpack.c.b16 %v4242, %v4234
    %v6827 = vpack.c.b16 %v4243, %v4235
    %v6828 = vpack.c.b16 %v4244, %v4236
    %v6829 = vpack.c.b16 %v4245, %v4237
    %v6830 = vpack.c.b16 %v4246, %v4238
    %v6831 = vpack.c.b16 %v4247, %v4239
    %v6832 = vpack.c.b16 %v4256, %v4248
    %v6833 = vpack.c.b16 %v4257, %v4249
    %v6834 = vpack.c.b16 %v4258, %v4250
    %v6835 = vpack.c.b16 %v4259, %v4251
    %v6836 = vpack.c.b16 %v4260, %v4252
    %v6837 = vpack.c.b16 %v4261, %v4253
    %v6838 = vpack.c.b16 %v4262, %v4254
    %v6839 = vpack.c.b16 %v4263, %v4255
    %v6840 = vpack.c.b16 %v4272, %v4264
    %v6841 = vpack.c.b16 %v4273, %v4265
    %v6842 = vpack.c.b16 %v4274, %v4266
    %v6843 = vpack.c.b16 %v4275, %v4267
    %v6844 = vpack.c.b16 %v4276, %v4268
    %v6845 = vpack.c.b16 %v4277, %v4269
    %v6846 = vpack.c.b16 %v4278, %v4270
    %v6847 = vpack.c.b16 %v4279, %v4271
    %v6848 = vpack.c.b16 %v4288, %v4280
    %v6849 = vpack.c.b16 %v4289, %v4281
    %v6850 = vpack.c.b16 %v4290, %v4282
    %v6851 = vpack.c.b16 %v4291, %v4283
    %v6852 = vpack.c.b16 %v4292, %v4284
    %v6853 = vpack.c.b16 %v4293, %v4285
    %v6854 = vpack.c.b16 %v4294, %v4286
    %v6855 = vpack.c.b16 %v4295, %v4287
    %v6856 = vpack.c.b16 %v4304, %v4296
    %v6857 = vpack.c.b16 %v4305, %v4297
    %v6858 = vpack.c.b16 %v4306, %v4298
    %v6859 = vpack.c.b16 %v4307, %v4299
    %v6860 = vpack.c.b16 %v4308, %v4300
    %v6861 = vpack.c.b16 %v4309, %v4301
    %v6862 = vpack.c.b16 %v4310, %v4302
    %v6863 = vpack.c.b16 %v4311, %v4303
    %v6864 = vpack.c.b16 %v4320, %v4312
    %v6865 = vpack.c.b16 %v4321, %v4313
    %v6866 = vpack.c.b16 %v4322, %v4314
    %v6867 = vpack.c.b16 %v4323, %v4315
    %v6868 = vpack.c.b16 %v4324, %v4316
    %v6869 = vpack.c.b16 %v4325, %v4317
    %v6870 = vpack.c.b16 %v4326, %v4318
    %v6871 = vpack.c.b16 %v4327, %v4319
    %v6872 = vpack.c.b16 %v4336, %v4328
    %v6873 = vpack.c.b16 %v4337, %v4329
    %v6874 = vpack.c.b16 %v4338, %v4330
    %v6875 = vpack.c.b16 %v4339, %v4331
    %v6876 = vpack.c.b16 %v4340, %v4332
    %v6877 = vpack.c.b16 %v4341, %v4333
    %v6878 = vpack.c.b16 %v4342, %v4334
    %v6879 = vpack.c.b16 %v4343, %v4335
    %v6880 = vpack.c.b16 %v4352, %v4344
    %v6881 = vpack.c.b16 %v4353, %v4345
    %v6882 = vpack.c.b16 %v4354, %v4346
    %v6883 = vpack.c.b16 %v4355, %v4347
    %v6884 = vpack.c.b16 %v4356, %v4348
    %v6885 = vpack.c.b16 %v4357, %v4349
    %v6886 = vpack.c.b16 %v4358, %v4350
    %v6887 = vpack.c.b16 %v4359, %v4351
    %v6888 = vpack.c.b16 %v4368, %v4360
    %v6889 = vpack.c.b16 %v4369, %v4361
    %v6890 = vpack.c.b16 %v4370, %v4362
    %v6891 = vpack.c.b16 %v4371, %v4363
    %v6892 = vpack.c.b16 %v4372, %v4364
    %v6893 = vpack.c.b16 %v4373, %v4365
    %v6894 = vpack.c.b16 %v4374, %v4366
    %v6895 = vpack.c.b16 %v4375, %v4367
    %v6896 = vpack.c.b16 %v4384, %v4376
    %v6897 = vpack.c.b16 %v4385, %v4377
    %v6898 = vpack.c.b16 %v4386, %v4378
    %v6899 = vpack.c.b16 %v4387, %v4379
    %v6900 = vpack.c.b16 %v4388, %v4380
    %v6901 = vpack.c.b16 %v4389, %v4381
    %v6902 = vpack.c.b16 %v4390, %v4382
    %v6903 = vpack.c.b16 %v4391, %v4383
    %v6904 = vpack.c.b16 %v4400, %v4392
    %v6905 = vpack.c.b16 %v4401, %v4393
    %v6906 = vpack.c.b16 %v4402, %v4394
    %v6907 = vpack.c.b16 %v4403, %v4395
    %v6908 = vpack.c.b16 %v4404, %v4396
    %v6909 = vpack.c.b16 %v4405, %v4397
    %v6910 = vpack.c.b16 %v4406, %v4398
    %v6911 = vpack.c.b16 %v4407, %v4399
    %v6912 = vpack.c.b16 %v4416, %v4408
    %v6913 = vpack.c.b16 %v4417, %v4409
    %v6914 = vpack.c.b16 %v4418, %v4410
    %v6915 = vpack.c.b16 %v4419, %v4411
    %v6916 = vpack.c.b16 %v4420, %v4412
    %v6917 = vpack.c.b16 %v4421, %v4413
    %v6918 = vpack.c.b16 %v4422, %v4414
    %v6919 = vpack.c.b16 %v4423, %v4415
    %v6920 = vpack.c.b16 %v4432, %v4424
    %v6921 = vpack.c.b16 %v4433, %v4425
    %v6922 = vpack.c.b16 %v4434, %v4426
    %v6923 = vpack.c.b16 %v4435, %v4427
    %v6924 = vpack.c.b16 %v4436, %v4428
    %v6925 = vpack.c.b16 %v4437, %v4429
    %v6926 = vpack.c.b16 %v4438, %v4430
    %v6927 = vpack.c.b16 %v4439, %v4431
    %v6928 = vpack.c.b16 %v4448, %v4440
    %v6929 = vpack.c.b16 %v4449, %v4441
    %v6930 = vpack.c.b16 %v4450, %v4442
    %v6931 = vpack.c.b16 %v4451, %v4443
    %v6932 = vpack.c.b16 %v4452, %v4444
    %v6933 = vpack.c.b16 %v4453, %v4445
    %v6934 = vpack.c.b16 %v4454, %v4446
    %v6935 = vpack.c.b16 %v4455, %v4447
    %v6936 = vpack.c.b16 %v4464, %v4456
    %v6937 = vpack.c.b16 %v4465, %v4457
    %v6938 = vpack.c.b16 %v4466, %v4458
    %v6939 = vpack.c.b16 %v4467, %v4459
    %v6940 = vpack.c.b16 %v4468, %v4460
    %v6941 = vpack.c.b16 %v4469, %v4461
    %v6942 = vpack.c.b16 %v4470, %v4462
    %v6943 = vpack.c.b16 %v4471, %v4463
    %v6944 = vpack.c.b16 %v4480, %v4472
    %v6945 = vpack.c.b16 %v4481, %v4473
    %v6946 = vpack.c.b16 %v4482, %v4474
    %v6947 = vpack.c.b16 %v4483, %v4475
    %v6948 = vpack.c.b16 %v4484, %v4476
    %v6949 = vpack.c.b16 %v4485, %v4477
    %v6950 = vpack.c.b16 %v4486, %v4478
    %v6951 = vpack.c.b16 %v4487, %v4479
    %v6952 = vpack.c.b16 %v4496, %v4488
    %v6953 = vpack.c.b16 %v4497, %v4489
    %v6954 = vpack.c.b16 %v4498, %v4490
    %v6955 = vpack.c.b16 %v4499, %v4491
    %v6956 = vpack.c.b16 %v4500, %v4492
    %v6957 = vpack.c.b16 %v4501, %v4493
    %v6958 = vpack.c.b16 %v4502, %v4494
    %v6959 = vpack.c.b16 %v4503, %v4495
    %v6960 = vpack.c.b16 %v4512, %v4504
    %v6961 = vpack.c.b16 %v4513, %v4505
    %v6962 = vpack.c.b16 %v4514, %v4506
    %v6963 = vpack.c.b16 %v4515, %v4507
    %v6964 = vpack.c.b16 %v4516, %v4508
    %v6965 = vpack.c.b16 %v4517, %v4509
    %v6966 = vpack.c.b16 %v4518, %v4510
    %v6967 = vpack.c.b16 %v4519, %v4511
    %v6968 = vpack.c.b16 %v4528, %v4520
    %v6969 = vpack.c.b16 %v4529, %v4521
    %v6970 = vpack.c.b16 %v4530, %v4522
    %v6971 = vpack.c.b16 %v4531, %v4523
    %v6972 = vpack.c.b16 %v4532, %v4524
    %v6973 = vpack.c.b16 %v4533, %v4525
    %v6974 = vpack.c.b16 %v4534, %v4526
    %v6975 = vpack.c.b16 %v4535, %v4527
    %v6976 = vpack.c.b16 %v4544, %v4536
    %v6977 = vpack.c.b16 %v4545, %v4537
    %v6978 = vpack.c.b16 %v4546, %v4538
    %v6979 = vpack.c.b16 %v4547, %v4539
    %v6980 = vpack.c.b16 %v4548, %v4540
    %v6981 = vpack.c.b16 %v4549, %v4541
    %v6982 = vpack.c.b16 %v4550, %v4542
    %v6983 = vpack.c.b16 %v4551, %v4543
    %v6984 = vpack.c.b16 %v4560, %v4552
    %v6985 = vpack.c.b16 %v4561, %v4553
    %v6986 = vpack.c.b16 %v4562, %v4554
    %v6987 = vpack.c.b16 %v4563, %v4555
    %v6988 = vpack.c.b16 %v4564, %v4556
    %v6989 = vpack.c.b16 %v4565, %v4557
    %v6990 = vpack.c.b16 %v4566, %v4558
    %v6991 = vpack.c.b16 %v4567, %v4559
    %v6992 = vpack.c.b16 %v4576, %v4568
    %v6993 = vpack.c.b16 %v4577, %v4569
    %v6994 = vpack.c.b16 %v4578, %v4570
    %v6995 = vpack.c.b16 %v4579, %v4571
    %v6996 = vpack.c.b16 %v4580, %v4572
    %v6997 = vpack.c.b16 %v4581, %v4573
    %v6998 = vpack.c.b16 %v4582, %v4574
    %v6999 = vpack.c.b16 %v4583, %v4575
    %v7000 = vpack.c.b16 %v4592, %v4584
    %v7001 = vpack.c.b16 %v4593, %v4585
    %v7002 = vpack.c.b16 %v4594, %v4586
    %v7003 = vpack.c.b16 %v4595, %v4587
    %v7004 = vpack.c.b16 %v4596, %v4588
    %v7005 = vpack.c.b16 %v4597, %v4589
    %v7006 = vpack.c.b16 %v4598, %v4590
    %v7007 = vpack.c.b16 %v4599, %v4591
    %v7008 = vpack.c.b16 %v4608, %v4600
    %v7009 = vpack.c.b16 %v4609, %v4601
    %v7010 = vpack.c.b16 %v4610, %v4602
    %v7011 = vpack.c.b16 %v4611, %v4603
    %v7012 = vpack.c.b16 %v4612, %v4604
    %v7013 = vpack.c.b16 %v4613, %v4605
    %v7014 = vpack.c.b16 %v4614, %v4606
    %v7015 = vpack.c.b16 %v4615, %v4607
    %v7016 = vpack.c.b16 %v4624, %v4616
    %v7017 = vpack.c.b16 %v4625, %v4617
    %v7018 = vpack.c.b16 %v4626, %v4618
    %v7019 = vpack.c.b16 %v4627, %v4619
    %v7020 = vpack.c.b16 %v4628, %v4620
    %v7021 = vpack.c.b16 %v4629, %v4621
    %v7022 = vpack.c.b16 %v4630, %v4622
    %v7023 = vpack.c.b16 %v4631, %v4623
    %v7024 = vpack.c.b16 %v4640, %v4632
    %v7025 = vpack.c.b16 %v4641, %v4633
    %v7026 = vpack.c.b16 %v4642, %v4634
    %v7027 = vpack.c.b16 %v4643, %v4635
    %v7028 = vpack.c.b16 %v4644, %v4636
    %v7029 = vpack.c.b16 %v4645, %v4637
    %v7030 = vpack.c.b16 %v4646, %v4638
    %v7031 = vpack.c.b16 %v4647, %v4639
    %v7032 = vpack.c.b16 %v4656, %v4648
    %v7033 = vpack.c.b16 %v4657, %v4649
    %v7034 = vpack.c.b16 %v4658, %v4650
    %v7035 = vpack.c.b16 %v4659, %v4651
    %v7036 = vpack.c.b16 %v4660, %v4652
    %v7037 = vpack.c.b16 %v4661, %v4653
    %v7038 = vpack.c.b16 %v4662, %v4654
    %v7039 = vpack.c.b16 %v4663, %v4655
    %v7040 = vpack.c.b16 %v4672, %v4664
    %v7041 = vpack.c.b16 %v4673, %v4665
    %v7042 = vpack.c.b16 %v4674, %v4666
    %v7043 = vpack.c.b16 %v4675, %v4667
    %v7044 = vpack.c.b16 %v4676, %v4668
    %v7045 = vpack.c.b16 %v4677, %v4669
    %v7046 = vpack.c.b16 %v4678, %v4670
    %v7047 = vpack.c.b16 %v4679, %v4671
    %v7048 = vpack.c.b16 %v4688, %v4680
    %v7049 = vpack.c.b16 %v4689, %v4681
    %v7050 = vpack.c.b16 %v4690, %v4682
    %v7051 = vpack.c.b16 %v4691, %v4683
    %v7052 = vpack.c.b16 %v4692, %v4684
    %v7053 = vpack.c.b16 %v4693, %v4685
    %v7054 = vpack.c.b16 %v4694, %v4686
    %v7055 = vpack.c.b16 %v4695, %v4687
    %v7056 = vpack.c.b16 %v4704, %v4696
    %v7057 = vpack.c.b16 %v4705, %v4697
    %v7058 = vpack.c.b16 %v4706, %v4698
    %v7059 = vpack.c.b16 %v4707, %v4699
    %v7060 = vpack.c.b16 %v4708, %v4700
    %v7061 = vpack.c.b16 %v4709, %v4701
    %v7062 = vpack.c.b16 %v4710, %v4702
    %v7063 = vpack.c.b16 %v4711, %v4703
    %v7064 = vpack.c.b16 %v4720, %v4712
    %v7065 = vpack.c.b16 %v4721, %v4713
    %v7066 = vpack.c.b16 %v4722, %v4714
    %v7067 = vpack.c.b16 %v4723, %v4715
    %v7068 = vpack.c.b16 %v4724, %v4716
    %v7069 = vpack.c.b16 %v4725, %v4717
    %v7070 = vpack.c.b16 %v4726, %v4718
    %v7071 = vpack.c.b16 %v4727, %v4719
    %v7072 = vpack.c.b16 %v4736, %v4728
    %v7073 = vpack.c.b16 %v4737, %v4729
    %v7074 = vpack.c.b16 %v4738, %v4730
    %v7075 = vpack.c.b16 %v4739, %v4731
    %v7076 = vpack.c.b16 %v4740, %v4732
    %v7077 = vpack.c.b16 %v4741, %v4733
    %v7078 = vpack.c.b16 %v4742, %v4734
    %v7079 = vpack.c.b16 %v4743, %v4735
    %v7080 = vpack.c.b16 %v4752, %v4744
    %v7081 = vpack.c.b16 %v4753, %v4745
    %v7082 = vpack.c.b16 %v4754, %v4746
    %v7083 = vpack.c.b16 %v4755, %v4747
    %v7084 = vpack.c.b16 %v4756, %v4748
    %v7085 = vpack.c.b16 %v4757, %v4749
    %v7086 = vpack.c.b16 %v4758, %v4750
    %v7087 = vpack.c.b16 %v4759, %v4751
    %v7088 = vpack.c.b16 %v4768, %v4760
    %v7089 = vpack.c.b16 %v4769, %v4761
    %v7090 = vpack.c.b16 %v4770, %v4762
    %v7091 = vpack.c.b16 %v4771, %v4763
    %v7092 = vpack.c.b16 %v4772, %v4764
    %v7093 = vpack.c.b16 %v4773, %v4765
    %v7094 = vpack.c.b16 %v4774, %v4766
    %v7095 = vpack.c.b16 %v4775, %v4767
    %v7096 = vpack.c.b16 %v4784, %v4776
    %v7097 = vpack.c.b16 %v4785, %v4777
    %v7098 = vpack.c.b16 %v4786, %v4778
    %v7099 = vpack.c.b16 %v4787, %v4779
    %v7100 = vpack.c.b16 %v4788, %v4780
    %v7101 = vpack.c.b16 %v4789, %v4781
    %v7102 = vpack.c.b16 %v4790, %v4782
    %v7103 = vpack.c.b16 %v4791, %v4783
    %v7104 = vpack.c.b16 %v4800, %v4792
    %v7105 = vpack.c.b16 %v4801, %v4793
    %v7106 = vpack.c.b16 %v4802, %v4794
    %v7107 = vpack.c.b16 %v4803, %v4795
    %v7108 = vpack.c.b16 %v4804, %v4796
    %v7109 = vpack.c.b16 %v4805, %v4797
    %v7110 = vpack.c.b16 %v4806, %v4798
    %v7111 = vpack.c.b16 %v4807, %v4799
    %v7112 = vpack.c.b16 %v4816, %v4808
    %v7113 = vpack.c.b16 %v4817, %v4809
    %v7114 = vpack.c.b16 %v4818, %v4810
    %v7115 = vpack.c.b16 %v4819, %v4811
    %v7116 = vpack.c.b16 %v4820, %v4812
    %v7117 = vpack.c.b16 %v4821, %v4813
    %v7118 = vpack.c.b16 %v4822, %v4814
    %v7119 = vpack.c.b16 %v4823, %v4815
    %v7120 = vpack.c.b16 %v4832, %v4824
    %v7121 = vpack.c.b16 %v4833, %v4825
    %v7122 = vpack.c.b16 %v4834, %v4826
    %v7123 = vpack.c.b16 %v4835, %v4827
    %v7124 = vpack.c.b16 %v4836, %v4828
    %v7125 = vpack.c.b16 %v4837, %v4829
    %v7126 = vpack.c.b16 %v4838, %v4830
    %v7127 = vpack.c.b16 %v4839, %v4831
    %v7128 = vpack.c.b16 %v4848, %v4840
    %v7129 = vpack.c.b16 %v4849, %v4841
    %v7130 = vpack.c.b16 %v4850, %v4842
    %v7131 = vpack.c.b16 %v4851, %v4843
    %v7132 = vpack.c.b16 %v4852, %v4844
    %v7133 = vpack.c.b16 %v4853, %v4845
    %v7134 = vpack.c.b16 %v4854, %v4846
    %v7135 = vpack.c.b16 %v4855, %v4847
    %v7136 = vpack.c.b16 %v4864, %v4856
    %v7137 = vpack.c.b16 %v4865, %v4857
    %v7138 = vpack.c.b16 %v4866, %v4858
    %v7139 = vpack.c.b16 %v4867, %v4859
    %v7140 = vpack.c.b16 %v4868, %v4860
    %v7141 = vpack.c.b16 %v4869, %v4861
    %v7142 = vpack.c.b16 %v4870, %v4862
    %v7143 = vpack.c.b16 %v4871, %v4863
    %v7144 = vpack.c.b16 %v4880, %v4872
    %v7145 = vpack.c.b16 %v4881, %v4873
    %v7146 = vpack.c.b16 %v4882, %v4874
    %v7147 = vpack.c.b16 %v4883, %v4875
    %v7148 = vpack.c.b16 %v4884, %v4876
    %v7149 = vpack.c.b16 %v4885, %v4877
    %v7150 = vpack.c.b16 %v4886, %v4878
    %v7151 = vpack.c.b16 %v4887, %v4879
    %v7152 = vpack.c.b16 %v4896, %v4888
    %v7153 = vpack.c.b16 %v4897, %v4889
    %v7154 = vpack.c.b16 %v4898, %v4890
    %v7155 = vpack.c.b16 %v4899, %v4891
    %v7156 = vpack.c.b16 %v4900, %v4892
    %v7157 = vpack.c.b16 %v4901, %v4893
    %v7158 = vpack.c.b16 %v4902, %v4894
    %v7159 = vpack.c.b16 %v4903, %v4895
    %v7160 = vpack.c.b16 %v4912, %v4904
    %v7161 = vpack.c.b16 %v4913, %v4905
    %v7162 = vpack.c.b16 %v4914, %v4906
    %v7163 = vpack.c.b16 %v4915, %v4907
    %v7164 = vpack.c.b16 %v4916, %v4908
    %v7165 = vpack.c.b16 %v4917, %v4909
    %v7166 = vpack.c.b16 %v4918, %v4910
    %v7167 = vpack.c.b16 %v4919, %v4911
    %v7168 = vpack.c.b16 %v4928, %v4920
    %v7169 = vpack.c.b16 %v4929, %v4921
    %v7170 = vpack.c.b16 %v4930, %v4922
    %v7171 = vpack.c.b16 %v4931, %v4923
    %v7172 = vpack.c.b16 %v4932, %v4924
    %v7173 = vpack.c.b16 %v4933, %v4925
    %v7174 = vpack.c.b16 %v4934, %v4926
    %v7175 = vpack.c.b16 %v4935, %v4927
    %v7176 = vpack.c.b16 %v4944, %v4936
    %v7177 = vpack.c.b16 %v4945, %v4937
    %v7178 = vpack.c.b16 %v4946, %v4938
    %v7179 = vpack.c.b16 %v4947, %v4939
    %v7180 = vpack.c.b16 %v4948, %v4940
    %v7181 = vpack.c.b16 %v4949, %v4941
    %v7182 = vpack.c.b16 %v4950, %v4942
    %v7183 = vpack.c.b16 %v4951, %v4943
    %v7184 = vpack.c.b16 %v4960, %v4952
    %v7185 = vpack.c.b16 %v4961, %v4953
    %v7186 = vpack.c.b16 %v4962, %v4954
    %v7187 = vpack.c.b16 %v4963, %v4955
    %v7188 = vpack.c.b16 %v4964, %v4956
    %v7189 = vpack.c.b16 %v4965, %v4957
    %v7190 = vpack.c.b16 %v4966, %v4958
    %v7191 = vpack.c.b16 %v4967, %v4959
    %v7192 = vpack.c.b16 %v4976, %v4968
    %v7193 = vpack.c.b16 %v4977, %v4969
    %v7194 = vpack.c.b16 %v4978, %v4970
    %v7195 = vpack.c.b16 %v4979, %v4971
    %v7196 = vpack.c.b16 %v4980, %v4972
    %v7197 = vpack.c.b16 %v4981, %v4973
    %v7198 = vpack.c.b16 %v4982, %v4974
    %v7199 = vpack.c.b16 %v4983, %v4975
    %v7200 = vpack.c.b16 %v4992, %v4984
    %v7201 = vpack.c.b16 %v4993, %v4985
    %v7202 = vpack.c.b16 %v4994, %v4986
    %v7203 = vpack.c.b16 %v4995, %v4987
    %v7204 = vpack.c.b16 %v4996, %v4988
    %v7205 = vpack.c.b16 %v4997, %v4989
    %v7206 = vpack.c.b16 %v4998, %v4990
    %v7207 = vpack.c.b16 %v4999, %v4991
    %v7208 = vpack.c.b16 %v5008, %v5000
    %v7209 = vpack.c.b16 %v5009, %v5001
    %v7210 = vpack.c.b16 %v5010, %v5002
    %v7211 = vpack.c.b16 %v5011, %v5003
    %v7212 = vpack.c.b16 %v5012, %v5004
    %v7213 = vpack.c.b16 %v5013, %v5005
    %v7214 = vpack.c.b16 %v5014, %v5006
    %v7215 = vpack.c.b16 %v5015, %v5007
    %v7216 = vpack.c.b16 %v5024, %v5016
    %v7217 = vpack.c.b16 %v5025, %v5017
    %v7218 = vpack.c.b16 %v5026, %v5018
    %v7219 = vpack.c.b16 %v5027, %v5019
    %v7220 = vpack.c.b16 %v5028, %v5020
    %v7221 = vpack.c.b16 %v5029, %v5021
    %v7222 = vpack.c.b16 %v5030, %v5022
    %v7223 = vpack.c.b16 %v5031, %v5023
    %v7224 = vpack.c.b16 %v5040, %v5032
    %v7225 = vpack.c.b16 %v5041, %v5033
    %v7226 = vpack.c.b16 %v5042, %v5034
    %v7227 = vpack.c.b16 %v5043, %v5035
    %v7228 = vpack.c.b16 %v5044, %v5036
    %v7229 = vpack.c.b16 %v5045, %v5037
    %v7230 = vpack.c.b16 %v5046, %v5038
    %v7231 = vpack.c.b16 %v5047, %v5039
    %v7232 = vpack.c.b16 %v5056, %v5048
    %v7233 = vpack.c.b16 %v5057, %v5049
    %v7234 = vpack.c.b16 %v5058, %v5050
    %v7235 = vpack.c.b16 %v5059, %v5051
    %v7236 = vpack.c.b16 %v5060, %v5052
    %v7237 = vpack.c.b16 %v5061, %v5053
    %v7238 = vpack.c.b16 %v5062, %v5054
    %v7239 = vpack.c.b16 %v5063, %v5055
    %v7240 = vpack.c.b16 %v5072, %v5064
    %v7241 = vpack.c.b16 %v5073, %v5065
    %v7242 = vpack.c.b16 %v5074, %v5066
    %v7243 = vpack.c.b16 %v5075, %v5067
    %v7244 = vpack.c.b16 %v5076, %v5068
    %v7245 = vpack.c.b16 %v5077, %v5069
    %v7246 = vpack.c.b16 %v5078, %v5070
    %v7247 = vpack.c.b16 %v5079, %v5071
    %v7248 = vpack.c.b16 %v5088, %v5080
    %v7249 = vpack.c.b16 %v5089, %v5081
    %v7250 = vpack.c.b16 %v5090, %v5082
    %v7251 = vpack.c.b16 %v5091, %v5083
    %v7252 = vpack.c.b16 %v5092, %v5084
    %v7253 = vpack.c.b16 %v5093, %v5085
    %v7254 = vpack.c.b16 %v5094, %v5086
    %v7255 = vpack.c.b16 %v5095, %v5087
    %v7256 = vpack.c.b16 %v5104, %v5096
    %v7257 = vpack.c.b16 %v5105, %v5097
    %v7258 = vpack.c.b16 %v5106, %v5098
    %v7259 = vpack.c.b16 %v5107, %v5099
    %v7260 = vpack.c.b16 %v5108, %v5100
    %v7261 = vpack.c.b16 %v5109, %v5101
    %v7262 = vpack.c.b16 %v5110, %v5102
    %v7263 = vpack.c.b16 %v5111, %v5103
    %v7264 = vpack.c.b16 %v5120, %v5112
    %v7265 = vpack.c.b16 %v5121, %v5113
    %v7266 = vpack.c.b16 %v5122, %v5114
    %v7267 = vpack.c.b16 %v5123, %v5115
    %v7268 = vpack.c.b16 %v5124, %v5116
    %v7269 = vpack.c.b16 %v5125, %v5117
    %v7270 = vpack.c.b16 %v5126, %v5118
    %v7271 = vpack.c.b16 %v5127, %v5119
    %v7272 = vpack.c.b16 %v5136, %v5128
    %v7273 = vpack.c.b16 %v5137, %v5129
    %v7274 = vpack.c.b16 %v5138, %v5130
    %v7275 = vpack.c.b16 %v5139, %v5131
    %v7276 = vpack.c.b16 %v5140, %v5132
    %v7277 = vpack.c.b16 %v5141, %v5133
    %v7278 = vpack.c.b16 %v5142, %v5134
    %v7279 = vpack.c.b16 %v5143, %v5135
    %v7280 = vpack.c.b16 %v5152, %v5144
    %v7281 = vpack.c.b16 %v5153, %v5145
    %v7282 = vpack.c.b16 %v5154, %v5146
    %v7283 = vpack.c.b16 %v5155, %v5147
    %v7284 = vpack.c.b16 %v5156, %v5148
    %v7285 = vpack.c.b16 %v5157, %v5149
    %v7286 = vpack.c.b16 %v5158, %v5150
    %v7287 = vpack.c.b16 %v5159, %v5151
    %v7288 = vpack.c.b16 %v5168, %v5160
    %v7289 = vpack.c.b16 %v5169, %v5161
    %v7290 = vpack.c.b16 %v5170, %v5162
    %v7291 = vpack.c.b16 %v5171, %v5163
    %v7292 = vpack.c.b16 %v5172, %v5164
    %v7293 = vpack.c.b16 %v5173, %v5165
    %v7294 = vpack.c.b16 %v5174, %v5166
    %v7295 = vpack.c.b16 %v5175, %v5167
    %v7296 = vpack.c.b16 %v5184, %v5176
    %v7297 = vpack.c.b16 %v5185, %v5177
    %v7298 = vpack.c.b16 %v5186, %v5178
    %v7299 = vpack.c.b16 %v5187, %v5179
    %v7300 = vpack.c.b16 %v5188, %v5180
    %v7301 = vpack.c.b16 %v5189, %v5181
    %v7302 = vpack.c.b16 %v5190, %v5182
    %v7303 = vpack.c.b16 %v5191, %v5183
    %v7304 = vpack.c.b16 %v5200, %v5192
    %v7305 = vpack.c.b16 %v5201, %v5193
    %v7306 = vpack.c.b16 %v5202, %v5194
    %v7307 = vpack.c.b16 %v5203, %v5195
    %v7308 = vpack.c.b16 %v5204, %v5196
    %v7309 = vpack.c.b16 %v5205, %v5197
    %v7310 = vpack.c.b16 %v5206, %v5198
    %v7311 = vpack.c.b16 %v5207, %v5199
    %v7312 = vpack.c.b16 %v5216, %v5208
    %v7313 = vpack.c.b16 %v5217, %v5209
    %v7314 = vpack.c.b16 %v5218, %v5210
    %v7315 = vpack.c.b16 %v5219, %v5211
    %v7316 = vpack.c.b16 %v5220, %v5212
    %v7317 = vpack.c.b16 %v5221, %v5213
    %v7318 = vpack.c.b16 %v5222, %v5214
    %v7319 = vpack.c.b16 %v5223, %v5215
    %v7320 = vpack.c.b16 %v5232, %v5224
    %v7321 = vpack.c.b16 %v5233, %v5225
    %v7322 = vpack.c.b16 %v5234, %v5226
    %v7323 = vpack.c.b16 %v5235, %v5227
    %v7324 = vpack.c.b16 %v5236, %v5228
    %v7325 = vpack.c.b16 %v5237, %v5229
    %v7326 = vpack.c.b16 %v5238, %v5230
    %v7327 = vpack.c.b16 %v5239, %v5231
    %v7328 = vpack.c.b16 %v5248, %v5240
    %v7329 = vpack.c.b16 %v5249, %v5241
    %v7330 = vpack.c.b16 %v5250, %v5242
    %v7331 = vpack.c.b16 %v5251, %v5243
    %v7332 = vpack.c.b16 %v5252, %v5244
    %v7333 = vpack.c.b16 %v5253, %v5245
    %v7334 = vpack.c.b16 %v5254, %v5246
    %v7335 = vpack.c.b16 %v5255, %v5247
    %v7336 = vpack.c.b16 %v5264, %v5256
    %v7337 = vpack.c.b16 %v5265, %v5257
    %v7338 = vpack.c.b16 %v5266, %v5258
    %v7339 = vpack.c.b16 %v5267, %v5259
    %v7340 = vpack.c.b16 %v5268, %v5260
    %v7341 = vpack.c.b16 %v5269, %v5261
    %v7342 = vpack.c.b16 %v5270, %v5262
    %v7343 = vpack.c.b16 %v5271, %v5263
    %v7344 = vpack.c.b16 %v5280, %v5272
    %v7345 = vpack.c.b16 %v5281, %v5273
    %v7346 = vpack.c.b16 %v5282, %v5274
    %v7347 = vpack.c.b16 %v5283, %v5275
    %v7348 = vpack.c.b16 %v5284, %v5276
    %v7349 = vpack.c.b16 %v5285, %v5277
    %v7350 = vpack.c.b16 %v5286, %v5278
    %v7351 = vpack.c.b16 %v5287, %v5279
    %v7352 = vpack.c.b16 %v5296, %v5288
    %v7353 = vpack.c.b16 %v5297, %v5289
    %v7354 = vpack.c.b16 %v5298, %v5290
    %v7355 = vpack.c.b16 %v5299, %v5291
    %v7356 = vpack.c.b16 %v5300, %v5292
    %v7357 = vpack.c.b16 %v5301, %v5293
    %v7358 = vpack.c.b16 %v5302, %v5294
    %v7359 = vpack.c.b16 %v5303, %v5295
    %v7360 = vpack.c.b16 %v5312, %v5304
    %v7361 = vpack.c.b16 %v5313, %v5305
    %v7362 = vpack.c.b16 %v5314, %v5306
    %v7363 = vpack.c.b16 %v5315, %v5307
    %v7364 = vpack.c.b16 %v5316, %v5308
    %v7365 = vpack.c.b16 %v5317, %v5309
    %v7366 = vpack.c.b16 %v5318, %v5310
    %v7367 = vpack.c.b16 %v5319, %v5311
    %v7368 = vpack.c.b16 %v5328, %v5320
    %v7369 = vpack.c.b16 %v5329, %v5321
    %v7370 = vpack.c.b16 %v5330, %v5322
    %v7371 = vpack.c.b16 %v5331, %v5323
    %v7372 = vpack.c.b16 %v5332, %v5324
    %v7373 = vpack.c.b16 %v5333, %v5325
    %v7374 = vpack.c.b16 %v5334, %v5326
    %v7375 = vpack.c.b16 %v5335, %v5327
    %v7376 = vpack.c.b16 %v5344, %v5336
    %v7377 = vpack.c.b16 %v5345, %v5337
    %v7378 = vpack.c.b16 %v5346, %v5338
    %v7379 = vpack.c.b16 %v5347, %v5339
    %v7380 = vpack.c.b16 %v5348, %v5340
    %v7381 = vpack.c.b16 %v5349, %v5341
    %v7382 = vpack.c.b16 %v5350, %v5342
    %v7383 = vpack.c.b16 %v5351, %v5343
    %v7384 = vpack.c.b16 %v5360, %v5352
    %v7385 = vpack.c.b16 %v5361, %v5353
    %v7386 = vpack.c.b16 %v5362, %v5354
    %v7387 = vpack.c.b16 %v5363, %v5355
    %v7388 = vpack.c.b16 %v5364, %v5356
    %v7389 = vpack.c.b16 %v5365, %v5357
    %v7390 = vpack.c.b16 %v5366, %v5358
    %v7391 = vpack.c.b16 %v5367, %v5359
    %v7392 = vpack.c.b16 %v5376, %v5368
    %v7393 = vpack.c.b16 %v5377, %v5369
    %v7394 = vpack.c.b16 %v5378, %v5370
    %v7395 = vpack.c.b16 %v5379, %v5371
    %v7396 = vpack.c.b16 %v5380, %v5372
    %v7397 = vpack.c.b16 %v5381, %v5373
    %v7398 = vpack.c.b16 %v5382, %v5374
    %v7399 = vpack.c.b16 %v5383, %v5375
    %v7400 = vpack.c.b16 %v5392, %v5384
    %v7401 = vpack.c.b16 %v5393, %v5385
    %v7402 = vpack.c.b16 %v5394, %v5386
    %v7403 = vpack.c.b16 %v5395, %v5387
    %v7404 = vpack.c.b16 %v5396, %v5388
    %v7405 = vpack.c.b16 %v5397, %v5389
    %v7406 = vpack.c.b16 %v5398, %v5390
    %v7407 = vpack.c.b16 %v5399, %v5391
    %v7408 = vpack.c.b16 %v5408, %v5400
    %v7409 = vpack.c.b16 %v5409, %v5401
    %v7410 = vpack.c.b16 %v5410, %v5402
    %v7411 = vpack.c.b16 %v5411, %v5403
    %v7412 = vpack.c.b16 %v5412, %v5404
    %v7413 = vpack.c.b16 %v5413, %v5405
    %v7414 = vpack.c.b16 %v5414, %v5406
    %v7415 = vpack.c.b16 %v5415, %v5407
    %v7416 = vpack.c.b16 %v5424, %v5416
    %v7417 = vpack.c.b16 %v5425, %v5417
    %v7418 = vpack.c.b16 %v5426, %v5418
    %v7419 = vpack.c.b16 %v5427, %v5419
    %v7420 = vpack.c.b16 %v5428, %v5420
    %v7421 = vpack.c.b16 %v5429, %v5421
    %v7422 = vpack.c.b16 %v5430, %v5422
    %v7423 = vpack.c.b16 %v5431, %v5423
    %v7424 = vpack.c.b16 %v5440, %v5432
    %v7425 = vpack.c.b16 %v5441, %v5433
    %v7426 = vpack.c.b16 %v5442, %v5434
    %v7427 = vpack.c.b16 %v5443, %v5435
    %v7428 = vpack.c.b16 %v5444, %v5436
    %v7429 = vpack.c.b16 %v5445, %v5437
    %v7430 = vpack.c.b16 %v5446, %v5438
    %v7431 = vpack.c.b16 %v5447, %v5439
    %v7432 = vpack.c.b16 %v5456, %v5448
    %v7433 = vpack.c.b16 %v5457, %v5449
    %v7434 = vpack.c.b16 %v5458, %v5450
    %v7435 = vpack.c.b16 %v5459, %v5451
    %v7436 = vpack.c.b16 %v5460, %v5452
    %v7437 = vpack.c.b16 %v5461, %v5453
    %v7438 = vpack.c.b16 %v5462, %v5454
    %v7439 = vpack.c.b16 %v5463, %v5455
    %v7440 = vpack.c.b16 %v5472, %v5464
    %v7441 = vpack.c.b16 %v5473, %v5465
    %v7442 = vpack.c.b16 %v5474, %v5466
    %v7443 = vpack.c.b16 %v5475, %v5467
    %v7444 = vpack.c.b16 %v5476, %v5468
    %v7445 = vpack.c.b16 %v5477, %v5469
    %v7446 = vpack.c.b16 %v5478, %v5470
    %v7447 = vpack.c.b16 %v5479, %v5471
    %v7448 = vpack.c.b16 %v5488, %v5480
    %v7449 = vpack.c.b16 %v5489, %v5481
    %v7450 = vpack.c.b16 %v5490, %v5482
    %v7451 = vpack.c.b16 %v5491, %v5483
    %v7452 = vpack.c.b16 %v5492, %v5484
    %v7453 = vpack.c.b16 %v5493, %v5485
    %v7454 = vpack.c.b16 %v5494, %v5486
    %v7455 = vpack.c.b16 %v5495, %v5487
    %v7456 = vpack.c.b16 %v5504, %v5496
    %v7457 = vpack.c.b16 %v5505, %v5497
    %v7458 = vpack.c.b16 %v5506, %v5498
    %v7459 = vpack.c.b16 %v5507, %v5499
    %v7460 = vpack.c.b16 %v5508, %v5500
    %v7461 = vpack.c.b16 %v5509, %v5501
    %v7462 = vpack.c.b16 %v5510, %v5502
    %v7463 = vpack.c.b16 %v5511, %v5503
    %v7464 = vpack.c.b16 %v5520, %v5512
    %v7465 = vpack.c.b16 %v5521, %v5513
    %v7466 = vpack.c.b16 %v5522, %v5514
    %v7467 = vpack.c.b16 %v5523, %v5515
    %v7468 = vpack.c.b16 %v5524, %v5516
    %v7469 = vpack.c.b16 %v5525, %v5517
    %v7470 = vpack.c.b16 %v5526, %v5518
    %v7471 = vpack.c.b16 %v5527, %v5519
    %v7472 = vpack.c.b16 %v5536, %v5528
    %v7473 = vpack.c.b16 %v5537, %v5529
    %v7474 = vpack.c.b16 %v5538, %v5530
    %v7475 = vpack.c.b16 %v5539, %v5531
    %v7476 = vpack.c.b16 %v5540, %v5532
    %v7477 = vpack.c.b16 %v5541, %v5533
    %v7478 = vpack.c.b16 %v5542, %v5534
    %v7479 = vpack.c.b16 %v5543, %v5535
    %v7480 = vpack.c.b16 %v5552, %v5544
    %v7481 = vpack.c.b16 %v5553, %v5545
    %v7482 = vpack.c.b16 %v5554, %v5546
    %v7483 = vpack.c.b16 %v5555, %v5547
    %v7484 = vpack.c.b16 %v5556, %v5548
    %v7485 = vpack.c.b16 %v5557, %v5549
    %v7486 = vpack.c.b16 %v5558, %v5550
    %v7487 = vpack.c.b16 %v5559, %v5551
    %v7488 = vpack.c.b16 %v5568, %v5560
    %v7489 = vpack.c.b16 %v5569, %v5561
    %v7490 = vpack.c.b16 %v5570, %v5562
    %v7491 = vpack.c.b16 %v5571, %v5563
    %v7492 = vpack.c.b16 %v5572, %v5564
    %v7493 = vpack.c.b16 %v5573, %v5565
    %v7494 = vpack.c.b16 %v5574, %v5566
    %v7495 = vpack.c.b16 %v5575, %v5567
    %v7496 = vpack.c.b16 %v5584, %v5576
    %v7497 = vpack.c.b16 %v5585, %v5577
    %v7498 = vpack.c.b16 %v5586, %v5578
    %v7499 = vpack.c.b16 %v5587, %v5579
    %v7500 = vpack.c.b16 %v5588, %v5580
    %v7501 = vpack.c.b16 %v5589, %v5581
    %v7502 = vpack.c.b16 %v5590, %v5582
    %v7503 = vpack.c.b16 %v5591, %v5583
    %v7504 = vpack.c.b16 %v5600, %v5592
    %v7505 = vpack.c.b16 %v5601, %v5593
    %v7506 = vpack.c.b16 %v5602, %v5594
    %v7507 = vpack.c.b16 %v5603, %v5595
    %v7508 = vpack.c.b16 %v5604, %v5596
    %v7509 = vpack.c.b16 %v5605, %v5597
    %v7510 = vpack.c.b16 %v5606, %v5598
    %v7511 = vpack.c.b16 %v5607, %v5599
    %v7512 = vpack.c.b16 %v5616, %v5608
    %v7513 = vpack.c.b16 %v5617, %v5609
    %v7514 = vpack.c.b16 %v5618, %v5610
    %v7515 = vpack.c.b16 %v5619, %v5611
    %v7516 = vpack.c.b16 %v5620, %v5612
    %v7517 = vpack.c.b16 %v5621, %v5613
    %v7518 = vpack.c.b16 %v5622, %v5614
    %v7519 = vpack.c.b16 %v5623, %v5615
    %v7520 = vpack.c.b16 %v5632, %v5624
    %v7521 = vpack.c.b16 %v5633, %v5625
    %v7522 = vpack.c.b16 %v5634, %v5626
    %v7523 = vpack.c.b16 %v5635, %v5627
    %v7524 = vpack.c.b16 %v5636, %v5628
    %v7525 = vpack.c.b16 %v5637, %v5629
    %v7526 = vpack.c.b16 %v5638, %v5630
    %v7527 = vpack.c.b16 %v5639, %v5631
    %v7528 = vpack.c.b16 %v5648, %v5640
    %v7529 = vpack.c.b16 %v5649, %v5641
    %v7530 = vpack.c.b16 %v5650, %v5642
    %v7531 = vpack.c.b16 %v5651, %v5643
    %v7532 = vpack.c.b16 %v5652, %v5644
    %v7533 = vpack.c.b16 %v5653, %v5645
    %v7534 = vpack.c.b16 %v5654, %v5646
    %v7535 = vpack.c.b16 %v5655, %v5647
    %v7536 = vpack.c.b16 %v5664, %v5656
    %v7537 = vpack.c.b16 %v5665, %v5657
    %v7538 = vpack.c.b16 %v5666, %v5658
    %v7539 = vpack.c.b16 %v5667, %v5659
    %v7540 = vpack.c.b16 %v5668, %v5660
    %v7541 = vpack.c.b16 %v5669, %v5661
    %v7542 = vpack.c.b16 %v5670, %v5662
    %v7543 = vpack.c.b16 %v5671, %v5663
    %v7544 = vpack.c.b16 %v5680, %v5672
    %v7545 = vpack.c.b16 %v5681, %v5673
    %v7546 = vpack.c.b16 %v5682, %v5674
    %v7547 = vpack.c.b16 %v5683, %v5675
    %v7548 = vpack.c.b16 %v5684, %v5676
    %v7549 = vpack.c.b16 %v5685, %v5677
    %v7550 = vpack.c.b16 %v5686, %v5678
    %v7551 = vpack.c.b16 %v5687, %v5679
    %v7552 = vpack.c.b16 %v5696, %v5688
    %v7553 = vpack.c.b16 %v5697, %v5689
    %v7554 = vpack.c.b16 %v5698, %v5690
    %v7555 = vpack.c.b16 %v5699, %v5691
    %v7556 = vpack.c.b16 %v5700, %v5692
    %v7557 = vpack.c.b16 %v5701, %v5693
    %v7558 = vpack.c.b16 %v5702, %v5694
    %v7559 = vpack.c.b16 %v5703, %v5695
    %v7560 = vpack.c.b16 %v5712, %v5704
    %v7561 = vpack.c.b16 %v5713, %v5705
    %v7562 = vpack.c.b16 %v5714, %v5706
    %v7563 = vpack.c.b16 %v5715, %v5707
    %v7564 = vpack.c.b16 %v5716, %v5708
    %v7565 = vpack.c.b16 %v5717, %v5709
    %v7566 = vpack.c.b16 %v5718, %v5710
    %v7567 = vpack.c.b16 %v5719, %v5711
    %v7568 = vpack.c.b16 %v5728, %v5720
    %v7569 = vpack.c.b16 %v5729, %v5721
    %v7570 = vpack.c.b16 %v5730, %v5722
    %v7571 = vpack.c.b16 %v5731, %v5723
    %v7572 = vpack.c.b16 %v5732, %v5724
    %v7573 = vpack.c.b16 %v5733, %v5725
    %v7574 = vpack.c.b16 %v5734, %v5726
    %v7575 = vpack.c.b16 %v5735, %v5727
    %v7576 = vpack.c.b16 %v5744, %v5736
    %v7577 = vpack.c.b16 %v5745, %v5737
    %v7578 = vpack.c.b16 %v5746, %v5738
    %v7579 = vpack.c.b16 %v5747, %v5739
    %v7580 = vpack.c.b16 %v5748, %v5740
    %v7581 = vpack.c.b16 %v5749, %v5741
    %v7582 = vpack.c.b16 %v5750, %v5742
    %v7583 = vpack.c.b16 %v5751, %v5743
    %v7584 = vpack.c.b16 %v5760, %v5752
    %v7585 = vpack.c.b16 %v5761, %v5753
    %v7586 = vpack.c.b16 %v5762, %v5754
    %v7587 = vpack.c.b16 %v5763, %v5755
    %v7588 = vpack.c.b16 %v5764, %v5756
    %v7589 = vpack.c.b16 %v5765, %v5757
    %v7590 = vpack.c.b16 %v5766, %v5758
    %v7591 = vpack.c.b16 %v5767, %v5759
    %v7592 = vpack.c.b16 %v5776, %v5768
    %v7593 = vpack.c.b16 %v5777, %v5769
    %v7594 = vpack.c.b16 %v5778, %v5770
    %v7595 = vpack.c.b16 %v5779, %v5771
    %v7596 = vpack.c.b16 %v5780, %v5772
    %v7597 = vpack.c.b16 %v5781, %v5773
    %v7598 = vpack.c.b16 %v5782, %v5774
    %v7599 = vpack.c.b16 %v5783, %v5775
    %v7600 = vpack.c.b16 %v5792, %v5784
    %v7601 = vpack.c.b16 %v5793, %v5785
    %v7602 = vpack.c.b16 %v5794, %v5786
    %v7603 = vpack.c.b16 %v5795, %v5787
    %v7604 = vpack.c.b16 %v5796, %v5788
    %v7605 = vpack.c.b16 %v5797, %v5789
    %v7606 = vpack.c.b16 %v5798, %v5790
    %v7607 = vpack.c.b16 %v5799, %v5791
    %v7608 = vpack.c.b16 %v5808, %v5800
    %v7609 = vpack.c.b16 %v5809, %v5801
    %v7610 = vpack.c.b16 %v5810, %v5802
    %v7611 = vpack.c.b16 %v5811, %v5803
    %v7612 = vpack.c.b16 %v5812, %v5804
    %v7613 = vpack.c.b16 %v5813, %v5805
    %v7614 = vpack.c.b16 %v5814, %v5806
    %v7615 = vpack.c.b16 %v5815, %v5807
    %v7616 = vpack.c.b16 %v5824, %v5816
    %v7617 = vpack.c.b16 %v5825, %v5817
    %v7618 = vpack.c.b16 %v5826, %v5818
    %v7619 = vpack.c.b16 %v5827, %v5819
    %v7620 = vpack.c.b16 %v5828, %v5820
    %v7621 = vpack.c.b16 %v5829, %v5821
    %v7622 = vpack.c.b16 %v5830, %v5822
    %v7623 = vpack.c.b16 %v5831, %v5823
    %v7624 = vpack.c.b16 %v5840, %v5832
    %v7625 = vpack.c.b16 %v5841, %v5833
    %v7626 = vpack.c.b16 %v5842, %v5834
    %v7627 = vpack.c.b16 %v5843, %v5835
    %v7628 = vpack.c.b16 %v5844, %v5836
    %v7629 = vpack.c.b16 %v5845, %v5837
    %v7630 = vpack.c.b16 %v5846, %v5838
    %v7631 = vpack.c.b16 %v5847, %v5839
    %v7632 = vpack.c.b16 %v5856, %v5848
    %v7633 = vpack.c.b16 %v5857, %v5849
    %v7634 = vpack.c.b16 %v5858, %v5850
    %v7635 = vpack.c.b16 %v5859, %v5851
    %v7636 = vpack.c.b16 %v5860, %v5852
    %v7637 = vpack.c.b16 %v5861, %v5853
    %v7638 = vpack.c.b16 %v5862, %v5854
    %v7639 = vpack.c.b16 %v5863, %v5855
    %v7640 = vpack.c.b16 %v5872, %v5864
    %v7641 = vpack.c.b16 %v5873, %v5865
    %v7642 = vpack.c.b16 %v5874, %v5866
    %v7643 = vpack.c.b16 %v5875, %v5867
    %v7644 = vpack.c.b16 %v5876, %v5868
    %v7645 = vpack.c.b16 %v5877, %v5869
    %v7646 = vpack.c.b16 %v5878, %v5870
    %v7647 = vpack.c.b16 %v5879, %v5871
    %v7648 = vpack.c.b16 %v5888, %v5880
    %v7649 = vpack.c.b16 %v5889, %v5881
    %v7650 = vpack.c.b16 %v5890, %v5882
    %v7651 = vpack.c.b16 %v5891, %v5883
    %v7652 = vpack.c.b16 %v5892, %v5884
    %v7653 = vpack.c.b16 %v5893, %v5885
    %v7654 = vpack.c.b16 %v5894, %v5886
    %v7655 = vpack.c.b16 %v5895, %v5887
    %v7656 = vpack.c.b16 %v5904, %v5896
    %v7657 = vpack.c.b16 %v5905, %v5897
    %v7658 = vpack.c.b16 %v5906, %v5898
    %v7659 = vpack.c.b16 %v5907, %v5899
    %v7660 = vpack.c.b16 %v5908, %v5900
    %v7661 = vpack.c.b16 %v5909, %v5901
    %v7662 = vpack.c.b16 %v5910, %v5902
    %v7663 = vpack.c.b16 %v5911, %v5903
    %v7664 = vpack.c.b16 %v5920, %v5912
    %v7665 = vpack.c.b16 %v5921, %v5913
    %v7666 = vpack.c.b16 %v5922, %v5914
    %v7667 = vpack.c.b16 %v5923, %v5915
    %v7668 = vpack.c.b16 %v5924, %v5916
    %v7669 = vpack.c.b16 %v5925, %v5917
    %v7670 = vpack.c.b16 %v5926, %v5918
    %v7671 = vpack.c.b16 %v5927, %v5919
    %v7672 = vpack.c.b16 %v5936, %v5928
    %v7673 = vpack.c.b16 %v5937, %v5929
    %v7674 = vpack.c.b16 %v5938, %v5930
    %v7675 = vpack.c.b16 %v5939, %v5931
    %v7676 = vpack.c.b16 %v5940, %v5932
    %v7677 = vpack.c.b16 %v5941, %v5933
    %v7678 = vpack.c.b16 %v5942, %v5934
    %v7679 = vpack.c.b16 %v5943, %v5935
    %v7680 = vpack.c.b16 %v5952, %v5944
    %v7681 = vpack.c.b16 %v5953, %v5945
    %v7682 = vpack.c.b16 %v5954, %v5946
    %v7683 = vpack.c.b16 %v5955, %v5947
    %v7684 = vpack.c.b16 %v5956, %v5948
    %v7685 = vpack.c.b16 %v5957, %v5949
    %v7686 = vpack.c.b16 %v5958, %v5950
    %v7687 = vpack.c.b16 %v5959, %v5951
    %v7688 = vpack.c.b16 %v5968, %v5960
    %v7689 = vpack.c.b16 %v5969, %v5961
    %v7690 = vpack.c.b16 %v5970, %v5962
    %v7691 = vpack.c.b16 %v5971, %v5963
    %v7692 = vpack.c.b16 %v5972, %v5964
    %v7693 = vpack.c.b16 %v5973, %v5965
    %v7694 = vpack.c.b16 %v5974, %v5966
    %v7695 = vpack.c.b16 %v5975, %v5967
    %v7696 = vpack.c.b16 %v5984, %v5976
    %v7697 = vpack.c.b16 %v5985, %v5977
    %v7698 = vpack.c.b16 %v5986, %v5978
    %v7699 = vpack.c.b16 %v5987, %v5979
    %v7700 = vpack.c.b16 %v5988, %v5980
    %v7701 = vpack.c.b16 %v5989, %v5981
    %v7702 = vpack.c.b16 %v5990, %v5982
    %v7703 = vpack.c.b16 %v5991, %v5983
    %v7704 = vpack.c.b16 %v6000, %v5992
    %v7705 = vpack.c.b16 %v6001, %v5993
    %v7706 = vpack.c.b16 %v6002, %v5994
    %v7707 = vpack.c.b16 %v6003, %v5995
    %v7708 = vpack.c.b16 %v6004, %v5996
    %v7709 = vpack.c.b16 %v6005, %v5997
    %v7710 = vpack.c.b16 %v6006, %v5998
    %v7711 = vpack.c.b16 %v6007, %v5999
    %v7712 = vpack.c.b16 %v6016, %v6008
    %v7713 = vpack.c.b16 %v6017, %v6009
    %v7714 = vpack.c.b16 %v6018, %v6010
    %v7715 = vpack.c.b16 %v6019, %v6011
    %v7716 = vpack.c.b16 %v6020, %v6012
    %v7717 = vpack.c.b16 %v6021, %v6013
    %v7718 = vpack.c.b16 %v6022, %v6014
    %v7719 = vpack.c.b16 %v6023, %v6015
    %v7720 = vpack.c.b16 %v6032, %v6024
    %v7721 = vpack.c.b16 %v6033, %v6025
    %v7722 = vpack.c.b16 %v6034, %v6026
    %v7723 = vpack.c.b16 %v6035, %v6027
    %v7724 = vpack.c.b16 %v6036, %v6028
    %v7725 = vpack.c.b16 %v6037, %v6029
    %v7726 = vpack.c.b16 %v6038, %v6030
    %v7727 = vpack.c.b16 %v6039, %v6031
    %v7728 = vpack.c.b16 %v6048, %v6040
    %v7729 = vpack.c.b16 %v6049, %v6041
    %v7730 = vpack.c.b16 %v6050, %v6042
    %v7731 = vpack.c.b16 %v6051, %v6043
    %v7732 = vpack.c.b16 %v6052, %v6044
    %v7733 = vpack.c.b16 %v6053, %v6045
    %v7734 = vpack.c.b16 %v6054, %v6046
    %v7735 = vpack.c.b16 %v6055, %v6047
    %v7736 = vpack.c.b16 %v6064, %v6056
    %v7737 = vpack.c.b16 %v6065, %v6057
    %v7738 = vpack.c.b16 %v6066, %v6058
    %v7739 = vpack.c.b16 %v6067, %v6059
    %v7740 = vpack.c.b16 %v6068, %v6060
    %v7741 = vpack.c.b16 %v6069, %v6061
    %v7742 = vpack.c.b16 %v6070, %v6062
    %v7743 = vpack.c.b16 %v6071, %v6063
    %v7744 = vpack.c.b16 %v6080, %v6072
    %v7745 = vpack.c.b16 %v6081, %v6073
    %v7746 = vpack.c.b16 %v6082, %v6074
    %v7747 = vpack.c.b16 %v6083, %v6075
    %v7748 = vpack.c.b16 %v6084, %v6076
    %v7749 = vpack.c.b16 %v6085, %v6077
    %v7750 = vpack.c.b16 %v6086, %v6078
    %v7751 = vpack.c.b16 %v6087, %v6079
    %v7752 = vpack.c.b16 %v6096, %v6088
    %v7753 = vpack.c.b16 %v6097, %v6089
    %v7754 = vpack.c.b16 %v6098, %v6090
    %v7755 = vpack.c.b16 %v6099, %v6091
    %v7756 = vpack.c.b16 %v6100, %v6092
    %v7757 = vpack.c.b16 %v6101, %v6093
    %v7758 = vpack.c.b16 %v6102, %v6094
    %v7759 = vpack.c.b16 %v6103, %v6095
    %v7760 = vpack.c.b16 %v6112, %v6104
    %v7761 = vpack.c.b16 %v6113, %v6105
    %v7762 = vpack.c.b16 %v6114, %v6106
    %v7763 = vpack.c.b16 %v6115, %v6107
    %v7764 = vpack.c.b16 %v6116, %v6108
    %v7765 = vpack.c.b16 %v6117, %v6109
    %v7766 = vpack.c.b16 %v6118, %v6110
    %v7767 = vpack.c.b16 %v6119, %v6111
    %v7768 = vpack.c.b16 %v6128, %v6120
    %v7769 = vpack.c.b16 %v6129, %v6121
    %v7770 = vpack.c.b16 %v6130, %v6122
    %v7771 = vpack.c.b16 %v6131, %v6123
    %v7772 = vpack.c.b16 %v6132, %v6124
    %v7773 = vpack.c.b16 %v6133, %v6125
    %v7774 = vpack.c.b16 %v6134, %v6126
    %v7775 = vpack.c.b16 %v6135, %v6127
    %v7776 = vpack.c.b16 %v6144, %v6136
    %v7777 = vpack.c.b16 %v6145, %v6137
    %v7778 = vpack.c.b16 %v6146, %v6138
    %v7779 = vpack.c.b16 %v6147, %v6139
    %v7780 = vpack.c.b16 %v6148, %v6140
    %v7781 = vpack.c.b16 %v6149, %v6141
    %v7782 = vpack.c.b16 %v6150, %v6142
    %v7783 = vpack.c.b16 %v6151, %v6143
    %v7784 = vpack.c.b16 %v6160, %v6152
    %v7785 = vpack.c.b16 %v6161, %v6153
    %v7786 = vpack.c.b16 %v6162, %v6154
    %v7787 = vpack.c.b16 %v6163, %v6155
    %v7788 = vpack.c.b16 %v6164, %v6156
    %v7789 = vpack.c.b16 %v6165, %v6157
    %v7790 = vpack.c.b16 %v6166, %v6158
    %v7791 = vpack.c.b16 %v6167, %v6159
    %v7792 = vpack.c.b16 %v6176, %v6168
    %v7793 = vpack.c.b16 %v6177, %v6169
    %v7794 = vpack.c.b16 %v6178, %v6170
    %v7795 = vpack.c.b16 %v6179, %v6171
    %v7796 = vpack.c.b16 %v6180, %v6172
    %v7797 = vpack.c.b16 %v6181, %v6173
    %v7798 = vpack.c.b16 %v6182, %v6174
    %v7799 = vpack.c.b16 %v6183, %v6175
    %v7800 = vpack.c.b16 %v6192, %v6184
    %v7801 = vpack.c.b16 %v6193, %v6185
    %v7802 = vpack.c.b16 %v6194, %v6186
    %v7803 = vpack.c.b16 %v6195, %v6187
    %v7804 = vpack.c.b16 %v6196, %v6188
    %v7805 = vpack.c.b16 %v6197, %v6189
    %v7806 = vpack.c.b16 %v6198, %v6190
    %v7807 = vpack.c.b16 %v6199, %v6191
    %v7808 = vpack.c.b16 %v6208, %v6200
    %v7809 = vpack.c.b16 %v6209, %v6201
    %v7810 = vpack.c.b16 %v6210, %v6202
    %v7811 = vpack.c.b16 %v6211, %v6203
    %v7812 = vpack.c.b16 %v6212, %v6204
    %v7813 = vpack.c.b16 %v6213, %v6205
    %v7814 = vpack.c.b16 %v6214, %v6206
    %v7815 = vpack.c.b16 %v6215, %v6207
    %v7816 = vpack.c.b16 %v6224, %v6216
    %v7817 = vpack.c.b16 %v6225, %v6217
    %v7818 = vpack.c.b16 %v6226, %v6218
    %v7819 = vpack.c.b16 %v6227, %v6219
    %v7820 = vpack.c.b16 %v6228, %v6220
    %v7821 = vpack.c.b16 %v6229, %v6221
    %v7822 = vpack.c.b16 %v6230, %v6222
    %v7823 = vpack.c.b16 %v6231, %v6223
    %v7824 = vpack.c.b16 %v6240, %v6232
    %v7825 = vpack.c.b16 %v6241, %v6233
    %v7826 = vpack.c.b16 %v6242, %v6234
    %v7827 = vpack.c.b16 %v6243, %v6235
    %v7828 = vpack.c.b16 %v6244, %v6236
    %v7829 = vpack.c.b16 %v6245, %v6237
    %v7830 = vpack.c.b16 %v6246, %v6238
    %v7831 = vpack.c.b16 %v6247, %v6239
    %v7832 = vpack.c.b16 %v6256, %v6248
    %v7833 = vpack.c.b16 %v6257, %v6249
    %v7834 = vpack.c.b16 %v6258, %v6250
    %v7835 = vpack.c.b16 %v6259, %v6251
    %v7836 = vpack.c.b16 %v6260, %v6252
    %v7837 = vpack.c.b16 %v6261, %v6253
    %v7838 = vpack.c.b16 %v6262, %v6254
    %v7839 = vpack.c.b16 %v6263, %v6255
    %v7840 = vpack.c.b16 %v6272, %v6264
    %v7841 = vpack.c.b16 %v6273, %v6265
    %v7842 = vpack.c.b16 %v6274, %v6266
    %v7843 = vpack.c.b16 %v6275, %v6267
    %v7844 = vpack.c.b16 %v6276, %v6268
    %v7845 = vpack.c.b16 %v6277, %v6269
    %v7846 = vpack.c.b16 %v6278, %v6270
    %v7847 = vpack.c.b16 %v6279, %v6271
    %v7848 = vpack.c.b16 %v6288, %v6280
    %v7849 = vpack.c.b16 %v6289, %v6281
    %v7850 = vpack.c.b16 %v6290, %v6282
    %v7851 = vpack.c.b16 %v6291, %v6283
    %v7852 = vpack.c.b16 %v6292, %v6284
    %v7853 = vpack.c.b16 %v6293, %v6285
    %v7854 = vpack.c.b16 %v6294, %v6286
    %v7855 = vpack.c.b16 %v6295, %v6287
    %v7856 = vpack.c.b16 %v6304, %v6296
    %v7857 = vpack.c.b16 %v6305, %v6297
    %v7858 = vpack.c.b16 %v6306, %v6298
    %v7859 = vpack.c.b16 %v6307, %v6299
    %v7860 = vpack.c.b16 %v6308, %v6300
    %v7861 = vpack.c.b16 %v6309, %v6301
    %v7862 = vpack.c.b16 %v6310, %v6302
    %v7863 = vpack.c.b16 %v6311, %v6303
    %v7864 = vpack.c.b16 %v6320, %v6312
    %v7865 = vpack.c.b16 %v6321, %v6313
    %v7866 = vpack.c.b16 %v6322, %v6314
    %v7867 = vpack.c.b16 %v6323, %v6315
    %v7868 = vpack.c.b16 %v6324, %v6316
    %v7869 = vpack.c.b16 %v6325, %v6317
    %v7870 = vpack.c.b16 %v6326, %v6318
    %v7871 = vpack.c.b16 %v6327, %v6319
    %v7872 = vpack.c.b16 %v6336, %v6328
    %v7873 = vpack.c.b16 %v6337, %v6329
    %v7874 = vpack.c.b16 %v6338, %v6330
    %v7875 = vpack.c.b16 %v6339, %v6331
    %v7876 = vpack.c.b16 %v6340, %v6332
    %v7877 = vpack.c.b16 %v6341, %v6333
    %v7878 = vpack.c.b16 %v6342, %v6334
    %v7879 = vpack.c.b16 %v6343, %v6335
    %9416 = vmatprep.subr.bf16.mxu0 %v6345
    %9417 = vmatpush1.bf16.msra.mxu0 %v6344
    %9418 = vmatprep.subr.bf16.mxu0 %v6353
    %9419 = vmatpush1.bf16.msra.mxu0 %v6352
    %9420 = vmatprep.subr.bf16.mxu0 %v6361
    %9421 = vmatpush1.bf16.msra.mxu0 %v6360
    %9422 = vmatprep.subr.bf16.mxu0 %v6369
    %9423 = vmatpush1.bf16.msra.mxu0 %v6368
    %9424 = vmatprep.subr.bf16.mxu0 %v6377
    %9425 = vmatpush1.bf16.msra.mxu0 %v6376
    %9426 = vmatprep.subr.bf16.mxu0 %v6385
    %9427 = vmatpush1.bf16.msra.mxu0 %v6384
    %9428 = vmatprep.subr.bf16.mxu0 %v6393
    %9429 = vmatpush1.bf16.msra.mxu0 %v6392
    %9430 = vmatprep.subr.bf16.mxu0 %v6401
    %9431 = vmatpush1.bf16.msra.mxu0 %v6400
    %9432 = vmatprep.subr.bf16.mxu0 %v6409
    %9433 = vmatpush1.bf16.msra.mxu0 %v6408
    %9434 = vmatprep.subr.bf16.mxu0 %v6417
    %9435 = vmatpush1.bf16.msra.mxu0 %v6416
    %9436 = vmatprep.subr.bf16.mxu0 %v6425
    %9437 = vmatpush1.bf16.msra.mxu0 %v6424
    %9438 = vmatprep.subr.bf16.mxu0 %v6433
    %9439 = vmatpush1.bf16.msra.mxu0 %v6432
    %9440 = vmatprep.subr.bf16.mxu0 %v6441
    %9441 = vmatpush1.bf16.msra.mxu0 %v6440
    %9442 = vmatprep.subr.bf16.mxu0 %v6449
    %9443 = vmatpush1.bf16.msra.mxu0 %v6448
    %9444 = vmatprep.subr.bf16.mxu0 %v6457
    %9445 = vmatpush1.bf16.msra.mxu0 %v6456
    %9446 = vmatprep.subr.bf16.mxu0 %v6465
    %9447 = vmatpush1.bf16.msra.mxu0 %v6464
    %9448 = vmatprep.mubr.bf16.mxu0 %v135
    %9449 = vmatmul.mubr.bf16.gmra.mrb[0].mxu0 %v134
    %v9450 = vpop.f32.mrb[0].mxu0
    %v9451 = vadd.f32 %v1699, %v9450
    %v9452 = vpop.f32.mrb[0].mxu0
    %v9453 = vadd.f32 %v1703, %v9452
    %v9454 = vpop.f32.mrb[0].mxu0
    %v9455 = vadd.f32 %v1699, %v9454
    %v9456 = vpop.f32.mrb[0].mxu0
    %v9457 = vadd.f32 %v1703, %v9456
    %9458 = vdwg.mxu0
    %9459 = vmatprep.subr.bf16.mxu0 %v6473
    %9460 = vmatpush1.bf16.msra.mxu0 %v6472
    %9461 = vmatprep.subr.bf16.mxu0 %v6481
    %9462 = vmatpush1.bf16.msra.mxu0 %v6480
    %9463 = vmatprep.subr.bf16.mxu0 %v6489
    %9464 = vmatpush1.bf16.msra.mxu0 %v6488
    %9465 = vmatprep.subr.bf16.mxu0 %v6497
    %9466 = vmatpush1.bf16.msra.mxu0 %v6496
    %9467 = vmatprep.subr.bf16.mxu0 %v6505
    %9468 = vmatpush1.bf16.msra.mxu0 %v6504
    %9469 = vmatprep.subr.bf16.mxu0 %v6513
    %9470 = vmatpush1.bf16.msra.mxu0 %v6512
    %9471 = vmatprep.subr.bf16.mxu0 %v6521
    %9472 = vmatpush1.bf16.msra.mxu0 %v6520
    %9473 = vmatprep.subr.bf16.mxu0 %v6529
    %9474 = vmatpush1.bf16.msra.mxu0 %v6528
    %9475 = vmatprep.subr.bf16.mxu0 %v6537
    %9476 = vmatpush1.bf16.msra.mxu0 %v6536
    %9477 = vmatprep.subr.bf16.mxu0 %v6545
    %9478 = vmatpush1.bf16.msra.mxu0 %v6544
    %9479 = vmatprep.subr.bf16.mxu0 %v6553
    %9480 = vmatpush1.bf16.msra.mxu0 %v6552
    %9481 = vmatprep.subr.bf16.mxu0 %v6561
    %9482 = vmatpush1.bf16.msra.mxu0 %v6560
    %9483 = vmatprep.subr.bf16.mxu0 %v6569
    %9484 = vmatpush1.bf16.msra.mxu0 %v6568
    %9485 = vmatprep.subr.bf16.mxu0 %v6577
    %9486 = vmatpush1.bf16.msra.mxu0 %v6576
    %9487 = vmatprep.subr.bf16.mxu0 %v6585
    %9488 = vmatpush1.bf16.msra.mxu0 %v6584
    %9489 = vmatprep.subr.bf16.mxu0 %v6593
    %9490 = vmatpush1.bf16.msra.mxu0 %v6592
    %9491 = vmatprep.mubr.bf16.mxu0 %v137
    %9492 = vmatmul.mubr.bf16.gmra.mrb[0].mxu0 %v136
    %v9493 = vpop.f32.mrb[0].mxu0
    %v9494 = vadd.f32 %v9451, %v9493
    %v9495 = vpop.f32.mrb[0].mxu0
    %v9496 = vadd.f32 %v9453, %v9495
    %v9497 = vpop.f32.mrb[0].mxu0
    %v9498 = vadd.f32 %v9455, %v9497
    %v9499 = vpop.f32.mrb[0].mxu0
    %v9500 = vadd.f32 %v9457, %v9499
    %9501 = vdwg.mxu0
    %9502 = vmatprep.subr.bf16.mxu0 %v6601
    %9503 = vmatpush1.bf16.msra.mxu0 %v6600
    %9504 = vmatprep.subr.bf16.mxu0 %v6609
    %9505 = vmatpush1.bf16.msra.mxu0 %v6608
    %9506 = vmatprep.subr.bf16.mxu0 %v6617
    %9507 = vmatpush1.bf16.msra.mxu0 %v6616
    %9508 = vmatprep.subr.bf16.mxu0 %v6625
    %9509 = vmatpush1.bf16.msra.mxu0 %v6624
    %9510 = vmatprep.subr.bf16.mxu0 %v6633
    %9511 = vmatpush1.bf16.msra.mxu0 %v6632
    %9512 = vmatprep.subr.bf16.mxu0 %v6641
    %9513 = vmatpush1.bf16.msra.mxu0 %v6640
    %9514 = vmatprep.subr.bf16.mxu0 %v6649
    %9515 = vmatpush1.bf16.msra.mxu0 %v6648
    %9516 = vmatprep.subr.bf16.mxu0 %v6657
    %9517 = vmatpush1.bf16.msra.mxu0 %v6656
    %9518 = vmatprep.subr.bf16.mxu0 %v6665
    %9519 = vmatpush1.bf16.msra.mxu0 %v6664
    %9520 = vmatprep.subr.bf16.mxu0 %v6673
    %9521 = vmatpush1.bf16.msra.mxu0 %v6672
    %9522 = vmatprep.subr.bf16.mxu0 %v6681
    %9523 = vmatpush1.bf16.msra.mxu0 %v6680
    %9524 = vmatprep.subr.bf16.mxu0 %v6689
    %9525 = vmatpush1.bf16.msra.mxu0 %v6688
    %9526 = vmatprep.subr.bf16.mxu0 %v6697
    %9527 = vmatpush1.bf16.msra.mxu0 %v6696
    %9528 = vmatprep.subr.bf16.mxu0 %v6705
    %9529 = vmatpush1.bf16.msra.mxu0 %v6704
    %9530 = vmatprep.subr.bf16.mxu0 %v6713
    %9531 = vmatpush1.bf16.msra.mxu0 %v6712
    %9532 = vmatprep.subr.bf16.mxu0 %v6721
    %9533 = vmatpush1.bf16.msra.mxu0 %v6720
    %9534 = vmatprep.mubr.bf16.mxu0 %v139
    %9535 = vmatmul.mubr.bf16.gmra.mrb[0].mxu0 %v138
    %v9536 = vpop.f32.mrb[0].mxu0
    %v9537 = vadd.f32 %v9494, %v9536
    %v9538 = vpop.f32.mrb[0].mxu0
    %v9539 = vadd.f32 %v9496, %v9538
    %v9540 = vpop.f32.mrb[0].mxu0
    %v9541 = vadd.f32 %v9498, %v9540
    %v9542 = vpop.f32.mrb[0].mxu0
    %v9543 = vadd.f32 %v9500, %v9542
    %9544 = vdwg.mxu0
    %9545 = vmatprep.subr.bf16.mxu0 %v6729
    %9546 = vmatpush1.bf16.msra.mxu0 %v6728
    %9547 = vmatprep.subr.bf16.mxu0 %v6737
    %9548 = vmatpush1.bf16.msra.mxu0 %v6736
    %9549 = vmatprep.subr.bf16.mxu0 %v6745
    %9550 = vmatpush1.bf16.msra.mxu0 %v6744
    %9551 = vmatprep.subr.bf16.mxu0 %v6753
    %9552 = vmatpush1.bf16.msra.mxu0 %v6752
    %9553 = vmatprep.subr.bf16.mxu0 %v6761
    %9554 = vmatpush1.bf16.msra.mxu0 %v6760
    %9555 = vmatprep.subr.bf16.mxu0 %v6769
    %9556 = vmatpush1.bf16.msra.mxu0 %v6768
    %9557 = vmatprep.subr.bf16.mxu0 %v6777
    %9558 = vmatpush1.bf16.msra.mxu0 %v6776
    %9559 = vmatprep.subr.bf16.mxu0 %v6785
    %9560 = vmatpush1.bf16.msra.mxu0 %v6784
    %9561 = vmatprep.subr.bf16.mxu0 %v6793
    %9562 = vmatpush1.bf16.msra.mxu0 %v6792
    %9563 = vmatprep.subr.bf16.mxu0 %v6801
    %9564 = vmatpush1.bf16.msra.mxu0 %v6800
    %9565 = vmatprep.subr.bf16.mxu0 %v6809
    %9566 = vmatpush1.bf16.msra.mxu0 %v6808
    %9567 = vmatprep.subr.bf16.mxu0 %v6817
    %9568 = vmatpush1.bf16.msra.mxu0 %v6816
    %9569 = vmatprep.subr.bf16.mxu0 %v6825
    %9570 = vmatpush1.bf16.msra.mxu0 %v6824
    %9571 = vmatprep.subr.bf16.mxu0 %v6833
    %9572 = vmatpush1.bf16.msra.mxu0 %v6832
    %9573 = vmatprep.subr.bf16.mxu0 %v6841
    %9574 = vmatpush1.bf16.msra.mxu0 %v6840
    %9575 = vmatprep.subr.bf16.mxu0 %v6849
    %9576 = vmatpush1.bf16.msra.mxu0 %v6848
    %9577 = vmatprep.mubr.bf16.mxu0 %v141
    %9578 = vmatmul.mubr.bf16.gmra.mrb[0].mxu0 %v140
    %v9579 = vpop.f32.mrb[0].mxu0
    %v9580 = vadd.f32 %v9537, %v9579
    %v9581 = vpop.f32.mrb[0].mxu0
    %v9582 = vadd.f32 %v9539, %v9581
    %v9583 = vpop.f32.mrb[0].mxu0
    %v9584 = vadd.f32 %v9541, %v9583
    %v9585 = vpop.f32.mrb[0].mxu0
    %v9586 = vadd.f32 %v9543, %v9585
    %9587 = vdwg.mxu0
    %9588 = vmatprep.subr.bf16.mxu0 %v6857
    %9589 = vmatpush1.bf16.msra.mxu0 %v6856
    %9590 = vmatprep.subr.bf16.mxu0 %v6865
    %9591 = vmatpush1.bf16.msra.mxu0 %v6864
    %9592 = vmatprep.subr.bf16.mxu0 %v6873
    %9593 = vmatpush1.bf16.msra.mxu0 %v6872
    %9594 = vmatprep.subr.bf16.mxu0 %v6881
    %9595 = vmatpush1.bf16.msra.mxu0 %v6880
    %9596 = vmatprep.subr.bf16.mxu0 %v6889
    %9597 = vmatpush1.bf16.msra.mxu0 %v6888
    %9598 = vmatprep.subr.bf16.mxu0 %v6897
    %9599 = vmatpush1.bf16.msra.mxu0 %v6896
    %9600 = vmatprep.subr.bf16.mxu0 %v6905
    %9601 = vmatpush1.bf16.msra.mxu0 %v6904
    %9602 = vmatprep.subr.bf16.mxu0 %v6913
    %9603 = vmatpush1.bf16.msra.mxu0 %v6912
    %9604 = vmatprep.subr.bf16.mxu0 %v6921
    %9605 = vmatpush1.bf16.msra.mxu0 %v6920
    %9606 = vmatprep.subr.bf16.mxu0 %v6929
    %9607 = vmatpush1.bf16.msra.mxu0 %v6928
    %9608 = vmatprep.subr.bf16.mxu0 %v6937
    %9609 = vmatpush1.bf16.msra.mxu0 %v6936
    %9610 = vmatprep.subr.bf16.mxu0 %v6945
    %9611 = vmatpush1.bf16.msra.mxu0 %v6944
    %9612 = vmatprep.subr.bf16.mxu0 %v6953
    %9613 = vmatpush1.bf16.msra.mxu0 %v6952
    %9614 = vmatprep.subr.bf16.mxu0 %v6961
    %9615 = vmatpush1.bf16.msra.mxu0 %v6960
    %9616 = vmatprep.subr.bf16.mxu0 %v6969
    %9617 = vmatpush1.bf16.msra.mxu0 %v6968
    %9618 = vmatprep.subr.bf16.mxu0 %v6977
    %9619 = vmatpush1.bf16.msra.mxu0 %v6976
    %9620 = vmatprep.mubr.bf16.mxu0 %v143
    %9621 = vmatmul.mubr.bf16.gmra.mrb[0].mxu0 %v142
    %v9622 = vpop.f32.mrb[0].mxu0
    %v9623 = vadd.f32 %v9580, %v9622
    %v9624 = vpop.f32.mrb[0].mxu0
    %v9625 = vadd.f32 %v9582, %v9624
    %v9626 = vpop.f32.mrb[0].mxu0
    %v9627 = vadd.f32 %v9584, %v9626
    %v9628 = vpop.f32.mrb[0].mxu0
    %v9629 = vadd.f32 %v9586, %v9628
    %9630 = vdwg.mxu0
    %9631 = vmatprep.subr.bf16.mxu0 %v6985
    %9632 = vmatpush1.bf16.msra.mxu0 %v6984
    %9633 = vmatprep.subr.bf16.mxu0 %v6993
    %9634 = vmatpush1.bf16.msra.mxu0 %v6992
    %9635 = vmatprep.subr.bf16.mxu0 %v7001
    %9636 = vmatpush1.bf16.msra.mxu0 %v7000
    %9637 = vmatprep.subr.bf16.mxu0 %v7009
    %9638 = vmatpush1.bf16.msra.mxu0 %v7008
    %9639 = vmatprep.subr.bf16.mxu0 %v7017
    %9640 = vmatpush1.bf16.msra.mxu0 %v7016
    %9641 = vmatprep.subr.bf16.mxu0 %v7025
    %9642 = vmatpush1.bf16.msra.mxu0 %v7024
    %9643 = vmatprep.subr.bf16.mxu0 %v7033
    %9644 = vmatpush1.bf16.msra.mxu0 %v7032
    %9645 = vmatprep.subr.bf16.mxu0 %v7041
    %9646 = vmatpush1.bf16.msra.mxu0 %v7040
    %9647 = vmatprep.subr.bf16.mxu0 %v7049
    %9648 = vmatpush1.bf16.msra.mxu0 %v7048
    %9649 = vmatprep.subr.bf16.mxu0 %v7057
    %9650 = vmatpush1.bf16.msra.mxu0 %v7056
    %9651 = vmatprep.subr.bf16.mxu0 %v7065
    %9652 = vmatpush1.bf16.msra.mxu0 %v7064
    %9653 = vmatprep.subr.bf16.mxu0 %v7073
    %9654 = vmatpush1.bf16.msra.mxu0 %v7072
    %9655 = vmatprep.subr.bf16.mxu0 %v7081
    %9656 = vmatpush1.bf16.msra.mxu0 %v7080
    %9657 = vmatprep.subr.bf16.mxu0 %v7089
    %9658 = vmatpush1.bf16.msra.mxu0 %v7088
    %9659 = vmatprep.subr.bf16.mxu0 %v7097
    %9660 = vmatpush1.bf16.msra.mxu0 %v7096
    %9661 = vmatprep.subr.bf16.mxu0 %v7105
    %9662 = vmatpush1.bf16.msra.mxu0 %v7104
    %9663 = vmatprep.mubr.bf16.mxu0 %v145
    %9664 = vmatmul.mubr.bf16.gmra.mrb[0].mxu0 %v144
    %v9665 = vpop.f32.mrb[0].mxu0
    %v9666 = vadd.f32 %v9623, %v9665
    %v9667 = vpop.f32.mrb[0].mxu0
    %v9668 = vadd.f32 %v9625, %v9667
    %v9669 = vpop.f32.mrb[0].mxu0
    %v9670 = vadd.f32 %v9627, %v9669
    %v9671 = vpop.f32.mrb[0].mxu0
    %v9672 = vadd.f32 %v9629, %v9671
    %9673 = vdwg.mxu0
    %9674 = vmatprep.subr.bf16.mxu0 %v7113
    %9675 = vmatpush1.bf16.msra.mxu0 %v7112
    %9676 = vmatprep.subr.bf16.mxu0 %v7121
    %9677 = vmatpush1.bf16.msra.mxu0 %v7120
    %9678 = vmatprep.subr.bf16.mxu0 %v7129
    %9679 = vmatpush1.bf16.msra.mxu0 %v7128
    %9680 = vmatprep.subr.bf16.mxu0 %v7137
    %9681 = vmatpush1.bf16.msra.mxu0 %v7136
    %9682 = vmatprep.subr.bf16.mxu0 %v7145
    %9683 = vmatpush1.bf16.msra.mxu0 %v7144
    %9684 = vmatprep.subr.bf16.mxu0 %v7153
    %9685 = vmatpush1.bf16.msra.mxu0 %v7152
    %9686 = vmatprep.subr.bf16.mxu0 %v7161
    %9687 = vmatpush1.bf16.msra.mxu0 %v7160
    %9688 = vmatprep.subr.bf16.mxu0 %v7169
    %9689 = vmatpush1.bf16.msra.mxu0 %v7168
    %9690 = vmatprep.subr.bf16.mxu0 %v7177
    %9691 = vmatpush1.bf16.msra.mxu0 %v7176
    %9692 = vmatprep.subr.bf16.mxu0 %v7185
    %9693 = vmatpush1.bf16.msra.mxu0 %v7184
    %9694 = vmatprep.subr.bf16.mxu0 %v7193
    %9695 = vmatpush1.bf16.msra.mxu0 %v7192
    %9696 = vmatprep.subr.bf16.mxu0 %v7201
    %9697 = vmatpush1.bf16.msra.mxu0 %v7200
    %9698 = vmatprep.subr.bf16.mxu0 %v7209
    %9699 = vmatpush1.bf16.msra.mxu0 %v7208
    %9700 = vmatprep.subr.bf16.mxu0 %v7217
    %9701 = vmatpush1.bf16.msra.mxu0 %v7216
    %9702 = vmatprep.subr.bf16.mxu0 %v7225
    %9703 = vmatpush1.bf16.msra.mxu0 %v7224
    %9704 = vmatprep.subr.bf16.mxu0 %v7233
    %9705 = vmatpush1.bf16.msra.mxu0 %v7232
    %9706 = vmatprep.mubr.bf16.mxu0 %v147
    %9707 = vmatmul.mubr.bf16.gmra.mrb[0].mxu0 %v146
    %v9708 = vpop.f32.mrb[0].mxu0
    %v9709 = vadd.f32 %v9666, %v9708
    %v9710 = vpop.f32.mrb[0].mxu0
    %v9711 = vadd.f32 %v9668, %v9710
    %v9712 = vpop.f32.mrb[0].mxu0
    %v9713 = vadd.f32 %v9670, %v9712
    %v9714 = vpop.f32.mrb[0].mxu0
    %v9715 = vadd.f32 %v9672, %v9714
    %9716 = vdwg.mxu0
    %9717 = vmatprep.subr.bf16.mxu0 %v7241
    %9718 = vmatpush1.bf16.msra.mxu0 %v7240
    %9719 = vmatprep.subr.bf16.mxu0 %v7249
    %9720 = vmatpush1.bf16.msra.mxu0 %v7248
    %9721 = vmatprep.subr.bf16.mxu0 %v7257
    %9722 = vmatpush1.bf16.msra.mxu0 %v7256
    %9723 = vmatprep.subr.bf16.mxu0 %v7265
    %9724 = vmatpush1.bf16.msra.mxu0 %v7264
    %9725 = vmatprep.subr.bf16.mxu0 %v7273
    %9726 = vmatpush1.bf16.msra.mxu0 %v7272
    %9727 = vmatprep.subr.bf16.mxu0 %v7281
    %9728 = vmatpush1.bf16.msra.mxu0 %v7280
    %9729 = vmatprep.subr.bf16.mxu0 %v7289
    %9730 = vmatpush1.bf16.msra.mxu0 %v7288
    %9731 = vmatprep.subr.bf16.mxu0 %v7297
    %9732 = vmatpush1.bf16.msra.mxu0 %v7296
    %9733 = vmatprep.subr.bf16.mxu0 %v7305
    %9734 = vmatpush1.bf16.msra.mxu0 %v7304
    %9735 = vmatprep.subr.bf16.mxu0 %v7313
    %9736 = vmatpush1.bf16.msra.mxu0 %v7312
    %9737 = vmatprep.subr.bf16.mxu0 %v7321
    %9738 = vmatpush1.bf16.msra.mxu0 %v7320
    %9739 = vmatprep.subr.bf16.mxu0 %v7329
    %9740 = vmatpush1.bf16.msra.mxu0 %v7328
    %9741 = vmatprep.subr.bf16.mxu0 %v7337
    %9742 = vmatpush1.bf16.msra.mxu0 %v7336
    %9743 = vmatprep.subr.bf16.mxu0 %v7345
    %9744 = vmatpush1.bf16.msra.mxu0 %v7344
    %9745 = vmatprep.subr.bf16.mxu0 %v7353
    %9746 = vmatpush1.bf16.msra.mxu0 %v7352
    %9747 = vmatprep.subr.bf16.mxu0 %v7361
    %9748 = vmatpush1.bf16.msra.mxu0 %v7360
    %9749 = vmatprep.mubr.bf16.mxu0 %v149
    %9750 = vmatmul.mubr.bf16.gmra.mrb[0].mxu0 %v148
    %v9751 = vpop.f32.mrb[0].mxu0
    %v9752 = vadd.f32 %v9709, %v9751
    %v9753 = vpop.f32.mrb[0].mxu0
    %v9754 = vadd.f32 %v9711, %v9753
    %v9755 = vpop.f32.mrb[0].mxu0
    %v9756 = vadd.f32 %v9713, %v9755
    %v9757 = vpop.f32.mrb[0].mxu0
    %v9758 = vadd.f32 %v9715, %v9757
    %9759 = vdwg.mxu0
    %9760 = vmatprep.subr.bf16.mxu0 %v7369
    %9761 = vmatpush1.bf16.msra.mxu0 %v7368
    %9762 = vmatprep.subr.bf16.mxu0 %v7377
    %9763 = vmatpush1.bf16.msra.mxu0 %v7376
    %9764 = vmatprep.subr.bf16.mxu0 %v7385
    %9765 = vmatpush1.bf16.msra.mxu0 %v7384
    %9766 = vmatprep.subr.bf16.mxu0 %v7393
    %9767 = vmatpush1.bf16.msra.mxu0 %v7392
    %9768 = vmatprep.subr.bf16.mxu0 %v7401
    %9769 = vmatpush1.bf16.msra.mxu0 %v7400
    %9770 = vmatprep.subr.bf16.mxu0 %v7409
    %9771 = vmatpush1.bf16.msra.mxu0 %v7408
    %9772 = vmatprep.subr.bf16.mxu0 %v7417
    %9773 = vmatpush1.bf16.msra.mxu0 %v7416
    %9774 = vmatprep.subr.bf16.mxu0 %v7425
    %9775 = vmatpush1.bf16.msra.mxu0 %v7424
    %9776 = vmatprep.subr.bf16.mxu0 %v7433
    %9777 = vmatpush1.bf16.msra.mxu0 %v7432
    %9778 = vmatprep.subr.bf16.mxu0 %v7441
    %9779 = vmatpush1.bf16.msra.mxu0 %v7440
    %9780 = vmatprep.subr.bf16.mxu0 %v7449
    %9781 = vmatpush1.bf16.msra.mxu0 %v7448
    %9782 = vmatprep.subr.bf16.mxu0 %v7457
    %9783 = vmatpush1.bf16.msra.mxu0 %v7456
    %9784 = vmatprep.subr.bf16.mxu0 %v7465
    %9785 = vmatpush1.bf16.msra.mxu0 %v7464
    %9786 = vmatprep.subr.bf16.mxu0 %v7473
    %9787 = vmatpush1.bf16.msra.mxu0 %v7472
    %9788 = vmatprep.subr.bf16.mxu0 %v7481
    %9789 = vmatpush1.bf16.msra.mxu0 %v7480
    %9790 = vmatprep.subr.bf16.mxu0 %v7489
    %9791 = vmatpush1.bf16.msra.mxu0 %v7488
    %9792 = vmatprep.mubr.bf16.mxu0 %v151
    %9793 = vmatmul.mubr.bf16.gmra.mrb[0].mxu0 %v150
    %v9794 = vpop.f32.mrb[0].mxu0
    %v9795 = vadd.f32 %v9752, %v9794
    %v9796 = vpop.f32.mrb[0].mxu0
    %v9797 = vadd.f32 %v9754, %v9796
    %v9798 = vpop.f32.mrb[0].mxu0
    %v9799 = vadd.f32 %v9756, %v9798
    %v9800 = vpop.f32.mrb[0].mxu0
    %v9801 = vadd.f32 %v9758, %v9800
    %9802 = vdwg.mxu0
    %9803 = vmatprep.subr.bf16.mxu0 %v7497
    %9804 = vmatpush1.bf16.msra.mxu0 %v7496
    %9805 = vmatprep.subr.bf16.mxu0 %v7505
    %9806 = vmatpush1.bf16.msra.mxu0 %v7504
    %9807 = vmatprep.subr.bf16.mxu0 %v7513
    %9808 = vmatpush1.bf16.msra.mxu0 %v7512
    %9809 = vmatprep.subr.bf16.mxu0 %v7521
    %9810 = vmatpush1.bf16.msra.mxu0 %v7520
    %9811 = vmatprep.subr.bf16.mxu0 %v7529
    %9812 = vmatpush1.bf16.msra.mxu0 %v7528
    %9813 = vmatprep.subr.bf16.mxu0 %v7537
    %9814 = vmatpush1.bf16.msra.mxu0 %v7536
    %9815 = vmatprep.subr.bf16.mxu0 %v7545
    %9816 = vmatpush1.bf16.msra.mxu0 %v7544
    %9817 = vmatprep.subr.bf16.mxu0 %v7553
    %9818 = vmatpush1.bf16.msra.mxu0 %v7552
    %9819 = vmatprep.subr.bf16.mxu0 %v7561
    %9820 = vmatpush1.bf16.msra.mxu0 %v7560
    %9821 = vmatprep.subr.bf16.mxu0 %v7569
    %9822 = vmatpush1.bf16.msra.mxu0 %v7568
    %9823 = vmatprep.subr.bf16.mxu0 %v7577
    %9824 = vmatpush1.bf16.msra.mxu0 %v7576
    %9825 = vmatprep.subr.bf16.mxu0 %v7585
    %9826 = vmatpush1.bf16.msra.mxu0 %v7584
    %9827 = vmatprep.subr.bf16.mxu0 %v7593
    %9828 = vmatpush1.bf16.msra.mxu0 %v7592
    %9829 = vmatprep.subr.bf16.mxu0 %v7601
    %9830 = vmatpush1.bf16.msra.mxu0 %v7600
    %9831 = vmatprep.subr.bf16.mxu0 %v7609
    %9832 = vmatpush1.bf16.msra.mxu0 %v7608
    %9833 = vmatprep.subr.bf16.mxu0 %v7617
    %9834 = vmatpush1.bf16.msra.mxu0 %v7616
    %9835 = vmatprep.mubr.bf16.mxu0 %v153
    %9836 = vmatmul.mubr.bf16.gmra.mrb[0].mxu0 %v152
    %v9837 = vpop.f32.mrb[0].mxu0
    %v9838 = vadd.f32 %v9795, %v9837
    %v9839 = vpop.f32.mrb[0].mxu0
    %v9840 = vadd.f32 %v9797, %v9839
    %v9841 = vpop.f32.mrb[0].mxu0
    %v9842 = vadd.f32 %v9799, %v9841
    %v9843 = vpop.f32.mrb[0].mxu0
    %v9844 = vadd.f32 %v9801, %v9843
    %9845 = vdwg.mxu0
    %9846 = vmatprep.subr.bf16.mxu0 %v7625
    %9847 = vmatpush1.bf16.msra.mxu0 %v7624
    %9848 = vmatprep.subr.bf16.mxu0 %v7633
    %9849 = vmatpush1.bf16.msra.mxu0 %v7632
    %9850 = vmatprep.subr.bf16.mxu0 %v7641
    %9851 = vmatpush1.bf16.msra.mxu0 %v7640
    %9852 = vmatprep.subr.bf16.mxu0 %v7649
    %9853 = vmatpush1.bf16.msra.mxu0 %v7648
    %9854 = vmatprep.subr.bf16.mxu0 %v7657
    %9855 = vmatpush1.bf16.msra.mxu0 %v7656
    %9856 = vmatprep.subr.bf16.mxu0 %v7665
    %9857 = vmatpush1.bf16.msra.mxu0 %v7664
    %9858 = vmatprep.subr.bf16.mxu0 %v7673
    %9859 = vmatpush1.bf16.msra.mxu0 %v7672
    %9860 = vmatprep.subr.bf16.mxu0 %v7681
    %9861 = vmatpush1.bf16.msra.mxu0 %v7680
    %9862 = vmatprep.subr.bf16.mxu0 %v7689
    %9863 = vmatpush1.bf16.msra.mxu0 %v7688
    %9864 = vmatprep.subr.bf16.mxu0 %v7697
    %9865 = vmatpush1.bf16.msra.mxu0 %v7696
    %9866 = vmatprep.subr.bf16.mxu0 %v7705
    %9867 = vmatpush1.bf16.msra.mxu0 %v7704
    %9868 = vmatprep.subr.bf16.mxu0 %v7713
    %9869 = vmatpush1.bf16.msra.mxu0 %v7712
    %9870 = vmatprep.subr.bf16.mxu0 %v7721
    %9871 = vmatpush1.bf16.msra.mxu0 %v7720
    %9872 = vmatprep.subr.bf16.mxu0 %v7729
    %9873 = vmatpush1.bf16.msra.mxu0 %v7728
    %9874 = vmatprep.subr.bf16.mxu0 %v7737
    %9875 = vmatpush1.bf16.msra.mxu0 %v7736
    %9876 = vmatprep.subr.bf16.mxu0 %v7745
    %9877 = vmatpush1.bf16.msra.mxu0 %v7744
    %9878 = vmatprep.mubr.bf16.mxu0 %v155
    %9879 = vmatmul.mubr.bf16.gmra.mrb[0].mxu0 %v154
    %v9880 = vpop.f32.mrb[0].mxu0
    %v9881 = vadd.f32 %v9838, %v9880
    %v9882 = vpop.f32.mrb[0].mxu0
    %v9883 = vadd.f32 %v9840, %v9882
    %v9884 = vpop.f32.mrb[0].mxu0
    %v9885 = vadd.f32 %v9842, %v9884
    %v9886 = vpop.f32.mrb[0].mxu0
    %v9887 = vadd.f32 %v9844, %v9886
    %9888 = vdwg.mxu0
    %9889 = vmatprep.subr.bf16.mxu0 %v7753
    %9890 = vmatpush1.bf16.msra.mxu0 %v7752
    %9891 = vmatprep.subr.bf16.mxu0 %v7761
    %9892 = vmatpush1.bf16.msra.mxu0 %v7760
    %9893 = vmatprep.subr.bf16.mxu0 %v7769
    %9894 = vmatpush1.bf16.msra.mxu0 %v7768
    %9895 = vmatprep.subr.bf16.mxu0 %v7777
    %9896 = vmatpush1.bf16.msra.mxu0 %v7776
    %9897 = vmatprep.subr.bf16.mxu0 %v7785
    %9898 = vmatpush1.bf16.msra.mxu0 %v7784
    %9899 = vmatprep.subr.bf16.mxu0 %v7793
    %9900 = vmatpush1.bf16.msra.mxu0 %v7792
    %9901 = vmatprep.subr.bf16.mxu0 %v7801
    %9902 = vmatpush1.bf16.msra.mxu0 %v7800
    %9903 = vmatprep.subr.bf16.mxu0 %v7809
    %9904 = vmatpush1.bf16.msra.mxu0 %v7808
    %9905 = vmatprep.subr.bf16.mxu0 %v7817
    %9906 = vmatpush1.bf16.msra.mxu0 %v7816
    %9907 = vmatprep.subr.bf16.mxu0 %v7825
    %9908 = vmatpush1.bf16.msra.mxu0 %v7824
    %9909 = vmatprep.subr.bf16.mxu0 %v7833
    %9910 = vmatpush1.bf16.msra.mxu0 %v7832
    %9911 = vmatprep.subr.bf16.mxu0 %v7841
    %9912 = vmatpush1.bf16.msra.mxu0 %v7840
    %9913 = vmatprep.subr.bf16.mxu0 %v7849
    %9914 = vmatpush1.bf16.msra.mxu0 %v7848
    %9915 = vmatprep.subr.bf16.mxu0 %v7857
    %9916 = vmatpush1.bf16.msra.mxu0 %v7856
    %9917 = vmatprep.subr.bf16.mxu0 %v7865
    %9918 = vmatpush1.bf16.msra.mxu0 %v7864
    %9919 = vmatprep.subr.bf16.mxu0 %v7873
    %9920 = vmatpush1.bf16.msra.mxu0 %v7872
    %9921 = vmatprep.mubr.bf16.mxu0 %v157
    %9922 = vmatmul.mubr.bf16.gmra.mrb[0].mxu0 %v156
    %v9923 = vpop.f32.mrb[0].mxu0
    %v9924 = vadd.f32 %v9881, %v9923
    %v9925 = vpop.f32.mrb[0].mxu0
    %v9926 = vadd.f32 %v9883, %v9925
    %v9927 = vpop.f32.mrb[0].mxu0
    %v9928 = vadd.f32 %v9885, %v9927
    %v9929 = vpop.f32.mrb[0].mxu0
    %v9930 = vadd.f32 %v9887, %v9929
    %9931 = vdwg.mxu0
    %9932 = vmatprep.subr.bf16.mxu0 %v6347
    %9933 = vmatpush1.bf16.msra.mxu0 %v6346
    %9934 = vmatprep.subr.bf16.mxu0 %v6355
    %9935 = vmatpush1.bf16.msra.mxu0 %v6354
    %9936 = vmatprep.subr.bf16.mxu0 %v6363
    %9937 = vmatpush1.bf16.msra.mxu0 %v6362
    %9938 = vmatprep.subr.bf16.mxu0 %v6371
    %9939 = vmatpush1.bf16.msra.mxu0 %v6370
    %9940 = vmatprep.subr.bf16.mxu0 %v6379
    %9941 = vmatpush1.bf16.msra.mxu0 %v6378
    %9942 = vmatprep.subr.bf16.mxu0 %v6387
    %9943 = vmatpush1.bf16.msra.mxu0 %v6386
    %9944 = vmatprep.subr.bf16.mxu0 %v6395
    %9945 = vmatpush1.bf16.msra.mxu0 %v6394
    %9946 = vmatprep.subr.bf16.mxu0 %v6403
    %9947 = vmatpush1.bf16.msra.mxu0 %v6402
    %9948 = vmatprep.subr.bf16.mxu0 %v6411
    %9949 = vmatpush1.bf16.msra.mxu0 %v6410
    %9950 = vmatprep.subr.bf16.mxu0 %v6419
    %9951 = vmatpush1.bf16.msra.mxu0 %v6418
    %9952 = vmatprep.subr.bf16.mxu0 %v6427
    %9953 = vmatpush1.bf16.msra.mxu0 %v6426
    %9954 = vmatprep.subr.bf16.mxu0 %v6435
    %9955 = vmatpush1.bf16.msra.mxu0 %v6434
    %9956 = vmatprep.subr.bf16.mxu0 %v6443
    %9957 = vmatpush1.bf16.msra.mxu0 %v6442
    %9958 = vmatprep.subr.bf16.mxu0 %v6451
    %9959 = vmatpush1.bf16.msra.mxu0 %v6450
    %9960 = vmatprep.subr.bf16.mxu0 %v6459
    %9961 = vmatpush1.bf16.msra.mxu0 %v6458
    %9962 = vmatprep.subr.bf16.mxu0 %v6467
    %9963 = vmatpush1.bf16.msra.mxu0 %v6466
    %9964 = vmatprep.mubr.bf16.mxu0 %v135
    %9965 = vmatmul.mubr.bf16.gmra.mrb[0].mxu0 %v134
    %v9966 = vpop.f32.mrb[0].mxu0
    %v9967 = vadd.f32 %v1707, %v9966
    %v9968 = vpop.f32.mrb[0].mxu0
    %v9969 = vadd.f32 %v1711, %v9968
    %v9970 = vpop.f32.mrb[0].mxu0
    %v9971 = vadd.f32 %v1707, %v9970
    %v9972 = vpop.f32.mrb[0].mxu0
    %v9973 = vadd.f32 %v1711, %v9972
    %9974 = vdwg.mxu0
    %9975 = vmatprep.subr.bf16.mxu0 %v6475
    %9976 = vmatpush1.bf16.msra.mxu0 %v6474
    %9977 = vmatprep.subr.bf16.mxu0 %v6483
    %9978 = vmatpush1.bf16.msra.mxu0 %v6482
    %9979 = vmatprep.subr.bf16.mxu0 %v6491
    %9980 = vmatpush1.bf16.msra.mxu0 %v6490
    %9981 = vmatprep.subr.bf16.mxu0 %v6499
    %9982 = vmatpush1.bf16.msra.mxu0 %v6498
    %9983 = vmatprep.subr.bf16.mxu0 %v6507
    %9984 = vmatpush1.bf16.msra.mxu0 %v6506
    %9985 = vmatprep.subr.bf16.mxu0 %v6515
    %9986 = vmatpush1.bf16.msra.mxu0 %v6514
    %9987 = vmatprep.subr.bf16.mxu0 %v6523
    %9988 = vmatpush1.bf16.msra.mxu0 %v6522
    %9989 = vmatprep.subr.bf16.mxu0 %v6531
    %9990 = vmatpush1.bf16.msra.mxu0 %v6530
    %9991 = vmatprep.subr.bf16.mxu0 %v6539
    %9992 = vmatpush1.bf16.msra.mxu0 %v6538
    %9993 = vmatprep.subr.bf16.mxu0 %v6547
    %9994 = vmatpush1.bf16.msra.mxu0 %v6546
    %9995 = vmatprep.subr.bf16.mxu0 %v6555
    %9996 = vmatpush1.bf16.msra.mxu0 %v6554
    %9997 = vmatprep.subr.bf16.mxu0 %v6563
    %9998 = vmatpush1.bf16.msra.mxu0 %v6562
    %9999 = vmatprep.subr.bf16.mxu0 %v6571
    %10000 = vmatpush1.bf16.msra.mxu0 %v6570
    %10001 = vmatprep.subr.bf16.mxu0 %v6579
    %10002 = vmatpush1.bf16.msra.mxu0 %v6578
    %10003 = vmatprep.subr.bf16.mxu0 %v6587
    %10004 = vmatpush1.bf16.msra.mxu0 %v6586
    %10005 = vmatprep.subr.bf16.mxu0 %v6595
    %10006 = vmatpush1.bf16.msra.mxu0 %v6594
    %10007 = vmatprep.mubr.bf16.mxu0 %v137
    %10008 = vmatmul.mubr.bf16.gmra.mrb[0].mxu0 %v136
    %v10009 = vpop.f32.mrb[0].mxu0
    %v10010 = vadd.f32 %v9967, %v10009
    %v10011 = vpop.f32.mrb[0].mxu0
    %v10012 = vadd.f32 %v9969, %v10011
    %v10013 = vpop.f32.mrb[0].mxu0
    %v10014 = vadd.f32 %v9971, %v10013
    %v10015 = vpop.f32.mrb[0].mxu0
    %v10016 = vadd.f32 %v9973, %v10015
    %10017 = vdwg.mxu0
    %10018 = vmatprep.subr.bf16.mxu0 %v6603
    %10019 = vmatpush1.bf16.msra.mxu0 %v6602
    %10020 = vmatprep.subr.bf16.mxu0 %v6611
    %10021 = vmatpush1.bf16.msra.mxu0 %v6610
    %10022 = vmatprep.subr.bf16.mxu0 %v6619
    %10023 = vmatpush1.bf16.msra.mxu0 %v6618
    %10024 = vmatprep.subr.bf16.mxu0 %v6627
    %10025 = vmatpush1.bf16.msra.mxu0 %v6626
    %10026 = vmatprep.subr.bf16.mxu0 %v6635
    %10027 = vmatpush1.bf16.msra.mxu0 %v6634
    %10028 = vmatprep.subr.bf16.mxu0 %v6643
    %10029 = vmatpush1.bf16.msra.mxu0 %v6642
    %10030 = vmatprep.subr.bf16.mxu0 %v6651
    %10031 = vmatpush1.bf16.msra.mxu0 %v6650
    %10032 = vmatprep.subr.bf16.mxu0 %v6659
    %10033 = vmatpush1.bf16.msra.mxu0 %v6658
    %10034 = vmatprep.subr.bf16.mxu0 %v6667
    %10035 = vmatpush1.bf16.msra.mxu0 %v6666
    %10036 = vmatprep.subr.bf16.mxu0 %v6675
    %10037 = vmatpush1.bf16.msra.mxu0 %v6674
    %10038 = vmatprep.subr.bf16.mxu0 %v6683
    %10039 = vmatpush1.bf16.msra.mxu0 %v6682
    %10040 = vmatprep.subr.bf16.mxu0 %v6691
    %10041 = vmatpush1.bf16.msra.mxu0 %v6690
    %10042 = vmatprep.subr.bf16.mxu0 %v6699
    %10043 = vmatpush1.bf16.msra.mxu0 %v6698
    %10044 = vmatprep.subr.bf16.mxu0 %v6707
    %10045 = vmatpush1.bf16.msra.mxu0 %v6706
    %10046 = vmatprep.subr.bf16.mxu0 %v6715
    %10047 = vmatpush1.bf16.msra.mxu0 %v6714
    %10048 = vmatprep.subr.bf16.mxu0 %v6723
    %10049 = vmatpush1.bf16.msra.mxu0 %v6722
    %10050 = vmatprep.mubr.bf16.mxu0 %v139
    %10051 = vmatmul.mubr.bf16.gmra.mrb[0].mxu0 %v138
    %v10052 = vpop.f32.mrb[0].mxu0
    %v10053 = vadd.f32 %v10010, %v10052
    %v10054 = vpop.f32.mrb[0].mxu0
    %v10055 = vadd.f32 %v10012, %v10054
    %v10056 = vpop.f32.mrb[0].mxu0
    %v10057 = vadd.f32 %v10014, %v10056
    %v10058 = vpop.f32.mrb[0].mxu0
    %v10059 = vadd.f32 %v10016, %v10058
    %10060 = vdwg.mxu0
    %10061 = vmatprep.subr.bf16.mxu0 %v6731
    %10062 = vmatpush1.bf16.msra.mxu0 %v6730
    %10063 = vmatprep.subr.bf16.mxu0 %v6739
    %10064 = vmatpush1.bf16.msra.mxu0 %v6738
    %10065 = vmatprep.subr.bf16.mxu0 %v6747
    %10066 = vmatpush1.bf16.msra.mxu0 %v6746
    %10067 = vmatprep.subr.bf16.mxu0 %v6755
    %10068 = vmatpush1.bf16.msra.mxu0 %v6754
    %10069 = vmatprep.subr.bf16.mxu0 %v6763
    %10070 = vmatpush1.bf16.msra.mxu0 %v6762
    %10071 = vmatprep.subr.bf16.mxu0 %v6771
    %10072 = vmatpush1.bf16.msra.mxu0 %v6770
    %10073 = vmatprep.subr.bf16.mxu0 %v6779
    %10074 = vmatpush1.bf16.msra.mxu0 %v6778
    %10075 = vmatprep.subr.bf16.mxu0 %v6787
    %10076 = vmatpush1.bf16.msra.mxu0 %v6786
    %10077 = vmatprep.subr.bf16.mxu0 %v6795
    %10078 = vmatpush1.bf16.msra.mxu0 %v6794
    %10079 = vmatprep.subr.bf16.mxu0 %v6803
    %10080 = vmatpush1.bf16.msra.mxu0 %v6802
    %10081 = vmatprep.subr.bf16.mxu0 %v6811
    %10082 = vmatpush1.bf16.msra.mxu0 %v6810
    %10083 = vmatprep.subr.bf16.mxu0 %v6819
    %10084 = vmatpush1.bf16.msra.mxu0 %v6818
    %10085 = vmatprep.subr.bf16.mxu0 %v6827
    %10086 = vmatpush1.bf16.msra.mxu0 %v6826
    %10087 = vmatprep.subr.bf16.mxu0 %v6835
    %10088 = vmatpush1.bf16.msra.mxu0 %v6834
    %10089 = vmatprep.subr.bf16.mxu0 %v6843
    %10090 = vmatpush1.bf16.msra.mxu0 %v6842
    %10091 = vmatprep.subr.bf16.mxu0 %v6851
    %10092 = vmatpush1.bf16.msra.mxu0 %v6850
    %10093 = vmatprep.mubr.bf16.mxu0 %v141
    %10094 = vmatmul.mubr.bf16.gmra.mrb[0].mxu0 %v140
    %v10095 = vpop.f32.mrb[0].mxu0
    %v10096 = vadd.f32 %v10053, %v10095
    %v10097 = vpop.f32.mrb[0].mxu0
    %v10098 = vadd.f32 %v10055, %v10097
    %v10099 = vpop.f32.mrb[0].mxu0
    %v10100 = vadd.f32 %v10057, %v10099
    %v10101 = vpop.f32.mrb[0].mxu0
    %v10102 = vadd.f32 %v10059, %v10101
    %10103 = vdwg.mxu0
    %10104 = vmatprep.subr.bf16.mxu0 %v6859
    %10105 = vmatpush1.bf16.msra.mxu0 %v6858
    %10106 = vmatprep.subr.bf16.mxu0 %v6867
    %10107 = vmatpush1.bf16.msra.mxu0 %v6866
    %10108 = vmatprep.subr.bf16.mxu0 %v6875
    %10109 = vmatpush1.bf16.msra.mxu0 %v6874
    %10110 = vmatprep.subr.bf16.mxu0 %v6883
    %10111 = vmatpush1.bf16.msra.mxu0 %v6882
    %10112 = vmatprep.subr.bf16.mxu0 %v6891
    %10113 = vmatpush1.bf16.msra.mxu0 %v6890
    %10114 = vmatprep.subr.bf16.mxu0 %v6899
    %10115 = vmatpush1.bf16.msra.mxu0 %v6898
    %10116 = vmatprep.subr.bf16.mxu0 %v6907
    %10117 = vmatpush1.bf16.msra.mxu0 %v6906
    %10118 = vmatprep.subr.bf16.mxu0 %v6915
    %10119 = vmatpush1.bf16.msra.mxu0 %v6914
    %10120 = vmatprep.subr.bf16.mxu0 %v6923
    %10121 = vmatpush1.bf16.msra.mxu0 %v6922
    %10122 = vmatprep.subr.bf16.mxu0 %v6931
    %10123 = vmatpush1.bf16.msra.mxu0 %v6930
    %10124 = vmatprep.subr.bf16.mxu0 %v6939
    %10125 = vmatpush1.bf16.msra.mxu0 %v6938
    %10126 = vmatprep.subr.bf16.mxu0 %v6947
    %10127 = vmatpush1.bf16.msra.mxu0 %v6946
    %10128 = vmatprep.subr.bf16.mxu0 %v6955
    %10129 = vmatpush1.bf16.msra.mxu0 %v6954
    %10130 = vmatprep.subr.bf16.mxu0 %v6963
    %10131 = vmatpush1.bf16.msra.mxu0 %v6962
    %10132 = vmatprep.subr.bf16.mxu0 %v6971
    %10133 = vmatpush1.bf16.msra.mxu0 %v6970
    %10134 = vmatprep.subr.bf16.mxu0 %v6979
    %10135 = vmatpush1.bf16.msra.mxu0 %v6978
    %10136 = vmatprep.mubr.bf16.mxu0 %v143
    %10137 = vmatmul.mubr.bf16.gmra.mrb[0].mxu0 %v142
    %v10138 = vpop.f32.mrb[0].mxu0
    %v10139 = vadd.f32 %v10096, %v10138
    %v10140 = vpop.f32.mrb[0].mxu0
    %v10141 = vadd.f32 %v10098, %v10140
    %v10142 = vpop.f32.mrb[0].mxu0
    %v10143 = vadd.f32 %v10100, %v10142
    %v10144 = vpop.f32.mrb[0].mxu0
    %v10145 = vadd.f32 %v10102, %v10144
    %10146 = vdwg.mxu0
    %10147 = vmatprep.subr.bf16.mxu0 %v6987
    %10148 = vmatpush1.bf16.msra.mxu0 %v6986
    %10149 = vmatprep.subr.bf16.mxu0 %v6995
    %10150 = vmatpush1.bf16.msra.mxu0 %v6994
    %10151 = vmatprep.subr.bf16.mxu0 %v7003
    %10152 = vmatpush1.bf16.msra.mxu0 %v7002
    %10153 = vmatprep.subr.bf16.mxu0 %v7011
    %10154 = vmatpush1.bf16.msra.mxu0 %v7010
    %10155 = vmatprep.subr.bf16.mxu0 %v7019
    %10156 = vmatpush1.bf16.msra.mxu0 %v7018
    %10157 = vmatprep.subr.bf16.mxu0 %v7027
    %10158 = vmatpush1.bf16.msra.mxu0 %v7026
    %10159 = vmatprep.subr.bf16.mxu0 %v7035
    %10160 = vmatpush1.bf16.msra.mxu0 %v7034
    %10161 = vmatprep.subr.bf16.mxu0 %v7043
    %10162 = vmatpush1.bf16.msra.mxu0 %v7042
    %10163 = vmatprep.subr.bf16.mxu0 %v7051
    %10164 = vmatpush1.bf16.msra.mxu0 %v7050
    %10165 = vmatprep.subr.bf16.mxu0 %v7059
    %10166 = vmatpush1.bf16.msra.mxu0 %v7058
    %10167 = vmatprep.subr.bf16.mxu0 %v7067
    %10168 = vmatpush1.bf16.msra.mxu0 %v7066
    %10169 = vmatprep.subr.bf16.mxu0 %v7075
    %10170 = vmatpush1.bf16.msra.mxu0 %v7074
    %10171 = vmatprep.subr.bf16.mxu0 %v7083
    %10172 = vmatpush1.bf16.msra.mxu0 %v7082
    %10173 = vmatprep.subr.bf16.mxu0 %v7091
    %10174 = vmatpush1.bf16.msra.mxu0 %v7090
    %10175 = vmatprep.subr.bf16.mxu0 %v7099
    %10176 = vmatpush1.bf16.msra.mxu0 %v7098
    %10177 = vmatprep.subr.bf16.mxu0 %v7107
    %10178 = vmatpush1.bf16.msra.mxu0 %v7106
    %10179 = vmatprep.mubr.bf16.mxu0 %v145
    %10180 = vmatmul.mubr.bf16.gmra.mrb[0].mxu0 %v144
    %v10181 = vpop.f32.mrb[0].mxu0
    %v10182 = vadd.f32 %v10139, %v10181
    %v10183 = vpop.f32.mrb[0].mxu0
    %v10184 = vadd.f32 %v10141, %v10183
    %v10185 = vpop.f32.mrb[0].mxu0
    %v10186 = vadd.f32 %v10143, %v10185
    %v10187 = vpop.f32.mrb[0].mxu0
    %v10188 = vadd.f32 %v10145, %v10187
    %10189 = vdwg.mxu0
    %10190 = vmatprep.subr.bf16.mxu0 %v7115
    %10191 = vmatpush1.bf16.msra.mxu0 %v7114
    %10192 = vmatprep.subr.bf16.mxu0 %v7123
    %10193 = vmatpush1.bf16.msra.mxu0 %v7122
    %10194 = vmatprep.subr.bf16.mxu0 %v7131
    %10195 = vmatpush1.bf16.msra.mxu0 %v7130
    %10196 = vmatprep.subr.bf16.mxu0 %v7139
    %10197 = vmatpush1.bf16.msra.mxu0 %v7138
    %10198 = vmatprep.subr.bf16.mxu0 %v7147
    %10199 = vmatpush1.bf16.msra.mxu0 %v7146
    %10200 = vmatprep.subr.bf16.mxu0 %v7155
    %10201 = vmatpush1.bf16.msra.mxu0 %v7154
    %10202 = vmatprep.subr.bf16.mxu0 %v7163
    %10203 = vmatpush1.bf16.msra.mxu0 %v7162
    %10204 = vmatprep.subr.bf16.mxu0 %v7171
    %10205 = vmatpush1.bf16.msra.mxu0 %v7170
    %10206 = vmatprep.subr.bf16.mxu0 %v7179
    %10207 = vmatpush1.bf16.msra.mxu0 %v7178
    %10208 = vmatprep.subr.bf16.mxu0 %v7187
    %10209 = vmatpush1.bf16.msra.mxu0 %v7186
    %10210 = vmatprep.subr.bf16.mxu0 %v7195
    %10211 = vmatpush1.bf16.msra.mxu0 %v7194
    %10212 = vmatprep.subr.bf16.mxu0 %v7203
    %10213 = vmatpush1.bf16.msra.mxu0 %v7202
    %10214 = vmatprep.subr.bf16.mxu0 %v7211
    %10215 = vmatpush1.bf16.msra.mxu0 %v7210
    %10216 = vmatprep.subr.bf16.mxu0 %v7219
    %10217 = vmatpush1.bf16.msra.mxu0 %v7218
    %10218 = vmatprep.subr.bf16.mxu0 %v7227
    %10219 = vmatpush1.bf16.msra.mxu0 %v7226
    %10220 = vmatprep.subr.bf16.mxu0 %v7235
    %10221 = vmatpush1.bf16.msra.mxu0 %v7234
    %10222 = vmatprep.mubr.bf16.mxu0 %v147
    %10223 = vmatmul.mubr.bf16.gmra.mrb[0].mxu0 %v146
    %v10224 = vpop.f32.mrb[0].mxu0
    %v10225 = vadd.f32 %v10182, %v10224
    %v10226 = vpop.f32.mrb[0].mxu0
    %v10227 = vadd.f32 %v10184, %v10226
    %v10228 = vpop.f32.mrb[0].mxu0
    %v10229 = vadd.f32 %v10186, %v10228
    %v10230 = vpop.f32.mrb[0].mxu0
    %v10231 = vadd.f32 %v10188, %v10230
    %10232 = vdwg.mxu0
    %10233 = vmatprep.subr.bf16.mxu0 %v7243
    %10234 = vmatpush1.bf16.msra.mxu0 %v7242
    %10235 = vmatprep.subr.bf16.mxu0 %v7251
    %10236 = vmatpush1.bf16.msra.mxu0 %v7250
    %10237 = vmatprep.subr.bf16.mxu0 %v7259
    %10238 = vmatpush1.bf16.msra.mxu0 %v7258
    %10239 = vmatprep.subr.bf16.mxu0 %v7267
    %10240 = vmatpush1.bf16.msra.mxu0 %v7266
    %10241 = vmatprep.subr.bf16.mxu0 %v7275
    %10242 = vmatpush1.bf16.msra.mxu0 %v7274
    %10243 = vmatprep.subr.bf16.mxu0 %v7283
    %10244 = vmatpush1.bf16.msra.mxu0 %v7282
    %10245 = vmatprep.subr.bf16.mxu0 %v7291
    %10246 = vmatpush1.bf16.msra.mxu0 %v7290
    %10247 = vmatprep.subr.bf16.mxu0 %v7299
    %10248 = vmatpush1.bf16.msra.mxu0 %v7298
    %10249 = vmatprep.subr.bf16.mxu0 %v7307
    %10250 = vmatpush1.bf16.msra.mxu0 %v7306
    %10251 = vmatprep.subr.bf16.mxu0 %v7315
    %10252 = vmatpush1.bf16.msra.mxu0 %v7314
    %10253 = vmatprep.subr.bf16.mxu0 %v7323
    %10254 = vmatpush1.bf16.msra.mxu0 %v7322
    %10255 = vmatprep.subr.bf16.mxu0 %v7331
    %10256 = vmatpush1.bf16.msra.mxu0 %v7330
    %10257 = vmatprep.subr.bf16.mxu0 %v7339
    %10258 = vmatpush1.bf16.msra.mxu0 %v7338
    %10259 = vmatprep.subr.bf16.mxu0 %v7347
    %10260 = vmatpush1.bf16.msra.mxu0 %v7346
    %10261 = vmatprep.subr.bf16.mxu0 %v7355
    %10262 = vmatpush1.bf16.msra.mxu0 %v7354
    %10263 = vmatprep.subr.bf16.mxu0 %v7363
    %10264 = vmatpush1.bf16.msra.mxu0 %v7362
    %10265 = vmatprep.mubr.bf16.mxu0 %v149
    %10266 = vmatmul.mubr.bf16.gmra.mrb[0].mxu0 %v148
    %v10267 = vpop.f32.mrb[0].mxu0
    %v10268 = vadd.f32 %v10225, %v10267
    %v10269 = vpop.f32.mrb[0].mxu0
    %v10270 = vadd.f32 %v10227, %v10269
    %v10271 = vpop.f32.mrb[0].mxu0
    %v10272 = vadd.f32 %v10229, %v10271
    %v10273 = vpop.f32.mrb[0].mxu0
    %v10274 = vadd.f32 %v10231, %v10273
    %10275 = vdwg.mxu0
    %10276 = vmatprep.subr.bf16.mxu0 %v7371
    %10277 = vmatpush1.bf16.msra.mxu0 %v7370
    %10278 = vmatprep.subr.bf16.mxu0 %v7379
    %10279 = vmatpush1.bf16.msra.mxu0 %v7378
    %10280 = vmatprep.subr.bf16.mxu0 %v7387
    %10281 = vmatpush1.bf16.msra.mxu0 %v7386
    %10282 = vmatprep.subr.bf16.mxu0 %v7395
    %10283 = vmatpush1.bf16.msra.mxu0 %v7394
    %10284 = vmatprep.subr.bf16.mxu0 %v7403
    %10285 = vmatpush1.bf16.msra.mxu0 %v7402
    %10286 = vmatprep.subr.bf16.mxu0 %v7411
    %10287 = vmatpush1.bf16.msra.mxu0 %v7410
    %10288 = vmatprep.subr.bf16.mxu0 %v7419
    %10289 = vmatpush1.bf16.msra.mxu0 %v7418
    %10290 = vmatprep.subr.bf16.mxu0 %v7427
    %10291 = vmatpush1.bf16.msra.mxu0 %v7426
    %10292 = vmatprep.subr.bf16.mxu0 %v7435
    %10293 = vmatpush1.bf16.msra.mxu0 %v7434
    %10294 = vmatprep.subr.bf16.mxu0 %v7443
    %10295 = vmatpush1.bf16.msra.mxu0 %v7442
    %10296 = vmatprep.subr.bf16.mxu0 %v7451
    %10297 = vmatpush1.bf16.msra.mxu0 %v7450
    %10298 = vmatprep.subr.bf16.mxu0 %v7459
    %10299 = vmatpush1.bf16.msra.mxu0 %v7458
    %10300 = vmatprep.subr.bf16.mxu0 %v7467
    %10301 = vmatpush1.bf16.msra.mxu0 %v7466
    %10302 = vmatprep.subr.bf16.mxu0 %v7475
    %10303 = vmatpush1.bf16.msra.mxu0 %v7474
    %10304 = vmatprep.subr.bf16.mxu0 %v7483
    %10305 = vmatpush1.bf16.msra.mxu0 %v7482
    %10306 = vmatprep.subr.bf16.mxu0 %v7491
    %10307 = vmatpush1.bf16.msra.mxu0 %v7490
    %10308 = vmatprep.mubr.bf16.mxu0 %v151
    %10309 = vmatmul.mubr.bf16.gmra.mrb[0].mxu0 %v150
    %v10310 = vpop.f32.mrb[0].mxu0
    %v10311 = vadd.f32 %v10268, %v10310
    %v10312 = vpop.f32.mrb[0].mxu0
    %v10313 = vadd.f32 %v10270, %v10312
    %v10314 = vpop.f32.mrb[0].mxu0
    %v10315 = vadd.f32 %v10272, %v10314
    %v10316 = vpop.f32.mrb[0].mxu0
    %v10317 = vadd.f32 %v10274, %v10316
    %10318 = vdwg.mxu0
    %10319 = vmatprep.subr.bf16.mxu0 %v7499
    %10320 = vmatpush1.bf16.msra.mxu0 %v7498
    %10321 = vmatprep.subr.bf16.mxu0 %v7507
    %10322 = vmatpush1.bf16.msra.mxu0 %v7506
    %10323 = vmatprep.subr.bf16.mxu0 %v7515
    %10324 = vmatpush1.bf16.msra.mxu0 %v7514
    %10325 = vmatprep.subr.bf16.mxu0 %v7523
    %10326 = vmatpush1.bf16.msra.mxu0 %v7522
    %10327 = vmatprep.subr.bf16.mxu0 %v7531
    %10328 = vmatpush1.bf16.msra.mxu0 %v7530
    %10329 = vmatprep.subr.bf16.mxu0 %v7539
    %10330 = vmatpush1.bf16.msra.mxu0 %v7538
    %10331 = vmatprep.subr.bf16.mxu0 %v7547
    %10332 = vmatpush1.bf16.msra.mxu0 %v7546
    %10333 = vmatprep.subr.bf16.mxu0 %v7555
    %10334 = vmatpush1.bf16.msra.mxu0 %v7554
    %10335 = vmatprep.subr.bf16.mxu0 %v7563
    %10336 = vmatpush1.bf16.msra.mxu0 %v7562
    %10337 = vmatprep.subr.bf16.mxu0 %v7571
    %10338 = vmatpush1.bf16.msra.mxu0 %v7570
    %10339 = vmatprep.subr.bf16.mxu0 %v7579
    %10340 = vmatpush1.bf16.msra.mxu0 %v7578
    %10341 = vmatprep.subr.bf16.mxu0 %v7587
    %10342 = vmatpush1.bf16.msra.mxu0 %v7586
    %10343 = vmatprep.subr.bf16.mxu0 %v7595
    %10344 = vmatpush1.bf16.msra.mxu0 %v7594
    %10345 = vmatprep.subr.bf16.mxu0 %v7603
    %10346 = vmatpush1.bf16.msra.mxu0 %v7602
    %10347 = vmatprep.subr.bf16.mxu0 %v7611
    %10348 = vmatpush1.bf16.msra.mxu0 %v7610
    %10349 = vmatprep.subr.bf16.mxu0 %v7619
    %10350 = vmatpush1.bf16.msra.mxu0 %v7618
    %10351 = vmatprep.mubr.bf16.mxu0 %v153
    %10352 = vmatmul.mubr.bf16.gmra.mrb[0].mxu0 %v152
    %v10353 = vpop.f32.mrb[0].mxu0
    %v10354 = vadd.f32 %v10311, %v10353
    %v10355 = vpop.f32.mrb[0].mxu0
    %v10356 = vadd.f32 %v10313, %v10355
    %v10357 = vpop.f32.mrb[0].mxu0
    %v10358 = vadd.f32 %v10315, %v10357
    %v10359 = vpop.f32.mrb[0].mxu0
    %v10360 = vadd.f32 %v10317, %v10359
    %10361 = vdwg.mxu0
    %10362 = vmatprep.subr.bf16.mxu0 %v7627
    %10363 = vmatpush1.bf16.msra.mxu0 %v7626
    %10364 = vmatprep.subr.bf16.mxu0 %v7635
    %10365 = vmatpush1.bf16.msra.mxu0 %v7634
    %10366 = vmatprep.subr.bf16.mxu0 %v7643
    %10367 = vmatpush1.bf16.msra.mxu0 %v7642
    %10368 = vmatprep.subr.bf16.mxu0 %v7651
    %10369 = vmatpush1.bf16.msra.mxu0 %v7650
    %10370 = vmatprep.subr.bf16.mxu0 %v7659
    %10371 = vmatpush1.bf16.msra.mxu0 %v7658
    %10372 = vmatprep.subr.bf16.mxu0 %v7667
    %10373 = vmatpush1.bf16.msra.mxu0 %v7666
    %10374 = vmatprep.subr.bf16.mxu0 %v7675
    %10375 = vmatpush1.bf16.msra.mxu0 %v7674
    %10376 = vmatprep.subr.bf16.mxu0 %v7683
    %10377 = vmatpush1.bf16.msra.mxu0 %v7682
    %10378 = vmatprep.subr.bf16.mxu0 %v7691
    %10379 = vmatpush1.bf16.msra.mxu0 %v7690
    %10380 = vmatprep.subr.bf16.mxu0 %v7699
    %10381 = vmatpush1.bf16.msra.mxu0 %v7698
    %10382 = vmatprep.subr.bf16.mxu0 %v7707
    %10383 = vmatpush1.bf16.msra.mxu0 %v7706
    %10384 = vmatprep.subr.bf16.mxu0 %v7715
    %10385 = vmatpush1.bf16.msra.mxu0 %v7714
    %10386 = vmatprep.subr.bf16.mxu0 %v7723
    %10387 = vmatpush1.bf16.msra.mxu0 %v7722
    %10388 = vmatprep.subr.bf16.mxu0 %v7731
    %10389 = vmatpush1.bf16.msra.mxu0 %v7730
    %10390 = vmatprep.subr.bf16.mxu0 %v7739
    %10391 = vmatpush1.bf16.msra.mxu0 %v7738
    %10392 = vmatprep.subr.bf16.mxu0 %v7747
    %10393 = vmatpush1.bf16.msra.mxu0 %v7746
    %10394 = vmatprep.mubr.bf16.mxu0 %v155
    %10395 = vmatmul.mubr.bf16.gmra.mrb[0].mxu0 %v154
    %v10396 = vpop.f32.mrb[0].mxu0
    %v10397 = vadd.f32 %v10354, %v10396
    %v10398 = vpop.f32.mrb[0].mxu0
    %v10399 = vadd.f32 %v10356, %v10398
    %v10400 = vpop.f32.mrb[0].mxu0
    %v10401 = vadd.f32 %v10358, %v10400
    %v10402 = vpop.f32.mrb[0].mxu0
    %v10403 = vadd.f32 %v10360, %v10402
    %10404 = vdwg.mxu0
    %10405 = vmatprep.subr.bf16.mxu0 %v7755
    %10406 = vmatpush1.bf16.msra.mxu0 %v7754
    %10407 = vmatprep.subr.bf16.mxu0 %v7763
    %10408 = vmatpush1.bf16.msra.mxu0 %v7762
    %10409 = vmatprep.subr.bf16.mxu0 %v7771
    %10410 = vmatpush1.bf16.msra.mxu0 %v7770
    %10411 = vmatprep.subr.bf16.mxu0 %v7779
    %10412 = vmatpush1.bf16.msra.mxu0 %v7778
    %10413 = vmatprep.subr.bf16.mxu0 %v7787
    %10414 = vmatpush1.bf16.msra.mxu0 %v7786
    %10415 = vmatprep.subr.bf16.mxu0 %v7795
    %10416 = vmatpush1.bf16.msra.mxu0 %v7794
    %10417 = vmatprep.subr.bf16.mxu0 %v7803
    %10418 = vmatpush1.bf16.msra.mxu0 %v7802
    %10419 = vmatprep.subr.bf16.mxu0 %v7811
    %10420 = vmatpush1.bf16.msra.mxu0 %v7810
    %10421 = vmatprep.subr.bf16.mxu0 %v7819
    %10422 = vmatpush1.bf16.msra.mxu0 %v7818
    %10423 = vmatprep.subr.bf16.mxu0 %v7827
    %10424 = vmatpush1.bf16.msra.mxu0 %v7826
    %10425 = vmatprep.subr.bf16.mxu0 %v7835
    %10426 = vmatpush1.bf16.msra.mxu0 %v7834
    %10427 = vmatprep.subr.bf16.mxu0 %v7843
    %10428 = vmatpush1.bf16.msra.mxu0 %v7842
    %10429 = vmatprep.subr.bf16.mxu0 %v7851
    %10430 = vmatpush1.bf16.msra.mxu0 %v7850
    %10431 = vmatprep.subr.bf16.mxu0 %v7859
    %10432 = vmatpush1.bf16.msra.mxu0 %v7858
    %10433 = vmatprep.subr.bf16.mxu0 %v7867
    %10434 = vmatpush1.bf16.msra.mxu0 %v7866
    %10435 = vmatprep.subr.bf16.mxu0 %v7875
    %10436 = vmatpush1.bf16.msra.mxu0 %v7874
    %10437 = vmatprep.mubr.bf16.mxu0 %v157
    %10438 = vmatmul.mubr.bf16.gmra.mrb[0].mxu0 %v156
    %v10439 = vpop.f32.mrb[0].mxu0
    %v10440 = vadd.f32 %v10397, %v10439
    %v10441 = vpop.f32.mrb[0].mxu0
    %v10442 = vadd.f32 %v10399, %v10441
    %v10443 = vpop.f32.mrb[0].mxu0
    %v10444 = vadd.f32 %v10401, %v10443
    %v10445 = vpop.f32.mrb[0].mxu0
    %v10446 = vadd.f32 %v10403, %v10445
    %10447 = vdwg.mxu0
    %10448 = vmatprep.subr.bf16.mxu0 %v6349
    %10449 = vmatpush1.bf16.msra.mxu0 %v6348
    %10450 = vmatprep.subr.bf16.mxu0 %v6357
    %10451 = vmatpush1.bf16.msra.mxu0 %v6356
    %10452 = vmatprep.subr.bf16.mxu0 %v6365
    %10453 = vmatpush1.bf16.msra.mxu0 %v6364
    %10454 = vmatprep.subr.bf16.mxu0 %v6373
    %10455 = vmatpush1.bf16.msra.mxu0 %v6372
    %10456 = vmatprep.subr.bf16.mxu0 %v6381
    %10457 = vmatpush1.bf16.msra.mxu0 %v6380
    %10458 = vmatprep.subr.bf16.mxu0 %v6389
    %10459 = vmatpush1.bf16.msra.mxu0 %v6388
    %10460 = vmatprep.subr.bf16.mxu0 %v6397
    %10461 = vmatpush1.bf16.msra.mxu0 %v6396
    %10462 = vmatprep.subr.bf16.mxu0 %v6405
    %10463 = vmatpush1.bf16.msra.mxu0 %v6404
    %10464 = vmatprep.subr.bf16.mxu0 %v6413
    %10465 = vmatpush1.bf16.msra.mxu0 %v6412
    %10466 = vmatprep.subr.bf16.mxu0 %v6421
    %10467 = vmatpush1.bf16.msra.mxu0 %v6420
    %10468 = vmatprep.subr.bf16.mxu0 %v6429
    %10469 = vmatpush1.bf16.msra.mxu0 %v6428
    %10470 = vmatprep.subr.bf16.mxu0 %v6437
    %10471 = vmatpush1.bf16.msra.mxu0 %v6436
    %10472 = vmatprep.subr.bf16.mxu0 %v6445
    %10473 = vmatpush1.bf16.msra.mxu0 %v6444
    %10474 = vmatprep.subr.bf16.mxu0 %v6453
    %10475 = vmatpush1.bf16.msra.mxu0 %v6452
    %10476 = vmatprep.subr.bf16.mxu0 %v6461
    %10477 = vmatpush1.bf16.msra.mxu0 %v6460
    %10478 = vmatprep.subr.bf16.mxu0 %v6469
    %10479 = vmatpush1.bf16.msra.mxu0 %v6468
    %10480 = vmatprep.mubr.bf16.mxu0 %v135
    %10481 = vmatmul.mubr.bf16.gmra.mrb[0].mxu0 %v134
    %v10482 = vpop.f32.mrb[0].mxu0
    %v10483 = vadd.f32 %v1715, %v10482
    %v10484 = vpop.f32.mrb[0].mxu0
    %v10485 = vadd.f32 %v1719, %v10484
    %v10486 = vpop.f32.mrb[0].mxu0
    %v10487 = vadd.f32 %v1715, %v10486
    %v10488 = vpop.f32.mrb[0].mxu0
    %v10489 = vadd.f32 %v1719, %v10488
    %10490 = vdwg.mxu0
    %10491 = vmatprep.subr.bf16.mxu0 %v6477
    %10492 = vmatpush1.bf16.msra.mxu0 %v6476
    %10493 = vmatprep.subr.bf16.mxu0 %v6485
    %10494 = vmatpush1.bf16.msra.mxu0 %v6484
    %10495 = vmatprep.subr.bf16.mxu0 %v6493
    %10496 = vmatpush1.bf16.msra.mxu0 %v6492
    %10497 = vmatprep.subr.bf16.mxu0 %v6501
    %10498 = vmatpush1.bf16.msra.mxu0 %v6500
    %10499 = vmatprep.subr.bf16.mxu0 %v6509
    %10500 = vmatpush1.bf16.msra.mxu0 %v6508
    %10501 = vmatprep.subr.bf16.mxu0 %v6517
    %10502 = vmatpush1.bf16.msra.mxu0 %v6516
    %10503 = vmatprep.subr.bf16.mxu0 %v6525
    %10504 = vmatpush1.bf16.msra.mxu0 %v6524
    %10505 = vmatprep.subr.bf16.mxu0 %v6533
    %10506 = vmatpush1.bf16.msra.mxu0 %v6532
    %10507 = vmatprep.subr.bf16.mxu0 %v6541
    %10508 = vmatpush1.bf16.msra.mxu0 %v6540
    %10509 = vmatprep.subr.bf16.mxu0 %v6549
    %10510 = vmatpush1.bf16.msra.mxu0 %v6548
    %10511 = vmatprep.subr.bf16.mxu0 %v6557
    %10512 = vmatpush1.bf16.msra.mxu0 %v6556
    %10513 = vmatprep.subr.bf16.mxu0 %v6565
    %10514 = vmatpush1.bf16.msra.mxu0 %v6564
    %10515 = vmatprep.subr.bf16.mxu0 %v6573
    %10516 = vmatpush1.bf16.msra.mxu0 %v6572
    %10517 = vmatprep.subr.bf16.mxu0 %v6581
    %10518 = vmatpush1.bf16.msra.mxu0 %v6580
    %10519 = vmatprep.subr.bf16.mxu0 %v6589
    %10520 = vmatpush1.bf16.msra.mxu0 %v6588
    %10521 = vmatprep.subr.bf16.mxu0 %v6597
    %10522 = vmatpush1.bf16.msra.mxu0 %v6596
    %10523 = vmatprep.mubr.bf16.mxu0 %v137
    %10524 = vmatmul.mubr.bf16.gmra.mrb[0].mxu0 %v136
    %v10525 = vpop.f32.mrb[0].mxu0
    %v10526 = vadd.f32 %v10483, %v10525
    %v10527 = vpop.f32.mrb[0].mxu0
    %v10528 = vadd.f32 %v10485, %v10527
    %v10529 = vpop.f32.mrb[0].mxu0
    %v10530 = vadd.f32 %v10487, %v10529
    %v10531 = vpop.f32.mrb[0].mxu0
    %v10532 = vadd.f32 %v10489, %v10531
    %10533 = vdwg.mxu0
    %10534 = vmatprep.subr.bf16.mxu0 %v6605
    %10535 = vmatpush1.bf16.msra.mxu0 %v6604
    %10536 = vmatprep.subr.bf16.mxu0 %v6613
    %10537 = vmatpush1.bf16.msra.mxu0 %v6612
    %10538 = vmatprep.subr.bf16.mxu0 %v6621
    %10539 = vmatpush1.bf16.msra.mxu0 %v6620
    %10540 = vmatprep.subr.bf16.mxu0 %v6629
    %10541 = vmatpush1.bf16.msra.mxu0 %v6628
    %10542 = vmatprep.subr.bf16.mxu0 %v6637
    %10543 = vmatpush1.bf16.msra.mxu0 %v6636
    %10544 = vmatprep.subr.bf16.mxu0 %v6645
    %10545 = vmatpush1.bf16.msra.mxu0 %v6644
    %10546 = vmatprep.subr.bf16.mxu0 %v6653
    %10547 = vmatpush1.bf16.msra.mxu0 %v6652
    %10548 = vmatprep.subr.bf16.mxu0 %v6661
    %10549 = vmatpush1.bf16.msra.mxu0 %v6660
    %10550 = vmatprep.subr.bf16.mxu0 %v6669
    %10551 = vmatpush1.bf16.msra.mxu0 %v6668
    %10552 = vmatprep.subr.bf16.mxu0 %v6677
    %10553 = vmatpush1.bf16.msra.mxu0 %v6676
    %10554 = vmatprep.subr.bf16.mxu0 %v6685
    %10555 = vmatpush1.bf16.msra.mxu0 %v6684
    %10556 = vmatprep.subr.bf16.mxu0 %v6693
    %10557 = vmatpush1.bf16.msra.mxu0 %v6692
    %10558 = vmatprep.subr.bf16.mxu0 %v6701
    %10559 = vmatpush1.bf16.msra.mxu0 %v6700
    %10560 = vmatprep.subr.bf16.mxu0 %v6709
    %10561 = vmatpush1.bf16.msra.mxu0 %v6708
    %10562 = vmatprep.subr.bf16.mxu0 %v6717
    %10563 = vmatpush1.bf16.msra.mxu0 %v6716
    %10564 = vmatprep.subr.bf16.mxu0 %v6725
    %10565 = vmatpush1.bf16.msra.mxu0 %v6724
    %10566 = vmatprep.mubr.bf16.mxu0 %v139
    %10567 = vmatmul.mubr.bf16.gmra.mrb[0].mxu0 %v138
    %v10568 = vpop.f32.mrb[0].mxu0
    %v10569 = vadd.f32 %v10526, %v10568
    %v10570 = vpop.f32.mrb[0].mxu0
    %v10571 = vadd.f32 %v10528, %v10570
    %v10572 = vpop.f32.mrb[0].mxu0
    %v10573 = vadd.f32 %v10530, %v10572
    %v10574 = vpop.f32.mrb[0].mxu0
    %v10575 = vadd.f32 %v10532, %v10574
    %10576 = vdwg.mxu0
    %10577 = vmatprep.subr.bf16.mxu0 %v6733
    %10578 = vmatpush1.bf16.msra.mxu0 %v6732
    %10579 = vmatprep.subr.bf16.mxu0 %v6741
    %10580 = vmatpush1.bf16.msra.mxu0 %v6740
    %10581 = vmatprep.subr.bf16.mxu0 %v6749
    %10582 = vmatpush1.bf16.msra.mxu0 %v6748
    %10583 = vmatprep.subr.bf16.mxu0 %v6757
    %10584 = vmatpush1.bf16.msra.mxu0 %v6756
    %10585 = vmatprep.subr.bf16.mxu0 %v6765
    %10586 = vmatpush1.bf16.msra.mxu0 %v6764
    %10587 = vmatprep.subr.bf16.mxu0 %v6773
    %10588 = vmatpush1.bf16.msra.mxu0 %v6772
    %10589 = vmatprep.subr.bf16.mxu0 %v6781
    %10590 = vmatpush1.bf16.msra.mxu0 %v6780
    %10591 = vmatprep.subr.bf16.mxu0 %v6789
    %10592 = vmatpush1.bf16.msra.mxu0 %v6788
    %10593 = vmatprep.subr.bf16.mxu0 %v6797
    %10594 = vmatpush1.bf16.msra.mxu0 %v6796
    %10595 = vmatprep.subr.bf16.mxu0 %v6805
    %10596 = vmatpush1.bf16.msra.mxu0 %v6804
    %10597 = vmatprep.subr.bf16.mxu0 %v6813
    %10598 = vmatpush1.bf16.msra.mxu0 %v6812
    %10599 = vmatprep.subr.bf16.mxu0 %v6821
    %10600 = vmatpush1.bf16.msra.mxu0 %v6820
    %10601 = vmatprep.subr.bf16.mxu0 %v6829
    %10602 = vmatpush1.bf16.msra.mxu0 %v6828
    %10603 = vmatprep.subr.bf16.mxu0 %v6837
    %10604 = vmatpush1.bf16.msra.mxu0 %v6836
    %10605 = vmatprep.subr.bf16.mxu0 %v6845
    %10606 = vmatpush1.bf16.msra.mxu0 %v6844
    %10607 = vmatprep.subr.bf16.mxu0 %v6853
    %10608 = vmatpush1.bf16.msra.mxu0 %v6852
    %10609 = vmatprep.mubr.bf16.mxu0 %v141
    %10610 = vmatmul.mubr.bf16.gmra.mrb[0].mxu0 %v140
    %v10611 = vpop.f32.mrb[0].mxu0
    %v10612 = vadd.f32 %v10569, %v10611
    %v10613 = vpop.f32.mrb[0].mxu0
    %v10614 = vadd.f32 %v10571, %v10613
    %v10615 = vpop.f32.mrb[0].mxu0
    %v10616 = vadd.f32 %v10573, %v10615
    %v10617 = vpop.f32.mrb[0].mxu0
    %v10618 = vadd.f32 %v10575, %v10617
    %10619 = vdwg.mxu0
    %10620 = vmatprep.subr.bf16.mxu0 %v6861
    %10621 = vmatpush1.bf16.msra.mxu0 %v6860
    %10622 = vmatprep.subr.bf16.mxu0 %v6869
    %10623 = vmatpush1.bf16.msra.mxu0 %v6868
    %10624 = vmatprep.subr.bf16.mxu0 %v6877
    %10625 = vmatpush1.bf16.msra.mxu0 %v6876
    %10626 = vmatprep.subr.bf16.mxu0 %v6885
    %10627 = vmatpush1.bf16.msra.mxu0 %v6884
    %10628 = vmatprep.subr.bf16.mxu0 %v6893
    %10629 = vmatpush1.bf16.msra.mxu0 %v6892
    %10630 = vmatprep.subr.bf16.mxu0 %v6901
    %10631 = vmatpush1.bf16.msra.mxu0 %v6900
    %10632 = vmatprep.subr.bf16.mxu0 %v6909
    %10633 = vmatpush1.bf16.msra.mxu0 %v6908
    %10634 = vmatprep.subr.bf16.mxu0 %v6917
    %10635 = vmatpush1.bf16.msra.mxu0 %v6916
    %10636 = vmatprep.subr.bf16.mxu0 %v6925
    %10637 = vmatpush1.bf16.msra.mxu0 %v6924
    %10638 = vmatprep.subr.bf16.mxu0 %v6933
    %10639 = vmatpush1.bf16.msra.mxu0 %v6932
    %10640 = vmatprep.subr.bf16.mxu0 %v6941
    %10641 = vmatpush1.bf16.msra.mxu0 %v6940
    %10642 = vmatprep.subr.bf16.mxu0 %v6949
    %10643 = vmatpush1.bf16.msra.mxu0 %v6948
    %10644 = vmatprep.subr.bf16.mxu0 %v6957
    %10645 = vmatpush1.bf16.msra.mxu0 %v6956
    %10646 = vmatprep.subr.bf16.mxu0 %v6965
    %10647 = vmatpush1.bf16.msra.mxu0 %v6964
    %10648 = vmatprep.subr.bf16.mxu0 %v6973
    %10649 = vmatpush1.bf16.msra.mxu0 %v6972
    %10650 = vmatprep.subr.bf16.mxu0 %v6981
    %10651 = vmatpush1.bf16.msra.mxu0 %v6980
    %10652 = vmatprep.mubr.bf16.mxu0 %v143
    %10653 = vmatmul.mubr.bf16.gmra.mrb[0].mxu0 %v142
    %v10654 = vpop.f32.mrb[0].mxu0
    %v10655 = vadd.f32 %v10612, %v10654
    %v10656 = vpop.f32.mrb[0].mxu0
    %v10657 = vadd.f32 %v10614, %v10656
    %v10658 = vpop.f32.mrb[0].mxu0
    %v10659 = vadd.f32 %v10616, %v10658
    %v10660 = vpop.f32.mrb[0].mxu0
    %v10661 = vadd.f32 %v10618, %v10660
    %10662 = vdwg.mxu0
    %10663 = vmatprep.subr.bf16.mxu0 %v6989
    %10664 = vmatpush1.bf16.msra.mxu0 %v6988
    %10665 = vmatprep.subr.bf16.mxu0 %v6997
    %10666 = vmatpush1.bf16.msra.mxu0 %v6996
    %10667 = vmatprep.subr.bf16.mxu0 %v7005
    %10668 = vmatpush1.bf16.msra.mxu0 %v7004
    %10669 = vmatprep.subr.bf16.mxu0 %v7013
    %10670 = vmatpush1.bf16.msra.mxu0 %v7012
    %10671 = vmatprep.subr.bf16.mxu0 %v7021
    %10672 = vmatpush1.bf16.msra.mxu0 %v7020
    %10673 = vmatprep.subr.bf16.mxu0 %v7029
    %10674 = vmatpush1.bf16.msra.mxu0 %v7028
    %10675 = vmatprep.subr.bf16.mxu0 %v7037
    %10676 = vmatpush1.bf16.msra.mxu0 %v7036
    %10677 = vmatprep.subr.bf16.mxu0 %v7045
    %10678 = vmatpush1.bf16.msra.mxu0 %v7044
    %10679 = vmatprep.subr.bf16.mxu0 %v7053
    %10680 = vmatpush1.bf16.msra.mxu0 %v7052
    %10681 = vmatprep.subr.bf16.mxu0 %v7061
    %10682 = vmatpush1.bf16.msra.mxu0 %v7060
    %10683 = vmatprep.subr.bf16.mxu0 %v7069
    %10684 = vmatpush1.bf16.msra.mxu0 %v7068
    %10685 = vmatprep.subr.bf16.mxu0 %v7077
    %10686 = vmatpush1.bf16.msra.mxu0 %v7076
    %10687 = vmatprep.subr.bf16.mxu0 %v7085
    %10688 = vmatpush1.bf16.msra.mxu0 %v7084
    %10689 = vmatprep.subr.bf16.mxu0 %v7093
    %10690 = vmatpush1.bf16.msra.mxu0 %v7092
    %10691 = vmatprep.subr.bf16.mxu0 %v7101
    %10692 = vmatpush1.bf16.msra.mxu0 %v7100
    %10693 = vmatprep.subr.bf16.mxu0 %v7109
    %10694 = vmatpush1.bf16.msra.mxu0 %v7108
    %10695 = vmatprep.mubr.bf16.mxu0 %v145
    %10696 = vmatmul.mubr.bf16.gmra.mrb[0].mxu0 %v144
    %v10697 = vpop.f32.mrb[0].mxu0
    %v10698 = vadd.f32 %v10655, %v10697
    %v10699 = vpop.f32.mrb[0].mxu0
    %v10700 = vadd.f32 %v10657, %v10699
    %v10701 = vpop.f32.mrb[0].mxu0
    %v10702 = vadd.f32 %v10659, %v10701
    %v10703 = vpop.f32.mrb[0].mxu0
    %v10704 = vadd.f32 %v10661, %v10703
    %10705 = vdwg.mxu0
    %10706 = vmatprep.subr.bf16.mxu0 %v7117
    %10707 = vmatpush1.bf16.msra.mxu0 %v7116
    %10708 = vmatprep.subr.bf16.mxu0 %v7125
    %10709 = vmatpush1.bf16.msra.mxu0 %v7124
    %10710 = vmatprep.subr.bf16.mxu0 %v7133
    %10711 = vmatpush1.bf16.msra.mxu0 %v7132
    %10712 = vmatprep.subr.bf16.mxu0 %v7141
    %10713 = vmatpush1.bf16.msra.mxu0 %v7140
    %10714 = vmatprep.subr.bf16.mxu0 %v7149
    %10715 = vmatpush1.bf16.msra.mxu0 %v7148
    %10716 = vmatprep.subr.bf16.mxu0 %v7157
    %10717 = vmatpush1.bf16.msra.mxu0 %v7156
    %10718 = vmatprep.subr.bf16.mxu0 %v7165
    %10719 = vmatpush1.bf16.msra.mxu0 %v7164
    %10720 = vmatprep.subr.bf16.mxu0 %v7173
    %10721 = vmatpush1.bf16.msra.mxu0 %v7172
    %10722 = vmatprep.subr.bf16.mxu0 %v7181
    %10723 = vmatpush1.bf16.msra.mxu0 %v7180
    %10724 = vmatprep.subr.bf16.mxu0 %v7189
    %10725 = vmatpush1.bf16.msra.mxu0 %v7188
    %10726 = vmatprep.subr.bf16.mxu0 %v7197
    %10727 = vmatpush1.bf16.msra.mxu0 %v7196
    %10728 = vmatprep.subr.bf16.mxu0 %v7205
    %10729 = vmatpush1.bf16.msra.mxu0 %v7204
    %10730 = vmatprep.subr.bf16.mxu0 %v7213
    %10731 = vmatpush1.bf16.msra.mxu0 %v7212
    %10732 = vmatprep.subr.bf16.mxu0 %v7221
    %10733 = vmatpush1.bf16.msra.mxu0 %v7220
    %10734 = vmatprep.subr.bf16.mxu0 %v7229
    %10735 = vmatpush1.bf16.msra.mxu0 %v7228
    %10736 = vmatprep.subr.bf16.mxu0 %v7237
    %10737 = vmatpush1.bf16.msra.mxu0 %v7236
    %10738 = vmatprep.mubr.bf16.mxu0 %v147
    %10739 = vmatmul.mubr.bf16.gmra.mrb[0].mxu0 %v146
    %v10740 = vpop.f32.mrb[0].mxu0
    %v10741 = vadd.f32 %v10698, %v10740
    %v10742 = vpop.f32.mrb[0].mxu0
    %v10743 = vadd.f32 %v10700, %v10742
    %v10744 = vpop.f32.mrb[0].mxu0
    %v10745 = vadd.f32 %v10702, %v10744
    %v10746 = vpop.f32.mrb[0].mxu0
    %v10747 = vadd.f32 %v10704, %v10746
    %10748 = vdwg.mxu0
    %10749 = vmatprep.subr.bf16.mxu0 %v7245
    %10750 = vmatpush1.bf16.msra.mxu0 %v7244
    %10751 = vmatprep.subr.bf16.mxu0 %v7253
    %10752 = vmatpush1.bf16.msra.mxu0 %v7252
    %10753 = vmatprep.subr.bf16.mxu0 %v7261
    %10754 = vmatpush1.bf16.msra.mxu0 %v7260
    %10755 = vmatprep.subr.bf16.mxu0 %v7269
    %10756 = vmatpush1.bf16.msra.mxu0 %v7268
    %10757 = vmatprep.subr.bf16.mxu0 %v7277
    %10758 = vmatpush1.bf16.msra.mxu0 %v7276
    %10759 = vmatprep.subr.bf16.mxu0 %v7285
    %10760 = vmatpush1.bf16.msra.mxu0 %v7284
    %10761 = vmatprep.subr.bf16.mxu0 %v7293
    %10762 = vmatpush1.bf16.msra.mxu0 %v7292
    %10763 = vmatprep.subr.bf16.mxu0 %v7301
    %10764 = vmatpush1.bf16.msra.mxu0 %v7300
    %10765 = vmatprep.subr.bf16.mxu0 %v7309
    %10766 = vmatpush1.bf16.msra.mxu0 %v7308
    %10767 = vmatprep.subr.bf16.mxu0 %v7317
    %10768 = vmatpush1.bf16.msra.mxu0 %v7316
    %10769 = vmatprep.subr.bf16.mxu0 %v7325
    %10770 = vmatpush1.bf16.msra.mxu0 %v7324
    %10771 = vmatprep.subr.bf16.mxu0 %v7333
    %10772 = vmatpush1.bf16.msra.mxu0 %v7332
    %10773 = vmatprep.subr.bf16.mxu0 %v7341
    %10774 = vmatpush1.bf16.msra.mxu0 %v7340
    %10775 = vmatprep.subr.bf16.mxu0 %v7349
    %10776 = vmatpush1.bf16.msra.mxu0 %v7348
    %10777 = vmatprep.subr.bf16.mxu0 %v7357
    %10778 = vmatpush1.bf16.msra.mxu0 %v7356
    %10779 = vmatprep.subr.bf16.mxu0 %v7365
    %10780 = vmatpush1.bf16.msra.mxu0 %v7364
    %10781 = vmatprep.mubr.bf16.mxu0 %v149
    %10782 = vmatmul.mubr.bf16.gmra.mrb[0].mxu0 %v148
    %v10783 = vpop.f32.mrb[0].mxu0
    %v10784 = vadd.f32 %v10741, %v10783
    %v10785 = vpop.f32.mrb[0].mxu0
    %v10786 = vadd.f32 %v10743, %v10785
    %v10787 = vpop.f32.mrb[0].mxu0
    %v10788 = vadd.f32 %v10745, %v10787
    %v10789 = vpop.f32.mrb[0].mxu0
    %v10790 = vadd.f32 %v10747, %v10789
    %10791 = vdwg.mxu0
    %10792 = vmatprep.subr.bf16.mxu0 %v7373
    %10793 = vmatpush1.bf16.msra.mxu0 %v7372
    %10794 = vmatprep.subr.bf16.mxu0 %v7381
    %10795 = vmatpush1.bf16.msra.mxu0 %v7380
    %10796 = vmatprep.subr.bf16.mxu0 %v7389
    %10797 = vmatpush1.bf16.msra.mxu0 %v7388
    %10798 = vmatprep.subr.bf16.mxu0 %v7397
    %10799 = vmatpush1.bf16.msra.mxu0 %v7396
    %10800 = vmatprep.subr.bf16.mxu0 %v7405
    %10801 = vmatpush1.bf16.msra.mxu0 %v7404
    %10802 = vmatprep.subr.bf16.mxu0 %v7413
    %10803 = vmatpush1.bf16.msra.mxu0 %v7412
    %10804 = vmatprep.subr.bf16.mxu0 %v7421
    %10805 = vmatpush1.bf16.msra.mxu0 %v7420
    %10806 = vmatprep.subr.bf16.mxu0 %v7429
    %10807 = vmatpush1.bf16.msra.mxu0 %v7428
    %10808 = vmatprep.subr.bf16.mxu0 %v7437
    %10809 = vmatpush1.bf16.msra.mxu0 %v7436
    %10810 = vmatprep.subr.bf16.mxu0 %v7445
    %10811 = vmatpush1.bf16.msra.mxu0 %v7444
    %10812 = vmatprep.subr.bf16.mxu0 %v7453
    %10813 = vmatpush1.bf16.msra.mxu0 %v7452
    %10814 = vmatprep.subr.bf16.mxu0 %v7461
    %10815 = vmatpush1.bf16.msra.mxu0 %v7460
    %10816 = vmatprep.subr.bf16.mxu0 %v7469
    %10817 = vmatpush1.bf16.msra.mxu0 %v7468
    %10818 = vmatprep.subr.bf16.mxu0 %v7477
    %10819 = vmatpush1.bf16.msra.mxu0 %v7476
    %10820 = vmatprep.subr.bf16.mxu0 %v7485
    %10821 = vmatpush1.bf16.msra.mxu0 %v7484
    %10822 = vmatprep.subr.bf16.mxu0 %v7493
    %10823 = vmatpush1.bf16.msra.mxu0 %v7492
    %10824 = vmatprep.mubr.bf16.mxu0 %v151
    %10825 = vmatmul.mubr.bf16.gmra.mrb[0].mxu0 %v150
    %v10826 = vpop.f32.mrb[0].mxu0
    %v10827 = vadd.f32 %v10784, %v10826
    %v10828 = vpop.f32.mrb[0].mxu0
    %v10829 = vadd.f32 %v10786, %v10828
    %v10830 = vpop.f32.mrb[0].mxu0
    %v10831 = vadd.f32 %v10788, %v10830
    %v10832 = vpop.f32.mrb[0].mxu0
    %v10833 = vadd.f32 %v10790, %v10832
    %10834 = vdwg.mxu0
    %10835 = vmatprep.subr.bf16.mxu0 %v7501
    %10836 = vmatpush1.bf16.msra.mxu0 %v7500
    %10837 = vmatprep.subr.bf16.mxu0 %v7509
    %10838 = vmatpush1.bf16.msra.mxu0 %v7508
    %10839 = vmatprep.subr.bf16.mxu0 %v7517
    %10840 = vmatpush1.bf16.msra.mxu0 %v7516
    %10841 = vmatprep.subr.bf16.mxu0 %v7525
    %10842 = vmatpush1.bf16.msra.mxu0 %v7524
    %10843 = vmatprep.subr.bf16.mxu0 %v7533
    %10844 = vmatpush1.bf16.msra.mxu0 %v7532
    %10845 = vmatprep.subr.bf16.mxu0 %v7541
    %10846 = vmatpush1.bf16.msra.mxu0 %v7540
    %10847 = vmatprep.subr.bf16.mxu0 %v7549
    %10848 = vmatpush1.bf16.msra.mxu0 %v7548
    %10849 = vmatprep.subr.bf16.mxu0 %v7557
    %10850 = vmatpush1.bf16.msra.mxu0 %v7556
    %10851 = vmatprep.subr.bf16.mxu0 %v7565
    %10852 = vmatpush1.bf16.msra.mxu0 %v7564
    %10853 = vmatprep.subr.bf16.mxu0 %v7573
    %10854 = vmatpush1.bf16.msra.mxu0 %v7572
    %10855 = vmatprep.subr.bf16.mxu0 %v7581
    %10856 = vmatpush1.bf16.msra.mxu0 %v7580
    %10857 = vmatprep.subr.bf16.mxu0 %v7589
    %10858 = vmatpush1.bf16.msra.mxu0 %v7588
    %10859 = vmatprep.subr.bf16.mxu0 %v7597
    %10860 = vmatpush1.bf16.msra.mxu0 %v7596
    %10861 = vmatprep.subr.bf16.mxu0 %v7605
    %10862 = vmatpush1.bf16.msra.mxu0 %v7604
    %10863 = vmatprep.subr.bf16.mxu0 %v7613
    %10864 = vmatpush1.bf16.msra.mxu0 %v7612
    %10865 = vmatprep.subr.bf16.mxu0 %v7621
    %10866 = vmatpush1.bf16.msra.mxu0 %v7620
    %10867 = vmatprep.mubr.bf16.mxu0 %v153
    %10868 = vmatmul.mubr.bf16.gmra.mrb[0].mxu0 %v152
    %v10869 = vpop.f32.mrb[0].mxu0
    %v10870 = vadd.f32 %v10827, %v10869
    %v10871 = vpop.f32.mrb[0].mxu0
    %v10872 = vadd.f32 %v10829, %v10871
    %v10873 = vpop.f32.mrb[0].mxu0
    %v10874 = vadd.f32 %v10831, %v10873
    %v10875 = vpop.f32.mrb[0].mxu0
    %v10876 = vadd.f32 %v10833, %v10875
    %10877 = vdwg.mxu0
    %10878 = vmatprep.subr.bf16.mxu0 %v7629
    %10879 = vmatpush1.bf16.msra.mxu0 %v7628
    %10880 = vmatprep.subr.bf16.mxu0 %v7637
    %10881 = vmatpush1.bf16.msra.mxu0 %v7636
    %10882 = vmatprep.subr.bf16.mxu0 %v7645
    %10883 = vmatpush1.bf16.msra.mxu0 %v7644
    %10884 = vmatprep.subr.bf16.mxu0 %v7653
    %10885 = vmatpush1.bf16.msra.mxu0 %v7652
    %10886 = vmatprep.subr.bf16.mxu0 %v7661
    %10887 = vmatpush1.bf16.msra.mxu0 %v7660
    %10888 = vmatprep.subr.bf16.mxu0 %v7669
    %10889 = vmatpush1.bf16.msra.mxu0 %v7668
    %10890 = vmatprep.subr.bf16.mxu0 %v7677
    %10891 = vmatpush1.bf16.msra.mxu0 %v7676
    %10892 = vmatprep.subr.bf16.mxu0 %v7685
    %10893 = vmatpush1.bf16.msra.mxu0 %v7684
    %10894 = vmatprep.subr.bf16.mxu0 %v7693
    %10895 = vmatpush1.bf16.msra.mxu0 %v7692
    %10896 = vmatprep.subr.bf16.mxu0 %v7701
    %10897 = vmatpush1.bf16.msra.mxu0 %v7700
    %10898 = vmatprep.subr.bf16.mxu0 %v7709
    %10899 = vmatpush1.bf16.msra.mxu0 %v7708
    %10900 = vmatprep.subr.bf16.mxu0 %v7717
    %10901 = vmatpush1.bf16.msra.mxu0 %v7716
    %10902 = vmatprep.subr.bf16.mxu0 %v7725
    %10903 = vmatpush1.bf16.msra.mxu0 %v7724
    %10904 = vmatprep.subr.bf16.mxu0 %v7733
    %10905 = vmatpush1.bf16.msra.mxu0 %v7732
    %10906 = vmatprep.subr.bf16.mxu0 %v7741
    %10907 = vmatpush1.bf16.msra.mxu0 %v7740
    %10908 = vmatprep.subr.bf16.mxu0 %v7749
    %10909 = vmatpush1.bf16.msra.mxu0 %v7748
    %10910 = vmatprep.mubr.bf16.mxu0 %v155
    %10911 = vmatmul.mubr.bf16.gmra.mrb[0].mxu0 %v154
    %v10912 = vpop.f32.mrb[0].mxu0
    %v10913 = vadd.f32 %v10870, %v10912
    %v10914 = vpop.f32.mrb[0].mxu0
    %v10915 = vadd.f32 %v10872, %v10914
    %v10916 = vpop.f32.mrb[0].mxu0
    %v10917 = vadd.f32 %v10874, %v10916
    %v10918 = vpop.f32.mrb[0].mxu0
    %v10919 = vadd.f32 %v10876, %v10918
    %10920 = vdwg.mxu0
    %10921 = vmatprep.subr.bf16.mxu0 %v7757
    %10922 = vmatpush1.bf16.msra.mxu0 %v7756
    %10923 = vmatprep.subr.bf16.mxu0 %v7765
    %10924 = vmatpush1.bf16.msra.mxu0 %v7764
    %10925 = vmatprep.subr.bf16.mxu0 %v7773
    %10926 = vmatpush1.bf16.msra.mxu0 %v7772
    %10927 = vmatprep.subr.bf16.mxu0 %v7781
    %10928 = vmatpush1.bf16.msra.mxu0 %v7780
    %10929 = vmatprep.subr.bf16.mxu0 %v7789
    %10930 = vmatpush1.bf16.msra.mxu0 %v7788
    %10931 = vmatprep.subr.bf16.mxu0 %v7797
    %10932 = vmatpush1.bf16.msra.mxu0 %v7796
    %10933 = vmatprep.subr.bf16.mxu0 %v7805
    %10934 = vmatpush1.bf16.msra.mxu0 %v7804
    %10935 = vmatprep.subr.bf16.mxu0 %v7813
    %10936 = vmatpush1.bf16.msra.mxu0 %v7812
    %10937 = vmatprep.subr.bf16.mxu0 %v7821
    %10938 = vmatpush1.bf16.msra.mxu0 %v7820
    %10939 = vmatprep.subr.bf16.mxu0 %v7829
    %10940 = vmatpush1.bf16.msra.mxu0 %v7828
    %10941 = vmatprep.subr.bf16.mxu0 %v7837
    %10942 = vmatpush1.bf16.msra.mxu0 %v7836
    %10943 = vmatprep.subr.bf16.mxu0 %v7845
    %10944 = vmatpush1.bf16.msra.mxu0 %v7844
    %10945 = vmatprep.subr.bf16.mxu0 %v7853
    %10946 = vmatpush1.bf16.msra.mxu0 %v7852
    %10947 = vmatprep.subr.bf16.mxu0 %v7861
    %10948 = vmatpush1.bf16.msra.mxu0 %v7860
    %10949 = vmatprep.subr.bf16.mxu0 %v7869
    %10950 = vmatpush1.bf16.msra.mxu0 %v7868
    %10951 = vmatprep.subr.bf16.mxu0 %v7877
    %10952 = vmatpush1.bf16.msra.mxu0 %v7876
    %10953 = vmatprep.mubr.bf16.mxu0 %v157
    %10954 = vmatmul.mubr.bf16.gmra.mrb[0].mxu0 %v156
    %v10955 = vpop.f32.mrb[0].mxu0
    %v10956 = vadd.f32 %v10913, %v10955
    %v10957 = vpop.f32.mrb[0].mxu0
    %v10958 = vadd.f32 %v10915, %v10957
    %v10959 = vpop.f32.mrb[0].mxu0
    %v10960 = vadd.f32 %v10917, %v10959
    %v10961 = vpop.f32.mrb[0].mxu0
    %v10962 = vadd.f32 %v10919, %v10961
    %10963 = vdwg.mxu0
    %10964 = vmatprep.subr.bf16.mxu0 %v6351
    %10965 = vmatpush1.bf16.msra.mxu0 %v6350
    %10966 = vmatprep.subr.bf16.mxu0 %v6359
    %10967 = vmatpush1.bf16.msra.mxu0 %v6358
    %10968 = vmatprep.subr.bf16.mxu0 %v6367
    %10969 = vmatpush1.bf16.msra.mxu0 %v6366
    %10970 = vmatprep.subr.bf16.mxu0 %v6375
    %10971 = vmatpush1.bf16.msra.mxu0 %v6374
    %10972 = vmatprep.subr.bf16.mxu0 %v6383
    %10973 = vmatpush1.bf16.msra.mxu0 %v6382
    %10974 = vmatprep.subr.bf16.mxu0 %v6391
    %10975 = vmatpush1.bf16.msra.mxu0 %v6390
    %10976 = vmatprep.subr.bf16.mxu0 %v6399
    %10977 = vmatpush1.bf16.msra.mxu0 %v6398
    %10978 = vmatprep.subr.bf16.mxu0 %v6407
    %10979 = vmatpush1.bf16.msra.mxu0 %v6406
    %10980 = vmatprep.subr.bf16.mxu0 %v6415
    %10981 = vmatpush1.bf16.msra.mxu0 %v6414
    %10982 = vmatprep.subr.bf16.mxu0 %v6423
    %10983 = vmatpush1.bf16.msra.mxu0 %v6422
    %10984 = vmatprep.subr.bf16.mxu0 %v6431
    %10985 = vmatpush1.bf16.msra.mxu0 %v6430
    %10986 = vmatprep.subr.bf16.mxu0 %v6439
    %10987 = vmatpush1.bf16.msra.mxu0 %v6438
    %10988 = vmatprep.subr.bf16.mxu0 %v6447
    %10989 = vmatpush1.bf16.msra.mxu0 %v6446
    %10990 = vmatprep.subr.bf16.mxu0 %v6455
    %10991 = vmatpush1.bf16.msra.mxu0 %v6454
    %10992 = vmatprep.subr.bf16.mxu0 %v6463
    %10993 = vmatpush1.bf16.msra.mxu0 %v6462
    %10994 = vmatprep.subr.bf16.mxu0 %v6471
    %10995 = vmatpush1.bf16.msra.mxu0 %v6470
    %10996 = vmatprep.mubr.bf16.mxu0 %v135
    %10997 = vmatmul.mubr.bf16.gmra.mrb[0].mxu0 %v134
    %v10998 = vpop.f32.mrb[0].mxu0
    %v10999 = vadd.f32 %v1723, %v10998
    %v11000 = vpop.f32.mrb[0].mxu0
    %v11001 = vadd.f32 %v1727, %v11000
    %v11002 = vpop.f32.mrb[0].mxu0
    %v11003 = vadd.f32 %v1723, %v11002
    %v11004 = vpop.f32.mrb[0].mxu0
    %v11005 = vadd.f32 %v1727, %v11004
    %11006 = vdwg.mxu0
    %11007 = vmatprep.subr.bf16.mxu0 %v6479
    %11008 = vmatpush1.bf16.msra.mxu0 %v6478
    %11009 = vmatprep.subr.bf16.mxu0 %v6487
    %11010 = vmatpush1.bf16.msra.mxu0 %v6486
    %11011 = vmatprep.subr.bf16.mxu0 %v6495
    %11012 = vmatpush1.bf16.msra.mxu0 %v6494
    %11013 = vmatprep.subr.bf16.mxu0 %v6503
    %11014 = vmatpush1.bf16.msra.mxu0 %v6502
    %11015 = vmatprep.subr.bf16.mxu0 %v6511
    %11016 = vmatpush1.bf16.msra.mxu0 %v6510
    %11017 = vmatprep.subr.bf16.mxu0 %v6519
    %11018 = vmatpush1.bf16.msra.mxu0 %v6518
    %11019 = vmatprep.subr.bf16.mxu0 %v6527
    %11020 = vmatpush1.bf16.msra.mxu0 %v6526
    %11021 = vmatprep.subr.bf16.mxu0 %v6535
    %11022 = vmatpush1.bf16.msra.mxu0 %v6534
    %11023 = vmatprep.subr.bf16.mxu0 %v6543
    %11024 = vmatpush1.bf16.msra.mxu0 %v6542
    %11025 = vmatprep.subr.bf16.mxu0 %v6551
    %11026 = vmatpush1.bf16.msra.mxu0 %v6550
    %11027 = vmatprep.subr.bf16.mxu0 %v6559
    %11028 = vmatpush1.bf16.msra.mxu0 %v6558
    %11029 = vmatprep.subr.bf16.mxu0 %v6567
    %11030 = vmatpush1.bf16.msra.mxu0 %v6566
    %11031 = vmatprep.subr.bf16.mxu0 %v6575
    %11032 = vmatpush1.bf16.msra.mxu0 %v6574
    %11033 = vmatprep.subr.bf16.mxu0 %v6583
    %11034 = vmatpush1.bf16.msra.mxu0 %v6582
    %11035 = vmatprep.subr.bf16.mxu0 %v6591
    %11036 = vmatpush1.bf16.msra.mxu0 %v6590
    %11037 = vmatprep.subr.bf16.mxu0 %v6599
    %11038 = vmatpush1.bf16.msra.mxu0 %v6598
    %11039 = vmatprep.mubr.bf16.mxu0 %v137
    %11040 = vmatmul.mubr.bf16.gmra.mrb[0].mxu0 %v136
    %v11041 = vpop.f32.mrb[0].mxu0
    %v11042 = vadd.f32 %v10999, %v11041
    %v11043 = vpop.f32.mrb[0].mxu0
    %v11044 = vadd.f32 %v11001, %v11043
    %v11045 = vpop.f32.mrb[0].mxu0
    %v11046 = vadd.f32 %v11003, %v11045
    %v11047 = vpop.f32.mrb[0].mxu0
    %v11048 = vadd.f32 %v11005, %v11047
    %11049 = vdwg.mxu0
    %11050 = vmatprep.subr.bf16.mxu0 %v6607
    %11051 = vmatpush1.bf16.msra.mxu0 %v6606
    %11052 = vmatprep.subr.bf16.mxu0 %v6615
    %11053 = vmatpush1.bf16.msra.mxu0 %v6614
    %11054 = vmatprep.subr.bf16.mxu0 %v6623
    %11055 = vmatpush1.bf16.msra.mxu0 %v6622
    %11056 = vmatprep.subr.bf16.mxu0 %v6631
    %11057 = vmatpush1.bf16.msra.mxu0 %v6630
    %11058 = vmatprep.subr.bf16.mxu0 %v6639
    %11059 = vmatpush1.bf16.msra.mxu0 %v6638
    %11060 = vmatprep.subr.bf16.mxu0 %v6647
    %11061 = vmatpush1.bf16.msra.mxu0 %v6646
    %11062 = vmatprep.subr.bf16.mxu0 %v6655
    %11063 = vmatpush1.bf16.msra.mxu0 %v6654
    %11064 = vmatprep.subr.bf16.mxu0 %v6663
    %11065 = vmatpush1.bf16.msra.mxu0 %v6662
    %11066 = vmatprep.subr.bf16.mxu0 %v6671
    %11067 = vmatpush1.bf16.msra.mxu0 %v6670
    %11068 = vmatprep.subr.bf16.mxu0 %v6679
    %11069 = vmatpush1.bf16.msra.mxu0 %v6678
    %11070 = vmatprep.subr.bf16.mxu0 %v6687
    %11071 = vmatpush1.bf16.msra.mxu0 %v6686
    %11072 = vmatprep.subr.bf16.mxu0 %v6695
    %11073 = vmatpush1.bf16.msra.mxu0 %v6694
    %11074 = vmatprep.subr.bf16.mxu0 %v6703
    %11075 = vmatpush1.bf16.msra.mxu0 %v6702
    %11076 = vmatprep.subr.bf16.mxu0 %v6711
    %11077 = vmatpush1.bf16.msra.mxu0 %v6710
    %11078 = vmatprep.subr.bf16.mxu0 %v6719
    %11079 = vmatpush1.bf16.msra.mxu0 %v6718
    %11080 = vmatprep.subr.bf16.mxu0 %v6727
    %11081 = vmatpush1.bf16.msra.mxu0 %v6726
    %11082 = vmatprep.mubr.bf16.mxu0 %v139
    %11083 = vmatmul.mubr.bf16.gmra.mrb[0].mxu0 %v138
    %v11084 = vpop.f32.mrb[0].mxu0
    %v11085 = vadd.f32 %v11042, %v11084
    %v11086 = vpop.f32.mrb[0].mxu0
    %v11087 = vadd.f32 %v11044, %v11086
    %v11088 = vpop.f32.mrb[0].mxu0
    %v11089 = vadd.f32 %v11046, %v11088
    %v11090 = vpop.f32.mrb[0].mxu0
    %v11091 = vadd.f32 %v11048, %v11090
    %11092 = vdwg.mxu0
    %11093 = vmatprep.subr.bf16.mxu0 %v6735
    %11094 = vmatpush1.bf16.msra.mxu0 %v6734
    %11095 = vmatprep.subr.bf16.mxu0 %v6743
    %11096 = vmatpush1.bf16.msra.mxu0 %v6742
    %11097 = vmatprep.subr.bf16.mxu0 %v6751
    %11098 = vmatpush1.bf16.msra.mxu0 %v6750
    %11099 = vmatprep.subr.bf16.mxu0 %v6759
    %11100 = vmatpush1.bf16.msra.mxu0 %v6758
    %11101 = vmatprep.subr.bf16.mxu0 %v6767
    %11102 = vmatpush1.bf16.msra.mxu0 %v6766
    %11103 = vmatprep.subr.bf16.mxu0 %v6775
    %11104 = vmatpush1.bf16.msra.mxu0 %v6774
    %11105 = vmatprep.subr.bf16.mxu0 %v6783
    %11106 = vmatpush1.bf16.msra.mxu0 %v6782
    %11107 = vmatprep.subr.bf16.mxu0 %v6791
    %11108 = vmatpush1.bf16.msra.mxu0 %v6790
    %11109 = vmatprep.subr.bf16.mxu0 %v6799
    %11110 = vmatpush1.bf16.msra.mxu0 %v6798
    %11111 = vmatprep.subr.bf16.mxu0 %v6807
    %11112 = vmatpush1.bf16.msra.mxu0 %v6806
    %11113 = vmatprep.subr.bf16.mxu0 %v6815
    %11114 = vmatpush1.bf16.msra.mxu0 %v6814
    %11115 = vmatprep.subr.bf16.mxu0 %v6823
    %11116 = vmatpush1.bf16.msra.mxu0 %v6822
    %11117 = vmatprep.subr.bf16.mxu0 %v6831
    %11118 = vmatpush1.bf16.msra.mxu0 %v6830
    %11119 = vmatprep.subr.bf16.mxu0 %v6839
    %11120 = vmatpush1.bf16.msra.mxu0 %v6838
    %11121 = vmatprep.subr.bf16.mxu0 %v6847
    %11122 = vmatpush1.bf16.msra.mxu0 %v6846
    %11123 = vmatprep.subr.bf16.mxu0 %v6855
    %11124 = vmatpush1.bf16.msra.mxu0 %v6854
    %11125 = vmatprep.mubr.bf16.mxu0 %v141
    %11126 = vmatmul.mubr.bf16.gmra.mrb[0].mxu0 %v140
    %v11127 = vpop.f32.mrb[0].mxu0
    %v11128 = vadd.f32 %v11085, %v11127
    %v11129 = vpop.f32.mrb[0].mxu0
    %v11130 = vadd.f32 %v11087, %v11129
    %v11131 = vpop.f32.mrb[0].mxu0
    %v11132 = vadd.f32 %v11089, %v11131
    %v11133 = vpop.f32.mrb[0].mxu0
    %v11134 = vadd.f32 %v11091, %v11133
    %11135 = vdwg.mxu0
    %11136 = vmatprep.subr.bf16.mxu0 %v6863
    %11137 = vmatpush1.bf16.msra.mxu0 %v6862
    %11138 = vmatprep.subr.bf16.mxu0 %v6871
    %11139 = vmatpush1.bf16.msra.mxu0 %v6870
    %11140 = vmatprep.subr.bf16.mxu0 %v6879
    %11141 = vmatpush1.bf16.msra.mxu0 %v6878
    %11142 = vmatprep.subr.bf16.mxu0 %v6887
    %11143 = vmatpush1.bf16.msra.mxu0 %v6886
    %11144 = vmatprep.subr.bf16.mxu0 %v6895
    %11145 = vmatpush1.bf16.msra.mxu0 %v6894
    %11146 = vmatprep.subr.bf16.mxu0 %v6903
    %11147 = vmatpush1.bf16.msra.mxu0 %v6902
    %11148 = vmatprep.subr.bf16.mxu0 %v6911
    %11149 = vmatpush1.bf16.msra.mxu0 %v6910
    %11150 = vmatprep.subr.bf16.mxu0 %v6919
    %11151 = vmatpush1.bf16.msra.mxu0 %v6918
    %11152 = vmatprep.subr.bf16.mxu0 %v6927
    %11153 = vmatpush1.bf16.msra.mxu0 %v6926
    %11154 = vmatprep.subr.bf16.mxu0 %v6935
    %11155 = vmatpush1.bf16.msra.mxu0 %v6934
    %11156 = vmatprep.subr.bf16.mxu0 %v6943
    %11157 = vmatpush1.bf16.msra.mxu0 %v6942
    %11158 = vmatprep.subr.bf16.mxu0 %v6951
    %11159 = vmatpush1.bf16.msra.mxu0 %v6950
    %11160 = vmatprep.subr.bf16.mxu0 %v6959
    %11161 = vmatpush1.bf16.msra.mxu0 %v6958
    %11162 = vmatprep.subr.bf16.mxu0 %v6967
    %11163 = vmatpush1.bf16.msra.mxu0 %v6966
    %11164 = vmatprep.subr.bf16.mxu0 %v6975
    %11165 = vmatpush1.bf16.msra.mxu0 %v6974
    %11166 = vmatprep.subr.bf16.mxu0 %v6983
    %11167 = vmatpush1.bf16.msra.mxu0 %v6982
    %11168 = vmatprep.mubr.bf16.mxu0 %v143
    %11169 = vmatmul.mubr.bf16.gmra.mrb[0].mxu0 %v142
    %v11170 = vpop.f32.mrb[0].mxu0
    %v11171 = vadd.f32 %v11128, %v11170
    %v11172 = vpop.f32.mrb[0].mxu0
    %v11173 = vadd.f32 %v11130, %v11172
    %v11174 = vpop.f32.mrb[0].mxu0
    %v11175 = vadd.f32 %v11132, %v11174
    %v11176 = vpop.f32.mrb[0].mxu0
    %v11177 = vadd.f32 %v11134, %v11176
    %11178 = vdwg.mxu0
    %11179 = vmatprep.subr.bf16.mxu0 %v6991
    %11180 = vmatpush1.bf16.msra.mxu0 %v6990
    %11181 = vmatprep.subr.bf16.mxu0 %v6999
    %11182 = vmatpush1.bf16.msra.mxu0 %v6998
    %11183 = vmatprep.subr.bf16.mxu0 %v7007
    %11184 = vmatpush1.bf16.msra.mxu0 %v7006
    %11185 = vmatprep.subr.bf16.mxu0 %v7015
    %11186 = vmatpush1.bf16.msra.mxu0 %v7014
    %11187 = vmatprep.subr.bf16.mxu0 %v7023
    %11188 = vmatpush1.bf16.msra.mxu0 %v7022
    %11189 = vmatprep.subr.bf16.mxu0 %v7031
    %11190 = vmatpush1.bf16.msra.mxu0 %v7030
    %11191 = vmatprep.subr.bf16.mxu0 %v7039
    %11192 = vmatpush1.bf16.msra.mxu0 %v7038
    %11193 = vmatprep.subr.bf16.mxu0 %v7047
    %11194 = vmatpush1.bf16.msra.mxu0 %v7046
    %11195 = vmatprep.subr.bf16.mxu0 %v7055
    %11196 = vmatpush1.bf16.msra.mxu0 %v7054
    %11197 = vmatprep.subr.bf16.mxu0 %v7063
    %11198 = vmatpush1.bf16.msra.mxu0 %v7062
    %11199 = vmatprep.subr.bf16.mxu0 %v7071
    %11200 = vmatpush1.bf16.msra.mxu0 %v7070
    %11201 = vmatprep.subr.bf16.mxu0 %v7079
    %11202 = vmatpush1.bf16.msra.mxu0 %v7078
    %11203 = vmatprep.subr.bf16.mxu0 %v7087
    %11204 = vmatpush1.bf16.msra.mxu0 %v7086
    %11205 = vmatprep.subr.bf16.mxu0 %v7095
    %11206 = vmatpush1.bf16.msra.mxu0 %v7094
    %11207 = vmatprep.subr.bf16.mxu0 %v7103
    %11208 = vmatpush1.bf16.msra.mxu0 %v7102
    %11209 = vmatprep.subr.bf16.mxu0 %v7111
    %11210 = vmatpush1.bf16.msra.mxu0 %v7110
    %11211 = vmatprep.mubr.bf16.mxu0 %v145
    %11212 = vmatmul.mubr.bf16.gmra.mrb[0].mxu0 %v144
    %v11213 = vpop.f32.mrb[0].mxu0
    %v11214 = vadd.f32 %v11171, %v11213
    %v11215 = vpop.f32.mrb[0].mxu0
    %v11216 = vadd.f32 %v11173, %v11215
    %v11217 = vpop.f32.mrb[0].mxu0
    %v11218 = vadd.f32 %v11175, %v11217
    %v11219 = vpop.f32.mrb[0].mxu0
    %v11220 = vadd.f32 %v11177, %v11219
    %11221 = vdwg.mxu0
    %11222 = vmatprep.subr.bf16.mxu0 %v7119
    %11223 = vmatpush1.bf16.msra.mxu0 %v7118
    %11224 = vmatprep.subr.bf16.mxu0 %v7127
    %11225 = vmatpush1.bf16.msra.mxu0 %v7126
    %11226 = vmatprep.subr.bf16.mxu0 %v7135
    %11227 = vmatpush1.bf16.msra.mxu0 %v7134
    %11228 = vmatprep.subr.bf16.mxu0 %v7143
    %11229 = vmatpush1.bf16.msra.mxu0 %v7142
    %11230 = vmatprep.subr.bf16.mxu0 %v7151
    %11231 = vmatpush1.bf16.msra.mxu0 %v7150
    %11232 = vmatprep.subr.bf16.mxu0 %v7159
    %11233 = vmatpush1.bf16.msra.mxu0 %v7158
    %11234 = vmatprep.subr.bf16.mxu0 %v7167
    %11235 = vmatpush1.bf16.msra.mxu0 %v7166
    %11236 = vmatprep.subr.bf16.mxu0 %v7175
    %11237 = vmatpush1.bf16.msra.mxu0 %v7174
    %11238 = vmatprep.subr.bf16.mxu0 %v7183
    %11239 = vmatpush1.bf16.msra.mxu0 %v7182
    %11240 = vmatprep.subr.bf16.mxu0 %v7191
    %11241 = vmatpush1.bf16.msra.mxu0 %v7190
    %11242 = vmatprep.subr.bf16.mxu0 %v7199
    %11243 = vmatpush1.bf16.msra.mxu0 %v7198
    %11244 = vmatprep.subr.bf16.mxu0 %v7207
    %11245 = vmatpush1.bf16.msra.mxu0 %v7206
    %11246 = vmatprep.subr.bf16.mxu0 %v7215
    %11247 = vmatpush1.bf16.msra.mxu0 %v7214
    %11248 = vmatprep.subr.bf16.mxu0 %v7223
    %11249 = vmatpush1.bf16.msra.mxu0 %v7222
    %11250 = vmatprep.subr.bf16.mxu0 %v7231
    %11251 = vmatpush1.bf16.msra.mxu0 %v7230
    %11252 = vmatprep.subr.bf16.mxu0 %v7239
    %11253 = vmatpush1.bf16.msra.mxu0 %v7238
    %11254 = vmatprep.mubr.bf16.mxu0 %v147
    %11255 = vmatmul.mubr.bf16.gmra.mrb[0].mxu0 %v146
    %v11256 = vpop.f32.mrb[0].mxu0
    %v11257 = vadd.f32 %v11214, %v11256
    %v11258 = vpop.f32.mrb[0].mxu0
    %v11259 = vadd.f32 %v11216, %v11258
    %v11260 = vpop.f32.mrb[0].mxu0
    %v11261 = vadd.f32 %v11218, %v11260
    %v11262 = vpop.f32.mrb[0].mxu0
    %v11263 = vadd.f32 %v11220, %v11262
    %11264 = vdwg.mxu0
    %11265 = vmatprep.subr.bf16.mxu0 %v7247
    %11266 = vmatpush1.bf16.msra.mxu0 %v7246
    %11267 = vmatprep.subr.bf16.mxu0 %v7255
    %11268 = vmatpush1.bf16.msra.mxu0 %v7254
    %11269 = vmatprep.subr.bf16.mxu0 %v7263
    %11270 = vmatpush1.bf16.msra.mxu0 %v7262
    %11271 = vmatprep.subr.bf16.mxu0 %v7271
    %11272 = vmatpush1.bf16.msra.mxu0 %v7270
    %11273 = vmatprep.subr.bf16.mxu0 %v7279
    %11274 = vmatpush1.bf16.msra.mxu0 %v7278
    %11275 = vmatprep.subr.bf16.mxu0 %v7287
    %11276 = vmatpush1.bf16.msra.mxu0 %v7286
    %11277 = vmatprep.subr.bf16.mxu0 %v7295
    %11278 = vmatpush1.bf16.msra.mxu0 %v7294
    %11279 = vmatprep.subr.bf16.mxu0 %v7303
    %11280 = vmatpush1.bf16.msra.mxu0 %v7302
    %11281 = vmatprep.subr.bf16.mxu0 %v7311
    %11282 = vmatpush1.bf16.msra.mxu0 %v7310
    %11283 = vmatprep.subr.bf16.mxu0 %v7319
    %11284 = vmatpush1.bf16.msra.mxu0 %v7318
    %11285 = vmatprep.subr.bf16.mxu0 %v7327
    %11286 = vmatpush1.bf16.msra.mxu0 %v7326
    %11287 = vmatprep.subr.bf16.mxu0 %v7335
    %11288 = vmatpush1.bf16.msra.mxu0 %v7334
    %11289 = vmatprep.subr.bf16.mxu0 %v7343
    %11290 = vmatpush1.bf16.msra.mxu0 %v7342
    %11291 = vmatprep.subr.bf16.mxu0 %v7351
    %11292 = vmatpush1.bf16.msra.mxu0 %v7350
    %11293 = vmatprep.subr.bf16.mxu0 %v7359
    %11294 = vmatpush1.bf16.msra.mxu0 %v7358
    %11295 = vmatprep.subr.bf16.mxu0 %v7367
    %11296 = vmatpush1.bf16.msra.mxu0 %v7366
    %11297 = vmatprep.mubr.bf16.mxu0 %v149
    %11298 = vmatmul.mubr.bf16.gmra.mrb[0].mxu0 %v148
    %v11299 = vpop.f32.mrb[0].mxu0
    %v11300 = vadd.f32 %v11257, %v11299
    %v11301 = vpop.f32.mrb[0].mxu0
    %v11302 = vadd.f32 %v11259, %v11301
    %v11303 = vpop.f32.mrb[0].mxu0
    %v11304 = vadd.f32 %v11261, %v11303
    %v11305 = vpop.f32.mrb[0].mxu0
    %v11306 = vadd.f32 %v11263, %v11305
    %11307 = vdwg.mxu0
    %11308 = vmatprep.subr.bf16.mxu0 %v7375
    %11309 = vmatpush1.bf16.msra.mxu0 %v7374
    %11310 = vmatprep.subr.bf16.mxu0 %v7383
    %11311 = vmatpush1.bf16.msra.mxu0 %v7382
    %11312 = vmatprep.subr.bf16.mxu0 %v7391
    %11313 = vmatpush1.bf16.msra.mxu0 %v7390
    %11314 = vmatprep.subr.bf16.mxu0 %v7399
    %11315 = vmatpush1.bf16.msra.mxu0 %v7398
    %11316 = vmatprep.subr.bf16.mxu0 %v7407
    %11317 = vmatpush1.bf16.msra.mxu0 %v7406
    %11318 = vmatprep.subr.bf16.mxu0 %v7415
    %11319 = vmatpush1.bf16.msra.mxu0 %v7414
    %11320 = vmatprep.subr.bf16.mxu0 %v7423
    %11321 = vmatpush1.bf16.msra.mxu0 %v7422
    %11322 = vmatprep.subr.bf16.mxu0 %v7431
    %11323 = vmatpush1.bf16.msra.mxu0 %v7430
    %11324 = vmatprep.subr.bf16.mxu0 %v7439
    %11325 = vmatpush1.bf16.msra.mxu0 %v7438
    %11326 = vmatprep.subr.bf16.mxu0 %v7447
    %11327 = vmatpush1.bf16.msra.mxu0 %v7446
    %11328 = vmatprep.subr.bf16.mxu0 %v7455
    %11329 = vmatpush1.bf16.msra.mxu0 %v7454
    %11330 = vmatprep.subr.bf16.mxu0 %v7463
    %11331 = vmatpush1.bf16.msra.mxu0 %v7462
    %11332 = vmatprep.subr.bf16.mxu0 %v7471
    %11333 = vmatpush1.bf16.msra.mxu0 %v7470
    %11334 = vmatprep.subr.bf16.mxu0 %v7479
    %11335 = vmatpush1.bf16.msra.mxu0 %v7478
    %11336 = vmatprep.subr.bf16.mxu0 %v7487
    %11337 = vmatpush1.bf16.msra.mxu0 %v7486
    %11338 = vmatprep.subr.bf16.mxu0 %v7495
    %11339 = vmatpush1.bf16.msra.mxu0 %v7494
    %11340 = vmatprep.mubr.bf16.mxu0 %v151
    %11341 = vmatmul.mubr.bf16.gmra.mrb[0].mxu0 %v150
    %v11342 = vpop.f32.mrb[0].mxu0
    %v11343 = vadd.f32 %v11300, %v11342
    %v11344 = vpop.f32.mrb[0].mxu0
    %v11345 = vadd.f32 %v11302, %v11344
    %v11346 = vpop.f32.mrb[0].mxu0
    %v11347 = vadd.f32 %v11304, %v11346
    %v11348 = vpop.f32.mrb[0].mxu0
    %v11349 = vadd.f32 %v11306, %v11348
    %11350 = vdwg.mxu0
    %11351 = vmatprep.subr.bf16.mxu0 %v7503
    %11352 = vmatpush1.bf16.msra.mxu0 %v7502
    %11353 = vmatprep.subr.bf16.mxu0 %v7511
    %11354 = vmatpush1.bf16.msra.mxu0 %v7510
    %11355 = vmatprep.subr.bf16.mxu0 %v7519
    %11356 = vmatpush1.bf16.msra.mxu0 %v7518
    %11357 = vmatprep.subr.bf16.mxu0 %v7527
    %11358 = vmatpush1.bf16.msra.mxu0 %v7526
    %11359 = vmatprep.subr.bf16.mxu0 %v7535
    %11360 = vmatpush1.bf16.msra.mxu0 %v7534
    %11361 = vmatprep.subr.bf16.mxu0 %v7543
    %11362 = vmatpush1.bf16.msra.mxu0 %v7542
    %11363 = vmatprep.subr.bf16.mxu0 %v7551
    %11364 = vmatpush1.bf16.msra.mxu0 %v7550
    %11365 = vmatprep.subr.bf16.mxu0 %v7559
    %11366 = vmatpush1.bf16.msra.mxu0 %v7558
    %11367 = vmatprep.subr.bf16.mxu0 %v7567
    %11368 = vmatpush1.bf16.msra.mxu0 %v7566
    %11369 = vmatprep.subr.bf16.mxu0 %v7575
    %11370 = vmatpush1.bf16.msra.mxu0 %v7574
    %11371 = vmatprep.subr.bf16.mxu0 %v7583
    %11372 = vmatpush1.bf16.msra.mxu0 %v7582
    %11373 = vmatprep.subr.bf16.mxu0 %v7591
    %11374 = vmatpush1.bf16.msra.mxu0 %v7590
    %11375 = vmatprep.subr.bf16.mxu0 %v7599
    %11376 = vmatpush1.bf16.msra.mxu0 %v7598
    %11377 = vmatprep.subr.bf16.mxu0 %v7607
    %11378 = vmatpush1.bf16.msra.mxu0 %v7606
    %11379 = vmatprep.subr.bf16.mxu0 %v7615
    %11380 = vmatpush1.bf16.msra.mxu0 %v7614
    %11381 = vmatprep.subr.bf16.mxu0 %v7623
    %11382 = vmatpush1.bf16.msra.mxu0 %v7622
    %11383 = vmatprep.mubr.bf16.mxu0 %v153
    %11384 = vmatmul.mubr.bf16.gmra.mrb[0].mxu0 %v152
    %v11385 = vpop.f32.mrb[0].mxu0
    %v11386 = vadd.f32 %v11343, %v11385
    %v11387 = vpop.f32.mrb[0].mxu0
    %v11388 = vadd.f32 %v11345, %v11387
    %v11389 = vpop.f32.mrb[0].mxu0
    %v11390 = vadd.f32 %v11347, %v11389
    %v11391 = vpop.f32.mrb[0].mxu0
    %v11392 = vadd.f32 %v11349, %v11391
    %11393 = vdwg.mxu0
    %11394 = vmatprep.subr.bf16.mxu0 %v7631
    %11395 = vmatpush1.bf16.msra.mxu0 %v7630
    %11396 = vmatprep.subr.bf16.mxu0 %v7639
    %11397 = vmatpush1.bf16.msra.mxu0 %v7638
    %11398 = vmatprep.subr.bf16.mxu0 %v7647
    %11399 = vmatpush1.bf16.msra.mxu0 %v7646
    %11400 = vmatprep.subr.bf16.mxu0 %v7655
    %11401 = vmatpush1.bf16.msra.mxu0 %v7654
    %11402 = vmatprep.subr.bf16.mxu0 %v7663
    %11403 = vmatpush1.bf16.msra.mxu0 %v7662
    %11404 = vmatprep.subr.bf16.mxu0 %v7671
    %11405 = vmatpush1.bf16.msra.mxu0 %v7670
    %11406 = vmatprep.subr.bf16.mxu0 %v7679
    %11407 = vmatpush1.bf16.msra.mxu0 %v7678
    %11408 = vmatprep.subr.bf16.mxu0 %v7687
    %11409 = vmatpush1.bf16.msra.mxu0 %v7686
    %11410 = vmatprep.subr.bf16.mxu0 %v7695
    %11411 = vmatpush1.bf16.msra.mxu0 %v7694
    %11412 = vmatprep.subr.bf16.mxu0 %v7703
    %11413 = vmatpush1.bf16.msra.mxu0 %v7702
    %11414 = vmatprep.subr.bf16.mxu0 %v7711
    %11415 = vmatpush1.bf16.msra.mxu0 %v7710
    %11416 = vmatprep.subr.bf16.mxu0 %v7719
    %11417 = vmatpush1.bf16.msra.mxu0 %v7718
    %11418 = vmatprep.subr.bf16.mxu0 %v7727
    %11419 = vmatpush1.bf16.msra.mxu0 %v7726
    %11420 = vmatprep.subr.bf16.mxu0 %v7735
    %11421 = vmatpush1.bf16.msra.mxu0 %v7734
    %11422 = vmatprep.subr.bf16.mxu0 %v7743
    %11423 = vmatpush1.bf16.msra.mxu0 %v7742
    %11424 = vmatprep.subr.bf16.mxu0 %v7751
    %11425 = vmatpush1.bf16.msra.mxu0 %v7750
    %11426 = vmatprep.mubr.bf16.mxu0 %v155
    %11427 = vmatmul.mubr.bf16.gmra.mrb[0].mxu0 %v154
    %v11428 = vpop.f32.mrb[0].mxu0
    %v11429 = vadd.f32 %v11386, %v11428
    %v11430 = vpop.f32.mrb[0].mxu0
    %v11431 = vadd.f32 %v11388, %v11430
    %v11432 = vpop.f32.mrb[0].mxu0
    %v11433 = vadd.f32 %v11390, %v11432
    %v11434 = vpop.f32.mrb[0].mxu0
    %v11435 = vadd.f32 %v11392, %v11434
    %11436 = vdwg.mxu0
    %11437 = vmatprep.subr.bf16.mxu0 %v7759
    %11438 = vmatpush1.bf16.msra.mxu0 %v7758
    %11439 = vmatprep.subr.bf16.mxu0 %v7767
    %11440 = vmatpush1.bf16.msra.mxu0 %v7766
    %11441 = vmatprep.subr.bf16.mxu0 %v7775
    %11442 = vmatpush1.bf16.msra.mxu0 %v7774
    %11443 = vmatprep.subr.bf16.mxu0 %v7783
    %11444 = vmatpush1.bf16.msra.mxu0 %v7782
    %11445 = vmatprep.subr.bf16.mxu0 %v7791
    %11446 = vmatpush1.bf16.msra.mxu0 %v7790
    %11447 = vmatprep.subr.bf16.mxu0 %v7799
    %11448 = vmatpush1.bf16.msra.mxu0 %v7798
    %11449 = vmatprep.subr.bf16.mxu0 %v7807
    %11450 = vmatpush1.bf16.msra.mxu0 %v7806
    %11451 = vmatprep.subr.bf16.mxu0 %v7815
    %11452 = vmatpush1.bf16.msra.mxu0 %v7814
    %11453 = vmatprep.subr.bf16.mxu0 %v7823
    %11454 = vmatpush1.bf16.msra.mxu0 %v7822
    %11455 = vmatprep.subr.bf16.mxu0 %v7831
    %11456 = vmatpush1.bf16.msra.mxu0 %v7830
    %11457 = vmatprep.subr.bf16.mxu0 %v7839
    %11458 = vmatpush1.bf16.msra.mxu0 %v7838
    %11459 = vmatprep.subr.bf16.mxu0 %v7847
    %11460 = vmatpush1.bf16.msra.mxu0 %v7846
    %11461 = vmatprep.subr.bf16.mxu0 %v7855
    %11462 = vmatpush1.bf16.msra.mxu0 %v7854
    %11463 = vmatprep.subr.bf16.mxu0 %v7863
    %11464 = vmatpush1.bf16.msra.mxu0 %v7862
    %11465 = vmatprep.subr.bf16.mxu0 %v7871
    %11466 = vmatpush1.bf16.msra.mxu0 %v7870
    %11467 = vmatprep.subr.bf16.mxu0 %v7879
    %11468 = vmatpush1.bf16.msra.mxu0 %v7878
    %11469 = vmatprep.mubr.bf16.mxu0 %v157
    %11470 = vmatmul.mubr.bf16.gmra.mrb[0].mxu0 %v156
    %v11471 = vpop.f32.mrb[0].mxu0
    %v11472 = vadd.f32 %v11429, %v11471
    %v11473 = vpop.f32.mrb[0].mxu0
    %v11474 = vadd.f32 %v11431, %v11473
    %v11475 = vpop.f32.mrb[0].mxu0
    %v11476 = vadd.f32 %v11433, %v11475
    %v11477 = vpop.f32.mrb[0].mxu0
    %v11478 = vadd.f32 %v11435, %v11477
    %11479 = vdwg.mxu0
    %v11480 = vmax.f32 %v9924, 0.0
    %v11481 = vmax.f32 %v9926, 0.0
    %v11482 = vmax.f32 %v10440, 0.0
    %v11483 = vmax.f32 %v10442, 0.0
    %v11484 = vmax.f32 %v10956, 0.0
    %v11485 = vmax.f32 %v10958, 0.0
    %v11486 = vmax.f32 %v11472, 0.0
    %v11487 = vmax.f32 %v11474, 0.0
    %v11488 = vmax.f32 %v9928, 0.0
    %v11489 = vmax.f32 %v9930, 0.0
    %v11490 = vmax.f32 %v10444, 0.0
    %v11491 = vmax.f32 %v10446, 0.0
    %v11492 = vmax.f32 %v10960, 0.0
    %v11493 = vmax.f32 %v10962, 0.0
    %v11494 = vmax.f32 %v11476, 0.0
    %v11495 = vmax.f32 %v11478, 0.0
    %v11496 = vpack.c.bf16 %v11488, %v11480
    %v11497 = vpack.c.bf16 %v11489, %v11481
    %v11498 = vpack.c.bf16 %v11490, %v11482
    %v11499 = vpack.c.bf16 %v11491, %v11483
    %v11500 = vpack.c.bf16 %v11492, %v11484
    %v11501 = vpack.c.bf16 %v11493, %v11485
    %v11502 = vpack.c.bf16 %v11494, %v11486
    %v11503 = vpack.c.bf16 %v11495, %v11487
    %v11504 = vld [vmem:[#allocation8] sm:$0xf]
    %v11505 = vld [vmem:[#allocation8 + $0x4] sm:$0xf]
    %v11506 = vld [vmem:[#allocation8 + $0x8] sm:$0xf]
    %v11507 = vld [vmem:[#allocation8 + $0xc] sm:$0xf]
    %v11508 = vld [vmem:[#allocation8 + $0x10] sm:$0xf]
    %v11509 = vld [vmem:[#allocation8 + $0x14] sm:$0xf]
    %v11510 = vld [vmem:[#allocation8 + $0x18] sm:$0xf]
    %v11511 = vld [vmem:[#allocation8 + $0x1c] sm:$0xf]
    %v11512 = vld [vmem:[#allocation8 + $0x20] sm:$0xf]
    %v11513 = vld [vmem:[#allocation8 + $0x24] sm:$0xf]
    %v11514 = vld [vmem:[#allocation8 + $0x28] sm:$0xf]
    %v11515 = vld [vmem:[#allocation8 + $0x2c] sm:$0xf]
    %v11516 = vld [vmem:[#allocation8 + $0x30] sm:$0xf]
    %v11517 = vld [vmem:[#allocation8 + $0x34] sm:$0xf]
    %v11518 = vld [vmem:[#allocation8 + $0x38] sm:$0xf]
    %v11519 = vld [vmem:[#allocation8 + $0x3c] sm:$0xf]
    %v11520 = vld [vmem:[#allocation8 + $0x40] sm:$0xf]
    %v11521 = vld [vmem:[#allocation8 + $0x44] sm:$0xf]
    %v11522 = vld [vmem:[#allocation8 + $0x48] sm:$0xf]
    %v11523 = vld [vmem:[#allocation8 + $0x4c] sm:$0xf]
    %v11524 = vld [vmem:[#allocation8 + $0x50] sm:$0xf]
    %v11525 = vld [vmem:[#allocation8 + $0x54] sm:$0xf]
    %v11526 = vld [vmem:[#allocation8 + $0x58] sm:$0xf]
    %v11527 = vld [vmem:[#allocation8 + $0x5c] sm:$0xf]
    %v11528 = vld [vmem:[#allocation8 + $0x60] sm:$0xf]
    %v11529 = vld [vmem:[#allocation8 + $0x64] sm:$0xf]
    %v11530 = vld [vmem:[#allocation8 + $0x68] sm:$0xf]
    %v11531 = vld [vmem:[#allocation8 + $0x6c] sm:$0xf]
    %v11532 = vld [vmem:[#allocation8 + $0x70] sm:$0xf]
    %v11533 = vld [vmem:[#allocation8 + $0x74] sm:$0xf]
    %v11534 = vld [vmem:[#allocation8 + $0x78] sm:$0xf]
    %v11535 = vld [vmem:[#allocation8 + $0x7c] sm:$0xf]
    %v11536 = vld [vmem:[#allocation8 + $0x80] sm:$0xf]
    %v11537 = vld [vmem:[#allocation8 + $0x84] sm:$0xf]
    %v11538 = vld [vmem:[#allocation8 + $0x88] sm:$0xf]
    %v11539 = vld [vmem:[#allocation8 + $0x8c] sm:$0xf]
    %v11540 = vld [vmem:[#allocation8 + $0x90] sm:$0xf]
    %v11541 = vld [vmem:[#allocation8 + $0x94] sm:$0xf]
    %v11542 = vld [vmem:[#allocation8 + $0x98] sm:$0xf]
    %v11543 = vld [vmem:[#allocation8 + $0x9c] sm:$0xf]
    %v11544 = vld [vmem:[#allocation8 + $0xa0] sm:$0xf]
    %v11545 = vld [vmem:[#allocation8 + $0xa4] sm:$0xf]
    %v11546 = vld [vmem:[#allocation8 + $0xa8] sm:$0xf]
    %v11547 = vld [vmem:[#allocation8 + $0xac] sm:$0xf]
    %v11548 = vld [vmem:[#allocation8 + $0xb0] sm:$0xf]
    %v11549 = vld [vmem:[#allocation8 + $0xb4] sm:$0xf]
    %v11550 = vld [vmem:[#allocation8 + $0xb8] sm:$0xf]
    %v11551 = vld [vmem:[#allocation8 + $0xbc] sm:$0xf]
    %v11552 = vld [vmem:[#allocation8 + $0xc0] sm:$0xf]
    %v11553 = vld [vmem:[#allocation8 + $0xc4] sm:$0xf]
    %v11554 = vld [vmem:[#allocation8 + $0xc8] sm:$0xf]
    %v11555 = vld [vmem:[#allocation8 + $0xcc] sm:$0xf]
    %v11556 = vld [vmem:[#allocation8 + $0xd0] sm:$0xf]
    %v11557 = vld [vmem:[#allocation8 + $0xd4] sm:$0xf]
    %v11558 = vld [vmem:[#allocation8 + $0xd8] sm:$0xf]
    %v11559 = vld [vmem:[#allocation8 + $0xdc] sm:$0xf]
    %v11560 = vld [vmem:[#allocation8 + $0xe0] sm:$0xf]
    %v11561 = vld [vmem:[#allocation8 + $0xe4] sm:$0xf]
    %v11562 = vld [vmem:[#allocation8 + $0xe8] sm:$0xf]
    %v11563 = vld [vmem:[#allocation8 + $0xec] sm:$0xf]
    %v11564 = vld [vmem:[#allocation8 + $0xf0] sm:$0xf]
    %v11565 = vld [vmem:[#allocation8 + $0xf4] sm:$0xf]
    %v11566 = vld [vmem:[#allocation8 + $0xf8] sm:$0xf]
    %v11567 = vld [vmem:[#allocation8 + $0xfc] sm:$0xf]
    %v11568 = vld [vmem:[#allocation8 + $0x100] sm:$0xf]
    %v11569 = vld [vmem:[#allocation8 + $0x104] sm:$0xf]
    %v11570 = vld [vmem:[#allocation8 + $0x108] sm:$0xf]
    %v11571 = vld [vmem:[#allocation8 + $0x10c] sm:$0xf]
    %v11572 = vld [vmem:[#allocation8 + $0x110] sm:$0xf]
    %v11573 = vld [vmem:[#allocation8 + $0x114] sm:$0xf]
    %v11574 = vld [vmem:[#allocation8 + $0x118] sm:$0xf]
    %v11575 = vld [vmem:[#allocation8 + $0x11c] sm:$0xf]
    %v11576 = vld [vmem:[#allocation8 + $0x120] sm:$0xf]
    %v11577 = vld [vmem:[#allocation8 + $0x124] sm:$0xf]
    %v11578 = vld [vmem:[#allocation8 + $0x128] sm:$0xf]
    %v11579 = vld [vmem:[#allocation8 + $0x12c] sm:$0xf]
    %v11580 = vld [vmem:[#allocation8 + $0x130] sm:$0xf]
    %v11581 = vld [vmem:[#allocation8 + $0x134] sm:$0xf]
    %v11582 = vld [vmem:[#allocation8 + $0x138] sm:$0xf]
    %v11583 = vld [vmem:[#allocation8 + $0x13c] sm:$0xf]
    %v11584 = vld [vmem:[#allocation8 + $0x140] sm:$0xf]
    %v11585 = vld [vmem:[#allocation8 + $0x144] sm:$0xf]
    %v11586 = vld [vmem:[#allocation8 + $0x148] sm:$0xf]
    %v11587 = vld [vmem:[#allocation8 + $0x14c] sm:$0xf]
    %v11588 = vld [vmem:[#allocation8 + $0x150] sm:$0xf]
    %v11589 = vld [vmem:[#allocation8 + $0x154] sm:$0xf]
    %v11590 = vld [vmem:[#allocation8 + $0x158] sm:$0xf]
    %v11591 = vld [vmem:[#allocation8 + $0x15c] sm:$0xf]
    %v11592 = vld [vmem:[#allocation8 + $0x160] sm:$0xf]
    %v11593 = vld [vmem:[#allocation8 + $0x164] sm:$0xf]
    %v11594 = vld [vmem:[#allocation8 + $0x168] sm:$0xf]
    %v11595 = vld [vmem:[#allocation8 + $0x16c] sm:$0xf]
    %v11596 = vld [vmem:[#allocation8 + $0x170] sm:$0xf]
    %v11597 = vld [vmem:[#allocation8 + $0x174] sm:$0xf]
    %v11598 = vld [vmem:[#allocation8 + $0x178] sm:$0xf]
    %v11599 = vld [vmem:[#allocation8 + $0x17c] sm:$0xf]
    %v11600 = vld [vmem:[#allocation8 + $0x180] sm:$0xf]
    %v11601 = vld [vmem:[#allocation8 + $0x184] sm:$0xf]
    %v11602 = vld [vmem:[#allocation8 + $0x188] sm:$0xf]
    %v11603 = vld [vmem:[#allocation8 + $0x18c] sm:$0xf]
    %v11604 = vld [vmem:[#allocation8 + $0x190] sm:$0xf]
    %v11605 = vld [vmem:[#allocation8 + $0x194] sm:$0xf]
    %v11606 = vld [vmem:[#allocation8 + $0x198] sm:$0xf]
    %v11607 = vld [vmem:[#allocation8 + $0x19c] sm:$0xf]
    %v11608 = vld [vmem:[#allocation8 + $0x1a0] sm:$0xf]
    %v11609 = vld [vmem:[#allocation8 + $0x1a4] sm:$0xf]
    %v11610 = vld [vmem:[#allocation8 + $0x1a8] sm:$0xf]
    %v11611 = vld [vmem:[#allocation8 + $0x1ac] sm:$0xf]
    %v11612 = vld [vmem:[#allocation8 + $0x1b0] sm:$0xf]
    %v11613 = vld [vmem:[#allocation8 + $0x1b4] sm:$0xf]
    %v11614 = vld [vmem:[#allocation8 + $0x1b8] sm:$0xf]
    %v11615 = vld [vmem:[#allocation8 + $0x1bc] sm:$0xf]
    %v11616 = vld [vmem:[#allocation8 + $0x1c0] sm:$0xf]
    %v11617 = vld [vmem:[#allocation8 + $0x1c4] sm:$0xf]
    %v11618 = vld [vmem:[#allocation8 + $0x1c8] sm:$0xf]
    %v11619 = vld [vmem:[#allocation8 + $0x1cc] sm:$0xf]
    %v11620 = vld [vmem:[#allocation8 + $0x1d0] sm:$0xf]
    %v11621 = vld [vmem:[#allocation8 + $0x1d4] sm:$0xf]
    %v11622 = vld [vmem:[#allocation8 + $0x1d8] sm:$0xf]
    %v11623 = vld [vmem:[#allocation8 + $0x1dc] sm:$0xf]
    %v11624 = vld [vmem:[#allocation8 + $0x1e0] sm:$0xf]
    %v11625 = vld [vmem:[#allocation8 + $0x1e4] sm:$0xf]
    %v11626 = vld [vmem:[#allocation8 + $0x1e8] sm:$0xf]
    %v11627 = vld [vmem:[#allocation8 + $0x1ec] sm:$0xf]
    %v11628 = vld [vmem:[#allocation8 + $0x1f0] sm:$0xf]
    %v11629 = vld [vmem:[#allocation8 + $0x1f4] sm:$0xf]
    %v11630 = vld [vmem:[#allocation8 + $0x1f8] sm:$0xf]
    %v11631 = vld [vmem:[#allocation8 + $0x1fc] sm:$0xf]
    %v11632 = vld [vmem:[#allocation10] sm:$0x1]
    %v11634 = vlaneseq
    %v11635 = vshrl.u32 %v11634, 7
    %v11636 = vsub.s32 0, %v11635
    %v11637 = vrot.slane %v11632, %v11636
    %v11767 = vunpack.c.l.b16 %v11504
    %v11768 = vunpack.c.l.b16 %v11505
    %v11769 = vunpack.c.l.b16 %v11506
    %v11770 = vunpack.c.l.b16 %v11507
    %v11771 = vunpack.c.l.b16 %v11508
    %v11772 = vunpack.c.l.b16 %v11509
    %v11773 = vunpack.c.l.b16 %v11510
    %v11774 = vunpack.c.l.b16 %v11511
    %v11775 = vunpack.c.l.b16 %v11512
    %v11776 = vunpack.c.l.b16 %v11513
    %v11777 = vunpack.c.l.b16 %v11514
    %v11778 = vunpack.c.l.b16 %v11515
    %v11779 = vunpack.c.l.b16 %v11516
    %v11780 = vunpack.c.l.b16 %v11517
    %v11781 = vunpack.c.l.b16 %v11518
    %v11782 = vunpack.c.l.b16 %v11519
    %v11783 = vunpack.c.l.b16 %v11520
    %v11784 = vunpack.c.l.b16 %v11521
    %v11785 = vunpack.c.l.b16 %v11522
    %v11786 = vunpack.c.l.b16 %v11523
    %v11787 = vunpack.c.l.b16 %v11524
    %v11788 = vunpack.c.l.b16 %v11525
    %v11789 = vunpack.c.l.b16 %v11526
    %v11790 = vunpack.c.l.b16 %v11527
    %v11791 = vunpack.c.l.b16 %v11528
    %v11792 = vunpack.c.l.b16 %v11529
    %v11793 = vunpack.c.l.b16 %v11530
    %v11794 = vunpack.c.l.b16 %v11531
    %v11795 = vunpack.c.l.b16 %v11532
    %v11796 = vunpack.c.l.b16 %v11533
    %v11797 = vunpack.c.l.b16 %v11534
    %v11798 = vunpack.c.l.b16 %v11535
    %v11799 = vunpack.c.l.b16 %v11536
    %v11800 = vunpack.c.l.b16 %v11537
    %v11801 = vunpack.c.l.b16 %v11538
    %v11802 = vunpack.c.l.b16 %v11539
    %v11803 = vunpack.c.l.b16 %v11540
    %v11804 = vunpack.c.l.b16 %v11541
    %v11805 = vunpack.c.l.b16 %v11542
    %v11806 = vunpack.c.l.b16 %v11543
    %v11807 = vunpack.c.l.b16 %v11544
    %v11808 = vunpack.c.l.b16 %v11545
    %v11809 = vunpack.c.l.b16 %v11546
    %v11810 = vunpack.c.l.b16 %v11547
    %v11811 = vunpack.c.l.b16 %v11548
    %v11812 = vunpack.c.l.b16 %v11549
    %v11813 = vunpack.c.l.b16 %v11550
    %v11814 = vunpack.c.l.b16 %v11551
    %v11815 = vunpack.c.l.b16 %v11552
    %v11816 = vunpack.c.l.b16 %v11553
    %v11817 = vunpack.c.l.b16 %v11554
    %v11818 = vunpack.c.l.b16 %v11555
    %v11819 = vunpack.c.l.b16 %v11556
    %v11820 = vunpack.c.l.b16 %v11557
    %v11821 = vunpack.c.l.b16 %v11558
    %v11822 = vunpack.c.l.b16 %v11559
    %v11823 = vunpack.c.l.b16 %v11560
    %v11824 = vunpack.c.l.b16 %v11561
    %v11825 = vunpack.c.l.b16 %v11562
    %v11826 = vunpack.c.l.b16 %v11563
    %v11827 = vunpack.c.l.b16 %v11564
    %v11828 = vunpack.c.l.b16 %v11565
    %v11829 = vunpack.c.l.b16 %v11566
    %v11830 = vunpack.c.l.b16 %v11567
    %v11831 = vunpack.c.l.b16 %v11568
    %v11832 = vunpack.c.l.b16 %v11569
    %v11833 = vunpack.c.l.b16 %v11570
    %v11834 = vunpack.c.l.b16 %v11571
    %v11835 = vunpack.c.l.b16 %v11572
    %v11836 = vunpack.c.l.b16 %v11573
    %v11837 = vunpack.c.l.b16 %v11574
    %v11838 = vunpack.c.l.b16 %v11575
    %v11839 = vunpack.c.l.b16 %v11576
    %v11840 = vunpack.c.l.b16 %v11577
    %v11841 = vunpack.c.l.b16 %v11578
    %v11842 = vunpack.c.l.b16 %v11579
    %v11843 = vunpack.c.l.b16 %v11580
    %v11844 = vunpack.c.l.b16 %v11581
    %v11845 = vunpack.c.l.b16 %v11582
    %v11846 = vunpack.c.l.b16 %v11583
    %v11847 = vunpack.c.l.b16 %v11584
    %v11848 = vunpack.c.l.b16 %v11585
    %v11849 = vunpack.c.l.b16 %v11586
    %v11850 = vunpack.c.l.b16 %v11587
    %v11851 = vunpack.c.l.b16 %v11588
    %v11852 = vunpack.c.l.b16 %v11589
    %v11853 = vunpack.c.l.b16 %v11590
    %v11854 = vunpack.c.l.b16 %v11591
    %v11855 = vunpack.c.l.b16 %v11592
    %v11856 = vunpack.c.l.b16 %v11593
    %v11857 = vunpack.c.l.b16 %v11594
    %v11858 = vunpack.c.l.b16 %v11595
    %v11859 = vunpack.c.l.b16 %v11596
    %v11860 = vunpack.c.l.b16 %v11597
    %v11861 = vunpack.c.l.b16 %v11598
    %v11862 = vunpack.c.l.b16 %v11599
    %v11863 = vunpack.c.l.b16 %v11600
    %v11864 = vunpack.c.l.b16 %v11601
    %v11865 = vunpack.c.l.b16 %v11602
    %v11866 = vunpack.c.l.b16 %v11603
    %v11867 = vunpack.c.l.b16 %v11604
    %v11868 = vunpack.c.l.b16 %v11605
    %v11869 = vunpack.c.l.b16 %v11606
    %v11870 = vunpack.c.l.b16 %v11607
    %v11871 = vunpack.c.l.b16 %v11608
    %v11872 = vunpack.c.l.b16 %v11609
    %v11873 = vunpack.c.l.b16 %v11610
    %v11874 = vunpack.c.l.b16 %v11611
    %v11875 = vunpack.c.l.b16 %v11612
    %v11876 = vunpack.c.l.b16 %v11613
    %v11877 = vunpack.c.l.b16 %v11614
    %v11878 = vunpack.c.l.b16 %v11615
    %v11879 = vunpack.c.l.b16 %v11616
    %v11880 = vunpack.c.l.b16 %v11617
    %v11881 = vunpack.c.l.b16 %v11618
    %v11882 = vunpack.c.l.b16 %v11619
    %v11883 = vunpack.c.l.b16 %v11620
    %v11884 = vunpack.c.l.b16 %v11621
    %v11885 = vunpack.c.l.b16 %v11622
    %v11886 = vunpack.c.l.b16 %v11623
    %v11887 = vunpack.c.l.b16 %v11624
    %v11888 = vunpack.c.l.b16 %v11625
    %v11889 = vunpack.c.l.b16 %v11626
    %v11890 = vunpack.c.l.b16 %v11627
    %v11891 = vunpack.c.l.b16 %v11628
    %v11892 = vunpack.c.l.b16 %v11629
    %v11893 = vunpack.c.l.b16 %v11630
    %v11894 = vunpack.c.l.b16 %v11631
    %v11895 = vpack.c.b16 %v11768, %v11767
    %v11896 = vpack.c.b16 %v11770, %v11769
    %v11897 = vpack.c.b16 %v11772, %v11771
    %v11898 = vpack.c.b16 %v11774, %v11773
    %v11899 = vpack.c.b16 %v11776, %v11775
    %v11900 = vpack.c.b16 %v11778, %v11777
    %v11901 = vpack.c.b16 %v11780, %v11779
    %v11902 = vpack.c.b16 %v11782, %v11781
    %v11903 = vpack.c.b16 %v11784, %v11783
    %v11904 = vpack.c.b16 %v11786, %v11785
    %v11905 = vpack.c.b16 %v11788, %v11787
    %v11906 = vpack.c.b16 %v11790, %v11789
    %v11907 = vpack.c.b16 %v11792, %v11791
    %v11908 = vpack.c.b16 %v11794, %v11793
    %v11909 = vpack.c.b16 %v11796, %v11795
    %v11910 = vpack.c.b16 %v11798, %v11797
    %v11911 = vpack.c.b16 %v11800, %v11799
    %v11912 = vpack.c.b16 %v11802, %v11801
    %v11913 = vpack.c.b16 %v11804, %v11803
    %v11914 = vpack.c.b16 %v11806, %v11805
    %v11915 = vpack.c.b16 %v11808, %v11807
    %v11916 = vpack.c.b16 %v11810, %v11809
    %v11917 = vpack.c.b16 %v11812, %v11811
    %v11918 = vpack.c.b16 %v11814, %v11813
    %v11919 = vpack.c.b16 %v11816, %v11815
    %v11920 = vpack.c.b16 %v11818, %v11817
    %v11921 = vpack.c.b16 %v11820, %v11819
    %v11922 = vpack.c.b16 %v11822, %v11821
    %v11923 = vpack.c.b16 %v11824, %v11823
    %v11924 = vpack.c.b16 %v11826, %v11825
    %v11925 = vpack.c.b16 %v11828, %v11827
    %v11926 = vpack.c.b16 %v11830, %v11829
    %v11927 = vpack.c.b16 %v11832, %v11831
    %v11928 = vpack.c.b16 %v11834, %v11833
    %v11929 = vpack.c.b16 %v11836, %v11835
    %v11930 = vpack.c.b16 %v11838, %v11837
    %v11931 = vpack.c.b16 %v11840, %v11839
    %v11932 = vpack.c.b16 %v11842, %v11841
    %v11933 = vpack.c.b16 %v11844, %v11843
    %v11934 = vpack.c.b16 %v11846, %v11845
    %v11935 = vpack.c.b16 %v11848, %v11847
    %v11936 = vpack.c.b16 %v11850, %v11849
    %v11937 = vpack.c.b16 %v11852, %v11851
    %v11938 = vpack.c.b16 %v11854, %v11853
    %v11939 = vpack.c.b16 %v11856, %v11855
    %v11940 = vpack.c.b16 %v11858, %v11857
    %v11941 = vpack.c.b16 %v11860, %v11859
    %v11942 = vpack.c.b16 %v11862, %v11861
    %v11943 = vpack.c.b16 %v11864, %v11863
    %v11944 = vpack.c.b16 %v11866, %v11865
    %v11945 = vpack.c.b16 %v11868, %v11867
    %v11946 = vpack.c.b16 %v11870, %v11869
    %v11947 = vpack.c.b16 %v11872, %v11871
    %v11948 = vpack.c.b16 %v11874, %v11873
    %v11949 = vpack.c.b16 %v11876, %v11875
    %v11950 = vpack.c.b16 %v11878, %v11877
    %v11951 = vpack.c.b16 %v11880, %v11879
    %v11952 = vpack.c.b16 %v11882, %v11881
    %v11953 = vpack.c.b16 %v11884, %v11883
    %v11954 = vpack.c.b16 %v11886, %v11885
    %v11955 = vpack.c.b16 %v11888, %v11887
    %v11956 = vpack.c.b16 %v11890, %v11889
    %v11957 = vpack.c.b16 %v11892, %v11891
    %v11958 = vpack.c.b16 %v11894, %v11893
    %12023 = vmatprep.subr.bf16.mxu0 0
    %12024 = vmatpush1.bf16.msra.mxu0 %v11895
    %12025 = vmatprep.subr.bf16.mxu0 0
    %12026 = vmatpush1.bf16.msra.mxu0 %v11896
    %12027 = vmatprep.subr.bf16.mxu0 0
    %12028 = vmatpush1.bf16.msra.mxu0 %v11897
    %12029 = vmatprep.subr.bf16.mxu0 0
    %12030 = vmatpush1.bf16.msra.mxu0 %v11898
    %12031 = vmatprep.subr.bf16.mxu0 0
    %12032 = vmatpush1.bf16.msra.mxu0 %v11899
    %12033 = vmatprep.subr.bf16.mxu0 0
    %12034 = vmatpush1.bf16.msra.mxu0 %v11900
    %12035 = vmatprep.subr.bf16.mxu0 0
    %12036 = vmatpush1.bf16.msra.mxu0 %v11901
    %12037 = vmatprep.subr.bf16.mxu0 0
    %12038 = vmatpush1.bf16.msra.mxu0 %v11902
    %12039 = vmatprep.subr.bf16.mxu0 0
    %12040 = vmatpush1.bf16.msra.mxu0 %v11903
    %12041 = vmatprep.subr.bf16.mxu0 0
    %12042 = vmatpush1.bf16.msra.mxu0 %v11904
    %12043 = vmatprep.subr.bf16.mxu0 0
    %12044 = vmatpush1.bf16.msra.mxu0 %v11905
    %12045 = vmatprep.subr.bf16.mxu0 0
    %12046 = vmatpush1.bf16.msra.mxu0 %v11906
    %12047 = vmatprep.subr.bf16.mxu0 0
    %12048 = vmatpush1.bf16.msra.mxu0 %v11907
    %12049 = vmatprep.subr.bf16.mxu0 0
    %12050 = vmatpush1.bf16.msra.mxu0 %v11908
    %12051 = vmatprep.subr.bf16.mxu0 0
    %12052 = vmatpush1.bf16.msra.mxu0 %v11909
    %12053 = vmatprep.subr.bf16.mxu0 0
    %12054 = vmatpush1.bf16.msra.mxu0 %v11910
    %12055 = vmatprep.mubr.bf16.mxu0 %v11497
    %12056 = vmatmul.mubr.bf16.gmra.mrb[0].mxu0 %v11496
    %v12057 = vpop.f32.mrb[0].mxu0
    %v12058 = vadd.f32 %v11637, %v12057
    %v12059 = vpop.f32.mrb[0].mxu0
    %v12060 = vpop.f32.mrb[0].mxu0
    %v12061 = vadd.f32 %v11637, %v12060
    %v12062 = vpop.f32.mrb[0].mxu0
    %12063 = vdwg.mxu0
    %12064 = vmatprep.subr.bf16.mxu0 0
    %12065 = vmatpush1.bf16.msra.mxu0 %v11911
    %12066 = vmatprep.subr.bf16.mxu0 0
    %12067 = vmatpush1.bf16.msra.mxu0 %v11912
    %12068 = vmatprep.subr.bf16.mxu0 0
    %12069 = vmatpush1.bf16.msra.mxu0 %v11913
    %12070 = vmatprep.subr.bf16.mxu0 0
    %12071 = vmatpush1.bf16.msra.mxu0 %v11914
    %12072 = vmatprep.subr.bf16.mxu0 0
    %12073 = vmatpush1.bf16.msra.mxu0 %v11915
    %12074 = vmatprep.subr.bf16.mxu0 0
    %12075 = vmatpush1.bf16.msra.mxu0 %v11916
    %12076 = vmatprep.subr.bf16.mxu0 0
    %12077 = vmatpush1.bf16.msra.mxu0 %v11917
    %12078 = vmatprep.subr.bf16.mxu0 0
    %12079 = vmatpush1.bf16.msra.mxu0 %v11918
    %12080 = vmatprep.subr.bf16.mxu0 0
    %12081 = vmatpush1.bf16.msra.mxu0 %v11919
    %12082 = vmatprep.subr.bf16.mxu0 0
    %12083 = vmatpush1.bf16.msra.mxu0 %v11920
    %12084 = vmatprep.subr.bf16.mxu0 0
    %12085 = vmatpush1.bf16.msra.mxu0 %v11921
    %12086 = vmatprep.subr.bf16.mxu0 0
    %12087 = vmatpush1.bf16.msra.mxu0 %v11922
    %12088 = vmatprep.subr.bf16.mxu0 0
    %12089 = vmatpush1.bf16.msra.mxu0 %v11923
    %12090 = vmatprep.subr.bf16.mxu0 0
    %12091 = vmatpush1.bf16.msra.mxu0 %v11924
    %12092 = vmatprep.subr.bf16.mxu0 0
    %12093 = vmatpush1.bf16.msra.mxu0 %v11925
    %12094 = vmatprep.subr.bf16.mxu0 0
    %12095 = vmatpush1.bf16.msra.mxu0 %v11926
    %12096 = vmatprep.mubr.bf16.mxu0 %v11499
    %12097 = vmatmul.mubr.bf16.gmra.mrb[0].mxu0 %v11498
    %v12098 = vpop.f32.mrb[0].mxu0
    %v12099 = vadd.f32 %v12058, %v12098
    %v12100 = vpop.f32.mrb[0].mxu0
    %v12101 = vpop.f32.mrb[0].mxu0
    %v12102 = vadd.f32 %v12061, %v12101
    %v12103 = vpop.f32.mrb[0].mxu0
    %12104 = vdwg.mxu0
    %12105 = vmatprep.subr.bf16.mxu0 0
    %12106 = vmatpush1.bf16.msra.mxu0 %v11927
    %12107 = vmatprep.subr.bf16.mxu0 0
    %12108 = vmatpush1.bf16.msra.mxu0 %v11928
    %12109 = vmatprep.subr.bf16.mxu0 0
    %12110 = vmatpush1.bf16.msra.mxu0 %v11929
    %12111 = vmatprep.subr.bf16.mxu0 0
    %12112 = vmatpush1.bf16.msra.mxu0 %v11930
    %12113 = vmatprep.subr.bf16.mxu0 0
    %12114 = vmatpush1.bf16.msra.mxu0 %v11931
    %12115 = vmatprep.subr.bf16.mxu0 0
    %12116 = vmatpush1.bf16.msra.mxu0 %v11932
    %12117 = vmatprep.subr.bf16.mxu0 0
    %12118 = vmatpush1.bf16.msra.mxu0 %v11933
    %12119 = vmatprep.subr.bf16.mxu0 0
    %12120 = vmatpush1.bf16.msra.mxu0 %v11934
    %12121 = vmatprep.subr.bf16.mxu0 0
    %12122 = vmatpush1.bf16.msra.mxu0 %v11935
    %12123 = vmatprep.subr.bf16.mxu0 0
    %12124 = vmatpush1.bf16.msra.mxu0 %v11936
    %12125 = vmatprep.subr.bf16.mxu0 0
    %12126 = vmatpush1.bf16.msra.mxu0 %v11937
    %12127 = vmatprep.subr.bf16.mxu0 0
    %12128 = vmatpush1.bf16.msra.mxu0 %v11938
    %12129 = vmatprep.subr.bf16.mxu0 0
    %12130 = vmatpush1.bf16.msra.mxu0 %v11939
    %12131 = vmatprep.subr.bf16.mxu0 0
    %12132 = vmatpush1.bf16.msra.mxu0 %v11940
    %12133 = vmatprep.subr.bf16.mxu0 0
    %12134 = vmatpush1.bf16.msra.mxu0 %v11941
    %12135 = vmatprep.subr.bf16.mxu0 0
    %12136 = vmatpush1.bf16.msra.mxu0 %v11942
    %12137 = vmatprep.mubr.bf16.mxu0 %v11501
    %12138 = vmatmul.mubr.bf16.gmra.mrb[0].mxu0 %v11500
    %v12139 = vpop.f32.mrb[0].mxu0
    %v12140 = vadd.f32 %v12099, %v12139
    %v12141 = vpop.f32.mrb[0].mxu0
    %v12142 = vpop.f32.mrb[0].mxu0
    %v12143 = vadd.f32 %v12102, %v12142
    %v12144 = vpop.f32.mrb[0].mxu0
    %12145 = vdwg.mxu0
    %12146 = vmatprep.subr.bf16.mxu0 0
    %12147 = vmatpush1.bf16.msra.mxu0 %v11943
    %12148 = vmatprep.subr.bf16.mxu0 0
    %12149 = vmatpush1.bf16.msra.mxu0 %v11944
    %12150 = vmatprep.subr.bf16.mxu0 0
    %12151 = vmatpush1.bf16.msra.mxu0 %v11945
    %12152 = vmatprep.subr.bf16.mxu0 0
    %12153 = vmatpush1.bf16.msra.mxu0 %v11946
    %12154 = vmatprep.subr.bf16.mxu0 0
    %12155 = vmatpush1.bf16.msra.mxu0 %v11947
    %12156 = vmatprep.subr.bf16.mxu0 0
    %12157 = vmatpush1.bf16.msra.mxu0 %v11948
    %12158 = vmatprep.subr.bf16.mxu0 0
    %12159 = vmatpush1.bf16.msra.mxu0 %v11949
    %12160 = vmatprep.subr.bf16.mxu0 0
    %12161 = vmatpush1.bf16.msra.mxu0 %v11950
    %12162 = vmatprep.subr.bf16.mxu0 0
    %12163 = vmatpush1.bf16.msra.mxu0 %v11951
    %12164 = vmatprep.subr.bf16.mxu0 0
    %12165 = vmatpush1.bf16.msra.mxu0 %v11952
    %12166 = vmatprep.subr.bf16.mxu0 0
    %12167 = vmatpush1.bf16.msra.mxu0 %v11953
    %12168 = vmatprep.subr.bf16.mxu0 0
    %12169 = vmatpush1.bf16.msra.mxu0 %v11954
    %12170 = vmatprep.subr.bf16.mxu0 0
    %12171 = vmatpush1.bf16.msra.mxu0 %v11955
    %12172 = vmatprep.subr.bf16.mxu0 0
    %12173 = vmatpush1.bf16.msra.mxu0 %v11956
    %12174 = vmatprep.subr.bf16.mxu0 0
    %12175 = vmatpush1.bf16.msra.mxu0 %v11957
    %12176 = vmatprep.subr.bf16.mxu0 0
    %12177 = vmatpush1.bf16.msra.mxu0 %v11958
    %12178 = vmatprep.mubr.bf16.mxu0 %v11503
    %12179 = vmatmul.mubr.bf16.gmra.mrb[0].mxu0 %v11502
    %v12180 = vpop.f32.mrb[0].mxu0
    %v12181 = vadd.f32 %v12140, %v12180
    %v12182 = vpop.f32.mrb[0].mxu0
    %v12183 = vpop.f32.mrb[0].mxu0
    %v12184 = vadd.f32 %v12143, %v12183
    %v12185 = vpop.f32.mrb[0].mxu0
    %12186 = vdwg.mxu0
    %12187 = vst [vmem:[#allocation11] sm:$0xff] %v12181
    %12188 = vst [vmem:[#allocation11 + $0x8] sm:$0xff] %v12184
    // Predicated region
    $region42: #{tpu_custom_call.1} parent=1 // pred_check
      _
    $region43: #{tpu_custom_call.1} parent=1 // pred_check_branch
      %12190 = sbr.rel (0) target = $region45
    $region44: #{tpu_custom_call.1} parent=1 // pred_region
      %s12192 = ssub.s32 256, 256
      %12193 = vsyncadd [#allocation4], %s12192
      %s12194 = sshll.u32 [#allocation11], 4
      %s12195 = int_to_ptr.vmem [resolvable:$true] %s12194
      %12200 = dma.vmem_to_hbm [thread:$0]  %s12195, 256, %s5, [#allocation4], 128, 128, 8
    $region45: #{tpu_custom_call.1} parent=1 // pred_fallthru
      _
    // Predicated region
    $region46: #{tpu_custom_call.1} parent=1 // pred_check
      _
    $region47: #{tpu_custom_call.1} parent=1 // pred_check_branch
      %12202 = sbr.rel (0) target = $region49
    $region48: #{tpu_custom_call.1} parent=1 // pred_region
      %12203 = dma.done [#allocation4], 256
    $region49: #{tpu_custom_call.1} parent=1 // pred_fallthru
      _
    %12204 = vsyncpa [#allocation3], 1
    %12205 = vsyncpa [#allocation6], 1
    %12206 = vsyncpa [#allocation9], 1
    %12207 = vsyncpa [#allocation4], 1

</llo_original>
